<compile_context>
chip_gen: v7x
topology: tpu7x:2x2x1
jax: 0.10.0
libtpu: 0.0.40
codegen_flags: <defaults>
</compile_context>

<pallas_src>
import functools

import jax
import jax.numpy as jnp
from jax import lax
from jax.experimental import pallas as pl
from jax.experimental.pallas import tpu as pltpu


_CP = 128          # lane-padded channel width
_BN_EPS = 1e-5     # torch.nn.BatchNorm2d default
_NEG_SLOPE = 0.01  # torch.nn.LeakyReLU default


# ----------------------------------------------------------------------------
# In-kernel building blocks (operate on VMEM-resident values)
# ----------------------------------------------------------------------------
def _spatial_pad1(x):
    """Zero-pad H and W by 1 on each side (NHWC value, stays in VMEM)."""
    n, h, w, cp = x.shape
    zw = jnp.zeros((n, h, 1, cp), jnp.float32)
    x = jnp.concatenate([zw, x, zw], axis=2)
    zh = jnp.zeros((n, 1, w + 2, cp), jnp.float32)
    return jnp.concatenate([zh, x, zh], axis=1)


def _conv_taps(xpad, w_ref, stride, hout, wout):
    """Conv (padding already applied) as KH*KW accumulated lane-dense matmuls.

    xpad : (N, Hp, Wp, CP) f32 value — spatially padded, channel-padded input.
    w_ref: (KH, KW, CP, CP) VMEM ref of channel-padded weights.
    Returns (N*hout*wout, CP) f32.
    """
    n, hp, wp, cp = xpad.shape
    kh, kw = w_ref.shape[0], w_ref.shape[1]
    m = n * hout * wout
    acc = jnp.zeros((m, cp), jnp.float32)
    for kj in range(kw):
        # Column (W) selection with stride — built once per kj, reused by all ki.
        if stride == 1:
            wsel = xpad[:, :, kj:kj + wout, :]
        else:
            wsel = jnp.concatenate(
                [xpad[:, :, kj + stride * wo: kj + stride * wo + 1, :]
                 for wo in range(wout)], axis=2)              # (n, hp, wout, cp)
        for ki in range(kh):
            # Row (H) selection: slicing/concat on a major dim — cheap.
            if stride == 1:
                win = wsel[:, ki:ki + hout]
            else:
                win = jnp.concatenate(
                    [wsel[:, ki + stride * ho: ki + stride * ho + 1]
                     for ho in range(hout)], axis=1)          # (n, hout, wout, cp)
            patch = win.reshape(m, cp)
            # NOTE(v6e/v7x): for large shapes cast `patch` and the weight tap to
            # bf16 here (keep preferred_element_type=f32) for ~2x MXU throughput.
            acc = acc + jnp.dot(patch, w_ref[ki, kj, :, :],
                                preferred_element_type=jnp.float32)
    return acc


# ----------------------------------------------------------------------------
# Fused encoder kernel: all layers in one program, activations never leave VMEM
# ----------------------------------------------------------------------------
def _encoder_kernel(*refs, layer_meta):
    # refs = (x_ref, [w, gamma, beta] * n_bn_layers, w_final, b_final, out_ref)
    x_ref = refs[0]
    o_ref = refs[-1]
    params = refs[1:-1]

    x = x_ref[...]                      # (N, H, W, CP) channel-padded activation
    pi = 0
    n_layers = len(layer_meta)
    for li, (stride, hout, wout, has_bn) in enumerate(layer_meta):
        xpad = _spatial_pad1(x)
        w_ref = params[pi]; pi += 1
        acc = _conv_taps(xpad, w_ref, stride, hout, wout)     # (M, CP) f32

        if has_bn:
            gamma_ref = params[pi]; pi += 1
            beta_ref = params[pi]; pi += 1
            # Conv bias omitted: cancelled exactly by the mean subtraction of
            # training-mode BatchNorm2d (biased variance, eps=1e-5).
            mean = jnp.mean(acc, axis=0, keepdims=True)
            var = jnp.mean((acc - mean) ** 2, axis=0, keepdims=True)
            y = (acc - mean) * lax.rsqrt(var + _BN_EPS)
            y = y * gamma_ref[...] + beta_ref[...]
            y = jnp.where(y >= 0, y, _NEG_SLOPE * y)          # LeakyReLU
        else:
            b_ref = params[pi]; pi += 1
            y = acc + b_ref[...]

        if li == n_layers - 1:
            o_ref[...] = y.astype(o_ref.dtype)                # lane-dense store
        else:
            x = y.reshape(x.shape[0], hout, wout, _CP)        # feed next layer


# ----------------------------------------------------------------------------
# Host-side wrapper (layout plumbing only)
# ----------------------------------------------------------------------------
def _pad_weight(w):
    kh, kw, cin, cout = w.shape
    wp = jnp.zeros((kh, kw, _CP, _CP), jnp.float32)
    return wp.at[:, :, :cin, :cout].set(w.astype(jnp.float32))


def _pad_vec(v):
    out = jnp.zeros((1, _CP), jnp.float32)
    return out.at[0, :v.shape[0]].set(v.astype(jnp.float32))


def encoder_forward(x_nchw, params, config):
    """Forward pass of the Encoder. Input NCHW (PyTorch layout); output NCHW."""
    x = jnp.transpose(x_nchw, (0, 2, 3, 1)).astype(jnp.float32)       # NHWC
    n, h, w, c = x.shape
    # Channel-pad the (tiny) input to the 128-lane width at the kernel boundary.
    x = jnp.concatenate([x, jnp.zeros((n, h, w, _CP - c), jnp.float32)], axis=-1)

    n_bn = config['convbn_blocks'] - 1
    kernel_inputs = [x]
    layer_meta = []

    for i in range(n_bn):
        wgt, _bias, gamma, beta = params[f'block{i}']   # conv bias unused: BN cancels it
        kh = wgt.shape[0]
        s = config['kernel_strides'][i]
        hout = (h + 2 - kh) // s + 1
        wout = (w + 2 - kh) // s + 1
        kernel_inputs += [_pad_weight(wgt), _pad_vec(gamma), _pad_vec(beta)]
        layer_meta.append((s, hout, wout, True))
        h, w = hout, wout

    wgt, bias = params['final']
    kh = wgt.shape[0]
    cout = wgt.shape[3]
    s = config['kernel_strides'][-2]
    hout = (h + 2 - kh) // s + 1
    wout = (w + 2 - kh) // s + 1
    kernel_inputs += [_pad_weight(wgt), _pad_vec(bias)]
    layer_meta.append((s, hout, wout, False))

    m_out = n * hout * wout

    def full_spec(shape):
        nd = len(shape)
        return pl.BlockSpec(shape, lambda i, _nd=nd: (0,) * _nd)

    kernel = functools.partial(_encoder_kernel, layer_meta=tuple(layer_meta))
    out2d = pl.pallas_call(
        kernel,
        out_shape=jax.ShapeDtypeStruct((m_out, _CP), jnp.float32),
        grid=(1,),                        # whole (tiny) encoder = one fused step
        in_specs=[full_spec(a.shape) for a in kernel_inputs],
        out_specs=full_spec((m_out, _CP)),
        compiler_params=pltpu.CompilerParams(
            dimension_semantics=("arbitrary",),
            vmem_limit_bytes=64 * 1024 * 1024),   # explicit budget, <= v7x physical
    )(*kernel_inputs)

    y = out2d[:, :cout].reshape(n, hout, wout, cout)
    return jnp.transpose(y, (0, 3, 1, 2))                             # back to NCHW


# ----------------------------------------------------------------------------
# Pure-JAX reference (sanity check of the Pallas path)
# ----------------------------------------------------------------------------
def _ref_forward(x_nchw, params, config):
    x = jnp.transpose(x_nchw, (0, 2, 3, 1)).astype(jnp.float32)
    n_bn = config['convbn_blocks'] - 1

    def conv(x, w, b, stride):
        y = lax.conv_general_dilated(
            x, w, window_strides=(stride, stride), padding=((1, 1), (1, 1)),
            dimension_numbers=('NHWC', 'HWIO', 'NHWC'))
        return y + b

    for i in range(n_bn):
        w, b, gamma, beta = params[f'block{i}']
        y = conv(x, w, b, config['kernel_strides'][i])
        mean = jnp.mean(y, axis=(0, 1, 2), keepdims=True)
        var = jnp.mean((y - mean) ** 2, axis=(0, 1, 2), keepdims=True)
        y = (y - mean) * lax.rsqrt(var + _BN_EPS) * gamma + beta
        x = jnp.where(y >= 0, y, _NEG_SLOPE * y)

    w, b = params['final']
    x = conv(x, w, b, config['kernel_strides'][-2])
    return jnp.transpose(x, (0, 3, 1, 2))


# ----------------------------------------------------------------------------
# Deterministic parameter initialization (shapes per the module __init__)
# ----------------------------------------------------------------------------
def init_params(config, key):
    params = {}
    chans = config['in_channels']
    n_bn = config['convbn_blocks'] - 1
    for i in range(n_bn):
        key, kw_, kb_ = jax.random.split(key, 3)
        cin, cout, k = chans[i], chans[i + 1], config['kernel_size'][i]
        w = jax.random.normal(kw_, (k, k, cin, cout), jnp.float32) * 0.1   # HWIO
        b = jax.random.normal(kb_, (cout,), jnp.float32) * 0.05
        gamma = jnp.ones((cout,), jnp.float32)    # BatchNorm2d default init
        beta = jnp.zeros((cout,), jnp.float32)
        params[f'block{i}'] = (w, b, gamma, beta)
    key, kw_, kb_ = jax.random.split(key, 3)
    cin = cout = chans[-1]
    k = config['kernel_size'][-2]
    w = jax.random.normal(kw_, (k, k, cin, cout), jnp.float32) * 0.1
    b = jax.random.normal(kb_, (cout,), jnp.float32) * 0.05
    params['final'] = (w, b)
    return params


if __name__ == "__main__":
    config = {
        'in_channels': [4, 8, 16],
        'kernel_size': [3, 3, 3],
        'kernel_strides': [2, 2, 1],
        'convbn_blocks': 3,
        'latent_dim': 16,
    }

    key = jax.random.PRNGKey(0)
    key, kx = jax.random.split(key)
    x = jax.random.normal(kx, (2, 4, 16, 16), jnp.float32)   # NCHW, like PyTorch

    params = init_params(config, key)

    out = encoder_forward(x, params, config)
    out = jax.block_until_ready(out)

    # sanity check against pure-JAX reference
    ref = jax.block_until_ready(_ref_forward(x, params, config))
    assert out.shape == (2, 16, 2, 2), out.shape
    assert jnp.allclose(out, ref, rtol=1e-3, atol=1e-3), float(jnp.max(jnp.abs(out - ref)))

    print("KERNEL_OK")
</pallas_src>

<mosaic_0001>
module attributes {stable_mosaic.version = 11 : i64} {
  func.func @_encoder_kernel(%arg0: i32, %arg1: memref<2x16x16x128xf32, #tpu.memory_space<vmem>>, %arg2: memref<3x3x128x128xf32, #tpu.memory_space<vmem>>, %arg3: memref<1x128xf32, #tpu.memory_space<vmem>>, %arg4: memref<1x128xf32, #tpu.memory_space<vmem>>, %arg5: memref<3x3x128x128xf32, #tpu.memory_space<vmem>>, %arg6: memref<1x128xf32, #tpu.memory_space<vmem>>, %arg7: memref<1x128xf32, #tpu.memory_space<vmem>>, %arg8: memref<3x3x128x128xf32, #tpu.memory_space<vmem>>, %arg9: memref<1x128xf32, #tpu.memory_space<vmem>>, %arg10: memref<8x128xf32, #tpu.memory_space<vmem>>) attributes {dimension_semantics = [#tpu.dimension_semantics<arbitrary>], iteration_bounds = array<i64: 1>, scalar_prefetch = 0 : i64, scratch_operands = 0 : i64, tpu.core_type = #tpu.core_type<tc>, window_params = [{pipeline_mode = #tpu.pipeline_mode<synchronous>, transform_indices = @transform_0, window_bounds = array<i64: 2, 16, 16, 128>}, {pipeline_mode = #tpu.pipeline_mode<synchronous>, transform_indices = @transform_1, window_bounds = array<i64: 3, 3, 128, 128>}, {pipeline_mode = #tpu.pipeline_mode<synchronous>, transform_indices = @transform_2, window_bounds = array<i64: 1, 128>}, {pipeline_mode = #tpu.pipeline_mode<synchronous>, transform_indices = @transform_3, window_bounds = array<i64: 1, 128>}, {pipeline_mode = #tpu.pipeline_mode<synchronous>, transform_indices = @transform_4, window_bounds = array<i64: 3, 3, 128, 128>}, {pipeline_mode = #tpu.pipeline_mode<synchronous>, transform_indices = @transform_5, window_bounds = array<i64: 1, 128>}, {pipeline_mode = #tpu.pipeline_mode<synchronous>, transform_indices = @transform_6, window_bounds = array<i64: 1, 128>}, {pipeline_mode = #tpu.pipeline_mode<synchronous>, transform_indices = @transform_7, window_bounds = array<i64: 3, 3, 128, 128>}, {pipeline_mode = #tpu.pipeline_mode<synchronous>, transform_indices = @transform_8, window_bounds = array<i64: 1, 128>}, {pipeline_mode = #tpu.pipeline_mode<synchronous>, transform_indices = @transform_9, window_bounds = array<i64: 8, 128>}]} {
    %c0 = arith.constant 0 : index
    %c0_0 = arith.constant 0 : index
    %c0_1 = arith.constant 0 : index
    %c0_2 = arith.constant 0 : index
    %0 = vector.load %arg1[%c0, %c0_0, %c0_1, %c0_2] : memref<2x16x16x128xf32, #tpu.memory_space<vmem>>, vector<2x16x16x128xf32>
    %cst = arith.constant 0.000000e+00 : f32
    %1 = vector.broadcast %cst : f32 to vector<2x16x1x128xf32>
    %2 = tpu.concatenate %1, %0, %1 in 2 : vector<2x16x1x128xf32>, vector<2x16x16x128xf32>, vector<2x16x1x128xf32> -> vector<2x16x18x128xf32>
    %cst_3 = arith.constant 0.000000e+00 : f32
    %3 = vector.broadcast %cst_3 : f32 to vector<2x1x18x128xf32>
    %4 = tpu.concatenate %3, %2, %3 in 1 : vector<2x1x18x128xf32>, vector<2x16x18x128xf32>, vector<2x1x18x128xf32> -> vector<2x18x18x128xf32>
    %cst_4 = arith.constant 0.000000e+00 : f32
    %5 = vector.broadcast %cst_4 : f32 to vector<128x128xf32>
    %6 = vector.extract_strided_slice %4 {offsets = [0, 0, 0, 0], sizes = [2, 18, 1, 128], strides = [1, 1, 1, 1]} : vector<2x18x18x128xf32> to vector<2x18x1x128xf32>
    %7 = vector.extract_strided_slice %4 {offsets = [0, 0, 2, 0], sizes = [2, 18, 1, 128], strides = [1, 1, 1, 1]} : vector<2x18x18x128xf32> to vector<2x18x1x128xf32>
    %8 = vector.extract_strided_slice %4 {offsets = [0, 0, 4, 0], sizes = [2, 18, 1, 128], strides = [1, 1, 1, 1]} : vector<2x18x18x128xf32> to vector<2x18x1x128xf32>
    %9 = vector.extract_strided_slice %4 {offsets = [0, 0, 6, 0], sizes = [2, 18, 1, 128], strides = [1, 1, 1, 1]} : vector<2x18x18x128xf32> to vector<2x18x1x128xf32>
    %10 = vector.extract_strided_slice %4 {offsets = [0, 0, 8, 0], sizes = [2, 18, 1, 128], strides = [1, 1, 1, 1]} : vector<2x18x18x128xf32> to vector<2x18x1x128xf32>
    %11 = vector.extract_strided_slice %4 {offsets = [0, 0, 10, 0], sizes = [2, 18, 1, 128], strides = [1, 1, 1, 1]} : vector<2x18x18x128xf32> to vector<2x18x1x128xf32>
    %12 = vector.extract_strided_slice %4 {offsets = [0, 0, 12, 0], sizes = [2, 18, 1, 128], strides = [1, 1, 1, 1]} : vector<2x18x18x128xf32> to vector<2x18x1x128xf32>
    %13 = vector.extract_strided_slice %4 {offsets = [0, 0, 14, 0], sizes = [2, 18, 1, 128], strides = [1, 1, 1, 1]} : vector<2x18x18x128xf32> to vector<2x18x1x128xf32>
    %14 = tpu.concatenate %6, %7, %8, %9, %10, %11, %12, %13 in 2 : vector<2x18x1x128xf32>, vector<2x18x1x128xf32>, vector<2x18x1x128xf32>, vector<2x18x1x128xf32>, vector<2x18x1x128xf32>, vector<2x18x1x128xf32>, vector<2x18x1x128xf32>, vector<2x18x1x128xf32> -> vector<2x18x8x128xf32>
    %15 = vector.extract_strided_slice %14 {offsets = [0, 0, 0, 0], sizes = [2, 1, 8, 128], strides = [1, 1, 1, 1]} : vector<2x18x8x128xf32> to vector<2x1x8x128xf32>
    %16 = vector.extract_strided_slice %14 {offsets = [0, 2, 0, 0], sizes = [2, 1, 8, 128], strides = [1, 1, 1, 1]} : vector<2x18x8x128xf32> to vector<2x1x8x128xf32>
    %17 = vector.extract_strided_slice %14 {offsets = [0, 4, 0, 0], sizes = [2, 1, 8, 128], strides = [1, 1, 1, 1]} : vector<2x18x8x128xf32> to vector<2x1x8x128xf32>
    %18 = vector.extract_strided_slice %14 {offsets = [0, 6, 0, 0], sizes = [2, 1, 8, 128], strides = [1, 1, 1, 1]} : vector<2x18x8x128xf32> to vector<2x1x8x128xf32>
    %19 = vector.extract_strided_slice %14 {offsets = [0, 8, 0, 0], sizes = [2, 1, 8, 128], strides = [1, 1, 1, 1]} : vector<2x18x8x128xf32> to vector<2x1x8x128xf32>
    %20 = vector.extract_strided_slice %14 {offsets = [0, 10, 0, 0], sizes = [2, 1, 8, 128], strides = [1, 1, 1, 1]} : vector<2x18x8x128xf32> to vector<2x1x8x128xf32>
    %21 = vector.extract_strided_slice %14 {offsets = [0, 12, 0, 0], sizes = [2, 1, 8, 128], strides = [1, 1, 1, 1]} : vector<2x18x8x128xf32> to vector<2x1x8x128xf32>
    %22 = vector.extract_strided_slice %14 {offsets = [0, 14, 0, 0], sizes = [2, 1, 8, 128], strides = [1, 1, 1, 1]} : vector<2x18x8x128xf32> to vector<2x1x8x128xf32>
    %23 = tpu.concatenate %15, %16, %17, %18, %19, %20, %21, %22 in 1 : vector<2x1x8x128xf32>, vector<2x1x8x128xf32>, vector<2x1x8x128xf32>, vector<2x1x8x128xf32>, vector<2x1x8x128xf32>, vector<2x1x8x128xf32>, vector<2x1x8x128xf32>, vector<2x1x8x128xf32> -> vector<2x8x8x128xf32>
    %24 = vector.shape_cast %23 : vector<2x8x8x128xf32> to vector<128x128xf32>
    %c0_5 = arith.constant 0 : index
    %c0_6 = arith.constant 0 : index
    %c0_7 = arith.constant 0 : index
    %c0_8 = arith.constant 0 : index
    %25 = vector.load %arg2[%c0_5, %c0_6, %c0_7, %c0_8] : memref<3x3x128x128xf32, #tpu.memory_space<vmem>>, vector<1x1x128x128xf32>
    %26 = vector.shape_cast %25 : vector<1x1x128x128xf32> to vector<128x128xf32>
    %cst_9 = arith.constant dense<0.000000e+00> : vector<128x128xf32>
    %27 = tpu.matmul %24, %26, %cst_9 {dimension_numbers = #tpu.dot_dimension_numbers<[1], [0], [0], [1], [0, 0, 1, 1], [], []>} : vector<128x128xf32>, vector<128x128xf32>, vector<128x128xf32> -> vector<128x128xf32>
    %28 = arith.addf %5, %27 : vector<128x128xf32>
    %29 = vector.extract_strided_slice %14 {offsets = [0, 1, 0, 0], sizes = [2, 1, 8, 128], strides = [1, 1, 1, 1]} : vector<2x18x8x128xf32> to vector<2x1x8x128xf32>
    %30 = vector.extract_strided_slice %14 {offsets = [0, 3, 0, 0], sizes = [2, 1, 8, 128], strides = [1, 1, 1, 1]} : vector<2x18x8x128xf32> to vector<2x1x8x128xf32>
    %31 = vector.extract_strided_slice %14 {offsets = [0, 5, 0, 0], sizes = [2, 1, 8, 128], strides = [1, 1, 1, 1]} : vector<2x18x8x128xf32> to vector<2x1x8x128xf32>
    %32 = vector.extract_strided_slice %14 {offsets = [0, 7, 0, 0], sizes = [2, 1, 8, 128], strides = [1, 1, 1, 1]} : vector<2x18x8x128xf32> to vector<2x1x8x128xf32>
    %33 = vector.extract_strided_slice %14 {offsets = [0, 9, 0, 0], sizes = [2, 1, 8, 128], strides = [1, 1, 1, 1]} : vector<2x18x8x128xf32> to vector<2x1x8x128xf32>
    %34 = vector.extract_strided_slice %14 {offsets = [0, 11, 0, 0], sizes = [2, 1, 8, 128], strides = [1, 1, 1, 1]} : vector<2x18x8x128xf32> to vector<2x1x8x128xf32>
    %35 = vector.extract_strided_slice %14 {offsets = [0, 13, 0, 0], sizes = [2, 1, 8, 128], strides = [1, 1, 1, 1]} : vector<2x18x8x128xf32> to vector<2x1x8x128xf32>
    %36 = vector.extract_strided_slice %14 {offsets = [0, 15, 0, 0], sizes = [2, 1, 8, 128], strides = [1, 1, 1, 1]} : vector<2x18x8x128xf32> to vector<2x1x8x128xf32>
    %37 = tpu.concatenate %29, %30, %31, %32, %33, %34, %35, %36 in 1 : vector<2x1x8x128xf32>, vector<2x1x8x128xf32>, vector<2x1x8x128xf32>, vector<2x1x8x128xf32>, vector<2x1x8x128xf32>, vector<2x1x8x128xf32>, vector<2x1x8x128xf32>, vector<2x1x8x128xf32> -> vector<2x8x8x128xf32>
    %38 = vector.shape_cast %37 : vector<2x8x8x128xf32> to vector<128x128xf32>
    %c1 = arith.constant 1 : index
    %c0_10 = arith.constant 0 : index
    %c0_11 = arith.constant 0 : index
    %c0_12 = arith.constant 0 : index
    %39 = vector.load %arg2[%c1, %c0_10, %c0_11, %c0_12] : memref<3x3x128x128xf32, #tpu.memory_space<vmem>>, vector<1x1x128x128xf32>
    %40 = vector.shape_cast %39 : vector<1x1x128x128xf32> to vector<128x128xf32>
    %cst_13 = arith.constant dense<0.000000e+00> : vector<128x128xf32>
    %41 = tpu.matmul %38, %40, %cst_13 {dimension_numbers = #tpu.dot_dimension_numbers<[1], [0], [0], [1], [0, 0, 1, 1], [], []>} : vector<128x128xf32>, vector<128x128xf32>, vector<128x128xf32> -> vector<128x128xf32>
    %42 = arith.addf %28, %41 : vector<128x128xf32>
    %43 = vector.extract_strided_slice %14 {offsets = [0, 2, 0, 0], sizes = [2, 1, 8, 128], strides = [1, 1, 1, 1]} : vector<2x18x8x128xf32> to vector<2x1x8x128xf32>
    %44 = vector.extract_strided_slice %14 {offsets = [0, 4, 0, 0], sizes = [2, 1, 8, 128], strides = [1, 1, 1, 1]} : vector<2x18x8x128xf32> to vector<2x1x8x128xf32>
    %45 = vector.extract_strided_slice %14 {offsets = [0, 6, 0, 0], sizes = [2, 1, 8, 128], strides = [1, 1, 1, 1]} : vector<2x18x8x128xf32> to vector<2x1x8x128xf32>
    %46 = vector.extract_strided_slice %14 {offsets = [0, 8, 0, 0], sizes = [2, 1, 8, 128], strides = [1, 1, 1, 1]} : vector<2x18x8x128xf32> to vector<2x1x8x128xf32>
    %47 = vector.extract_strided_slice %14 {offsets = [0, 10, 0, 0], sizes = [2, 1, 8, 128], strides = [1, 1, 1, 1]} : vector<2x18x8x128xf32> to vector<2x1x8x128xf32>
    %48 = vector.extract_strided_slice %14 {offsets = [0, 12, 0, 0], sizes = [2, 1, 8, 128], strides = [1, 1, 1, 1]} : vector<2x18x8x128xf32> to vector<2x1x8x128xf32>
    %49 = vector.extract_strided_slice %14 {offsets = [0, 14, 0, 0], sizes = [2, 1, 8, 128], strides = [1, 1, 1, 1]} : vector<2x18x8x128xf32> to vector<2x1x8x128xf32>
    %50 = vector.extract_strided_slice %14 {offsets = [0, 16, 0, 0], sizes = [2, 1, 8, 128], strides = [1, 1, 1, 1]} : vector<2x18x8x128xf32> to vector<2x1x8x128xf32>
    %51 = tpu.concatenate %43, %44, %45, %46, %47, %48, %49, %50 in 1 : vector<2x1x8x128xf32>, vector<2x1x8x128xf32>, vector<2x1x8x128xf32>, vector<2x1x8x128xf32>, vector<2x1x8x128xf32>, vector<2x1x8x128xf32>, vector<2x1x8x128xf32>, vector<2x1x8x128xf32> -> vector<2x8x8x128xf32>
    %52 = vector.shape_cast %51 : vector<2x8x8x128xf32> to vector<128x128xf32>
    %c2 = arith.constant 2 : index
    %c0_14 = arith.constant 0 : index
    %c0_15 = arith.constant 0 : index
    %c0_16 = arith.constant 0 : index
    %53 = vector.load %arg2[%c2, %c0_14, %c0_15, %c0_16] : memref<3x3x128x128xf32, #tpu.memory_space<vmem>>, vector<1x1x128x128xf32>
    %54 = vector.shape_cast %53 : vector<1x1x128x128xf32> to vector<128x128xf32>
    %cst_17 = arith.constant dense<0.000000e+00> : vector<128x128xf32>
    %55 = tpu.matmul %52, %54, %cst_17 {dimension_numbers = #tpu.dot_dimension_numbers<[1], [0], [0], [1], [0, 0, 1, 1], [], []>} : vector<128x128xf32>, vector<128x128xf32>, vector<128x128xf32> -> vector<128x128xf32>
    %56 = arith.addf %42, %55 : vector<128x128xf32>
    %57 = vector.extract_strided_slice %4 {offsets = [0, 0, 1, 0], sizes = [2, 18, 1, 128], strides = [1, 1, 1, 1]} : vector<2x18x18x128xf32> to vector<2x18x1x128xf32>
    %58 = vector.extract_strided_slice %4 {offsets = [0, 0, 3, 0], sizes = [2, 18, 1, 128], strides = [1, 1, 1, 1]} : vector<2x18x18x128xf32> to vector<2x18x1x128xf32>
    %59 = vector.extract_strided_slice %4 {offsets = [0, 0, 5, 0], sizes = [2, 18, 1, 128], strides = [1, 1, 1, 1]} : vector<2x18x18x128xf32> to vector<2x18x1x128xf32>
    %60 = vector.extract_strided_slice %4 {offsets = [0, 0, 7, 0], sizes = [2, 18, 1, 128], strides = [1, 1, 1, 1]} : vector<2x18x18x128xf32> to vector<2x18x1x128xf32>
    %61 = vector.extract_strided_slice %4 {offsets = [0, 0, 9, 0], sizes = [2, 18, 1, 128], strides = [1, 1, 1, 1]} : vector<2x18x18x128xf32> to vector<2x18x1x128xf32>
    %62 = vector.extract_strided_slice %4 {offsets = [0, 0, 11, 0], sizes = [2, 18, 1, 128], strides = [1, 1, 1, 1]} : vector<2x18x18x128xf32> to vector<2x18x1x128xf32>
    %63 = vector.extract_strided_slice %4 {offsets = [0, 0, 13, 0], sizes = [2, 18, 1, 128], strides = [1, 1, 1, 1]} : vector<2x18x18x128xf32> to vector<2x18x1x128xf32>
    %64 = vector.extract_strided_slice %4 {offsets = [0, 0, 15, 0], sizes = [2, 18, 1, 128], strides = [1, 1, 1, 1]} : vector<2x18x18x128xf32> to vector<2x18x1x128xf32>
    %65 = tpu.concatenate %57, %58, %59, %60, %61, %62, %63, %64 in 2 : vector<2x18x1x128xf32>, vector<2x18x1x128xf32>, vector<2x18x1x128xf32>, vector<2x18x1x128xf32>, vector<2x18x1x128xf32>, vector<2x18x1x128xf32>, vector<2x18x1x128xf32>, vector<2x18x1x128xf32> -> vector<2x18x8x128xf32>
    %66 = vector.extract_strided_slice %65 {offsets = [0, 0, 0, 0], sizes = [2, 1, 8, 128], strides = [1, 1, 1, 1]} : vector<2x18x8x128xf32> to vector<2x1x8x128xf32>
    %67 = vector.extract_strided_slice %65 {offsets = [0, 2, 0, 0], sizes = [2, 1, 8, 128], strides = [1, 1, 1, 1]} : vector<2x18x8x128xf32> to vector<2x1x8x128xf32>
    %68 = vector.extract_strided_slice %65 {offsets = [0, 4, 0, 0], sizes = [2, 1, 8, 128], strides = [1, 1, 1, 1]} : vector<2x18x8x128xf32> to vector<2x1x8x128xf32>
    %69 = vector.extract_strided_slice %65 {offsets = [0, 6, 0, 0], sizes = [2, 1, 8, 128], strides = [1, 1, 1, 1]} : vector<2x18x8x128xf32> to vector<2x1x8x128xf32>
    %70 = vector.extract_strided_slice %65 {offsets = [0, 8, 0, 0], sizes = [2, 1, 8, 128], strides = [1, 1, 1, 1]} : vector<2x18x8x128xf32> to vector<2x1x8x128xf32>
    %71 = vector.extract_strided_slice %65 {offsets = [0, 10, 0, 0], sizes = [2, 1, 8, 128], strides = [1, 1, 1, 1]} : vector<2x18x8x128xf32> to vector<2x1x8x128xf32>
    %72 = vector.extract_strided_slice %65 {offsets = [0, 12, 0, 0], sizes = [2, 1, 8, 128], strides = [1, 1, 1, 1]} : vector<2x18x8x128xf32> to vector<2x1x8x128xf32>
    %73 = vector.extract_strided_slice %65 {offsets = [0, 14, 0, 0], sizes = [2, 1, 8, 128], strides = [1, 1, 1, 1]} : vector<2x18x8x128xf32> to vector<2x1x8x128xf32>
    %74 = tpu.concatenate %66, %67, %68, %69, %70, %71, %72, %73 in 1 : vector<2x1x8x128xf32>, vector<2x1x8x128xf32>, vector<2x1x8x128xf32>, vector<2x1x8x128xf32>, vector<2x1x8x128xf32>, vector<2x1x8x128xf32>, vector<2x1x8x128xf32>, vector<2x1x8x128xf32> -> vector<2x8x8x128xf32>
    %75 = vector.shape_cast %74 : vector<2x8x8x128xf32> to vector<128x128xf32>
    %c0_18 = arith.constant 0 : index
    %c1_19 = arith.constant 1 : index
    %c0_20 = arith.constant 0 : index
    %c0_21 = arith.constant 0 : index
    %76 = vector.load %arg2[%c0_18, %c1_19, %c0_20, %c0_21] : memref<3x3x128x128xf32, #tpu.memory_space<vmem>>, vector<1x1x128x128xf32>
    %77 = vector.shape_cast %76 : vector<1x1x128x128xf32> to vector<128x128xf32>
    %cst_22 = arith.constant dense<0.000000e+00> : vector<128x128xf32>
    %78 = tpu.matmul %75, %77, %cst_22 {dimension_numbers = #tpu.dot_dimension_numbers<[1], [0], [0], [1], [0, 0, 1, 1], [], []>} : vector<128x128xf32>, vector<128x128xf32>, vector<128x128xf32> -> vector<128x128xf32>
    %79 = arith.addf %56, %78 : vector<128x128xf32>
    %80 = vector.extract_strided_slice %65 {offsets = [0, 1, 0, 0], sizes = [2, 1, 8, 128], strides = [1, 1, 1, 1]} : vector<2x18x8x128xf32> to vector<2x1x8x128xf32>
    %81 = vector.extract_strided_slice %65 {offsets = [0, 3, 0, 0], sizes = [2, 1, 8, 128], strides = [1, 1, 1, 1]} : vector<2x18x8x128xf32> to vector<2x1x8x128xf32>
    %82 = vector.extract_strided_slice %65 {offsets = [0, 5, 0, 0], sizes = [2, 1, 8, 128], strides = [1, 1, 1, 1]} : vector<2x18x8x128xf32> to vector<2x1x8x128xf32>
    %83 = vector.extract_strided_slice %65 {offsets = [0, 7, 0, 0], sizes = [2, 1, 8, 128], strides = [1, 1, 1, 1]} : vector<2x18x8x128xf32> to vector<2x1x8x128xf32>
    %84 = vector.extract_strided_slice %65 {offsets = [0, 9, 0, 0], sizes = [2, 1, 8, 128], strides = [1, 1, 1, 1]} : vector<2x18x8x128xf32> to vector<2x1x8x128xf32>
    %85 = vector.extract_strided_slice %65 {offsets = [0, 11, 0, 0], sizes = [2, 1, 8, 128], strides = [1, 1, 1, 1]} : vector<2x18x8x128xf32> to vector<2x1x8x128xf32>
    %86 = vector.extract_strided_slice %65 {offsets = [0, 13, 0, 0], sizes = [2, 1, 8, 128], strides = [1, 1, 1, 1]} : vector<2x18x8x128xf32> to vector<2x1x8x128xf32>
    %87 = vector.extract_strided_slice %65 {offsets = [0, 15, 0, 0], sizes = [2, 1, 8, 128], strides = [1, 1, 1, 1]} : vector<2x18x8x128xf32> to vector<2x1x8x128xf32>
    %88 = tpu.concatenate %80, %81, %82, %83, %84, %85, %86, %87 in 1 : vector<2x1x8x128xf32>, vector<2x1x8x128xf32>, vector<2x1x8x128xf32>, vector<2x1x8x128xf32>, vector<2x1x8x128xf32>, vector<2x1x8x128xf32>, vector<2x1x8x128xf32>, vector<2x1x8x128xf32> -> vector<2x8x8x128xf32>
    %89 = vector.shape_cast %88 : vector<2x8x8x128xf32> to vector<128x128xf32>
    %c1_23 = arith.constant 1 : index
    %c1_24 = arith.constant 1 : index
    %c0_25 = arith.constant 0 : index
    %c0_26 = arith.constant 0 : index
    %90 = vector.load %arg2[%c1_23, %c1_24, %c0_25, %c0_26] : memref<3x3x128x128xf32, #tpu.memory_space<vmem>>, vector<1x1x128x128xf32>
    %91 = vector.shape_cast %90 : vector<1x1x128x128xf32> to vector<128x128xf32>
    %cst_27 = arith.constant dense<0.000000e+00> : vector<128x128xf32>
    %92 = tpu.matmul %89, %91, %cst_27 {dimension_numbers = #tpu.dot_dimension_numbers<[1], [0], [0], [1], [0, 0, 1, 1], [], []>} : vector<128x128xf32>, vector<128x128xf32>, vector<128x128xf32> -> vector<128x128xf32>
    %93 = arith.addf %79, %92 : vector<128x128xf32>
    %94 = vector.extract_strided_slice %65 {offsets = [0, 2, 0, 0], sizes = [2, 1, 8, 128], strides = [1, 1, 1, 1]} : vector<2x18x8x128xf32> to vector<2x1x8x128xf32>
    %95 = vector.extract_strided_slice %65 {offsets = [0, 4, 0, 0], sizes = [2, 1, 8, 128], strides = [1, 1, 1, 1]} : vector<2x18x8x128xf32> to vector<2x1x8x128xf32>
    %96 = vector.extract_strided_slice %65 {offsets = [0, 6, 0, 0], sizes = [2, 1, 8, 128], strides = [1, 1, 1, 1]} : vector<2x18x8x128xf32> to vector<2x1x8x128xf32>
    %97 = vector.extract_strided_slice %65 {offsets = [0, 8, 0, 0], sizes = [2, 1, 8, 128], strides = [1, 1, 1, 1]} : vector<2x18x8x128xf32> to vector<2x1x8x128xf32>
    %98 = vector.extract_strided_slice %65 {offsets = [0, 10, 0, 0], sizes = [2, 1, 8, 128], strides = [1, 1, 1, 1]} : vector<2x18x8x128xf32> to vector<2x1x8x128xf32>
    %99 = vector.extract_strided_slice %65 {offsets = [0, 12, 0, 0], sizes = [2, 1, 8, 128], strides = [1, 1, 1, 1]} : vector<2x18x8x128xf32> to vector<2x1x8x128xf32>
    %100 = vector.extract_strided_slice %65 {offsets = [0, 14, 0, 0], sizes = [2, 1, 8, 128], strides = [1, 1, 1, 1]} : vector<2x18x8x128xf32> to vector<2x1x8x128xf32>
    %101 = vector.extract_strided_slice %65 {offsets = [0, 16, 0, 0], sizes = [2, 1, 8, 128], strides = [1, 1, 1, 1]} : vector<2x18x8x128xf32> to vector<2x1x8x128xf32>
    %102 = tpu.concatenate %94, %95, %96, %97, %98, %99, %100, %101 in 1 : vector<2x1x8x128xf32>, vector<2x1x8x128xf32>, vector<2x1x8x128xf32>, vector<2x1x8x128xf32>, vector<2x1x8x128xf32>, vector<2x1x8x128xf32>, vector<2x1x8x128xf32>, vector<2x1x8x128xf32> -> vector<2x8x8x128xf32>
    %103 = vector.shape_cast %102 : vector<2x8x8x128xf32> to vector<128x128xf32>
    %c2_28 = arith.constant 2 : index
    %c1_29 = arith.constant 1 : index
    %c0_30 = arith.constant 0 : index
    %c0_31 = arith.constant 0 : index
    %104 = vector.load %arg2[%c2_28, %c1_29, %c0_30, %c0_31] : memref<3x3x128x128xf32, #tpu.memory_space<vmem>>, vector<1x1x128x128xf32>
    %105 = vector.shape_cast %104 : vector<1x1x128x128xf32> to vector<128x128xf32>
    %cst_32 = arith.constant dense<0.000000e+00> : vector<128x128xf32>
    %106 = tpu.matmul %103, %105, %cst_32 {dimension_numbers = #tpu.dot_dimension_numbers<[1], [0], [0], [1], [0, 0, 1, 1], [], []>} : vector<128x128xf32>, vector<128x128xf32>, vector<128x128xf32> -> vector<128x128xf32>
    %107 = arith.addf %93, %106 : vector<128x128xf32>
    %108 = vector.extract_strided_slice %4 {offsets = [0, 0, 2, 0], sizes = [2, 18, 1, 128], strides = [1, 1, 1, 1]} : vector<2x18x18x128xf32> to vector<2x18x1x128xf32>
    %109 = vector.extract_strided_slice %4 {offsets = [0, 0, 4, 0], sizes = [2, 18, 1, 128], strides = [1, 1, 1, 1]} : vector<2x18x18x128xf32> to vector<2x18x1x128xf32>
    %110 = vector.extract_strided_slice %4 {offsets = [0, 0, 6, 0], sizes = [2, 18, 1, 128], strides = [1, 1, 1, 1]} : vector<2x18x18x128xf32> to vector<2x18x1x128xf32>
    %111 = vector.extract_strided_slice %4 {offsets = [0, 0, 8, 0], sizes = [2, 18, 1, 128], strides = [1, 1, 1, 1]} : vector<2x18x18x128xf32> to vector<2x18x1x128xf32>
    %112 = vector.extract_strided_slice %4 {offsets = [0, 0, 10, 0], sizes = [2, 18, 1, 128], strides = [1, 1, 1, 1]} : vector<2x18x18x128xf32> to vector<2x18x1x128xf32>
    %113 = vector.extract_strided_slice %4 {offsets = [0, 0, 12, 0], sizes = [2, 18, 1, 128], strides = [1, 1, 1, 1]} : vector<2x18x18x128xf32> to vector<2x18x1x128xf32>
    %114 = vector.extract_strided_slice %4 {offsets = [0, 0, 14, 0], sizes = [2, 18, 1, 128], strides = [1, 1, 1, 1]} : vector<2x18x18x128xf32> to vector<2x18x1x128xf32>
    %115 = vector.extract_strided_slice %4 {offsets = [0, 0, 16, 0], sizes = [2, 18, 1, 128], strides = [1, 1, 1, 1]} : vector<2x18x18x128xf32> to vector<2x18x1x128xf32>
    %116 = tpu.concatenate %108, %109, %110, %111, %112, %113, %114, %115 in 2 : vector<2x18x1x128xf32>, vector<2x18x1x128xf32>, vector<2x18x1x128xf32>, vector<2x18x1x128xf32>, vector<2x18x1x128xf32>, vector<2x18x1x128xf32>, vector<2x18x1x128xf32>, vector<2x18x1x128xf32> -> vector<2x18x8x128xf32>
    %117 = vector.extract_strided_slice %116 {offsets = [0, 0, 0, 0], sizes = [2, 1, 8, 128], strides = [1, 1, 1, 1]} : vector<2x18x8x128xf32> to vector<2x1x8x128xf32>
    %118 = vector.extract_strided_slice %116 {offsets = [0, 2, 0, 0], sizes = [2, 1, 8, 128], strides = [1, 1, 1, 1]} : vector<2x18x8x128xf32> to vector<2x1x8x128xf32>
    %119 = vector.extract_strided_slice %116 {offsets = [0, 4, 0, 0], sizes = [2, 1, 8, 128], strides = [1, 1, 1, 1]} : vector<2x18x8x128xf32> to vector<2x1x8x128xf32>
    %120 = vector.extract_strided_slice %116 {offsets = [0, 6, 0, 0], sizes = [2, 1, 8, 128], strides = [1, 1, 1, 1]} : vector<2x18x8x128xf32> to vector<2x1x8x128xf32>
    %121 = vector.extract_strided_slice %116 {offsets = [0, 8, 0, 0], sizes = [2, 1, 8, 128], strides = [1, 1, 1, 1]} : vector<2x18x8x128xf32> to vector<2x1x8x128xf32>
    %122 = vector.extract_strided_slice %116 {offsets = [0, 10, 0, 0], sizes = [2, 1, 8, 128], strides = [1, 1, 1, 1]} : vector<2x18x8x128xf32> to vector<2x1x8x128xf32>
    %123 = vector.extract_strided_slice %116 {offsets = [0, 12, 0, 0], sizes = [2, 1, 8, 128], strides = [1, 1, 1, 1]} : vector<2x18x8x128xf32> to vector<2x1x8x128xf32>
    %124 = vector.extract_strided_slice %116 {offsets = [0, 14, 0, 0], sizes = [2, 1, 8, 128], strides = [1, 1, 1, 1]} : vector<2x18x8x128xf32> to vector<2x1x8x128xf32>
    %125 = tpu.concatenate %117, %118, %119, %120, %121, %122, %123, %124 in 1 : vector<2x1x8x128xf32>, vector<2x1x8x128xf32>, vector<2x1x8x128xf32>, vector<2x1x8x128xf32>, vector<2x1x8x128xf32>, vector<2x1x8x128xf32>, vector<2x1x8x128xf32>, vector<2x1x8x128xf32> -> vector<2x8x8x128xf32>
    %126 = vector.shape_cast %125 : vector<2x8x8x128xf32> to vector<128x128xf32>
    %c0_33 = arith.constant 0 : index
    %c2_34 = arith.constant 2 : index
    %c0_35 = arith.constant 0 : index
    %c0_36 = arith.constant 0 : index
    %127 = vector.load %arg2[%c0_33, %c2_34, %c0_35, %c0_36] : memref<3x3x128x128xf32, #tpu.memory_space<vmem>>, vector<1x1x128x128xf32>
    %128 = vector.shape_cast %127 : vector<1x1x128x128xf32> to vector<128x128xf32>
    %cst_37 = arith.constant dense<0.000000e+00> : vector<128x128xf32>
    %129 = tpu.matmul %126, %128, %cst_37 {dimension_numbers = #tpu.dot_dimension_numbers<[1], [0], [0], [1], [0, 0, 1, 1], [], []>} : vector<128x128xf32>, vector<128x128xf32>, vector<128x128xf32> -> vector<128x128xf32>
    %130 = arith.addf %107, %129 : vector<128x128xf32>
    %131 = vector.extract_strided_slice %116 {offsets = [0, 1, 0, 0], sizes = [2, 1, 8, 128], strides = [1, 1, 1, 1]} : vector<2x18x8x128xf32> to vector<2x1x8x128xf32>
    %132 = vector.extract_strided_slice %116 {offsets = [0, 3, 0, 0], sizes = [2, 1, 8, 128], strides = [1, 1, 1, 1]} : vector<2x18x8x128xf32> to vector<2x1x8x128xf32>
    %133 = vector.extract_strided_slice %116 {offsets = [0, 5, 0, 0], sizes = [2, 1, 8, 128], strides = [1, 1, 1, 1]} : vector<2x18x8x128xf32> to vector<2x1x8x128xf32>
    %134 = vector.extract_strided_slice %116 {offsets = [0, 7, 0, 0], sizes = [2, 1, 8, 128], strides = [1, 1, 1, 1]} : vector<2x18x8x128xf32> to vector<2x1x8x128xf32>
    %135 = vector.extract_strided_slice %116 {offsets = [0, 9, 0, 0], sizes = [2, 1, 8, 128], strides = [1, 1, 1, 1]} : vector<2x18x8x128xf32> to vector<2x1x8x128xf32>
    %136 = vector.extract_strided_slice %116 {offsets = [0, 11, 0, 0], sizes = [2, 1, 8, 128], strides = [1, 1, 1, 1]} : vector<2x18x8x128xf32> to vector<2x1x8x128xf32>
    %137 = vector.extract_strided_slice %116 {offsets = [0, 13, 0, 0], sizes = [2, 1, 8, 128], strides = [1, 1, 1, 1]} : vector<2x18x8x128xf32> to vector<2x1x8x128xf32>
    %138 = vector.extract_strided_slice %116 {offsets = [0, 15, 0, 0], sizes = [2, 1, 8, 128], strides = [1, 1, 1, 1]} : vector<2x18x8x128xf32> to vector<2x1x8x128xf32>
    %139 = tpu.concatenate %131, %132, %133, %134, %135, %136, %137, %138 in 1 : vector<2x1x8x128xf32>, vector<2x1x8x128xf32>, vector<2x1x8x128xf32>, vector<2x1x8x128xf32>, vector<2x1x8x128xf32>, vector<2x1x8x128xf32>, vector<2x1x8x128xf32>, vector<2x1x8x128xf32> -> vector<2x8x8x128xf32>
    %140 = vector.shape_cast %139 : vector<2x8x8x128xf32> to vector<128x128xf32>
    %c1_38 = arith.constant 1 : index
    %c2_39 = arith.constant 2 : index
    %c0_40 = arith.constant 0 : index
    %c0_41 = arith.constant 0 : index
    %141 = vector.load %arg2[%c1_38, %c2_39, %c0_40, %c0_41] : memref<3x3x128x128xf32, #tpu.memory_space<vmem>>, vector<1x1x128x128xf32>
    %142 = vector.shape_cast %141 : vector<1x1x128x128xf32> to vector<128x128xf32>
    %cst_42 = arith.constant dense<0.000000e+00> : vector<128x128xf32>
    %143 = tpu.matmul %140, %142, %cst_42 {dimension_numbers = #tpu.dot_dimension_numbers<[1], [0], [0], [1], [0, 0, 1, 1], [], []>} : vector<128x128xf32>, vector<128x128xf32>, vector<128x128xf32> -> vector<128x128xf32>
    %144 = arith.addf %130, %143 : vector<128x128xf32>
    %145 = vector.extract_strided_slice %116 {offsets = [0, 2, 0, 0], sizes = [2, 1, 8, 128], strides = [1, 1, 1, 1]} : vector<2x18x8x128xf32> to vector<2x1x8x128xf32>
    %146 = vector.extract_strided_slice %116 {offsets = [0, 4, 0, 0], sizes = [2, 1, 8, 128], strides = [1, 1, 1, 1]} : vector<2x18x8x128xf32> to vector<2x1x8x128xf32>
    %147 = vector.extract_strided_slice %116 {offsets = [0, 6, 0, 0], sizes = [2, 1, 8, 128], strides = [1, 1, 1, 1]} : vector<2x18x8x128xf32> to vector<2x1x8x128xf32>
    %148 = vector.extract_strided_slice %116 {offsets = [0, 8, 0, 0], sizes = [2, 1, 8, 128], strides = [1, 1, 1, 1]} : vector<2x18x8x128xf32> to vector<2x1x8x128xf32>
    %149 = vector.extract_strided_slice %116 {offsets = [0, 10, 0, 0], sizes = [2, 1, 8, 128], strides = [1, 1, 1, 1]} : vector<2x18x8x128xf32> to vector<2x1x8x128xf32>
    %150 = vector.extract_strided_slice %116 {offsets = [0, 12, 0, 0], sizes = [2, 1, 8, 128], strides = [1, 1, 1, 1]} : vector<2x18x8x128xf32> to vector<2x1x8x128xf32>
    %151 = vector.extract_strided_slice %116 {offsets = [0, 14, 0, 0], sizes = [2, 1, 8, 128], strides = [1, 1, 1, 1]} : vector<2x18x8x128xf32> to vector<2x1x8x128xf32>
    %152 = vector.extract_strided_slice %116 {offsets = [0, 16, 0, 0], sizes = [2, 1, 8, 128], strides = [1, 1, 1, 1]} : vector<2x18x8x128xf32> to vector<2x1x8x128xf32>
    %153 = tpu.concatenate %145, %146, %147, %148, %149, %150, %151, %152 in 1 : vector<2x1x8x128xf32>, vector<2x1x8x128xf32>, vector<2x1x8x128xf32>, vector<2x1x8x128xf32>, vector<2x1x8x128xf32>, vector<2x1x8x128xf32>, vector<2x1x8x128xf32>, vector<2x1x8x128xf32> -> vector<2x8x8x128xf32>
    %154 = vector.shape_cast %153 : vector<2x8x8x128xf32> to vector<128x128xf32>
    %c2_43 = arith.constant 2 : index
    %c2_44 = arith.constant 2 : index
    %c0_45 = arith.constant 0 : index
    %c0_46 = arith.constant 0 : index
    %155 = vector.load %arg2[%c2_43, %c2_44, %c0_45, %c0_46] : memref<3x3x128x128xf32, #tpu.memory_space<vmem>>, vector<1x1x128x128xf32>
    %156 = vector.shape_cast %155 : vector<1x1x128x128xf32> to vector<128x128xf32>
    %cst_47 = arith.constant dense<0.000000e+00> : vector<128x128xf32>
    %157 = tpu.matmul %154, %156, %cst_47 {dimension_numbers = #tpu.dot_dimension_numbers<[1], [0], [0], [1], [0, 0, 1, 1], [], []>} : vector<128x128xf32>, vector<128x128xf32>, vector<128x128xf32> -> vector<128x128xf32>
    %158 = arith.addf %144, %157 : vector<128x128xf32>
    %cst_48 = arith.constant dense<0.000000e+00> : vector<128xf32>
    %159 = vector.multi_reduction <add>, %158, %cst_48 [0] : vector<128x128xf32> to vector<128xf32>
    %160 = vector.shape_cast %159 : vector<128xf32> to vector<1x128xf32>
    %cst_49 = arith.constant 1.280000e+02 : f32
    %161 = vector.broadcast %cst_49 : f32 to vector<1x128xf32>
    %162 = arith.divf %160, %161 : vector<1x128xf32>
    %163 = vector.broadcast %162 : vector<1x128xf32> to vector<128x128xf32>
    %164 = arith.subf %158, %163 : vector<128x128xf32>
    %165 = arith.mulf %164, %164 : vector<128x128xf32>
    %cst_50 = arith.constant dense<0.000000e+00> : vector<128xf32>
    %166 = vector.multi_reduction <add>, %165, %cst_50 [0] : vector<128x128xf32> to vector<128xf32>
    %167 = vector.shape_cast %166 : vector<128xf32> to vector<1x128xf32>
    %cst_51 = arith.constant 1.280000e+02 : f32
    %168 = vector.broadcast %cst_51 : f32 to vector<1x128xf32>
    %169 = arith.divf %167, %168 : vector<1x128xf32>
    %170 = vector.broadcast %162 : vector<1x128xf32> to vector<128x128xf32>
    %171 = arith.subf %158, %170 : vector<128x128xf32>
    %cst_52 = arith.constant 9.99999974E-6 : f32
    %172 = vector.broadcast %cst_52 : f32 to vector<1x128xf32>
    %173 = arith.addf %169, %172 : vector<1x128xf32>
    %174 = math.rsqrt %173 : vector<1x128xf32>
    %175 = vector.broadcast %174 : vector<1x128xf32> to vector<128x128xf32>
    %176 = arith.mulf %171, %175 : vector<128x128xf32>
    %c0_53 = arith.constant 0 : index
    %c0_54 = arith.constant 0 : index
    %177 = vector.load %arg3[%c0_53, %c0_54] : memref<1x128xf32, #tpu.memory_space<vmem>>, vector<1x128xf32>
    %178 = vector.broadcast %177 : vector<1x128xf32> to vector<128x128xf32>
    %179 = arith.mulf %176, %178 : vector<128x128xf32>
    %c0_55 = arith.constant 0 : index
    %c0_56 = arith.constant 0 : index
    %180 = vector.load %arg4[%c0_55, %c0_56] : memref<1x128xf32, #tpu.memory_space<vmem>>, vector<1x128xf32>
    %181 = vector.broadcast %180 : vector<1x128xf32> to vector<128x128xf32>
    %182 = arith.addf %179, %181 : vector<128x128xf32>
    %cst_57 = arith.constant 0.000000e+00 : f32
    %183 = vector.broadcast %cst_57 : f32 to vector<128x128xf32>
    %184 = arith.cmpf oge, %182, %183 : vector<128x128xf32>
    %cst_58 = arith.constant 0.00999999977 : f32
    %185 = vector.broadcast %cst_58 : f32 to vector<128x128xf32>
    %186 = arith.mulf %185, %182 : vector<128x128xf32>
    %187 = arith.select %184, %182, %186 : vector<128x128xi1>, vector<128x128xf32>
    %188 = vector.shape_cast %187 : vector<128x128xf32> to vector<2x8x8x128xf32>
    %cst_59 = arith.constant 0.000000e+00 : f32
    %189 = vector.broadcast %cst_59 : f32 to vector<2x8x1x128xf32>
    %190 = tpu.concatenate %189, %188, %189 in 2 : vector<2x8x1x128xf32>, vector<2x8x8x128xf32>, vector<2x8x1x128xf32> -> vector<2x8x10x128xf32>
    %cst_60 = arith.constant 0.000000e+00 : f32
    %191 = vector.broadcast %cst_60 : f32 to vector<2x1x10x128xf32>
    %192 = tpu.concatenate %191, %190, %191 in 1 : vector<2x1x10x128xf32>, vector<2x8x10x128xf32>, vector<2x1x10x128xf32> -> vector<2x10x10x128xf32>
    %cst_61 = arith.constant 0.000000e+00 : f32
    %193 = vector.broadcast %cst_61 : f32 to vector<32x128xf32>
    %194 = vector.extract_strided_slice %192 {offsets = [0, 0, 0, 0], sizes = [2, 10, 1, 128], strides = [1, 1, 1, 1]} : vector<2x10x10x128xf32> to vector<2x10x1x128xf32>
    %195 = vector.extract_strided_slice %192 {offsets = [0, 0, 2, 0], sizes = [2, 10, 1, 128], strides = [1, 1, 1, 1]} : vector<2x10x10x128xf32> to vector<2x10x1x128xf32>
    %196 = vector.extract_strided_slice %192 {offsets = [0, 0, 4, 0], sizes = [2, 10, 1, 128], strides = [1, 1, 1, 1]} : vector<2x10x10x128xf32> to vector<2x10x1x128xf32>
    %197 = vector.extract_strided_slice %192 {offsets = [0, 0, 6, 0], sizes = [2, 10, 1, 128], strides = [1, 1, 1, 1]} : vector<2x10x10x128xf32> to vector<2x10x1x128xf32>
    %198 = tpu.concatenate %194, %195, %196, %197 in 2 : vector<2x10x1x128xf32>, vector<2x10x1x128xf32>, vector<2x10x1x128xf32>, vector<2x10x1x128xf32> -> vector<2x10x4x128xf32>
    %199 = vector.extract_strided_slice %198 {offsets = [0, 0, 0, 0], sizes = [2, 1, 4, 128], strides = [1, 1, 1, 1]} : vector<2x10x4x128xf32> to vector<2x1x4x128xf32>
    %200 = vector.extract_strided_slice %198 {offsets = [0, 2, 0, 0], sizes = [2, 1, 4, 128], strides = [1, 1, 1, 1]} : vector<2x10x4x128xf32> to vector<2x1x4x128xf32>
    %201 = vector.extract_strided_slice %198 {offsets = [0, 4, 0, 0], sizes = [2, 1, 4, 128], strides = [1, 1, 1, 1]} : vector<2x10x4x128xf32> to vector<2x1x4x128xf32>
    %202 = vector.extract_strided_slice %198 {offsets = [0, 6, 0, 0], sizes = [2, 1, 4, 128], strides = [1, 1, 1, 1]} : vector<2x10x4x128xf32> to vector<2x1x4x128xf32>
    %203 = tpu.concatenate %199, %200, %201, %202 in 1 : vector<2x1x4x128xf32>, vector<2x1x4x128xf32>, vector<2x1x4x128xf32>, vector<2x1x4x128xf32> -> vector<2x4x4x128xf32>
    %204 = vector.shape_cast %203 : vector<2x4x4x128xf32> to vector<32x128xf32>
    %c0_62 = arith.constant 0 : index
    %c0_63 = arith.constant 0 : index
    %c0_64 = arith.constant 0 : index
    %c0_65 = arith.constant 0 : index
    %205 = vector.load %arg5[%c0_62, %c0_63, %c0_64, %c0_65] : memref<3x3x128x128xf32, #tpu.memory_space<vmem>>, vector<1x1x128x128xf32>
    %206 = vector.shape_cast %205 : vector<1x1x128x128xf32> to vector<128x128xf32>
    %cst_66 = arith.constant dense<0.000000e+00> : vector<32x128xf32>
    %207 = tpu.matmul %204, %206, %cst_66 {dimension_numbers = #tpu.dot_dimension_numbers<[1], [0], [0], [1], [0, 0, 1, 1], [], []>} : vector<32x128xf32>, vector<128x128xf32>, vector<32x128xf32> -> vector<32x128xf32>
    %208 = arith.addf %193, %207 : vector<32x128xf32>
    %209 = vector.extract_strided_slice %198 {offsets = [0, 1, 0, 0], sizes = [2, 1, 4, 128], strides = [1, 1, 1, 1]} : vector<2x10x4x128xf32> to vector<2x1x4x128xf32>
    %210 = vector.extract_strided_slice %198 {offsets = [0, 3, 0, 0], sizes = [2, 1, 4, 128], strides = [1, 1, 1, 1]} : vector<2x10x4x128xf32> to vector<2x1x4x128xf32>
    %211 = vector.extract_strided_slice %198 {offsets = [0, 5, 0, 0], sizes = [2, 1, 4, 128], strides = [1, 1, 1, 1]} : vector<2x10x4x128xf32> to vector<2x1x4x128xf32>
    %212 = vector.extract_strided_slice %198 {offsets = [0, 7, 0, 0], sizes = [2, 1, 4, 128], strides = [1, 1, 1, 1]} : vector<2x10x4x128xf32> to vector<2x1x4x128xf32>
    %213 = tpu.concatenate %209, %210, %211, %212 in 1 : vector<2x1x4x128xf32>, vector<2x1x4x128xf32>, vector<2x1x4x128xf32>, vector<2x1x4x128xf32> -> vector<2x4x4x128xf32>
    %214 = vector.shape_cast %213 : vector<2x4x4x128xf32> to vector<32x128xf32>
    %c1_67 = arith.constant 1 : index
    %c0_68 = arith.constant 0 : index
    %c0_69 = arith.constant 0 : index
    %c0_70 = arith.constant 0 : index
    %215 = vector.load %arg5[%c1_67, %c0_68, %c0_69, %c0_70] : memref<3x3x128x128xf32, #tpu.memory_space<vmem>>, vector<1x1x128x128xf32>
    %216 = vector.shape_cast %215 : vector<1x1x128x128xf32> to vector<128x128xf32>
    %cst_71 = arith.constant dense<0.000000e+00> : vector<32x128xf32>
    %217 = tpu.matmul %214, %216, %cst_71 {dimension_numbers = #tpu.dot_dimension_numbers<[1], [0], [0], [1], [0, 0, 1, 1], [], []>} : vector<32x128xf32>, vector<128x128xf32>, vector<32x128xf32> -> vector<32x128xf32>
    %218 = arith.addf %208, %217 : vector<32x128xf32>
    %219 = vector.extract_strided_slice %198 {offsets = [0, 2, 0, 0], sizes = [2, 1, 4, 128], strides = [1, 1, 1, 1]} : vector<2x10x4x128xf32> to vector<2x1x4x128xf32>
    %220 = vector.extract_strided_slice %198 {offsets = [0, 4, 0, 0], sizes = [2, 1, 4, 128], strides = [1, 1, 1, 1]} : vector<2x10x4x128xf32> to vector<2x1x4x128xf32>
    %221 = vector.extract_strided_slice %198 {offsets = [0, 6, 0, 0], sizes = [2, 1, 4, 128], strides = [1, 1, 1, 1]} : vector<2x10x4x128xf32> to vector<2x1x4x128xf32>
    %222 = vector.extract_strided_slice %198 {offsets = [0, 8, 0, 0], sizes = [2, 1, 4, 128], strides = [1, 1, 1, 1]} : vector<2x10x4x128xf32> to vector<2x1x4x128xf32>
    %223 = tpu.concatenate %219, %220, %221, %222 in 1 : vector<2x1x4x128xf32>, vector<2x1x4x128xf32>, vector<2x1x4x128xf32>, vector<2x1x4x128xf32> -> vector<2x4x4x128xf32>
    %224 = vector.shape_cast %223 : vector<2x4x4x128xf32> to vector<32x128xf32>
    %c2_72 = arith.constant 2 : index
    %c0_73 = arith.constant 0 : index
    %c0_74 = arith.constant 0 : index
    %c0_75 = arith.constant 0 : index
    %225 = vector.load %arg5[%c2_72, %c0_73, %c0_74, %c0_75] : memref<3x3x128x128xf32, #tpu.memory_space<vmem>>, vector<1x1x128x128xf32>
    %226 = vector.shape_cast %225 : vector<1x1x128x128xf32> to vector<128x128xf32>
    %cst_76 = arith.constant dense<0.000000e+00> : vector<32x128xf32>
    %227 = tpu.matmul %224, %226, %cst_76 {dimension_numbers = #tpu.dot_dimension_numbers<[1], [0], [0], [1], [0, 0, 1, 1], [], []>} : vector<32x128xf32>, vector<128x128xf32>, vector<32x128xf32> -> vector<32x128xf32>
    %228 = arith.addf %218, %227 : vector<32x128xf32>
    %229 = vector.extract_strided_slice %192 {offsets = [0, 0, 1, 0], sizes = [2, 10, 1, 128], strides = [1, 1, 1, 1]} : vector<2x10x10x128xf32> to vector<2x10x1x128xf32>
    %230 = vector.extract_strided_slice %192 {offsets = [0, 0, 3, 0], sizes = [2, 10, 1, 128], strides = [1, 1, 1, 1]} : vector<2x10x10x128xf32> to vector<2x10x1x128xf32>
    %231 = vector.extract_strided_slice %192 {offsets = [0, 0, 5, 0], sizes = [2, 10, 1, 128], strides = [1, 1, 1, 1]} : vector<2x10x10x128xf32> to vector<2x10x1x128xf32>
    %232 = vector.extract_strided_slice %192 {offsets = [0, 0, 7, 0], sizes = [2, 10, 1, 128], strides = [1, 1, 1, 1]} : vector<2x10x10x128xf32> to vector<2x10x1x128xf32>
    %233 = tpu.concatenate %229, %230, %231, %232 in 2 : vector<2x10x1x128xf32>, vector<2x10x1x128xf32>, vector<2x10x1x128xf32>, vector<2x10x1x128xf32> -> vector<2x10x4x128xf32>
    %234 = vector.extract_strided_slice %233 {offsets = [0, 0, 0, 0], sizes = [2, 1, 4, 128], strides = [1, 1, 1, 1]} : vector<2x10x4x128xf32> to vector<2x1x4x128xf32>
    %235 = vector.extract_strided_slice %233 {offsets = [0, 2, 0, 0], sizes = [2, 1, 4, 128], strides = [1, 1, 1, 1]} : vector<2x10x4x128xf32> to vector<2x1x4x128xf32>
    %236 = vector.extract_strided_slice %233 {offsets = [0, 4, 0, 0], sizes = [2, 1, 4, 128], strides = [1, 1, 1, 1]} : vector<2x10x4x128xf32> to vector<2x1x4x128xf32>
    %237 = vector.extract_strided_slice %233 {offsets = [0, 6, 0, 0], sizes = [2, 1, 4, 128], strides = [1, 1, 1, 1]} : vector<2x10x4x128xf32> to vector<2x1x4x128xf32>
    %238 = tpu.concatenate %234, %235, %236, %237 in 1 : vector<2x1x4x128xf32>, vector<2x1x4x128xf32>, vector<2x1x4x128xf32>, vector<2x1x4x128xf32> -> vector<2x4x4x128xf32>
    %239 = vector.shape_cast %238 : vector<2x4x4x128xf32> to vector<32x128xf32>
    %c0_77 = arith.constant 0 : index
    %c1_78 = arith.constant 1 : index
    %c0_79 = arith.constant 0 : index
    %c0_80 = arith.constant 0 : index
    %240 = vector.load %arg5[%c0_77, %c1_78, %c0_79, %c0_80] : memref<3x3x128x128xf32, #tpu.memory_space<vmem>>, vector<1x1x128x128xf32>
    %241 = vector.shape_cast %240 : vector<1x1x128x128xf32> to vector<128x128xf32>
    %cst_81 = arith.constant dense<0.000000e+00> : vector<32x128xf32>
    %242 = tpu.matmul %239, %241, %cst_81 {dimension_numbers = #tpu.dot_dimension_numbers<[1], [0], [0], [1], [0, 0, 1, 1], [], []>} : vector<32x128xf32>, vector<128x128xf32>, vector<32x128xf32> -> vector<32x128xf32>
    %243 = arith.addf %228, %242 : vector<32x128xf32>
    %244 = vector.extract_strided_slice %233 {offsets = [0, 1, 0, 0], sizes = [2, 1, 4, 128], strides = [1, 1, 1, 1]} : vector<2x10x4x128xf32> to vector<2x1x4x128xf32>
    %245 = vector.extract_strided_slice %233 {offsets = [0, 3, 0, 0], sizes = [2, 1, 4, 128], strides = [1, 1, 1, 1]} : vector<2x10x4x128xf32> to vector<2x1x4x128xf32>
    %246 = vector.extract_strided_slice %233 {offsets = [0, 5, 0, 0], sizes = [2, 1, 4, 128], strides = [1, 1, 1, 1]} : vector<2x10x4x128xf32> to vector<2x1x4x128xf32>
    %247 = vector.extract_strided_slice %233 {offsets = [0, 7, 0, 0], sizes = [2, 1, 4, 128], strides = [1, 1, 1, 1]} : vector<2x10x4x128xf32> to vector<2x1x4x128xf32>
    %248 = tpu.concatenate %244, %245, %246, %247 in 1 : vector<2x1x4x128xf32>, vector<2x1x4x128xf32>, vector<2x1x4x128xf32>, vector<2x1x4x128xf32> -> vector<2x4x4x128xf32>
    %249 = vector.shape_cast %248 : vector<2x4x4x128xf32> to vector<32x128xf32>
    %c1_82 = arith.constant 1 : index
    %c1_83 = arith.constant 1 : index
    %c0_84 = arith.constant 0 : index
    %c0_85 = arith.constant 0 : index
    %250 = vector.load %arg5[%c1_82, %c1_83, %c0_84, %c0_85] : memref<3x3x128x128xf32, #tpu.memory_space<vmem>>, vector<1x1x128x128xf32>
    %251 = vector.shape_cast %250 : vector<1x1x128x128xf32> to vector<128x128xf32>
    %cst_86 = arith.constant dense<0.000000e+00> : vector<32x128xf32>
    %252 = tpu.matmul %249, %251, %cst_86 {dimension_numbers = #tpu.dot_dimension_numbers<[1], [0], [0], [1], [0, 0, 1, 1], [], []>} : vector<32x128xf32>, vector<128x128xf32>, vector<32x128xf32> -> vector<32x128xf32>
    %253 = arith.addf %243, %252 : vector<32x128xf32>
    %254 = vector.extract_strided_slice %233 {offsets = [0, 2, 0, 0], sizes = [2, 1, 4, 128], strides = [1, 1, 1, 1]} : vector<2x10x4x128xf32> to vector<2x1x4x128xf32>
    %255 = vector.extract_strided_slice %233 {offsets = [0, 4, 0, 0], sizes = [2, 1, 4, 128], strides = [1, 1, 1, 1]} : vector<2x10x4x128xf32> to vector<2x1x4x128xf32>
    %256 = vector.extract_strided_slice %233 {offsets = [0, 6, 0, 0], sizes = [2, 1, 4, 128], strides = [1, 1, 1, 1]} : vector<2x10x4x128xf32> to vector<2x1x4x128xf32>
    %257 = vector.extract_strided_slice %233 {offsets = [0, 8, 0, 0], sizes = [2, 1, 4, 128], strides = [1, 1, 1, 1]} : vector<2x10x4x128xf32> to vector<2x1x4x128xf32>
    %258 = tpu.concatenate %254, %255, %256, %257 in 1 : vector<2x1x4x128xf32>, vector<2x1x4x128xf32>, vector<2x1x4x128xf32>, vector<2x1x4x128xf32> -> vector<2x4x4x128xf32>
    %259 = vector.shape_cast %258 : vector<2x4x4x128xf32> to vector<32x128xf32>
    %c2_87 = arith.constant 2 : index
    %c1_88 = arith.constant 1 : index
    %c0_89 = arith.constant 0 : index
    %c0_90 = arith.constant 0 : index
    %260 = vector.load %arg5[%c2_87, %c1_88, %c0_89, %c0_90] : memref<3x3x128x128xf32, #tpu.memory_space<vmem>>, vector<1x1x128x128xf32>
    %261 = vector.shape_cast %260 : vector<1x1x128x128xf32> to vector<128x128xf32>
    %cst_91 = arith.constant dense<0.000000e+00> : vector<32x128xf32>
    %262 = tpu.matmul %259, %261, %cst_91 {dimension_numbers = #tpu.dot_dimension_numbers<[1], [0], [0], [1], [0, 0, 1, 1], [], []>} : vector<32x128xf32>, vector<128x128xf32>, vector<32x128xf32> -> vector<32x128xf32>
    %263 = arith.addf %253, %262 : vector<32x128xf32>
    %264 = vector.extract_strided_slice %192 {offsets = [0, 0, 2, 0], sizes = [2, 10, 1, 128], strides = [1, 1, 1, 1]} : vector<2x10x10x128xf32> to vector<2x10x1x128xf32>
    %265 = vector.extract_strided_slice %192 {offsets = [0, 0, 4, 0], sizes = [2, 10, 1, 128], strides = [1, 1, 1, 1]} : vector<2x10x10x128xf32> to vector<2x10x1x128xf32>
    %266 = vector.extract_strided_slice %192 {offsets = [0, 0, 6, 0], sizes = [2, 10, 1, 128], strides = [1, 1, 1, 1]} : vector<2x10x10x128xf32> to vector<2x10x1x128xf32>
    %267 = vector.extract_strided_slice %192 {offsets = [0, 0, 8, 0], sizes = [2, 10, 1, 128], strides = [1, 1, 1, 1]} : vector<2x10x10x128xf32> to vector<2x10x1x128xf32>
    %268 = tpu.concatenate %264, %265, %266, %267 in 2 : vector<2x10x1x128xf32>, vector<2x10x1x128xf32>, vector<2x10x1x128xf32>, vector<2x10x1x128xf32> -> vector<2x10x4x128xf32>
    %269 = vector.extract_strided_slice %268 {offsets = [0, 0, 0, 0], sizes = [2, 1, 4, 128], strides = [1, 1, 1, 1]} : vector<2x10x4x128xf32> to vector<2x1x4x128xf32>
    %270 = vector.extract_strided_slice %268 {offsets = [0, 2, 0, 0], sizes = [2, 1, 4, 128], strides = [1, 1, 1, 1]} : vector<2x10x4x128xf32> to vector<2x1x4x128xf32>
    %271 = vector.extract_strided_slice %268 {offsets = [0, 4, 0, 0], sizes = [2, 1, 4, 128], strides = [1, 1, 1, 1]} : vector<2x10x4x128xf32> to vector<2x1x4x128xf32>
    %272 = vector.extract_strided_slice %268 {offsets = [0, 6, 0, 0], sizes = [2, 1, 4, 128], strides = [1, 1, 1, 1]} : vector<2x10x4x128xf32> to vector<2x1x4x128xf32>
    %273 = tpu.concatenate %269, %270, %271, %272 in 1 : vector<2x1x4x128xf32>, vector<2x1x4x128xf32>, vector<2x1x4x128xf32>, vector<2x1x4x128xf32> -> vector<2x4x4x128xf32>
    %274 = vector.shape_cast %273 : vector<2x4x4x128xf32> to vector<32x128xf32>
    %c0_92 = arith.constant 0 : index
    %c2_93 = arith.constant 2 : index
    %c0_94 = arith.constant 0 : index
    %c0_95 = arith.constant 0 : index
    %275 = vector.load %arg5[%c0_92, %c2_93, %c0_94, %c0_95] : memref<3x3x128x128xf32, #tpu.memory_space<vmem>>, vector<1x1x128x128xf32>
    %276 = vector.shape_cast %275 : vector<1x1x128x128xf32> to vector<128x128xf32>
    %cst_96 = arith.constant dense<0.000000e+00> : vector<32x128xf32>
    %277 = tpu.matmul %274, %276, %cst_96 {dimension_numbers = #tpu.dot_dimension_numbers<[1], [0], [0], [1], [0, 0, 1, 1], [], []>} : vector<32x128xf32>, vector<128x128xf32>, vector<32x128xf32> -> vector<32x128xf32>
    %278 = arith.addf %263, %277 : vector<32x128xf32>
    %279 = vector.extract_strided_slice %268 {offsets = [0, 1, 0, 0], sizes = [2, 1, 4, 128], strides = [1, 1, 1, 1]} : vector<2x10x4x128xf32> to vector<2x1x4x128xf32>
    %280 = vector.extract_strided_slice %268 {offsets = [0, 3, 0, 0], sizes = [2, 1, 4, 128], strides = [1, 1, 1, 1]} : vector<2x10x4x128xf32> to vector<2x1x4x128xf32>
    %281 = vector.extract_strided_slice %268 {offsets = [0, 5, 0, 0], sizes = [2, 1, 4, 128], strides = [1, 1, 1, 1]} : vector<2x10x4x128xf32> to vector<2x1x4x128xf32>
    %282 = vector.extract_strided_slice %268 {offsets = [0, 7, 0, 0], sizes = [2, 1, 4, 128], strides = [1, 1, 1, 1]} : vector<2x10x4x128xf32> to vector<2x1x4x128xf32>
    %283 = tpu.concatenate %279, %280, %281, %282 in 1 : vector<2x1x4x128xf32>, vector<2x1x4x128xf32>, vector<2x1x4x128xf32>, vector<2x1x4x128xf32> -> vector<2x4x4x128xf32>
    %284 = vector.shape_cast %283 : vector<2x4x4x128xf32> to vector<32x128xf32>
    %c1_97 = arith.constant 1 : index
    %c2_98 = arith.constant 2 : index
    %c0_99 = arith.constant 0 : index
    %c0_100 = arith.constant 0 : index
    %285 = vector.load %arg5[%c1_97, %c2_98, %c0_99, %c0_100] : memref<3x3x128x128xf32, #tpu.memory_space<vmem>>, vector<1x1x128x128xf32>
    %286 = vector.shape_cast %285 : vector<1x1x128x128xf32> to vector<128x128xf32>
    %cst_101 = arith.constant dense<0.000000e+00> : vector<32x128xf32>
    %287 = tpu.matmul %284, %286, %cst_101 {dimension_numbers = #tpu.dot_dimension_numbers<[1], [0], [0], [1], [0, 0, 1, 1], [], []>} : vector<32x128xf32>, vector<128x128xf32>, vector<32x128xf32> -> vector<32x128xf32>
    %288 = arith.addf %278, %287 : vector<32x128xf32>
    %289 = vector.extract_strided_slice %268 {offsets = [0, 2, 0, 0], sizes = [2, 1, 4, 128], strides = [1, 1, 1, 1]} : vector<2x10x4x128xf32> to vector<2x1x4x128xf32>
    %290 = vector.extract_strided_slice %268 {offsets = [0, 4, 0, 0], sizes = [2, 1, 4, 128], strides = [1, 1, 1, 1]} : vector<2x10x4x128xf32> to vector<2x1x4x128xf32>
    %291 = vector.extract_strided_slice %268 {offsets = [0, 6, 0, 0], sizes = [2, 1, 4, 128], strides = [1, 1, 1, 1]} : vector<2x10x4x128xf32> to vector<2x1x4x128xf32>
    %292 = vector.extract_strided_slice %268 {offsets = [0, 8, 0, 0], sizes = [2, 1, 4, 128], strides = [1, 1, 1, 1]} : vector<2x10x4x128xf32> to vector<2x1x4x128xf32>
    %293 = tpu.concatenate %289, %290, %291, %292 in 1 : vector<2x1x4x128xf32>, vector<2x1x4x128xf32>, vector<2x1x4x128xf32>, vector<2x1x4x128xf32> -> vector<2x4x4x128xf32>
    %294 = vector.shape_cast %293 : vector<2x4x4x128xf32> to vector<32x128xf32>
    %c2_102 = arith.constant 2 : index
    %c2_103 = arith.constant 2 : index
    %c0_104 = arith.constant 0 : index
    %c0_105 = arith.constant 0 : index
    %295 = vector.load %arg5[%c2_102, %c2_103, %c0_104, %c0_105] : memref<3x3x128x128xf32, #tpu.memory_space<vmem>>, vector<1x1x128x128xf32>
    %296 = vector.shape_cast %295 : vector<1x1x128x128xf32> to vector<128x128xf32>
    %cst_106 = arith.constant dense<0.000000e+00> : vector<32x128xf32>
    %297 = tpu.matmul %294, %296, %cst_106 {dimension_numbers = #tpu.dot_dimension_numbers<[1], [0], [0], [1], [0, 0, 1, 1], [], []>} : vector<32x128xf32>, vector<128x128xf32>, vector<32x128xf32> -> vector<32x128xf32>
    %298 = arith.addf %288, %297 : vector<32x128xf32>
    %cst_107 = arith.constant dense<0.000000e+00> : vector<128xf32>
    %299 = vector.multi_reduction <add>, %298, %cst_107 [0] : vector<32x128xf32> to vector<128xf32>
    %300 = vector.shape_cast %299 : vector<128xf32> to vector<1x128xf32>
    %cst_108 = arith.constant 3.200000e+01 : f32
    %301 = vector.broadcast %cst_108 : f32 to vector<1x128xf32>
    %302 = arith.divf %300, %301 : vector<1x128xf32>
    %303 = vector.broadcast %302 : vector<1x128xf32> to vector<32x128xf32>
    %304 = arith.subf %298, %303 : vector<32x128xf32>
    %305 = arith.mulf %304, %304 : vector<32x128xf32>
    %cst_109 = arith.constant dense<0.000000e+00> : vector<128xf32>
    %306 = vector.multi_reduction <add>, %305, %cst_109 [0] : vector<32x128xf32> to vector<128xf32>
    %307 = vector.shape_cast %306 : vector<128xf32> to vector<1x128xf32>
    %cst_110 = arith.constant 3.200000e+01 : f32
    %308 = vector.broadcast %cst_110 : f32 to vector<1x128xf32>
    %309 = arith.divf %307, %308 : vector<1x128xf32>
    %310 = vector.broadcast %302 : vector<1x128xf32> to vector<32x128xf32>
    %311 = arith.subf %298, %310 : vector<32x128xf32>
    %cst_111 = arith.constant 9.99999974E-6 : f32
    %312 = vector.broadcast %cst_111 : f32 to vector<1x128xf32>
    %313 = arith.addf %309, %312 : vector<1x128xf32>
    %314 = math.rsqrt %313 : vector<1x128xf32>
    %315 = vector.broadcast %314 : vector<1x128xf32> to vector<32x128xf32>
    %316 = arith.mulf %311, %315 : vector<32x128xf32>
    %c0_112 = arith.constant 0 : index
    %c0_113 = arith.constant 0 : index
    %317 = vector.load %arg6[%c0_112, %c0_113] : memref<1x128xf32, #tpu.memory_space<vmem>>, vector<1x128xf32>
    %318 = vector.broadcast %317 : vector<1x128xf32> to vector<32x128xf32>
    %319 = arith.mulf %316, %318 : vector<32x128xf32>
    %c0_114 = arith.constant 0 : index
    %c0_115 = arith.constant 0 : index
    %320 = vector.load %arg7[%c0_114, %c0_115] : memref<1x128xf32, #tpu.memory_space<vmem>>, vector<1x128xf32>
    %321 = vector.broadcast %320 : vector<1x128xf32> to vector<32x128xf32>
    %322 = arith.addf %319, %321 : vector<32x128xf32>
    %cst_116 = arith.constant 0.000000e+00 : f32
    %323 = vector.broadcast %cst_116 : f32 to vector<32x128xf32>
    %324 = arith.cmpf oge, %322, %323 : vector<32x128xf32>
    %cst_117 = arith.constant 0.00999999977 : f32
    %325 = vector.broadcast %cst_117 : f32 to vector<32x128xf32>
    %326 = arith.mulf %325, %322 : vector<32x128xf32>
    %327 = arith.select %324, %322, %326 : vector<32x128xi1>, vector<32x128xf32>
    %328 = vector.shape_cast %327 : vector<32x128xf32> to vector<2x4x4x128xf32>
    %cst_118 = arith.constant 0.000000e+00 : f32
    %329 = vector.broadcast %cst_118 : f32 to vector<2x4x1x128xf32>
    %330 = tpu.concatenate %329, %328, %329 in 2 : vector<2x4x1x128xf32>, vector<2x4x4x128xf32>, vector<2x4x1x128xf32> -> vector<2x4x6x128xf32>
    %cst_119 = arith.constant 0.000000e+00 : f32
    %331 = vector.broadcast %cst_119 : f32 to vector<2x1x6x128xf32>
    %332 = tpu.concatenate %331, %330, %331 in 1 : vector<2x1x6x128xf32>, vector<2x4x6x128xf32>, vector<2x1x6x128xf32> -> vector<2x6x6x128xf32>
    %cst_120 = arith.constant 0.000000e+00 : f32
    %333 = vector.broadcast %cst_120 : f32 to vector<8x128xf32>
    %334 = vector.extract_strided_slice %332 {offsets = [0, 0, 0, 0], sizes = [2, 6, 1, 128], strides = [1, 1, 1, 1]} : vector<2x6x6x128xf32> to vector<2x6x1x128xf32>
    %335 = vector.extract_strided_slice %332 {offsets = [0, 0, 2, 0], sizes = [2, 6, 1, 128], strides = [1, 1, 1, 1]} : vector<2x6x6x128xf32> to vector<2x6x1x128xf32>
    %336 = tpu.concatenate %334, %335 in 2 : vector<2x6x1x128xf32>, vector<2x6x1x128xf32> -> vector<2x6x2x128xf32>
    %337 = vector.extract_strided_slice %336 {offsets = [0, 0, 0, 0], sizes = [2, 1, 2, 128], strides = [1, 1, 1, 1]} : vector<2x6x2x128xf32> to vector<2x1x2x128xf32>
    %338 = vector.extract_strided_slice %336 {offsets = [0, 2, 0, 0], sizes = [2, 1, 2, 128], strides = [1, 1, 1, 1]} : vector<2x6x2x128xf32> to vector<2x1x2x128xf32>
    %339 = tpu.concatenate %337, %338 in 1 : vector<2x1x2x128xf32>, vector<2x1x2x128xf32> -> vector<2x2x2x128xf32>
    %340 = vector.shape_cast %339 : vector<2x2x2x128xf32> to vector<8x128xf32>
    %c0_121 = arith.constant 0 : index
    %c0_122 = arith.constant 0 : index
    %c0_123 = arith.constant 0 : index
    %c0_124 = arith.constant 0 : index
    %341 = vector.load %arg8[%c0_121, %c0_122, %c0_123, %c0_124] : memref<3x3x128x128xf32, #tpu.memory_space<vmem>>, vector<1x1x128x128xf32>
    %342 = vector.shape_cast %341 : vector<1x1x128x128xf32> to vector<128x128xf32>
    %cst_125 = arith.constant dense<0.000000e+00> : vector<8x128xf32>
    %343 = tpu.matmul %340, %342, %cst_125 {dimension_numbers = #tpu.dot_dimension_numbers<[1], [0], [0], [1], [0, 0, 1, 1], [], []>} : vector<8x128xf32>, vector<128x128xf32>, vector<8x128xf32> -> vector<8x128xf32>
    %344 = arith.addf %333, %343 : vector<8x128xf32>
    %345 = vector.extract_strided_slice %336 {offsets = [0, 1, 0, 0], sizes = [2, 1, 2, 128], strides = [1, 1, 1, 1]} : vector<2x6x2x128xf32> to vector<2x1x2x128xf32>
    %346 = vector.extract_strided_slice %336 {offsets = [0, 3, 0, 0], sizes = [2, 1, 2, 128], strides = [1, 1, 1, 1]} : vector<2x6x2x128xf32> to vector<2x1x2x128xf32>
    %347 = tpu.concatenate %345, %346 in 1 : vector<2x1x2x128xf32>, vector<2x1x2x128xf32> -> vector<2x2x2x128xf32>
    %348 = vector.shape_cast %347 : vector<2x2x2x128xf32> to vector<8x128xf32>
    %c1_126 = arith.constant 1 : index
    %c0_127 = arith.constant 0 : index
    %c0_128 = arith.constant 0 : index
    %c0_129 = arith.constant 0 : index
    %349 = vector.load %arg8[%c1_126, %c0_127, %c0_128, %c0_129] : memref<3x3x128x128xf32, #tpu.memory_space<vmem>>, vector<1x1x128x128xf32>
    %350 = vector.shape_cast %349 : vector<1x1x128x128xf32> to vector<128x128xf32>
    %cst_130 = arith.constant dense<0.000000e+00> : vector<8x128xf32>
    %351 = tpu.matmul %348, %350, %cst_130 {dimension_numbers = #tpu.dot_dimension_numbers<[1], [0], [0], [1], [0, 0, 1, 1], [], []>} : vector<8x128xf32>, vector<128x128xf32>, vector<8x128xf32> -> vector<8x128xf32>
    %352 = arith.addf %344, %351 : vector<8x128xf32>
    %353 = vector.extract_strided_slice %336 {offsets = [0, 2, 0, 0], sizes = [2, 1, 2, 128], strides = [1, 1, 1, 1]} : vector<2x6x2x128xf32> to vector<2x1x2x128xf32>
    %354 = vector.extract_strided_slice %336 {offsets = [0, 4, 0, 0], sizes = [2, 1, 2, 128], strides = [1, 1, 1, 1]} : vector<2x6x2x128xf32> to vector<2x1x2x128xf32>
    %355 = tpu.concatenate %353, %354 in 1 : vector<2x1x2x128xf32>, vector<2x1x2x128xf32> -> vector<2x2x2x128xf32>
    %356 = vector.shape_cast %355 : vector<2x2x2x128xf32> to vector<8x128xf32>
    %c2_131 = arith.constant 2 : index
    %c0_132 = arith.constant 0 : index
    %c0_133 = arith.constant 0 : index
    %c0_134 = arith.constant 0 : index
    %357 = vector.load %arg8[%c2_131, %c0_132, %c0_133, %c0_134] : memref<3x3x128x128xf32, #tpu.memory_space<vmem>>, vector<1x1x128x128xf32>
    %358 = vector.shape_cast %357 : vector<1x1x128x128xf32> to vector<128x128xf32>
    %cst_135 = arith.constant dense<0.000000e+00> : vector<8x128xf32>
    %359 = tpu.matmul %356, %358, %cst_135 {dimension_numbers = #tpu.dot_dimension_numbers<[1], [0], [0], [1], [0, 0, 1, 1], [], []>} : vector<8x128xf32>, vector<128x128xf32>, vector<8x128xf32> -> vector<8x128xf32>
    %360 = arith.addf %352, %359 : vector<8x128xf32>
    %361 = vector.extract_strided_slice %332 {offsets = [0, 0, 1, 0], sizes = [2, 6, 1, 128], strides = [1, 1, 1, 1]} : vector<2x6x6x128xf32> to vector<2x6x1x128xf32>
    %362 = vector.extract_strided_slice %332 {offsets = [0, 0, 3, 0], sizes = [2, 6, 1, 128], strides = [1, 1, 1, 1]} : vector<2x6x6x128xf32> to vector<2x6x1x128xf32>
    %363 = tpu.concatenate %361, %362 in 2 : vector<2x6x1x128xf32>, vector<2x6x1x128xf32> -> vector<2x6x2x128xf32>
    %364 = vector.extract_strided_slice %363 {offsets = [0, 0, 0, 0], sizes = [2, 1, 2, 128], strides = [1, 1, 1, 1]} : vector<2x6x2x128xf32> to vector<2x1x2x128xf32>
    %365 = vector.extract_strided_slice %363 {offsets = [0, 2, 0, 0], sizes = [2, 1, 2, 128], strides = [1, 1, 1, 1]} : vector<2x6x2x128xf32> to vector<2x1x2x128xf32>
    %366 = tpu.concatenate %364, %365 in 1 : vector<2x1x2x128xf32>, vector<2x1x2x128xf32> -> vector<2x2x2x128xf32>
    %367 = vector.shape_cast %366 : vector<2x2x2x128xf32> to vector<8x128xf32>
    %c0_136 = arith.constant 0 : index
    %c1_137 = arith.constant 1 : index
    %c0_138 = arith.constant 0 : index
    %c0_139 = arith.constant 0 : index
    %368 = vector.load %arg8[%c0_136, %c1_137, %c0_138, %c0_139] : memref<3x3x128x128xf32, #tpu.memory_space<vmem>>, vector<1x1x128x128xf32>
    %369 = vector.shape_cast %368 : vector<1x1x128x128xf32> to vector<128x128xf32>
    %cst_140 = arith.constant dense<0.000000e+00> : vector<8x128xf32>
    %370 = tpu.matmul %367, %369, %cst_140 {dimension_numbers = #tpu.dot_dimension_numbers<[1], [0], [0], [1], [0, 0, 1, 1], [], []>} : vector<8x128xf32>, vector<128x128xf32>, vector<8x128xf32> -> vector<8x128xf32>
    %371 = arith.addf %360, %370 : vector<8x128xf32>
    %372 = vector.extract_strided_slice %363 {offsets = [0, 1, 0, 0], sizes = [2, 1, 2, 128], strides = [1, 1, 1, 1]} : vector<2x6x2x128xf32> to vector<2x1x2x128xf32>
    %373 = vector.extract_strided_slice %363 {offsets = [0, 3, 0, 0], sizes = [2, 1, 2, 128], strides = [1, 1, 1, 1]} : vector<2x6x2x128xf32> to vector<2x1x2x128xf32>
    %374 = tpu.concatenate %372, %373 in 1 : vector<2x1x2x128xf32>, vector<2x1x2x128xf32> -> vector<2x2x2x128xf32>
    %375 = vector.shape_cast %374 : vector<2x2x2x128xf32> to vector<8x128xf32>
    %c1_141 = arith.constant 1 : index
    %c1_142 = arith.constant 1 : index
    %c0_143 = arith.constant 0 : index
    %c0_144 = arith.constant 0 : index
    %376 = vector.load %arg8[%c1_141, %c1_142, %c0_143, %c0_144] : memref<3x3x128x128xf32, #tpu.memory_space<vmem>>, vector<1x1x128x128xf32>
    %377 = vector.shape_cast %376 : vector<1x1x128x128xf32> to vector<128x128xf32>
    %cst_145 = arith.constant dense<0.000000e+00> : vector<8x128xf32>
    %378 = tpu.matmul %375, %377, %cst_145 {dimension_numbers = #tpu.dot_dimension_numbers<[1], [0], [0], [1], [0, 0, 1, 1], [], []>} : vector<8x128xf32>, vector<128x128xf32>, vector<8x128xf32> -> vector<8x128xf32>
    %379 = arith.addf %371, %378 : vector<8x128xf32>
    %380 = vector.extract_strided_slice %363 {offsets = [0, 2, 0, 0], sizes = [2, 1, 2, 128], strides = [1, 1, 1, 1]} : vector<2x6x2x128xf32> to vector<2x1x2x128xf32>
    %381 = vector.extract_strided_slice %363 {offsets = [0, 4, 0, 0], sizes = [2, 1, 2, 128], strides = [1, 1, 1, 1]} : vector<2x6x2x128xf32> to vector<2x1x2x128xf32>
    %382 = tpu.concatenate %380, %381 in 1 : vector<2x1x2x128xf32>, vector<2x1x2x128xf32> -> vector<2x2x2x128xf32>
    %383 = vector.shape_cast %382 : vector<2x2x2x128xf32> to vector<8x128xf32>
    %c2_146 = arith.constant 2 : index
    %c1_147 = arith.constant 1 : index
    %c0_148 = arith.constant 0 : index
    %c0_149 = arith.constant 0 : index
    %384 = vector.load %arg8[%c2_146, %c1_147, %c0_148, %c0_149] : memref<3x3x128x128xf32, #tpu.memory_space<vmem>>, vector<1x1x128x128xf32>
    %385 = vector.shape_cast %384 : vector<1x1x128x128xf32> to vector<128x128xf32>
    %cst_150 = arith.constant dense<0.000000e+00> : vector<8x128xf32>
    %386 = tpu.matmul %383, %385, %cst_150 {dimension_numbers = #tpu.dot_dimension_numbers<[1], [0], [0], [1], [0, 0, 1, 1], [], []>} : vector<8x128xf32>, vector<128x128xf32>, vector<8x128xf32> -> vector<8x128xf32>
    %387 = arith.addf %379, %386 : vector<8x128xf32>
    %388 = vector.extract_strided_slice %332 {offsets = [0, 0, 2, 0], sizes = [2, 6, 1, 128], strides = [1, 1, 1, 1]} : vector<2x6x6x128xf32> to vector<2x6x1x128xf32>
    %389 = vector.extract_strided_slice %332 {offsets = [0, 0, 4, 0], sizes = [2, 6, 1, 128], strides = [1, 1, 1, 1]} : vector<2x6x6x128xf32> to vector<2x6x1x128xf32>
    %390 = tpu.concatenate %388, %389 in 2 : vector<2x6x1x128xf32>, vector<2x6x1x128xf32> -> vector<2x6x2x128xf32>
    %391 = vector.extract_strided_slice %390 {offsets = [0, 0, 0, 0], sizes = [2, 1, 2, 128], strides = [1, 1, 1, 1]} : vector<2x6x2x128xf32> to vector<2x1x2x128xf32>
    %392 = vector.extract_strided_slice %390 {offsets = [0, 2, 0, 0], sizes = [2, 1, 2, 128], strides = [1, 1, 1, 1]} : vector<2x6x2x128xf32> to vector<2x1x2x128xf32>
    %393 = tpu.concatenate %391, %392 in 1 : vector<2x1x2x128xf32>, vector<2x1x2x128xf32> -> vector<2x2x2x128xf32>
    %394 = vector.shape_cast %393 : vector<2x2x2x128xf32> to vector<8x128xf32>
    %c0_151 = arith.constant 0 : index
    %c2_152 = arith.constant 2 : index
    %c0_153 = arith.constant 0 : index
    %c0_154 = arith.constant 0 : index
    %395 = vector.load %arg8[%c0_151, %c2_152, %c0_153, %c0_154] : memref<3x3x128x128xf32, #tpu.memory_space<vmem>>, vector<1x1x128x128xf32>
    %396 = vector.shape_cast %395 : vector<1x1x128x128xf32> to vector<128x128xf32>
    %cst_155 = arith.constant dense<0.000000e+00> : vector<8x128xf32>
    %397 = tpu.matmul %394, %396, %cst_155 {dimension_numbers = #tpu.dot_dimension_numbers<[1], [0], [0], [1], [0, 0, 1, 1], [], []>} : vector<8x128xf32>, vector<128x128xf32>, vector<8x128xf32> -> vector<8x128xf32>
    %398 = arith.addf %387, %397 : vector<8x128xf32>
    %399 = vector.extract_strided_slice %390 {offsets = [0, 1, 0, 0], sizes = [2, 1, 2, 128], strides = [1, 1, 1, 1]} : vector<2x6x2x128xf32> to vector<2x1x2x128xf32>
    %400 = vector.extract_strided_slice %390 {offsets = [0, 3, 0, 0], sizes = [2, 1, 2, 128], strides = [1, 1, 1, 1]} : vector<2x6x2x128xf32> to vector<2x1x2x128xf32>
    %401 = tpu.concatenate %399, %400 in 1 : vector<2x1x2x128xf32>, vector<2x1x2x128xf32> -> vector<2x2x2x128xf32>
    %402 = vector.shape_cast %401 : vector<2x2x2x128xf32> to vector<8x128xf32>
    %c1_156 = arith.constant 1 : index
    %c2_157 = arith.constant 2 : index
    %c0_158 = arith.constant 0 : index
    %c0_159 = arith.constant 0 : index
    %403 = vector.load %arg8[%c1_156, %c2_157, %c0_158, %c0_159] : memref<3x3x128x128xf32, #tpu.memory_space<vmem>>, vector<1x1x128x128xf32>
    %404 = vector.shape_cast %403 : vector<1x1x128x128xf32> to vector<128x128xf32>
    %cst_160 = arith.constant dense<0.000000e+00> : vector<8x128xf32>
    %405 = tpu.matmul %402, %404, %cst_160 {dimension_numbers = #tpu.dot_dimension_numbers<[1], [0], [0], [1], [0, 0, 1, 1], [], []>} : vector<8x128xf32>, vector<128x128xf32>, vector<8x128xf32> -> vector<8x128xf32>
    %406 = arith.addf %398, %405 : vector<8x128xf32>
    %407 = vector.extract_strided_slice %390 {offsets = [0, 2, 0, 0], sizes = [2, 1, 2, 128], strides = [1, 1, 1, 1]} : vector<2x6x2x128xf32> to vector<2x1x2x128xf32>
    %408 = vector.extract_strided_slice %390 {offsets = [0, 4, 0, 0], sizes = [2, 1, 2, 128], strides = [1, 1, 1, 1]} : vector<2x6x2x128xf32> to vector<2x1x2x128xf32>
    %409 = tpu.concatenate %407, %408 in 1 : vector<2x1x2x128xf32>, vector<2x1x2x128xf32> -> vector<2x2x2x128xf32>
    %410 = vector.shape_cast %409 : vector<2x2x2x128xf32> to vector<8x128xf32>
    %c2_161 = arith.constant 2 : index
    %c2_162 = arith.constant 2 : index
    %c0_163 = arith.constant 0 : index
    %c0_164 = arith.constant 0 : index
    %411 = vector.load %arg8[%c2_161, %c2_162, %c0_163, %c0_164] : memref<3x3x128x128xf32, #tpu.memory_space<vmem>>, vector<1x1x128x128xf32>
    %412 = vector.shape_cast %411 : vector<1x1x128x128xf32> to vector<128x128xf32>
    %cst_165 = arith.constant dense<0.000000e+00> : vector<8x128xf32>
    %413 = tpu.matmul %410, %412, %cst_165 {dimension_numbers = #tpu.dot_dimension_numbers<[1], [0], [0], [1], [0, 0, 1, 1], [], []>} : vector<8x128xf32>, vector<128x128xf32>, vector<8x128xf32> -> vector<8x128xf32>
    %414 = arith.addf %406, %413 : vector<8x128xf32>
    %c0_166 = arith.constant 0 : index
    %c0_167 = arith.constant 0 : index
    %415 = vector.load %arg9[%c0_166, %c0_167] : memref<1x128xf32, #tpu.memory_space<vmem>>, vector<1x128xf32>
    %416 = vector.broadcast %415 : vector<1x128xf32> to vector<8x128xf32>
    %417 = arith.addf %414, %416 : vector<8x128xf32>
    %c0_168 = arith.constant 0 : index
    %c0_169 = arith.constant 0 : index
    %418 = vector.load %arg10[%c0_168, %c0_169] : memref<8x128xf32, #tpu.memory_space<vmem>>, vector<8x128xf32>
    tpu.vector_store %arg10[%c0_168, %c0_169], %417 {strides = array<i32>} : memref<8x128xf32, #tpu.memory_space<vmem>>, vector<8x128xf32>,
    return
  }
  func.func @transform_0(%arg0: i32) -> (i32, i32, i32, i32) {
    %c0_i32 = arith.constant 0 : i32
    %c0_i32_0 = arith.constant 0 : i32
    %c0_i32_1 = arith.constant 0 : i32
    %c0_i32_2 = arith.constant 0 : i32
    %c0_i32_3 = arith.constant 0 : i32
    return %c0_i32, %c0_i32_0, %c0_i32_1, %c0_i32_2 : i32, i32, i32, i32
  }
  func.func @transform_1(%arg0: i32) -> (i32, i32, i32, i32) {
    %c0_i32 = arith.constant 0 : i32
    %c0_i32_0 = arith.constant 0 : i32
    %c0_i32_1 = arith.constant 0 : i32
    %c0_i32_2 = arith.constant 0 : i32
    %c0_i32_3 = arith.constant 0 : i32
    return %c0_i32, %c0_i32_0, %c0_i32_1, %c0_i32_2 : i32, i32, i32, i32
  }
  func.func @transform_2(%arg0: i32) -> (i32, i32) {
    %c0_i32 = arith.constant 0 : i32
    %c0_i32_0 = arith.constant 0 : i32
    %c0_i32_1 = arith.constant 0 : i32
    return %c0_i32, %c0_i32_0 : i32, i32
  }
  func.func @transform_3(%arg0: i32) -> (i32, i32) {
    %c0_i32 = arith.constant 0 : i32
    %c0_i32_0 = arith.constant 0 : i32
    %c0_i32_1 = arith.constant 0 : i32
    return %c0_i32, %c0_i32_0 : i32, i32
  }
  func.func @transform_4(%arg0: i32) -> (i32, i32, i32, i32) {
    %c0_i32 = arith.constant 0 : i32
    %c0_i32_0 = arith.constant 0 : i32
    %c0_i32_1 = arith.constant 0 : i32
    %c0_i32_2 = arith.constant 0 : i32
    %c0_i32_3 = arith.constant 0 : i32
    return %c0_i32, %c0_i32_0, %c0_i32_1, %c0_i32_2 : i32, i32, i32, i32
  }
  func.func @transform_5(%arg0: i32) -> (i32, i32) {
    %c0_i32 = arith.constant 0 : i32
    %c0_i32_0 = arith.constant 0 : i32
    %c0_i32_1 = arith.constant 0 : i32
    return %c0_i32, %c0_i32_0 : i32, i32
  }
  func.func @transform_6(%arg0: i32) -> (i32, i32) {
    %c0_i32 = arith.constant 0 : i32
    %c0_i32_0 = arith.constant 0 : i32
    %c0_i32_1 = arith.constant 0 : i32
    return %c0_i32, %c0_i32_0 : i32, i32
  }
  func.func @transform_7(%arg0: i32) -> (i32, i32, i32, i32) {
    %c0_i32 = arith.constant 0 : i32
    %c0_i32_0 = arith.constant 0 : i32
    %c0_i32_1 = arith.constant 0 : i32
    %c0_i32_2 = arith.constant 0 : i32
    %c0_i32_3 = arith.constant 0 : i32
    return %c0_i32, %c0_i32_0, %c0_i32_1, %c0_i32_2 : i32, i32, i32, i32
  }
  func.func @transform_8(%arg0: i32) -> (i32, i32) {
    %c0_i32 = arith.constant 0 : i32
    %c0_i32_0 = arith.constant 0 : i32
    %c0_i32_1 = arith.constant 0 : i32
    return %c0_i32, %c0_i32_0 : i32, i32
  }
  func.func @transform_9(%arg0: i32) -> (i32, i32) {
    %c0_i32 = arith.constant 0 : i32
    %c0_i32_0 = arith.constant 0 : i32
    %c0_i32_1 = arith.constant 0 : i32
    return %c0_i32, %c0_i32_0 : i32, i32
  }
}

</mosaic_0001>

<llo_original>
// kernel: tpu_custom_call.1
$region0: #{tpu_custom_call.1}
  #allocation0 [shape = 'u32[]', space=smem, size = 0x4, offset = 0x4, fixed_abs, tag = 'smem constant byte address 0x4 - core index']
  #allocation1 [shape = 'u32[144,128]{1,0:T(1,128)}', space=vmem, size = 0x12000, scoped, tag = 'internal scratch']
  %s0 = inlined_call_operand.hbm [shape: f32[2,16,16,128], index: 0, kind: input, shape index: {}]
  %s1 = inlined_call_operand.hbm [shape: f32[3,3,128,128], index: 1, kind: input, shape index: {}]
  %s2 = inlined_call_operand.hbm [shape: f32[1,128], index: 2, kind: input, shape index: {}]
  %s3 = inlined_call_operand.hbm [shape: f32[1,128], index: 3, kind: input, shape index: {}]
  %s4 = inlined_call_operand.hbm [shape: f32[3,3,128,128], index: 4, kind: input, shape index: {}]
  %s5 = inlined_call_operand.hbm [shape: f32[1,128], index: 5, kind: input, shape index: {}]
  %s6 = inlined_call_operand.hbm [shape: f32[1,128], index: 6, kind: input, shape index: {}]
  %s7 = inlined_call_operand.hbm [shape: f32[3,3,128,128], index: 7, kind: input, shape index: {}]
  %s8 = inlined_call_operand.hbm [shape: f32[1,128], index: 8, kind: input, shape index: {}]
  %s9 = inlined_call_operand.hbm [shape: f32[8,128], index: 9, kind: output, shape index: {}]
  %s10 = sld [smem:[#allocation0]]
  $region82: #{tpu_custom_call.1} parent=0
    _
  %s12 = ssub.s32 1, %s10
  %s13 = scalar_select 0, %s12, %s10
  $region1: #{tpu_custom_call.1} parent=0
    #allocation2 [shape = 'u8[262144]{0}', space=vmem, size = 0x40000, scoped, tag = 'input window, operand 0, single buffered']
    #allocation3 [shape = 's32[1]{0}', space=sflag, size = 0x4, scoped, tag = 'scoped memory for tpu_custom_call.1']
    #allocation4 [shape = 's32[1]{0}', space=sflag, size = 0x4, scoped, tag = 'scoped memory for tpu_custom_call.1']
    #allocation5 [shape = 'u8[589824]{0}', space=vmem, size = 0x90000, scoped, tag = 'input window, operand 1, single buffered']
    #allocation6 [shape = 's32[1]{0}', space=sflag, size = 0x4, scoped, tag = 'scoped memory for tpu_custom_call.1']
    #allocation7 [shape = 'u8[512]{0}', space=vmem, size = 0x400, scoped, tag = 'input window, operand 2, single buffered']
    #allocation8 [shape = 'u8[512]{0}', space=vmem, size = 0x400, scoped, tag = 'input window, operand 3, single buffered']
    #allocation9 [shape = 's32[1]{0}', space=sflag, size = 0x4, scoped, tag = 'scoped memory for tpu_custom_call.1']
    #allocation10 [shape = 'u8[589824]{0}', space=vmem, size = 0x90000, scoped, tag = 'input window, operand 4, single buffered']
    #allocation11 [shape = 'u8[512]{0}', space=vmem, size = 0x400, scoped, tag = 'input window, operand 5, single buffered']
    #allocation12 [shape = 's32[1]{0}', space=sflag, size = 0x4, scoped, tag = 'scoped memory for tpu_custom_call.1']
    #allocation13 [shape = 'u8[512]{0}', space=vmem, size = 0x400, scoped, tag = 'input window, operand 6, single buffered']
    #allocation14 [shape = 'u8[589824]{0}', space=vmem, size = 0x90000, scoped, tag = 'input window, operand 7, single buffered']
    #allocation15 [shape = 's32[1]{0}', space=sflag, size = 0x4, scoped, tag = 'scoped memory for tpu_custom_call.1']
    #allocation16 [shape = 'u8[512]{0}', space=vmem, size = 0x400, scoped, tag = 'input window, operand 8, single buffered']
    #allocation17 [shape = 'u8[4096]{0}', space=vmem, size = 0x1000, scoped, tag = 'output window, operand 0, single buffered']
    %14 = vsyncpa [#allocation3], 0
    %15 = vsyncpa [#allocation6], 0
    %16 = vsyncpa [#allocation9], 0
    %17 = vsyncpa [#allocation12], 0
    %18 = vsyncpa [#allocation15], 0
    %19 = vsyncpa [#allocation4], 0
    // Predicated region
    $region2: #{tpu_custom_call.1} parent=1 // pred_check
      _
    $region3: #{tpu_custom_call.1} parent=1 // pred_check_branch
      %21 = sbr.rel (0) target = $region5
    $region4: #{tpu_custom_call.1} parent=1 // pred_region
      %s23 = ssub.s32 8192, 8192
      %24 = vsyncadd [#allocation3], %s23
      %s25 = sshll.u32 [#allocation2], 4
      %s26 = int_to_ptr.vmem [resolvable:$true] %s25
      %31 = dma.hbm_to_vmem [thread:$0]  %s0, 8192, %s26, [#allocation3], 128, 128, 8
    $region5: #{tpu_custom_call.1} parent=1 // pred_fallthru
      _
    // Predicated region
    $region6: #{tpu_custom_call.1} parent=1 // pred_check
      _
    $region7: #{tpu_custom_call.1} parent=1 // pred_check_branch
      %33 = sbr.rel (0) target = $region9
    $region8: #{tpu_custom_call.1} parent=1 // pred_region
      %s35 = ssub.s32 18432, 18432
      %36 = vsyncadd [#allocation6], %s35
      %s37 = sshll.u32 [#allocation5], 4
      %s38 = int_to_ptr.vmem [resolvable:$true] %s37
      %43 = dma.hbm_to_vmem [thread:$0]  %s1, 18432, %s38, [#allocation6], 128, 128, 8
    $region9: #{tpu_custom_call.1} parent=1 // pred_fallthru
      _
    // Predicated region
    $region10: #{tpu_custom_call.1} parent=1 // pred_check
      _
    $region11: #{tpu_custom_call.1} parent=1 // pred_check_branch
      %45 = sbr.rel (0) target = $region13
    $region12: #{tpu_custom_call.1} parent=1 // pred_region
      %s47 = ssub.s32 16, 16
      %48 = vsyncadd [#allocation6], %s47
      %s50 = sshll.u32 [#allocation7], 4
      %s51 = int_to_ptr.vmem [resolvable:$true] %s50
      %53 = dma.hbm_to_vmem [thread:$0]  %s2, 16, %s51, [#allocation6]
    $region13: #{tpu_custom_call.1} parent=1 // pred_fallthru
      _
    // Predicated region
    $region14: #{tpu_custom_call.1} parent=1 // pred_check
      _
    $region15: #{tpu_custom_call.1} parent=1 // pred_check_branch
      %55 = sbr.rel (0) target = $region17
    $region16: #{tpu_custom_call.1} parent=1 // pred_region
      %s57 = ssub.s32 16, 16
      %58 = vsyncadd [#allocation9], %s57
      %s60 = sshll.u32 [#allocation8], 4
      %s61 = int_to_ptr.vmem [resolvable:$true] %s60
      %63 = dma.hbm_to_vmem [thread:$0]  %s3, 16, %s61, [#allocation9]
    $region17: #{tpu_custom_call.1} parent=1 // pred_fallthru
      _
    // Predicated region
    $region18: #{tpu_custom_call.1} parent=1 // pred_check
      _
    $region19: #{tpu_custom_call.1} parent=1 // pred_check_branch
      %65 = sbr.rel (0) target = $region21
    $region20: #{tpu_custom_call.1} parent=1 // pred_region
      %s67 = ssub.s32 18432, 18432
      %68 = vsyncadd [#allocation9], %s67
      %s69 = sshll.u32 [#allocation10], 4
      %s70 = int_to_ptr.vmem [resolvable:$true] %s69
      %75 = dma.hbm_to_vmem [thread:$0]  %s4, 18432, %s70, [#allocation9], 128, 128, 8
    $region21: #{tpu_custom_call.1} parent=1 // pred_fallthru
      _
    // Predicated region
    $region22: #{tpu_custom_call.1} parent=1 // pred_check
      _
    $region23: #{tpu_custom_call.1} parent=1 // pred_check_branch
      %77 = sbr.rel (0) target = $region25
    $region24: #{tpu_custom_call.1} parent=1 // pred_region
      %s79 = ssub.s32 16, 16
      %80 = vsyncadd [#allocation12], %s79
      %s82 = sshll.u32 [#allocation11], 4
      %s83 = int_to_ptr.vmem [resolvable:$true] %s82
      %85 = dma.hbm_to_vmem [thread:$0]  %s5, 16, %s83, [#allocation12]
    $region25: #{tpu_custom_call.1} parent=1 // pred_fallthru
      _
    // Predicated region
    $region26: #{tpu_custom_call.1} parent=1 // pred_check
      _
    $region27: #{tpu_custom_call.1} parent=1 // pred_check_branch
      %87 = sbr.rel (0) target = $region29
    $region28: #{tpu_custom_call.1} parent=1 // pred_region
      %s89 = ssub.s32 16, 16
      %90 = vsyncadd [#allocation12], %s89
      %s92 = sshll.u32 [#allocation13], 4
      %s93 = int_to_ptr.vmem [resolvable:$true] %s92
      %95 = dma.hbm_to_vmem [thread:$0]  %s6, 16, %s93, [#allocation12]
    $region29: #{tpu_custom_call.1} parent=1 // pred_fallthru
      _
    // Predicated region
    $region30: #{tpu_custom_call.1} parent=1 // pred_check
      _
    $region31: #{tpu_custom_call.1} parent=1 // pred_check_branch
      %97 = sbr.rel (0) target = $region33
    $region32: #{tpu_custom_call.1} parent=1 // pred_region
      %s99 = ssub.s32 18432, 18432
      %100 = vsyncadd [#allocation15], %s99
      %s101 = sshll.u32 [#allocation14], 4
      %s102 = int_to_ptr.vmem [resolvable:$true] %s101
      %107 = dma.hbm_to_vmem [thread:$0]  %s7, 18432, %s102, [#allocation15], 128, 128, 8
    $region33: #{tpu_custom_call.1} parent=1 // pred_fallthru
      _
    // Predicated region
    $region34: #{tpu_custom_call.1} parent=1 // pred_check
      _
    $region35: #{tpu_custom_call.1} parent=1 // pred_check_branch
      %109 = sbr.rel (0) target = $region37
    $region36: #{tpu_custom_call.1} parent=1 // pred_region
      %s111 = ssub.s32 16, 16
      %112 = vsyncadd [#allocation15], %s111
      %s114 = sshll.u32 [#allocation16], 4
      %s115 = int_to_ptr.vmem [resolvable:$true] %s114
      %117 = dma.hbm_to_vmem [thread:$0]  %s8, 16, %s115, [#allocation15]
    $region37: #{tpu_custom_call.1} parent=1 // pred_fallthru
      _
    // Predicated region
    $region38: #{tpu_custom_call.1} parent=1 // pred_check
      _
    $region39: #{tpu_custom_call.1} parent=1 // pred_check_branch
      %119 = sbr.rel (0) target = $region41
    $region40: #{tpu_custom_call.1} parent=1 // pred_region
      %120 = dma.done [#allocation3], 8192
    $region41: #{tpu_custom_call.1} parent=1 // pred_fallthru
      _
    // Predicated region
    $region42: #{tpu_custom_call.1} parent=1 // pred_check
      _
    $region43: #{tpu_custom_call.1} parent=1 // pred_check_branch
      %122 = sbr.rel (0) target = $region45
    $region44: #{tpu_custom_call.1} parent=1 // pred_region
      %123 = dma.done [#allocation6], 18432
    $region45: #{tpu_custom_call.1} parent=1 // pred_fallthru
      _
    // Predicated region
    $region46: #{tpu_custom_call.1} parent=1 // pred_check
      _
    $region47: #{tpu_custom_call.1} parent=1 // pred_check_branch
      %125 = sbr.rel (0) target = $region49
    $region48: #{tpu_custom_call.1} parent=1 // pred_region
      %126 = dma.done [#allocation6], 16
    $region49: #{tpu_custom_call.1} parent=1 // pred_fallthru
      _
    // Predicated region
    $region50: #{tpu_custom_call.1} parent=1 // pred_check
      _
    $region51: #{tpu_custom_call.1} parent=1 // pred_check_branch
      %128 = sbr.rel (0) target = $region53
    $region52: #{tpu_custom_call.1} parent=1 // pred_region
      %129 = dma.done [#allocation9], 16
    $region53: #{tpu_custom_call.1} parent=1 // pred_fallthru
      _
    // Predicated region
    $region54: #{tpu_custom_call.1} parent=1 // pred_check
      _
    $region55: #{tpu_custom_call.1} parent=1 // pred_check_branch
      %131 = sbr.rel (0) target = $region57
    $region56: #{tpu_custom_call.1} parent=1 // pred_region
      %132 = dma.done [#allocation9], 18432
    $region57: #{tpu_custom_call.1} parent=1 // pred_fallthru
      _
    // Predicated region
    $region58: #{tpu_custom_call.1} parent=1 // pred_check
      _
    $region59: #{tpu_custom_call.1} parent=1 // pred_check_branch
      %134 = sbr.rel (0) target = $region61
    $region60: #{tpu_custom_call.1} parent=1 // pred_region
      %135 = dma.done [#allocation12], 16
    $region61: #{tpu_custom_call.1} parent=1 // pred_fallthru
      _
    // Predicated region
    $region62: #{tpu_custom_call.1} parent=1 // pred_check
      _
    $region63: #{tpu_custom_call.1} parent=1 // pred_check_branch
      %137 = sbr.rel (0) target = $region65
    $region64: #{tpu_custom_call.1} parent=1 // pred_region
      %138 = dma.done [#allocation12], 16
    $region65: #{tpu_custom_call.1} parent=1 // pred_fallthru
      _
    // Predicated region
    $region66: #{tpu_custom_call.1} parent=1 // pred_check
      _
    $region67: #{tpu_custom_call.1} parent=1 // pred_check_branch
      %140 = sbr.rel (0) target = $region69
    $region68: #{tpu_custom_call.1} parent=1 // pred_region
      %141 = dma.done [#allocation15], 18432
    $region69: #{tpu_custom_call.1} parent=1 // pred_fallthru
      _
    // Predicated region
    $region70: #{tpu_custom_call.1} parent=1 // pred_check
      _
    $region71: #{tpu_custom_call.1} parent=1 // pred_check_branch
      %143 = sbr.rel (0) target = $region73
    $region72: #{tpu_custom_call.1} parent=1 // pred_region
      %144 = dma.done [#allocation15], 16
    $region73: #{tpu_custom_call.1} parent=1 // pred_fallthru
      _
    %v145 = vld [vmem:[#allocation2] sm:$0xff]
    %v146 = vld [vmem:[#allocation2 + $0x8] sm:$0xff]
    %v147 = vld [vmem:[#allocation2 + $0x10] sm:$0xff]
    %v148 = vld [vmem:[#allocation2 + $0x18] sm:$0xff]
    %v149 = vld [vmem:[#allocation2 + $0x20] sm:$0xff]
    %v150 = vld [vmem:[#allocation2 + $0x28] sm:$0xff]
    %v151 = vld [vmem:[#allocation2 + $0x30] sm:$0xff]
    %v152 = vld [vmem:[#allocation2 + $0x38] sm:$0xff]
    %v153 = vld [vmem:[#allocation2 + $0x40] sm:$0xff]
    %v154 = vld [vmem:[#allocation2 + $0x48] sm:$0xff]
    %v155 = vld [vmem:[#allocation2 + $0x50] sm:$0xff]
    %v156 = vld [vmem:[#allocation2 + $0x58] sm:$0xff]
    %v157 = vld [vmem:[#allocation2 + $0x60] sm:$0xff]
    %v158 = vld [vmem:[#allocation2 + $0x68] sm:$0xff]
    %v159 = vld [vmem:[#allocation2 + $0x70] sm:$0xff]
    %v160 = vld [vmem:[#allocation2 + $0x78] sm:$0xff]
    %v161 = vld [vmem:[#allocation2 + $0x80] sm:$0xff]
    %v162 = vld [vmem:[#allocation2 + $0x88] sm:$0xff]
    %v163 = vld [vmem:[#allocation2 + $0x90] sm:$0xff]
    %v164 = vld [vmem:[#allocation2 + $0x98] sm:$0xff]
    %v165 = vld [vmem:[#allocation2 + $0xa0] sm:$0xff]
    %v166 = vld [vmem:[#allocation2 + $0xa8] sm:$0xff]
    %v167 = vld [vmem:[#allocation2 + $0xb0] sm:$0xff]
    %v168 = vld [vmem:[#allocation2 + $0xb8] sm:$0xff]
    %v169 = vld [vmem:[#allocation2 + $0xc0] sm:$0xff]
    %v170 = vld [vmem:[#allocation2 + $0xc8] sm:$0xff]
    %v171 = vld [vmem:[#allocation2 + $0xd0] sm:$0xff]
    %v172 = vld [vmem:[#allocation2 + $0xd8] sm:$0xff]
    %v173 = vld [vmem:[#allocation2 + $0xe0] sm:$0xff]
    %v174 = vld [vmem:[#allocation2 + $0xe8] sm:$0xff]
    %v175 = vld [vmem:[#allocation2 + $0xf0] sm:$0xff]
    %v176 = vld [vmem:[#allocation2 + $0xf8] sm:$0xff]
    %v177 = vld [vmem:[#allocation2 + $0x100] sm:$0xff]
    %v178 = vld [vmem:[#allocation2 + $0x108] sm:$0xff]
    %v179 = vld [vmem:[#allocation2 + $0x110] sm:$0xff]
    %v180 = vld [vmem:[#allocation2 + $0x118] sm:$0xff]
    %v181 = vld [vmem:[#allocation2 + $0x120] sm:$0xff]
    %v182 = vld [vmem:[#allocation2 + $0x128] sm:$0xff]
    %v183 = vld [vmem:[#allocation2 + $0x130] sm:$0xff]
    %v184 = vld [vmem:[#allocation2 + $0x138] sm:$0xff]
    %v185 = vld [vmem:[#allocation2 + $0x140] sm:$0xff]
    %v186 = vld [vmem:[#allocation2 + $0x148] sm:$0xff]
    %v187 = vld [vmem:[#allocation2 + $0x150] sm:$0xff]
    %v188 = vld [vmem:[#allocation2 + $0x158] sm:$0xff]
    %v189 = vld [vmem:[#allocation2 + $0x160] sm:$0xff]
    %v190 = vld [vmem:[#allocation2 + $0x168] sm:$0xff]
    %v191 = vld [vmem:[#allocation2 + $0x170] sm:$0xff]
    %v192 = vld [vmem:[#allocation2 + $0x178] sm:$0xff]
    %v193 = vld [vmem:[#allocation2 + $0x180] sm:$0xff]
    %v194 = vld [vmem:[#allocation2 + $0x188] sm:$0xff]
    %v195 = vld [vmem:[#allocation2 + $0x190] sm:$0xff]
    %v196 = vld [vmem:[#allocation2 + $0x198] sm:$0xff]
    %v197 = vld [vmem:[#allocation2 + $0x1a0] sm:$0xff]
    %v198 = vld [vmem:[#allocation2 + $0x1a8] sm:$0xff]
    %v199 = vld [vmem:[#allocation2 + $0x1b0] sm:$0xff]
    %v200 = vld [vmem:[#allocation2 + $0x1b8] sm:$0xff]
    %v201 = vld [vmem:[#allocation2 + $0x1c0] sm:$0xff]
    %v202 = vld [vmem:[#allocation2 + $0x1c8] sm:$0xff]
    %v203 = vld [vmem:[#allocation2 + $0x1d0] sm:$0xff]
    %v204 = vld [vmem:[#allocation2 + $0x1d8] sm:$0xff]
    %v205 = vld [vmem:[#allocation2 + $0x1e0] sm:$0xff]
    %v206 = vld [vmem:[#allocation2 + $0x1e8] sm:$0xff]
    %v207 = vld [vmem:[#allocation2 + $0x1f0] sm:$0xff]
    %v208 = vld [vmem:[#allocation2 + $0x1f8] sm:$0xff]
    %vm273 = vcmask 1040384
    %v274 = vrot.slane %v145, 7
    %v275 = vrot.slane %v146, 7
    %v276 = vsel %vm273, %v274, %v275
    %v277 = vrot.slane %v147, 7
    %v278 = vrot.slane %v148, 7
    %v279 = vsel %vm273, %v277, %v278
    %v280 = vrot.slane %v149, 7
    %v281 = vrot.slane %v150, 7
    %v282 = vsel %vm273, %v280, %v281
    %v283 = vrot.slane %v151, 7
    %v284 = vrot.slane %v152, 7
    %v285 = vsel %vm273, %v283, %v284
    %v286 = vrot.slane %v153, 7
    %v287 = vrot.slane %v154, 7
    %v288 = vsel %vm273, %v286, %v287
    %v289 = vrot.slane %v155, 7
    %v290 = vrot.slane %v156, 7
    %v291 = vsel %vm273, %v289, %v290
    %v292 = vrot.slane %v157, 7
    %v293 = vrot.slane %v158, 7
    %v294 = vsel %vm273, %v292, %v293
    %v295 = vrot.slane %v159, 7
    %v296 = vrot.slane %v160, 7
    %v297 = vsel %vm273, %v295, %v296
    %v298 = vrot.slane %v161, 7
    %v299 = vrot.slane %v162, 7
    %v300 = vsel %vm273, %v298, %v299
    %v301 = vrot.slane %v163, 7
    %v302 = vrot.slane %v164, 7
    %v303 = vsel %vm273, %v301, %v302
    %v304 = vrot.slane %v165, 7
    %v305 = vrot.slane %v166, 7
    %v306 = vsel %vm273, %v304, %v305
    %v307 = vrot.slane %v167, 7
    %v308 = vrot.slane %v168, 7
    %v309 = vsel %vm273, %v307, %v308
    %v310 = vrot.slane %v169, 7
    %v311 = vrot.slane %v170, 7
    %v312 = vsel %vm273, %v310, %v311
    %v313 = vrot.slane %v171, 7
    %v314 = vrot.slane %v172, 7
    %v315 = vsel %vm273, %v313, %v314
    %v316 = vrot.slane %v173, 7
    %v317 = vrot.slane %v174, 7
    %v318 = vsel %vm273, %v316, %v317
    %v319 = vrot.slane %v175, 7
    %v320 = vrot.slane %v176, 7
    %v321 = vsel %vm273, %v319, %v320
    %v322 = vrot.slane %v177, 7
    %v323 = vrot.slane %v178, 7
    %v324 = vsel %vm273, %v322, %v323
    %v325 = vrot.slane %v179, 7
    %v326 = vrot.slane %v180, 7
    %v327 = vsel %vm273, %v325, %v326
    %v328 = vrot.slane %v181, 7
    %v329 = vrot.slane %v182, 7
    %v330 = vsel %vm273, %v328, %v329
    %v331 = vrot.slane %v183, 7
    %v332 = vrot.slane %v184, 7
    %v333 = vsel %vm273, %v331, %v332
    %v334 = vrot.slane %v185, 7
    %v335 = vrot.slane %v186, 7
    %v336 = vsel %vm273, %v334, %v335
    %v337 = vrot.slane %v187, 7
    %v338 = vrot.slane %v188, 7
    %v339 = vsel %vm273, %v337, %v338
    %v340 = vrot.slane %v189, 7
    %v341 = vrot.slane %v190, 7
    %v342 = vsel %vm273, %v340, %v341
    %v343 = vrot.slane %v191, 7
    %v344 = vrot.slane %v192, 7
    %v345 = vsel %vm273, %v343, %v344
    %v346 = vrot.slane %v193, 7
    %v347 = vrot.slane %v194, 7
    %v348 = vsel %vm273, %v346, %v347
    %v349 = vrot.slane %v195, 7
    %v350 = vrot.slane %v196, 7
    %v351 = vsel %vm273, %v349, %v350
    %v352 = vrot.slane %v197, 7
    %v353 = vrot.slane %v198, 7
    %v354 = vsel %vm273, %v352, %v353
    %v355 = vrot.slane %v199, 7
    %v356 = vrot.slane %v200, 7
    %v357 = vsel %vm273, %v355, %v356
    %v358 = vrot.slane %v201, 7
    %v359 = vrot.slane %v202, 7
    %v360 = vsel %vm273, %v358, %v359
    %v361 = vrot.slane %v203, 7
    %v362 = vrot.slane %v204, 7
    %v363 = vsel %vm273, %v361, %v362
    %v364 = vrot.slane %v205, 7
    %v365 = vrot.slane %v206, 7
    %v366 = vsel %vm273, %v364, %v365
    %v367 = vrot.slane %v207, 7
    %v368 = vrot.slane %v208, 7
    %v369 = vsel %vm273, %v367, %v368
    %v466 = vsel %vm273, 0.0, %v274
    %v467 = vsel %vm273, 0.0, %v277
    %v468 = vsel %vm273, 0.0, %v280
    %v469 = vsel %vm273, 0.0, %v283
    %v470 = vsel %vm273, 0.0, %v286
    %v471 = vsel %vm273, 0.0, %v289
    %v472 = vsel %vm273, 0.0, %v292
    %v473 = vsel %vm273, 0.0, %v295
    %v474 = vsel %vm273, 0.0, %v298
    %v475 = vsel %vm273, 0.0, %v301
    %v476 = vsel %vm273, 0.0, %v304
    %v477 = vsel %vm273, 0.0, %v307
    %v478 = vsel %vm273, 0.0, %v310
    %v479 = vsel %vm273, 0.0, %v313
    %v480 = vsel %vm273, 0.0, %v316
    %v481 = vsel %vm273, 0.0, %v319
    %v482 = vsel %vm273, 0.0, %v322
    %v483 = vsel %vm273, 0.0, %v325
    %v484 = vsel %vm273, 0.0, %v328
    %v485 = vsel %vm273, 0.0, %v331
    %v486 = vsel %vm273, 0.0, %v334
    %v487 = vsel %vm273, 0.0, %v337
    %v488 = vsel %vm273, 0.0, %v340
    %v489 = vsel %vm273, 0.0, %v343
    %v490 = vsel %vm273, 0.0, %v346
    %v491 = vsel %vm273, 0.0, %v349
    %v492 = vsel %vm273, 0.0, %v352
    %v493 = vsel %vm273, 0.0, %v355
    %v494 = vsel %vm273, 0.0, %v358
    %v495 = vsel %vm273, 0.0, %v361
    %v496 = vsel %vm273, 0.0, %v364
    %v497 = vsel %vm273, 0.0, %v367
    %v498 = vsel %vm273, %v275, 0.0
    %v499 = vsel %vm273, %v278, 0.0
    %v500 = vsel %vm273, %v281, 0.0
    %v501 = vsel %vm273, %v284, 0.0
    %v502 = vsel %vm273, %v287, 0.0
    %v503 = vsel %vm273, %v290, 0.0
    %v504 = vsel %vm273, %v293, 0.0
    %v505 = vsel %vm273, %v296, 0.0
    %v506 = vsel %vm273, %v299, 0.0
    %v507 = vsel %vm273, %v302, 0.0
    %v508 = vsel %vm273, %v305, 0.0
    %v509 = vsel %vm273, %v308, 0.0
    %v510 = vsel %vm273, %v311, 0.0
    %v511 = vsel %vm273, %v314, 0.0
    %v512 = vsel %vm273, %v317, 0.0
    %v513 = vsel %vm273, %v320, 0.0
    %v514 = vsel %vm273, %v323, 0.0
    %v515 = vsel %vm273, %v326, 0.0
    %v516 = vsel %vm273, %v329, 0.0
    %v517 = vsel %vm273, %v332, 0.0
    %v518 = vsel %vm273, %v335, 0.0
    %v519 = vsel %vm273, %v338, 0.0
    %v520 = vsel %vm273, %v341, 0.0
    %v521 = vsel %vm273, %v344, 0.0
    %v522 = vsel %vm273, %v347, 0.0
    %v523 = vsel %vm273, %v350, 0.0
    %v524 = vsel %vm273, %v353, 0.0
    %v525 = vsel %vm273, %v356, 0.0
    %v526 = vsel %vm273, %v359, 0.0
    %v527 = vsel %vm273, %v362, 0.0
    %v528 = vsel %vm273, %v365, 0.0
    %v529 = vsel %vm273, %v368, 0.0
    %v563 = vrot.slane 0.0, 1
    %v564 = vrot.slane %v466, 1
    %v565 = vrot.slane %v467, 1
    %v566 = vrot.slane %v468, 1
    %v567 = vrot.slane %v469, 1
    %v568 = vrot.slane %v470, 1
    %v569 = vrot.slane %v471, 1
    %v570 = vrot.slane %v472, 1
    %v571 = vrot.slane %v473, 1
    %v572 = vrot.slane %v474, 1
    %v573 = vrot.slane %v475, 1
    %v574 = vrot.slane %v476, 1
    %v575 = vrot.slane %v477, 1
    %v576 = vrot.slane %v478, 1
    %v577 = vrot.slane %v479, 1
    %v578 = vrot.slane %v480, 1
    %v579 = vrot.slane %v481, 1
    %v580 = vrot.slane %v482, 1
    %v581 = vrot.slane %v483, 1
    %v582 = vrot.slane %v484, 1
    %v583 = vrot.slane %v485, 1
    %v584 = vrot.slane %v486, 1
    %v585 = vrot.slane %v487, 1
    %v586 = vrot.slane %v488, 1
    %v587 = vrot.slane %v489, 1
    %v588 = vrot.slane %v490, 1
    %v589 = vrot.slane %v491, 1
    %v590 = vrot.slane %v492, 1
    %v591 = vrot.slane %v493, 1
    %v592 = vrot.slane %v494, 1
    %v593 = vrot.slane %v495, 1
    %v594 = vrot.slane %v496, 1
    %v595 = vrot.slane %v497, 1
    %v629 = vrot.slane 0.0, 2
    %v630 = vrot.slane %v466, 2
    %v631 = vrot.slane %v467, 2
    %v632 = vrot.slane %v468, 2
    %v633 = vrot.slane %v469, 2
    %v634 = vrot.slane %v470, 2
    %v635 = vrot.slane %v471, 2
    %v636 = vrot.slane %v472, 2
    %v637 = vrot.slane %v473, 2
    %v638 = vrot.slane %v474, 2
    %v639 = vrot.slane %v475, 2
    %v640 = vrot.slane %v476, 2
    %v641 = vrot.slane %v477, 2
    %v642 = vrot.slane %v478, 2
    %v643 = vrot.slane %v479, 2
    %v644 = vrot.slane %v480, 2
    %v645 = vrot.slane %v481, 2
    %v646 = vrot.slane %v482, 2
    %v647 = vrot.slane %v483, 2
    %v648 = vrot.slane %v484, 2
    %v649 = vrot.slane %v485, 2
    %v650 = vrot.slane %v486, 2
    %v651 = vrot.slane %v487, 2
    %v652 = vrot.slane %v488, 2
    %v653 = vrot.slane %v489, 2
    %v654 = vrot.slane %v490, 2
    %v655 = vrot.slane %v491, 2
    %v656 = vrot.slane %v492, 2
    %v657 = vrot.slane %v493, 2
    %v658 = vrot.slane %v494, 2
    %v659 = vrot.slane %v495, 2
    %v660 = vrot.slane %v496, 2
    %v661 = vrot.slane %v497, 2
    %v695 = vrot.slane 0.0, 3
    %v696 = vrot.slane %v466, 3
    %v697 = vrot.slane %v467, 3
    %v698 = vrot.slane %v468, 3
    %v699 = vrot.slane %v469, 3
    %v700 = vrot.slane %v470, 3
    %v701 = vrot.slane %v471, 3
    %v702 = vrot.slane %v472, 3
    %v703 = vrot.slane %v473, 3
    %v704 = vrot.slane %v474, 3
    %v705 = vrot.slane %v475, 3
    %v706 = vrot.slane %v476, 3
    %v707 = vrot.slane %v477, 3
    %v708 = vrot.slane %v478, 3
    %v709 = vrot.slane %v479, 3
    %v710 = vrot.slane %v480, 3
    %v711 = vrot.slane %v481, 3
    %v712 = vrot.slane %v482, 3
    %v713 = vrot.slane %v483, 3
    %v714 = vrot.slane %v484, 3
    %v715 = vrot.slane %v485, 3
    %v716 = vrot.slane %v486, 3
    %v717 = vrot.slane %v487, 3
    %v718 = vrot.slane %v488, 3
    %v719 = vrot.slane %v489, 3
    %v720 = vrot.slane %v490, 3
    %v721 = vrot.slane %v491, 3
    %v722 = vrot.slane %v492, 3
    %v723 = vrot.slane %v493, 3
    %v724 = vrot.slane %v494, 3
    %v725 = vrot.slane %v495, 3
    %v726 = vrot.slane %v496, 3
    %v727 = vrot.slane %v497, 3
    %v761 = vrot.slane 0.0, 4
    %v762 = vrot.slane %v276, 4
    %v763 = vrot.slane %v279, 4
    %v764 = vrot.slane %v282, 4
    %v765 = vrot.slane %v285, 4
    %v766 = vrot.slane %v288, 4
    %v767 = vrot.slane %v291, 4
    %v768 = vrot.slane %v294, 4
    %v769 = vrot.slane %v297, 4
    %v770 = vrot.slane %v300, 4
    %v771 = vrot.slane %v303, 4
    %v772 = vrot.slane %v306, 4
    %v773 = vrot.slane %v309, 4
    %v774 = vrot.slane %v312, 4
    %v775 = vrot.slane %v315, 4
    %v776 = vrot.slane %v318, 4
    %v777 = vrot.slane %v321, 4
    %v778 = vrot.slane %v324, 4
    %v779 = vrot.slane %v327, 4
    %v780 = vrot.slane %v330, 4
    %v781 = vrot.slane %v333, 4
    %v782 = vrot.slane %v336, 4
    %v783 = vrot.slane %v339, 4
    %v784 = vrot.slane %v342, 4
    %v785 = vrot.slane %v345, 4
    %v786 = vrot.slane %v348, 4
    %v787 = vrot.slane %v351, 4
    %v788 = vrot.slane %v354, 4
    %v789 = vrot.slane %v357, 4
    %v790 = vrot.slane %v360, 4
    %v791 = vrot.slane %v363, 4
    %v792 = vrot.slane %v366, 4
    %v793 = vrot.slane %v369, 4
    %v827 = vrot.slane 0.0, 5
    %v828 = vrot.slane %v276, 5
    %v829 = vrot.slane %v279, 5
    %v830 = vrot.slane %v282, 5
    %v831 = vrot.slane %v285, 5
    %v832 = vrot.slane %v288, 5
    %v833 = vrot.slane %v291, 5
    %v834 = vrot.slane %v294, 5
    %v835 = vrot.slane %v297, 5
    %v836 = vrot.slane %v300, 5
    %v837 = vrot.slane %v303, 5
    %v838 = vrot.slane %v306, 5
    %v839 = vrot.slane %v309, 5
    %v840 = vrot.slane %v312, 5
    %v841 = vrot.slane %v315, 5
    %v842 = vrot.slane %v318, 5
    %v843 = vrot.slane %v321, 5
    %v844 = vrot.slane %v324, 5
    %v845 = vrot.slane %v327, 5
    %v846 = vrot.slane %v330, 5
    %v847 = vrot.slane %v333, 5
    %v848 = vrot.slane %v336, 5
    %v849 = vrot.slane %v339, 5
    %v850 = vrot.slane %v342, 5
    %v851 = vrot.slane %v345, 5
    %v852 = vrot.slane %v348, 5
    %v853 = vrot.slane %v351, 5
    %v854 = vrot.slane %v354, 5
    %v855 = vrot.slane %v357, 5
    %v856 = vrot.slane %v360, 5
    %v857 = vrot.slane %v363, 5
    %v858 = vrot.slane %v366, 5
    %v859 = vrot.slane %v369, 5
    %v893 = vrot.slane 0.0, 6
    %v894 = vrot.slane %v276, 6
    %v895 = vrot.slane %v279, 6
    %v896 = vrot.slane %v282, 6
    %v897 = vrot.slane %v285, 6
    %v898 = vrot.slane %v288, 6
    %v899 = vrot.slane %v291, 6
    %v900 = vrot.slane %v294, 6
    %v901 = vrot.slane %v297, 6
    %v902 = vrot.slane %v300, 6
    %v903 = vrot.slane %v303, 6
    %v904 = vrot.slane %v306, 6
    %v905 = vrot.slane %v309, 6
    %v906 = vrot.slane %v312, 6
    %v907 = vrot.slane %v315, 6
    %v908 = vrot.slane %v318, 6
    %v909 = vrot.slane %v321, 6
    %v910 = vrot.slane %v324, 6
    %v911 = vrot.slane %v327, 6
    %v912 = vrot.slane %v330, 6
    %v913 = vrot.slane %v333, 6
    %v914 = vrot.slane %v336, 6
    %v915 = vrot.slane %v339, 6
    %v916 = vrot.slane %v342, 6
    %v917 = vrot.slane %v345, 6
    %v918 = vrot.slane %v348, 6
    %v919 = vrot.slane %v351, 6
    %v920 = vrot.slane %v354, 6
    %v921 = vrot.slane %v357, 6
    %v922 = vrot.slane %v360, 6
    %v923 = vrot.slane %v363, 6
    %v924 = vrot.slane %v366, 6
    %v925 = vrot.slane %v369, 6
    %v959 = vrot.slane 0.0, 7
    %v960 = vrot.slane %v276, 7
    %v961 = vrot.slane %v279, 7
    %v962 = vrot.slane %v282, 7
    %v963 = vrot.slane %v285, 7
    %v964 = vrot.slane %v288, 7
    %v965 = vrot.slane %v291, 7
    %v966 = vrot.slane %v294, 7
    %v967 = vrot.slane %v297, 7
    %v968 = vrot.slane %v300, 7
    %v969 = vrot.slane %v303, 7
    %v970 = vrot.slane %v306, 7
    %v971 = vrot.slane %v309, 7
    %v972 = vrot.slane %v312, 7
    %v973 = vrot.slane %v315, 7
    %v974 = vrot.slane %v318, 7
    %v975 = vrot.slane %v321, 7
    %v976 = vrot.slane %v324, 7
    %v977 = vrot.slane %v327, 7
    %v978 = vrot.slane %v330, 7
    %v979 = vrot.slane %v333, 7
    %v980 = vrot.slane %v336, 7
    %v981 = vrot.slane %v339, 7
    %v982 = vrot.slane %v342, 7
    %v983 = vrot.slane %v345, 7
    %v984 = vrot.slane %v348, 7
    %v985 = vrot.slane %v351, 7
    %v986 = vrot.slane %v354, 7
    %v987 = vrot.slane %v357, 7
    %v988 = vrot.slane %v360, 7
    %v989 = vrot.slane %v363, 7
    %v990 = vrot.slane %v366, 7
    %v991 = vrot.slane %v369, 7
    %v1025 = vsel %vm273, 0.0, %v563
    %v1026 = vsel %vm273, %v466, %v564
    %v1027 = vsel %vm273, %v467, %v565
    %v1028 = vsel %vm273, %v468, %v566
    %v1029 = vsel %vm273, %v469, %v567
    %v1030 = vsel %vm273, %v470, %v568
    %v1031 = vsel %vm273, %v471, %v569
    %v1032 = vsel %vm273, %v472, %v570
    %v1033 = vsel %vm273, %v473, %v571
    %v1034 = vsel %vm273, %v474, %v572
    %v1035 = vsel %vm273, %v475, %v573
    %v1036 = vsel %vm273, %v476, %v574
    %v1037 = vsel %vm273, %v477, %v575
    %v1038 = vsel %vm273, %v478, %v576
    %v1039 = vsel %vm273, %v479, %v577
    %v1040 = vsel %vm273, %v480, %v578
    %v1041 = vsel %vm273, %v481, %v579
    %v1042 = vsel %vm273, %v482, %v580
    %v1043 = vsel %vm273, %v483, %v581
    %v1044 = vsel %vm273, %v484, %v582
    %v1045 = vsel %vm273, %v485, %v583
    %v1046 = vsel %vm273, %v486, %v584
    %v1047 = vsel %vm273, %v487, %v585
    %v1048 = vsel %vm273, %v488, %v586
    %v1049 = vsel %vm273, %v489, %v587
    %v1050 = vsel %vm273, %v490, %v588
    %v1051 = vsel %vm273, %v491, %v589
    %v1052 = vsel %vm273, %v492, %v590
    %v1053 = vsel %vm273, %v493, %v591
    %v1054 = vsel %vm273, %v494, %v592
    %v1055 = vsel %vm273, %v495, %v593
    %v1056 = vsel %vm273, %v496, %v594
    %v1057 = vsel %vm273, %v497, %v595
    %vm1058 = vcmask 1041408
    %v1059 = vsel %vm1058, %v1025, %v629
    %v1060 = vsel %vm1058, %v1026, %v630
    %v1061 = vsel %vm1058, %v1027, %v631
    %v1062 = vsel %vm1058, %v1028, %v632
    %v1063 = vsel %vm1058, %v1029, %v633
    %v1064 = vsel %vm1058, %v1030, %v634
    %v1065 = vsel %vm1058, %v1031, %v635
    %v1066 = vsel %vm1058, %v1032, %v636
    %v1067 = vsel %vm1058, %v1033, %v637
    %v1068 = vsel %vm1058, %v1034, %v638
    %v1069 = vsel %vm1058, %v1035, %v639
    %v1070 = vsel %vm1058, %v1036, %v640
    %v1071 = vsel %vm1058, %v1037, %v641
    %v1072 = vsel %vm1058, %v1038, %v642
    %v1073 = vsel %vm1058, %v1039, %v643
    %v1074 = vsel %vm1058, %v1040, %v644
    %v1075 = vsel %vm1058, %v1041, %v645
    %v1076 = vsel %vm1058, %v1042, %v646
    %v1077 = vsel %vm1058, %v1043, %v647
    %v1078 = vsel %vm1058, %v1044, %v648
    %v1079 = vsel %vm1058, %v1045, %v649
    %v1080 = vsel %vm1058, %v1046, %v650
    %v1081 = vsel %vm1058, %v1047, %v651
    %v1082 = vsel %vm1058, %v1048, %v652
    %v1083 = vsel %vm1058, %v1049, %v653
    %v1084 = vsel %vm1058, %v1050, %v654
    %v1085 = vsel %vm1058, %v1051, %v655
    %v1086 = vsel %vm1058, %v1052, %v656
    %v1087 = vsel %vm1058, %v1053, %v657
    %v1088 = vsel %vm1058, %v1054, %v658
    %v1089 = vsel %vm1058, %v1055, %v659
    %v1090 = vsel %vm1058, %v1056, %v660
    %v1091 = vsel %vm1058, %v1057, %v661
    %vm1092 = vcmask 1042432
    %v1093 = vsel %vm1092, %v1059, %v695
    %v1094 = vsel %vm1092, %v1060, %v696
    %v1095 = vsel %vm1092, %v1061, %v697
    %v1096 = vsel %vm1092, %v1062, %v698
    %v1097 = vsel %vm1092, %v1063, %v699
    %v1098 = vsel %vm1092, %v1064, %v700
    %v1099 = vsel %vm1092, %v1065, %v701
    %v1100 = vsel %vm1092, %v1066, %v702
    %v1101 = vsel %vm1092, %v1067, %v703
    %v1102 = vsel %vm1092, %v1068, %v704
    %v1103 = vsel %vm1092, %v1069, %v705
    %v1104 = vsel %vm1092, %v1070, %v706
    %v1105 = vsel %vm1092, %v1071, %v707
    %v1106 = vsel %vm1092, %v1072, %v708
    %v1107 = vsel %vm1092, %v1073, %v709
    %v1108 = vsel %vm1092, %v1074, %v710
    %v1109 = vsel %vm1092, %v1075, %v711
    %v1110 = vsel %vm1092, %v1076, %v712
    %v1111 = vsel %vm1092, %v1077, %v713
    %v1112 = vsel %vm1092, %v1078, %v714
    %v1113 = vsel %vm1092, %v1079, %v715
    %v1114 = vsel %vm1092, %v1080, %v716
    %v1115 = vsel %vm1092, %v1081, %v717
    %v1116 = vsel %vm1092, %v1082, %v718
    %v1117 = vsel %vm1092, %v1083, %v719
    %v1118 = vsel %vm1092, %v1084, %v720
    %v1119 = vsel %vm1092, %v1085, %v721
    %v1120 = vsel %vm1092, %v1086, %v722
    %v1121 = vsel %vm1092, %v1087, %v723
    %v1122 = vsel %vm1092, %v1088, %v724
    %v1123 = vsel %vm1092, %v1089, %v725
    %v1124 = vsel %vm1092, %v1090, %v726
    %v1125 = vsel %vm1092, %v1091, %v727
    %vm1126 = vcmask 1043456
    %v1127 = vsel %vm1126, %v1093, %v761
    %v1128 = vsel %vm1126, %v1094, %v762
    %v1129 = vsel %vm1126, %v1095, %v763
    %v1130 = vsel %vm1126, %v1096, %v764
    %v1131 = vsel %vm1126, %v1097, %v765
    %v1132 = vsel %vm1126, %v1098, %v766
    %v1133 = vsel %vm1126, %v1099, %v767
    %v1134 = vsel %vm1126, %v1100, %v768
    %v1135 = vsel %vm1126, %v1101, %v769
    %v1136 = vsel %vm1126, %v1102, %v770
    %v1137 = vsel %vm1126, %v1103, %v771
    %v1138 = vsel %vm1126, %v1104, %v772
    %v1139 = vsel %vm1126, %v1105, %v773
    %v1140 = vsel %vm1126, %v1106, %v774
    %v1141 = vsel %vm1126, %v1107, %v775
    %v1142 = vsel %vm1126, %v1108, %v776
    %v1143 = vsel %vm1126, %v1109, %v777
    %v1144 = vsel %vm1126, %v1110, %v778
    %v1145 = vsel %vm1126, %v1111, %v779
    %v1146 = vsel %vm1126, %v1112, %v780
    %v1147 = vsel %vm1126, %v1113, %v781
    %v1148 = vsel %vm1126, %v1114, %v782
    %v1149 = vsel %vm1126, %v1115, %v783
    %v1150 = vsel %vm1126, %v1116, %v784
    %v1151 = vsel %vm1126, %v1117, %v785
    %v1152 = vsel %vm1126, %v1118, %v786
    %v1153 = vsel %vm1126, %v1119, %v787
    %v1154 = vsel %vm1126, %v1120, %v788
    %v1155 = vsel %vm1126, %v1121, %v789
    %v1156 = vsel %vm1126, %v1122, %v790
    %v1157 = vsel %vm1126, %v1123, %v791
    %v1158 = vsel %vm1126, %v1124, %v792
    %v1159 = vsel %vm1126, %v1125, %v793
    %vm1160 = vcmask 1044480
    %v1161 = vsel %vm1160, %v1127, %v827
    %v1162 = vsel %vm1160, %v1128, %v828
    %v1163 = vsel %vm1160, %v1129, %v829
    %v1164 = vsel %vm1160, %v1130, %v830
    %v1165 = vsel %vm1160, %v1131, %v831
    %v1166 = vsel %vm1160, %v1132, %v832
    %v1167 = vsel %vm1160, %v1133, %v833
    %v1168 = vsel %vm1160, %v1134, %v834
    %v1169 = vsel %vm1160, %v1135, %v835
    %v1170 = vsel %vm1160, %v1136, %v836
    %v1171 = vsel %vm1160, %v1137, %v837
    %v1172 = vsel %vm1160, %v1138, %v838
    %v1173 = vsel %vm1160, %v1139, %v839
    %v1174 = vsel %vm1160, %v1140, %v840
    %v1175 = vsel %vm1160, %v1141, %v841
    %v1176 = vsel %vm1160, %v1142, %v842
    %v1177 = vsel %vm1160, %v1143, %v843
    %v1178 = vsel %vm1160, %v1144, %v844
    %v1179 = vsel %vm1160, %v1145, %v845
    %v1180 = vsel %vm1160, %v1146, %v846
    %v1181 = vsel %vm1160, %v1147, %v847
    %v1182 = vsel %vm1160, %v1148, %v848
    %v1183 = vsel %vm1160, %v1149, %v849
    %v1184 = vsel %vm1160, %v1150, %v850
    %v1185 = vsel %vm1160, %v1151, %v851
    %v1186 = vsel %vm1160, %v1152, %v852
    %v1187 = vsel %vm1160, %v1153, %v853
    %v1188 = vsel %vm1160, %v1154, %v854
    %v1189 = vsel %vm1160, %v1155, %v855
    %v1190 = vsel %vm1160, %v1156, %v856
    %v1191 = vsel %vm1160, %v1157, %v857
    %v1192 = vsel %vm1160, %v1158, %v858
    %v1193 = vsel %vm1160, %v1159, %v859
    %vm1194 = vcmask 1045504
    %v1195 = vsel %vm1194, %v1161, %v893
    %v1196 = vsel %vm1194, %v1162, %v894
    %v1197 = vsel %vm1194, %v1163, %v895
    %v1198 = vsel %vm1194, %v1164, %v896
    %v1199 = vsel %vm1194, %v1165, %v897
    %v1200 = vsel %vm1194, %v1166, %v898
    %v1201 = vsel %vm1194, %v1167, %v899
    %v1202 = vsel %vm1194, %v1168, %v900
    %v1203 = vsel %vm1194, %v1169, %v901
    %v1204 = vsel %vm1194, %v1170, %v902
    %v1205 = vsel %vm1194, %v1171, %v903
    %v1206 = vsel %vm1194, %v1172, %v904
    %v1207 = vsel %vm1194, %v1173, %v905
    %v1208 = vsel %vm1194, %v1174, %v906
    %v1209 = vsel %vm1194, %v1175, %v907
    %v1210 = vsel %vm1194, %v1176, %v908
    %v1211 = vsel %vm1194, %v1177, %v909
    %v1212 = vsel %vm1194, %v1178, %v910
    %v1213 = vsel %vm1194, %v1179, %v911
    %v1214 = vsel %vm1194, %v1180, %v912
    %v1215 = vsel %vm1194, %v1181, %v913
    %v1216 = vsel %vm1194, %v1182, %v914
    %v1217 = vsel %vm1194, %v1183, %v915
    %v1218 = vsel %vm1194, %v1184, %v916
    %v1219 = vsel %vm1194, %v1185, %v917
    %v1220 = vsel %vm1194, %v1186, %v918
    %v1221 = vsel %vm1194, %v1187, %v919
    %v1222 = vsel %vm1194, %v1188, %v920
    %v1223 = vsel %vm1194, %v1189, %v921
    %v1224 = vsel %vm1194, %v1190, %v922
    %v1225 = vsel %vm1194, %v1191, %v923
    %v1226 = vsel %vm1194, %v1192, %v924
    %v1227 = vsel %vm1194, %v1193, %v925
    %vm1228 = vcmask 1046528
    %v1229 = vsel %vm1228, %v1195, %v959
    %v1230 = vsel %vm1228, %v1196, %v960
    %v1231 = vsel %vm1228, %v1197, %v961
    %v1232 = vsel %vm1228, %v1198, %v962
    %v1233 = vsel %vm1228, %v1199, %v963
    %v1234 = vsel %vm1228, %v1200, %v964
    %v1235 = vsel %vm1228, %v1201, %v965
    %v1236 = vsel %vm1228, %v1202, %v966
    %v1237 = vsel %vm1228, %v1203, %v967
    %v1238 = vsel %vm1228, %v1204, %v968
    %v1239 = vsel %vm1228, %v1205, %v969
    %v1240 = vsel %vm1228, %v1206, %v970
    %v1241 = vsel %vm1228, %v1207, %v971
    %v1242 = vsel %vm1228, %v1208, %v972
    %v1243 = vsel %vm1228, %v1209, %v973
    %v1244 = vsel %vm1228, %v1210, %v974
    %v1245 = vsel %vm1228, %v1211, %v975
    %v1246 = vsel %vm1228, %v1212, %v976
    %v1247 = vsel %vm1228, %v1213, %v977
    %v1248 = vsel %vm1228, %v1214, %v978
    %v1249 = vsel %vm1228, %v1215, %v979
    %v1250 = vsel %vm1228, %v1216, %v980
    %v1251 = vsel %vm1228, %v1217, %v981
    %v1252 = vsel %vm1228, %v1218, %v982
    %v1253 = vsel %vm1228, %v1219, %v983
    %v1254 = vsel %vm1228, %v1220, %v984
    %v1255 = vsel %vm1228, %v1221, %v985
    %v1256 = vsel %vm1228, %v1222, %v986
    %v1257 = vsel %vm1228, %v1223, %v987
    %v1258 = vsel %vm1228, %v1224, %v988
    %v1259 = vsel %vm1228, %v1225, %v989
    %v1260 = vsel %vm1228, %v1226, %v990
    %v1261 = vsel %vm1228, %v1227, %v991
    %v1262 = vld [vmem:[#allocation5] sm:$0xff]
    %v1263 = vld [vmem:[#allocation5 + $0x8] sm:$0xff]
    %v1264 = vld [vmem:[#allocation5 + $0x10] sm:$0xff]
    %v1265 = vld [vmem:[#allocation5 + $0x18] sm:$0xff]
    %v1266 = vld [vmem:[#allocation5 + $0x20] sm:$0xff]
    %v1267 = vld [vmem:[#allocation5 + $0x28] sm:$0xff]
    %v1268 = vld [vmem:[#allocation5 + $0x30] sm:$0xff]
    %v1269 = vld [vmem:[#allocation5 + $0x38] sm:$0xff]
    %v1270 = vld [vmem:[#allocation5 + $0x40] sm:$0xff]
    %v1271 = vld [vmem:[#allocation5 + $0x48] sm:$0xff]
    %v1272 = vld [vmem:[#allocation5 + $0x50] sm:$0xff]
    %v1273 = vld [vmem:[#allocation5 + $0x58] sm:$0xff]
    %v1274 = vld [vmem:[#allocation5 + $0x60] sm:$0xff]
    %v1275 = vld [vmem:[#allocation5 + $0x68] sm:$0xff]
    %v1276 = vld [vmem:[#allocation5 + $0x70] sm:$0xff]
    %v1277 = vld [vmem:[#allocation5 + $0x78] sm:$0xff]
    %s1278 = scalar_lea.vmem [#allocation5], 384
    %v1279 = vld [vmem:[%s1278] sm:$0xff]
    %v1280 = vld [vmem:[%s1278 + $0x8] sm:$0xff]
    %v1281 = vld [vmem:[%s1278 + $0x10] sm:$0xff]
    %v1282 = vld [vmem:[%s1278 + $0x18] sm:$0xff]
    %v1283 = vld [vmem:[%s1278 + $0x20] sm:$0xff]
    %v1284 = vld [vmem:[%s1278 + $0x28] sm:$0xff]
    %v1285 = vld [vmem:[%s1278 + $0x30] sm:$0xff]
    %v1286 = vld [vmem:[%s1278 + $0x38] sm:$0xff]
    %v1287 = vld [vmem:[%s1278 + $0x40] sm:$0xff]
    %v1288 = vld [vmem:[%s1278 + $0x48] sm:$0xff]
    %v1289 = vld [vmem:[%s1278 + $0x50] sm:$0xff]
    %v1290 = vld [vmem:[%s1278 + $0x58] sm:$0xff]
    %v1291 = vld [vmem:[%s1278 + $0x60] sm:$0xff]
    %v1292 = vld [vmem:[%s1278 + $0x68] sm:$0xff]
    %v1293 = vld [vmem:[%s1278 + $0x70] sm:$0xff]
    %v1294 = vld [vmem:[%s1278 + $0x78] sm:$0xff]
    %1295 = vmatprep.subr.mxu0 0.0
    %1296 = vmatpush1.msra.mxu0 %v1279
    %1297 = vmatprep.subr.mxu0 0.0
    %1298 = vmatpush1.msra.mxu0 %v1280
    %1299 = vmatprep.subr.mxu0 0.0
    %1300 = vmatpush1.msra.mxu0 %v1281
    %1301 = vmatprep.subr.mxu0 0.0
    %1302 = vmatpush1.msra.mxu0 %v1282
    %1303 = vmatprep.subr.mxu0 0.0
    %1304 = vmatpush1.msra.mxu0 %v1283
    %1305 = vmatprep.subr.mxu0 0.0
    %1306 = vmatpush1.msra.mxu0 %v1284
    %1307 = vmatprep.subr.mxu0 0.0
    %1308 = vmatpush1.msra.mxu0 %v1285
    %1309 = vmatprep.subr.mxu0 0.0
    %1310 = vmatpush1.msra.mxu0 %v1286
    %1311 = vmatprep.subr.mxu0 0.0
    %1312 = vmatpush1.msra.mxu0 %v1287
    %1313 = vmatprep.subr.mxu0 0.0
    %1314 = vmatpush1.msra.mxu0 %v1288
    %1315 = vmatprep.subr.mxu0 0.0
    %1316 = vmatpush1.msra.mxu0 %v1289
    %1317 = vmatprep.subr.mxu0 0.0
    %1318 = vmatpush1.msra.mxu0 %v1290
    %1319 = vmatprep.subr.mxu0 0.0
    %1320 = vmatpush1.msra.mxu0 %v1291
    %1321 = vmatprep.subr.mxu0 0.0
    %1322 = vmatpush1.msra.mxu0 %v1292
    %1323 = vmatprep.subr.mxu0 0.0
    %1324 = vmatpush1.msra.mxu0 %v1293
    %1325 = vmatprep.subr.mxu0 0.0
    %1326 = vmatpush1.msra.mxu0 %v1294
    %1327 = vmatprep.subr.mxu0 0.0
    %1328 = vmatpush1.msra.mxu0 0.0
    %1329 = vmatprep.subr.mxu0 0.0
    %1330 = vmatpush1.msra.mxu0 0.0
    %1331 = vmatprep.subr.mxu0 0.0
    %1332 = vmatpush1.msra.mxu0 0.0
    %1333 = vmatprep.subr.mxu0 0.0
    %1334 = vmatpush1.msra.mxu0 0.0
    %1335 = vmatprep.subr.mxu0 0.0
    %1336 = vmatpush1.msra.mxu0 0.0
    %1337 = vmatprep.subr.mxu0 0.0
    %1338 = vmatpush1.msra.mxu0 0.0
    %1339 = vmatprep.subr.mxu0 0.0
    %1340 = vmatpush1.msra.mxu0 0.0
    %1341 = vmatprep.subr.mxu0 0.0
    %1342 = vmatpush1.msra.mxu0 0.0
    %1343 = vmatprep.subr.mxu0 0.0
    %1344 = vmatpush1.msra.mxu0 0.0
    %1345 = vmatprep.subr.mxu0 0.0
    %1346 = vmatpush1.msra.mxu0 0.0
    %1347 = vmatprep.subr.mxu0 0.0
    %1348 = vmatpush1.msra.mxu0 0.0
    %1349 = vmatprep.subr.mxu0 0.0
    %1350 = vmatpush1.msra.mxu0 0.0
    %1351 = vmatprep.subr.mxu0 0.0
    %1352 = vmatpush1.msra.mxu0 0.0
    %1353 = vmatprep.subr.mxu0 0.0
    %1354 = vmatpush1.msra.mxu0 0.0
    %1355 = vmatprep.subr.mxu0 0.0
    %1356 = vmatpush1.msra.mxu0 0.0
    %1357 = vmatprep.subr.mxu0 0.0
    %1358 = vmatpush1.msra.mxu0 0.0
    %1359 = vmatprep.mubr.f32.mxu0 0.0
    %1360 = vmatmul.mubr.f32.gmra.mrb[0].mxu0 %v1230
    %v1361 = vpop.f32.mrb[0].mxu0
    %v1362 = vadd.f32 0.0, %v1361
    %v1363 = vpop.f32.mrb[0].mxu0
    %1364 = vmatprep.mubr.f32.mxu0 0.0
    %1365 = vmatmul.mubr.f32.gmra.mrb[0].mxu0 %v1232
    %v1366 = vpop.f32.mrb[0].mxu0
    %v1367 = vadd.f32 0.0, %v1366
    %v1368 = vpop.f32.mrb[0].mxu0
    %1369 = vmatprep.mubr.f32.mxu0 0.0
    %1370 = vmatmul.mubr.f32.gmra.mrb[0].mxu0 %v1234
    %v1371 = vpop.f32.mrb[0].mxu0
    %v1372 = vadd.f32 0.0, %v1371
    %v1373 = vpop.f32.mrb[0].mxu0
    %1374 = vmatprep.mubr.f32.mxu0 0.0
    %1375 = vmatmul.mubr.f32.gmra.mrb[0].mxu0 %v1236
    %v1376 = vpop.f32.mrb[0].mxu0
    %v1377 = vadd.f32 0.0, %v1376
    %v1378 = vpop.f32.mrb[0].mxu0
    %1379 = vmatprep.mubr.f32.mxu0 0.0
    %1380 = vmatmul.mubr.f32.gmra.mrb[0].mxu0 %v1238
    %v1381 = vpop.f32.mrb[0].mxu0
    %v1382 = vadd.f32 0.0, %v1381
    %v1383 = vpop.f32.mrb[0].mxu0
    %1384 = vmatprep.mubr.f32.mxu0 0.0
    %1385 = vmatmul.mubr.f32.gmra.mrb[0].mxu0 %v1240
    %v1386 = vpop.f32.mrb[0].mxu0
    %v1387 = vadd.f32 0.0, %v1386
    %v1388 = vpop.f32.mrb[0].mxu0
    %1389 = vmatprep.mubr.f32.mxu0 0.0
    %1390 = vmatmul.mubr.f32.gmra.mrb[0].mxu0 %v1242
    %v1391 = vpop.f32.mrb[0].mxu0
    %v1392 = vadd.f32 0.0, %v1391
    %v1393 = vpop.f32.mrb[0].mxu0
    %1394 = vmatprep.mubr.f32.mxu0 0.0
    %1395 = vmatmul.mubr.f32.gmra.mrb[0].mxu0 %v1244
    %v1396 = vpop.f32.mrb[0].mxu0
    %v1397 = vadd.f32 0.0, %v1396
    %v1398 = vpop.f32.mrb[0].mxu0
    %1399 = vmatprep.mubr.f32.mxu0 0.0
    %1400 = vmatmul.mubr.f32.gmra.mrb[0].mxu0 %v1246
    %v1401 = vpop.f32.mrb[0].mxu0
    %v1402 = vadd.f32 0.0, %v1401
    %v1403 = vpop.f32.mrb[0].mxu0
    %1404 = vmatprep.mubr.f32.mxu0 0.0
    %1405 = vmatmul.mubr.f32.gmra.mrb[0].mxu0 %v1248
    %v1406 = vpop.f32.mrb[0].mxu0
    %v1407 = vadd.f32 0.0, %v1406
    %v1408 = vpop.f32.mrb[0].mxu0
    %1409 = vmatprep.mubr.f32.mxu0 0.0
    %1410 = vmatmul.mubr.f32.gmra.mrb[0].mxu0 %v1250
    %v1411 = vpop.f32.mrb[0].mxu0
    %v1412 = vadd.f32 0.0, %v1411
    %v1413 = vpop.f32.mrb[0].mxu0
    %1414 = vmatprep.mubr.f32.mxu0 0.0
    %1415 = vmatmul.mubr.f32.gmra.mrb[0].mxu0 %v1252
    %v1416 = vpop.f32.mrb[0].mxu0
    %v1417 = vadd.f32 0.0, %v1416
    %v1418 = vpop.f32.mrb[0].mxu0
    %1419 = vmatprep.mubr.f32.mxu0 0.0
    %1420 = vmatmul.mubr.f32.gmra.mrb[0].mxu0 %v1254
    %v1421 = vpop.f32.mrb[0].mxu0
    %v1422 = vadd.f32 0.0, %v1421
    %v1423 = vpop.f32.mrb[0].mxu0
    %1424 = vmatprep.mubr.f32.mxu0 0.0
    %1425 = vmatmul.mubr.f32.gmra.mrb[0].mxu0 %v1256
    %v1426 = vpop.f32.mrb[0].mxu0
    %v1427 = vadd.f32 0.0, %v1426
    %v1428 = vpop.f32.mrb[0].mxu0
    %1429 = vmatprep.mubr.f32.mxu0 0.0
    %1430 = vmatmul.mubr.f32.gmra.mrb[0].mxu0 %v1258
    %v1431 = vpop.f32.mrb[0].mxu0
    %v1432 = vadd.f32 0.0, %v1431
    %v1433 = vpop.f32.mrb[0].mxu0
    %1434 = vmatprep.mubr.f32.mxu0 0.0
    %1435 = vmatmul.mubr.f32.gmra.mrb[0].mxu0 %v1260
    %v1436 = vpop.f32.mrb[0].mxu0
    %v1437 = vadd.f32 0.0, %v1436
    %v1438 = vpop.f32.mrb[0].mxu0
    %1439 = vdwg.mxu0
    %1440 = vmatprep.subr.mxu0 0.0
    %1441 = vmatpush1.msra.mxu0 %v1262
    %1442 = vmatprep.subr.mxu0 0.0
    %1443 = vmatpush1.msra.mxu0 %v1263
    %1444 = vmatprep.subr.mxu0 0.0
    %1445 = vmatpush1.msra.mxu0 %v1264
    %1446 = vmatprep.subr.mxu0 0.0
    %1447 = vmatpush1.msra.mxu0 %v1265
    %1448 = vmatprep.subr.mxu0 0.0
    %1449 = vmatpush1.msra.mxu0 %v1266
    %1450 = vmatprep.subr.mxu0 0.0
    %1451 = vmatpush1.msra.mxu0 %v1267
    %1452 = vmatprep.subr.mxu0 0.0
    %1453 = vmatpush1.msra.mxu0 %v1268
    %1454 = vmatprep.subr.mxu0 0.0
    %1455 = vmatpush1.msra.mxu0 %v1269
    %1456 = vmatprep.subr.mxu0 0.0
    %1457 = vmatpush1.msra.mxu0 %v1270
    %1458 = vmatprep.subr.mxu0 0.0
    %1459 = vmatpush1.msra.mxu0 %v1271
    %1460 = vmatprep.subr.mxu0 0.0
    %1461 = vmatpush1.msra.mxu0 %v1272
    %1462 = vmatprep.subr.mxu0 0.0
    %1463 = vmatpush1.msra.mxu0 %v1273
    %1464 = vmatprep.subr.mxu0 0.0
    %1465 = vmatpush1.msra.mxu0 %v1274
    %1466 = vmatprep.subr.mxu0 0.0
    %1467 = vmatpush1.msra.mxu0 %v1275
    %1468 = vmatprep.subr.mxu0 0.0
    %1469 = vmatpush1.msra.mxu0 %v1276
    %1470 = vmatprep.subr.mxu0 0.0
    %1471 = vmatpush1.msra.mxu0 %v1277
    %1472 = vmatprep.subr.mxu0 0.0
    %1473 = vmatpush1.msra.mxu0 0.0
    %1474 = vmatprep.subr.mxu0 0.0
    %1475 = vmatpush1.msra.mxu0 0.0
    %1476 = vmatprep.subr.mxu0 0.0
    %1477 = vmatpush1.msra.mxu0 0.0
    %1478 = vmatprep.subr.mxu0 0.0
    %1479 = vmatpush1.msra.mxu0 0.0
    %1480 = vmatprep.subr.mxu0 0.0
    %1481 = vmatpush1.msra.mxu0 0.0
    %1482 = vmatprep.subr.mxu0 0.0
    %1483 = vmatpush1.msra.mxu0 0.0
    %1484 = vmatprep.subr.mxu0 0.0
    %1485 = vmatpush1.msra.mxu0 0.0
    %1486 = vmatprep.subr.mxu0 0.0
    %1487 = vmatpush1.msra.mxu0 0.0
    %1488 = vmatprep.subr.mxu0 0.0
    %1489 = vmatpush1.msra.mxu0 0.0
    %1490 = vmatprep.subr.mxu0 0.0
    %1491 = vmatpush1.msra.mxu0 0.0
    %1492 = vmatprep.subr.mxu0 0.0
    %1493 = vmatpush1.msra.mxu0 0.0
    %1494 = vmatprep.subr.mxu0 0.0
    %1495 = vmatpush1.msra.mxu0 0.0
    %1496 = vmatprep.subr.mxu0 0.0
    %1497 = vmatpush1.msra.mxu0 0.0
    %1498 = vmatprep.subr.mxu0 0.0
    %1499 = vmatpush1.msra.mxu0 0.0
    %1500 = vmatprep.subr.mxu0 0.0
    %1501 = vmatpush1.msra.mxu0 0.0
    %1502 = vmatprep.subr.mxu0 0.0
    %1503 = vmatpush1.msra.mxu0 0.0
    %1504 = vmatprep.mubr.f32.mxu0 0.0
    %1505 = vmatmul.mubr.f32.gmra.mrb[0].mxu0 %v1229
    %v1506 = vpop.f32.mrb[0].mxu0
    %v1507 = vadd.f32 %v1362, %v1506
    %v1508 = vpop.f32.mrb[0].mxu0
    %1509 = vmatprep.mubr.f32.mxu0 0.0
    %1510 = vmatmul.mubr.f32.gmra.mrb[0].mxu0 %v1231
    %v1511 = vpop.f32.mrb[0].mxu0
    %v1512 = vadd.f32 %v1367, %v1511
    %v1513 = vpop.f32.mrb[0].mxu0
    %1514 = vmatprep.mubr.f32.mxu0 0.0
    %1515 = vmatmul.mubr.f32.gmra.mrb[0].mxu0 %v1233
    %v1516 = vpop.f32.mrb[0].mxu0
    %v1517 = vadd.f32 %v1372, %v1516
    %v1518 = vpop.f32.mrb[0].mxu0
    %1519 = vmatprep.mubr.f32.mxu0 0.0
    %1520 = vmatmul.mubr.f32.gmra.mrb[0].mxu0 %v1235
    %v1521 = vpop.f32.mrb[0].mxu0
    %v1522 = vadd.f32 %v1377, %v1521
    %v1523 = vpop.f32.mrb[0].mxu0
    %1524 = vmatprep.mubr.f32.mxu0 0.0
    %1525 = vmatmul.mubr.f32.gmra.mrb[0].mxu0 %v1237
    %v1526 = vpop.f32.mrb[0].mxu0
    %v1527 = vadd.f32 %v1382, %v1526
    %v1528 = vpop.f32.mrb[0].mxu0
    %1529 = vmatprep.mubr.f32.mxu0 0.0
    %1530 = vmatmul.mubr.f32.gmra.mrb[0].mxu0 %v1239
    %v1531 = vpop.f32.mrb[0].mxu0
    %v1532 = vadd.f32 %v1387, %v1531
    %v1533 = vpop.f32.mrb[0].mxu0
    %1534 = vmatprep.mubr.f32.mxu0 0.0
    %1535 = vmatmul.mubr.f32.gmra.mrb[0].mxu0 %v1241
    %v1536 = vpop.f32.mrb[0].mxu0
    %v1537 = vadd.f32 %v1392, %v1536
    %v1538 = vpop.f32.mrb[0].mxu0
    %1539 = vmatprep.mubr.f32.mxu0 0.0
    %1540 = vmatmul.mubr.f32.gmra.mrb[0].mxu0 %v1243
    %v1541 = vpop.f32.mrb[0].mxu0
    %v1542 = vadd.f32 %v1397, %v1541
    %v1543 = vpop.f32.mrb[0].mxu0
    %1544 = vmatprep.mubr.f32.mxu0 0.0
    %1545 = vmatmul.mubr.f32.gmra.mrb[0].mxu0 %v1229
    %v1546 = vpop.f32.mrb[0].mxu0
    %v1547 = vadd.f32 %v1402, %v1546
    %v1548 = vpop.f32.mrb[0].mxu0
    %1549 = vmatprep.mubr.f32.mxu0 0.0
    %1550 = vmatmul.mubr.f32.gmra.mrb[0].mxu0 %v1247
    %v1551 = vpop.f32.mrb[0].mxu0
    %v1552 = vadd.f32 %v1407, %v1551
    %v1553 = vpop.f32.mrb[0].mxu0
    %1554 = vmatprep.mubr.f32.mxu0 0.0
    %1555 = vmatmul.mubr.f32.gmra.mrb[0].mxu0 %v1249
    %v1556 = vpop.f32.mrb[0].mxu0
    %v1557 = vadd.f32 %v1412, %v1556
    %v1558 = vpop.f32.mrb[0].mxu0
    %1559 = vmatprep.mubr.f32.mxu0 0.0
    %1560 = vmatmul.mubr.f32.gmra.mrb[0].mxu0 %v1251
    %v1561 = vpop.f32.mrb[0].mxu0
    %v1562 = vadd.f32 %v1417, %v1561
    %v1563 = vpop.f32.mrb[0].mxu0
    %1564 = vmatprep.mubr.f32.mxu0 0.0
    %1565 = vmatmul.mubr.f32.gmra.mrb[0].mxu0 %v1253
    %v1566 = vpop.f32.mrb[0].mxu0
    %v1567 = vadd.f32 %v1422, %v1566
    %v1568 = vpop.f32.mrb[0].mxu0
    %1569 = vmatprep.mubr.f32.mxu0 0.0
    %1570 = vmatmul.mubr.f32.gmra.mrb[0].mxu0 %v1255
    %v1571 = vpop.f32.mrb[0].mxu0
    %v1572 = vadd.f32 %v1427, %v1571
    %v1573 = vpop.f32.mrb[0].mxu0
    %1574 = vmatprep.mubr.f32.mxu0 0.0
    %1575 = vmatmul.mubr.f32.gmra.mrb[0].mxu0 %v1257
    %v1576 = vpop.f32.mrb[0].mxu0
    %v1577 = vadd.f32 %v1432, %v1576
    %v1578 = vpop.f32.mrb[0].mxu0
    %1579 = vmatprep.mubr.f32.mxu0 0.0
    %1580 = vmatmul.mubr.f32.gmra.mrb[0].mxu0 %v1259
    %v1581 = vpop.f32.mrb[0].mxu0
    %v1582 = vadd.f32 %v1437, %v1581
    %v1583 = vpop.f32.mrb[0].mxu0
    %1584 = vdwg.mxu0
    %s1585 = scalar_lea.vmem [#allocation5], 768
    %v1586 = vld [vmem:[%s1585] sm:$0xff]
    %v1587 = vld [vmem:[%s1585 + $0x8] sm:$0xff]
    %v1588 = vld [vmem:[%s1585 + $0x10] sm:$0xff]
    %v1589 = vld [vmem:[%s1585 + $0x18] sm:$0xff]
    %v1590 = vld [vmem:[%s1585 + $0x20] sm:$0xff]
    %v1591 = vld [vmem:[%s1585 + $0x28] sm:$0xff]
    %v1592 = vld [vmem:[%s1585 + $0x30] sm:$0xff]
    %v1593 = vld [vmem:[%s1585 + $0x38] sm:$0xff]
    %v1594 = vld [vmem:[%s1585 + $0x40] sm:$0xff]
    %v1595 = vld [vmem:[%s1585 + $0x48] sm:$0xff]
    %v1596 = vld [vmem:[%s1585 + $0x50] sm:$0xff]
    %v1597 = vld [vmem:[%s1585 + $0x58] sm:$0xff]
    %v1598 = vld [vmem:[%s1585 + $0x60] sm:$0xff]
    %v1599 = vld [vmem:[%s1585 + $0x68] sm:$0xff]
    %v1600 = vld [vmem:[%s1585 + $0x70] sm:$0xff]
    %v1601 = vld [vmem:[%s1585 + $0x78] sm:$0xff]
    %1602 = vmatprep.subr.mxu0 0.0
    %1603 = vmatpush1.msra.mxu0 %v1586
    %1604 = vmatprep.subr.mxu0 0.0
    %1605 = vmatpush1.msra.mxu0 %v1587
    %1606 = vmatprep.subr.mxu0 0.0
    %1607 = vmatpush1.msra.mxu0 %v1588
    %1608 = vmatprep.subr.mxu0 0.0
    %1609 = vmatpush1.msra.mxu0 %v1589
    %1610 = vmatprep.subr.mxu0 0.0
    %1611 = vmatpush1.msra.mxu0 %v1590
    %1612 = vmatprep.subr.mxu0 0.0
    %1613 = vmatpush1.msra.mxu0 %v1591
    %1614 = vmatprep.subr.mxu0 0.0
    %1615 = vmatpush1.msra.mxu0 %v1592
    %1616 = vmatprep.subr.mxu0 0.0
    %1617 = vmatpush1.msra.mxu0 %v1593
    %1618 = vmatprep.subr.mxu0 0.0
    %1619 = vmatpush1.msra.mxu0 %v1594
    %1620 = vmatprep.subr.mxu0 0.0
    %1621 = vmatpush1.msra.mxu0 %v1595
    %1622 = vmatprep.subr.mxu0 0.0
    %1623 = vmatpush1.msra.mxu0 %v1596
    %1624 = vmatprep.subr.mxu0 0.0
    %1625 = vmatpush1.msra.mxu0 %v1597
    %1626 = vmatprep.subr.mxu0 0.0
    %1627 = vmatpush1.msra.mxu0 %v1598
    %1628 = vmatprep.subr.mxu0 0.0
    %1629 = vmatpush1.msra.mxu0 %v1599
    %1630 = vmatprep.subr.mxu0 0.0
    %1631 = vmatpush1.msra.mxu0 %v1600
    %1632 = vmatprep.subr.mxu0 0.0
    %1633 = vmatpush1.msra.mxu0 %v1601
    %1634 = vmatprep.subr.mxu0 0.0
    %1635 = vmatpush1.msra.mxu0 0.0
    %1636 = vmatprep.subr.mxu0 0.0
    %1637 = vmatpush1.msra.mxu0 0.0
    %1638 = vmatprep.subr.mxu0 0.0
    %1639 = vmatpush1.msra.mxu0 0.0
    %1640 = vmatprep.subr.mxu0 0.0
    %1641 = vmatpush1.msra.mxu0 0.0
    %1642 = vmatprep.subr.mxu0 0.0
    %1643 = vmatpush1.msra.mxu0 0.0
    %1644 = vmatprep.subr.mxu0 0.0
    %1645 = vmatpush1.msra.mxu0 0.0
    %1646 = vmatprep.subr.mxu0 0.0
    %1647 = vmatpush1.msra.mxu0 0.0
    %1648 = vmatprep.subr.mxu0 0.0
    %1649 = vmatpush1.msra.mxu0 0.0
    %1650 = vmatprep.subr.mxu0 0.0
    %1651 = vmatpush1.msra.mxu0 0.0
    %1652 = vmatprep.subr.mxu0 0.0
    %1653 = vmatpush1.msra.mxu0 0.0
    %1654 = vmatprep.subr.mxu0 0.0
    %1655 = vmatpush1.msra.mxu0 0.0
    %1656 = vmatprep.subr.mxu0 0.0
    %1657 = vmatpush1.msra.mxu0 0.0
    %1658 = vmatprep.subr.mxu0 0.0
    %1659 = vmatpush1.msra.mxu0 0.0
    %1660 = vmatprep.subr.mxu0 0.0
    %1661 = vmatpush1.msra.mxu0 0.0
    %1662 = vmatprep.subr.mxu0 0.0
    %1663 = vmatpush1.msra.mxu0 0.0
    %1664 = vmatprep.subr.mxu0 0.0
    %1665 = vmatpush1.msra.mxu0 0.0
    %1666 = vmatprep.mubr.f32.mxu0 0.0
    %1667 = vmatmul.mubr.f32.gmra.mrb[0].mxu0 %v1231
    %v1668 = vpop.f32.mrb[0].mxu0
    %v1669 = vadd.f32 0.0, %v1668
    %v1670 = vpop.f32.mrb[0].mxu0
    %1671 = vmatprep.mubr.f32.mxu0 0.0
    %1672 = vmatmul.mubr.f32.gmra.mrb[0].mxu0 %v1233
    %v1673 = vpop.f32.mrb[0].mxu0
    %v1674 = vadd.f32 0.0, %v1673
    %v1675 = vpop.f32.mrb[0].mxu0
    %1676 = vmatprep.mubr.f32.mxu0 0.0
    %1677 = vmatmul.mubr.f32.gmra.mrb[0].mxu0 %v1235
    %v1678 = vpop.f32.mrb[0].mxu0
    %v1679 = vadd.f32 0.0, %v1678
    %v1680 = vpop.f32.mrb[0].mxu0
    %1681 = vmatprep.mubr.f32.mxu0 0.0
    %1682 = vmatmul.mubr.f32.gmra.mrb[0].mxu0 %v1237
    %v1683 = vpop.f32.mrb[0].mxu0
    %v1684 = vadd.f32 0.0, %v1683
    %v1685 = vpop.f32.mrb[0].mxu0
    %1686 = vmatprep.mubr.f32.mxu0 0.0
    %1687 = vmatmul.mubr.f32.gmra.mrb[0].mxu0 %v1239
    %v1688 = vpop.f32.mrb[0].mxu0
    %v1689 = vadd.f32 0.0, %v1688
    %v1690 = vpop.f32.mrb[0].mxu0
    %1691 = vmatprep.mubr.f32.mxu0 0.0
    %1692 = vmatmul.mubr.f32.gmra.mrb[0].mxu0 %v1241
    %v1693 = vpop.f32.mrb[0].mxu0
    %v1694 = vadd.f32 0.0, %v1693
    %v1695 = vpop.f32.mrb[0].mxu0
    %1696 = vmatprep.mubr.f32.mxu0 0.0
    %1697 = vmatmul.mubr.f32.gmra.mrb[0].mxu0 %v1243
    %v1698 = vpop.f32.mrb[0].mxu0
    %v1699 = vadd.f32 0.0, %v1698
    %v1700 = vpop.f32.mrb[0].mxu0
    %1701 = vmatprep.mubr.f32.mxu0 0.0
    %1702 = vmatmul.mubr.f32.gmra.mrb[0].mxu0 %v1245
    %v1703 = vpop.f32.mrb[0].mxu0
    %v1704 = vadd.f32 0.0, %v1703
    %v1705 = vpop.f32.mrb[0].mxu0
    %1706 = vmatprep.mubr.f32.mxu0 0.0
    %1707 = vmatmul.mubr.f32.gmra.mrb[0].mxu0 %v1247
    %v1708 = vpop.f32.mrb[0].mxu0
    %v1709 = vadd.f32 0.0, %v1708
    %v1710 = vpop.f32.mrb[0].mxu0
    %1711 = vmatprep.mubr.f32.mxu0 0.0
    %1712 = vmatmul.mubr.f32.gmra.mrb[0].mxu0 %v1249
    %v1713 = vpop.f32.mrb[0].mxu0
    %v1714 = vadd.f32 0.0, %v1713
    %v1715 = vpop.f32.mrb[0].mxu0
    %1716 = vmatprep.mubr.f32.mxu0 0.0
    %1717 = vmatmul.mubr.f32.gmra.mrb[0].mxu0 %v1251
    %v1718 = vpop.f32.mrb[0].mxu0
    %v1719 = vadd.f32 0.0, %v1718
    %v1720 = vpop.f32.mrb[0].mxu0
    %1721 = vmatprep.mubr.f32.mxu0 0.0
    %1722 = vmatmul.mubr.f32.gmra.mrb[0].mxu0 %v1253
    %v1723 = vpop.f32.mrb[0].mxu0
    %v1724 = vadd.f32 0.0, %v1723
    %v1725 = vpop.f32.mrb[0].mxu0
    %1726 = vmatprep.mubr.f32.mxu0 0.0
    %1727 = vmatmul.mubr.f32.gmra.mrb[0].mxu0 %v1255
    %v1728 = vpop.f32.mrb[0].mxu0
    %v1729 = vadd.f32 0.0, %v1728
    %v1730 = vpop.f32.mrb[0].mxu0
    %1731 = vmatprep.mubr.f32.mxu0 0.0
    %1732 = vmatmul.mubr.f32.gmra.mrb[0].mxu0 %v1257
    %v1733 = vpop.f32.mrb[0].mxu0
    %v1734 = vadd.f32 0.0, %v1733
    %v1735 = vpop.f32.mrb[0].mxu0
    %1736 = vmatprep.mubr.f32.mxu0 0.0
    %1737 = vmatmul.mubr.f32.gmra.mrb[0].mxu0 %v1259
    %v1738 = vpop.f32.mrb[0].mxu0
    %v1739 = vadd.f32 0.0, %v1738
    %v1740 = vpop.f32.mrb[0].mxu0
    %1741 = vmatprep.mubr.f32.mxu0 0.0
    %1742 = vmatmul.mubr.f32.gmra.mrb[0].mxu0 %v1261
    %v1743 = vpop.f32.mrb[0].mxu0
    %v1744 = vadd.f32 0.0, %v1743
    %v1745 = vpop.f32.mrb[0].mxu0
    %1746 = vdwg.mxu0
    %v1747 = vadd.f32 %v1507, %v1669
    %v1748 = vadd.f32 %v1512, %v1674
    %v1749 = vadd.f32 %v1517, %v1679
    %v1750 = vadd.f32 %v1522, %v1684
    %v1751 = vadd.f32 %v1527, %v1689
    %v1752 = vadd.f32 %v1532, %v1694
    %v1753 = vadd.f32 %v1537, %v1699
    %v1754 = vadd.f32 %v1542, %v1704
    %v1755 = vadd.f32 %v1547, %v1709
    %v1756 = vadd.f32 %v1552, %v1714
    %v1757 = vadd.f32 %v1557, %v1719
    %v1758 = vadd.f32 %v1562, %v1724
    %v1759 = vadd.f32 %v1567, %v1729
    %v1760 = vadd.f32 %v1572, %v1734
    %v1761 = vadd.f32 %v1577, %v1739
    %v1762 = vadd.f32 %v1582, %v1744
    %v1763 = vrot.slane %v466, 4
    %v1764 = vrot.slane %v467, 4
    %v1765 = vrot.slane %v468, 4
    %v1766 = vrot.slane %v469, 4
    %v1767 = vrot.slane %v470, 4
    %v1768 = vrot.slane %v471, 4
    %v1769 = vrot.slane %v472, 4
    %v1770 = vrot.slane %v473, 4
    %v1771 = vrot.slane %v474, 4
    %v1772 = vrot.slane %v475, 4
    %v1773 = vrot.slane %v476, 4
    %v1774 = vrot.slane %v477, 4
    %v1775 = vrot.slane %v478, 4
    %v1776 = vrot.slane %v479, 4
    %v1777 = vrot.slane %v480, 4
    %v1778 = vrot.slane %v481, 4
    %v1779 = vrot.slane %v482, 4
    %v1780 = vrot.slane %v483, 4
    %v1781 = vrot.slane %v484, 4
    %v1782 = vrot.slane %v485, 4
    %v1783 = vrot.slane %v486, 4
    %v1784 = vrot.slane %v487, 4
    %v1785 = vrot.slane %v488, 4
    %v1786 = vrot.slane %v489, 4
    %v1787 = vrot.slane %v490, 4
    %v1788 = vrot.slane %v491, 4
    %v1789 = vrot.slane %v492, 4
    %v1790 = vrot.slane %v493, 4
    %v1791 = vrot.slane %v494, 4
    %v1792 = vrot.slane %v495, 4
    %v1793 = vrot.slane %v496, 4
    %v1794 = vrot.slane %v497, 4
    %v1827 = vsel %vm273, %v563, %v629
    %v1828 = vsel %vm273, %v564, %v630
    %v1829 = vsel %vm273, %v565, %v631
    %v1830 = vsel %vm273, %v566, %v632
    %v1831 = vsel %vm273, %v567, %v633
    %v1832 = vsel %vm273, %v568, %v634
    %v1833 = vsel %vm273, %v569, %v635
    %v1834 = vsel %vm273, %v570, %v636
    %v1835 = vsel %vm273, %v571, %v637
    %v1836 = vsel %vm273, %v572, %v638
    %v1837 = vsel %vm273, %v573, %v639
    %v1838 = vsel %vm273, %v574, %v640
    %v1839 = vsel %vm273, %v575, %v641
    %v1840 = vsel %vm273, %v576, %v642
    %v1841 = vsel %vm273, %v577, %v643
    %v1842 = vsel %vm273, %v578, %v644
    %v1843 = vsel %vm273, %v579, %v645
    %v1844 = vsel %vm273, %v580, %v646
    %v1845 = vsel %vm273, %v581, %v647
    %v1846 = vsel %vm273, %v582, %v648
    %v1847 = vsel %vm273, %v583, %v649
    %v1848 = vsel %vm273, %v584, %v650
    %v1849 = vsel %vm273, %v585, %v651
    %v1850 = vsel %vm273, %v586, %v652
    %v1851 = vsel %vm273, %v587, %v653
    %v1852 = vsel %vm273, %v588, %v654
    %v1853 = vsel %vm273, %v589, %v655
    %v1854 = vsel %vm273, %v590, %v656
    %v1855 = vsel %vm273, %v591, %v657
    %v1856 = vsel %vm273, %v592, %v658
    %v1857 = vsel %vm273, %v593, %v659
    %v1858 = vsel %vm273, %v594, %v660
    %v1859 = vsel %vm273, %v595, %v661
    %v1860 = vsel %vm1058, %v1827, %v695
    %v1861 = vsel %vm1058, %v1828, %v696
    %v1862 = vsel %vm1058, %v1829, %v697
    %v1863 = vsel %vm1058, %v1830, %v698
    %v1864 = vsel %vm1058, %v1831, %v699
    %v1865 = vsel %vm1058, %v1832, %v700
    %v1866 = vsel %vm1058, %v1833, %v701
    %v1867 = vsel %vm1058, %v1834, %v702
    %v1868 = vsel %vm1058, %v1835, %v703
    %v1869 = vsel %vm1058, %v1836, %v704
    %v1870 = vsel %vm1058, %v1837, %v705
    %v1871 = vsel %vm1058, %v1838, %v706
    %v1872 = vsel %vm1058, %v1839, %v707
    %v1873 = vsel %vm1058, %v1840, %v708
    %v1874 = vsel %vm1058, %v1841, %v709
    %v1875 = vsel %vm1058, %v1842, %v710
    %v1876 = vsel %vm1058, %v1843, %v711
    %v1877 = vsel %vm1058, %v1844, %v712
    %v1878 = vsel %vm1058, %v1845, %v713
    %v1879 = vsel %vm1058, %v1846, %v714
    %v1880 = vsel %vm1058, %v1847, %v715
    %v1881 = vsel %vm1058, %v1848, %v716
    %v1882 = vsel %vm1058, %v1849, %v717
    %v1883 = vsel %vm1058, %v1850, %v718
    %v1884 = vsel %vm1058, %v1851, %v719
    %v1885 = vsel %vm1058, %v1852, %v720
    %v1886 = vsel %vm1058, %v1853, %v721
    %v1887 = vsel %vm1058, %v1854, %v722
    %v1888 = vsel %vm1058, %v1855, %v723
    %v1889 = vsel %vm1058, %v1856, %v724
    %v1890 = vsel %vm1058, %v1857, %v725
    %v1891 = vsel %vm1058, %v1858, %v726
    %v1892 = vsel %vm1058, %v1859, %v727
    %v1893 = vsel %vm1092, %v1860, %v761
    %v1894 = vsel %vm1092, %v1861, %v1763
    %v1895 = vsel %vm1092, %v1862, %v1764
    %v1896 = vsel %vm1092, %v1863, %v1765
    %v1897 = vsel %vm1092, %v1864, %v1766
    %v1898 = vsel %vm1092, %v1865, %v1767
    %v1899 = vsel %vm1092, %v1866, %v1768
    %v1900 = vsel %vm1092, %v1867, %v1769
    %v1901 = vsel %vm1092, %v1868, %v1770
    %v1902 = vsel %vm1092, %v1869, %v1771
    %v1903 = vsel %vm1092, %v1870, %v1772
    %v1904 = vsel %vm1092, %v1871, %v1773
    %v1905 = vsel %vm1092, %v1872, %v1774
    %v1906 = vsel %vm1092, %v1873, %v1775
    %v1907 = vsel %vm1092, %v1874, %v1776
    %v1908 = vsel %vm1092, %v1875, %v1777
    %v1909 = vsel %vm1092, %v1876, %v1778
    %v1910 = vsel %vm1092, %v1877, %v1779
    %v1911 = vsel %vm1092, %v1878, %v1780
    %v1912 = vsel %vm1092, %v1879, %v1781
    %v1913 = vsel %vm1092, %v1880, %v1782
    %v1914 = vsel %vm1092, %v1881, %v1783
    %v1915 = vsel %vm1092, %v1882, %v1784
    %v1916 = vsel %vm1092, %v1883, %v1785
    %v1917 = vsel %vm1092, %v1884, %v1786
    %v1918 = vsel %vm1092, %v1885, %v1787
    %v1919 = vsel %vm1092, %v1886, %v1788
    %v1920 = vsel %vm1092, %v1887, %v1789
    %v1921 = vsel %vm1092, %v1888, %v1790
    %v1922 = vsel %vm1092, %v1889, %v1791
    %v1923 = vsel %vm1092, %v1890, %v1792
    %v1924 = vsel %vm1092, %v1891, %v1793
    %v1925 = vsel %vm1092, %v1892, %v1794
    %v1926 = vsel %vm1126, %v1893, %v827
    %v1927 = vsel %vm1126, %v1894, %v828
    %v1928 = vsel %vm1126, %v1895, %v829
    %v1929 = vsel %vm1126, %v1896, %v830
    %v1930 = vsel %vm1126, %v1897, %v831
    %v1931 = vsel %vm1126, %v1898, %v832
    %v1932 = vsel %vm1126, %v1899, %v833
    %v1933 = vsel %vm1126, %v1900, %v834
    %v1934 = vsel %vm1126, %v1901, %v835
    %v1935 = vsel %vm1126, %v1902, %v836
    %v1936 = vsel %vm1126, %v1903, %v837
    %v1937 = vsel %vm1126, %v1904, %v838
    %v1938 = vsel %vm1126, %v1905, %v839
    %v1939 = vsel %vm1126, %v1906, %v840
    %v1940 = vsel %vm1126, %v1907, %v841
    %v1941 = vsel %vm1126, %v1908, %v842
    %v1942 = vsel %vm1126, %v1909, %v843
    %v1943 = vsel %vm1126, %v1910, %v844
    %v1944 = vsel %vm1126, %v1911, %v845
    %v1945 = vsel %vm1126, %v1912, %v846
    %v1946 = vsel %vm1126, %v1913, %v847
    %v1947 = vsel %vm1126, %v1914, %v848
    %v1948 = vsel %vm1126, %v1915, %v849
    %v1949 = vsel %vm1126, %v1916, %v850
    %v1950 = vsel %vm1126, %v1917, %v851
    %v1951 = vsel %vm1126, %v1918, %v852
    %v1952 = vsel %vm1126, %v1919, %v853
    %v1953 = vsel %vm1126, %v1920, %v854
    %v1954 = vsel %vm1126, %v1921, %v855
    %v1955 = vsel %vm1126, %v1922, %v856
    %v1956 = vsel %vm1126, %v1923, %v857
    %v1957 = vsel %vm1126, %v1924, %v858
    %v1958 = vsel %vm1126, %v1925, %v859
    %v1959 = vsel %vm1160, %v1926, %v893
    %v1960 = vsel %vm1160, %v1927, %v894
    %v1961 = vsel %vm1160, %v1928, %v895
    %v1962 = vsel %vm1160, %v1929, %v896
    %v1963 = vsel %vm1160, %v1930, %v897
    %v1964 = vsel %vm1160, %v1931, %v898
    %v1965 = vsel %vm1160, %v1932, %v899
    %v1966 = vsel %vm1160, %v1933, %v900
    %v1967 = vsel %vm1160, %v1934, %v901
    %v1968 = vsel %vm1160, %v1935, %v902
    %v1969 = vsel %vm1160, %v1936, %v903
    %v1970 = vsel %vm1160, %v1937, %v904
    %v1971 = vsel %vm1160, %v1938, %v905
    %v1972 = vsel %vm1160, %v1939, %v906
    %v1973 = vsel %vm1160, %v1940, %v907
    %v1974 = vsel %vm1160, %v1941, %v908
    %v1975 = vsel %vm1160, %v1942, %v909
    %v1976 = vsel %vm1160, %v1943, %v910
    %v1977 = vsel %vm1160, %v1944, %v911
    %v1978 = vsel %vm1160, %v1945, %v912
    %v1979 = vsel %vm1160, %v1946, %v913
    %v1980 = vsel %vm1160, %v1947, %v914
    %v1981 = vsel %vm1160, %v1948, %v915
    %v1982 = vsel %vm1160, %v1949, %v916
    %v1983 = vsel %vm1160, %v1950, %v917
    %v1984 = vsel %vm1160, %v1951, %v918
    %v1985 = vsel %vm1160, %v1952, %v919
    %v1986 = vsel %vm1160, %v1953, %v920
    %v1987 = vsel %vm1160, %v1954, %v921
    %v1988 = vsel %vm1160, %v1955, %v922
    %v1989 = vsel %vm1160, %v1956, %v923
    %v1990 = vsel %vm1160, %v1957, %v924
    %v1991 = vsel %vm1160, %v1958, %v925
    %v1992 = vsel %vm1194, %v1959, %v959
    %v1993 = vsel %vm1194, %v1960, %v960
    %v1994 = vsel %vm1194, %v1961, %v961
    %v1995 = vsel %vm1194, %v1962, %v962
    %v1996 = vsel %vm1194, %v1963, %v963
    %v1997 = vsel %vm1194, %v1964, %v964
    %v1998 = vsel %vm1194, %v1965, %v965
    %v1999 = vsel %vm1194, %v1966, %v966
    %v2000 = vsel %vm1194, %v1967, %v967
    %v2001 = vsel %vm1194, %v1968, %v968
    %v2002 = vsel %vm1194, %v1969, %v969
    %v2003 = vsel %vm1194, %v1970, %v970
    %v2004 = vsel %vm1194, %v1971, %v971
    %v2005 = vsel %vm1194, %v1972, %v972
    %v2006 = vsel %vm1194, %v1973, %v973
    %v2007 = vsel %vm1194, %v1974, %v974
    %v2008 = vsel %vm1194, %v1975, %v975
    %v2009 = vsel %vm1194, %v1976, %v976
    %v2010 = vsel %vm1194, %v1977, %v977
    %v2011 = vsel %vm1194, %v1978, %v978
    %v2012 = vsel %vm1194, %v1979, %v979
    %v2013 = vsel %vm1194, %v1980, %v980
    %v2014 = vsel %vm1194, %v1981, %v981
    %v2015 = vsel %vm1194, %v1982, %v982
    %v2016 = vsel %vm1194, %v1983, %v983
    %v2017 = vsel %vm1194, %v1984, %v984
    %v2018 = vsel %vm1194, %v1985, %v985
    %v2019 = vsel %vm1194, %v1986, %v986
    %v2020 = vsel %vm1194, %v1987, %v987
    %v2021 = vsel %vm1194, %v1988, %v988
    %v2022 = vsel %vm1194, %v1989, %v989
    %v2023 = vsel %vm1194, %v1990, %v990
    %v2024 = vsel %vm1194, %v1991, %v991
    %v2025 = vsel %vm1228, %v1992, 0.0
    %v2026 = vsel %vm1228, %v1993, %v276
    %v2027 = vsel %vm1228, %v1994, %v279
    %v2028 = vsel %vm1228, %v1995, %v282
    %v2029 = vsel %vm1228, %v1996, %v285
    %v2030 = vsel %vm1228, %v1997, %v288
    %v2031 = vsel %vm1228, %v1998, %v291
    %v2032 = vsel %vm1228, %v1999, %v294
    %v2033 = vsel %vm1228, %v2000, %v297
    %v2034 = vsel %vm1228, %v2001, %v300
    %v2035 = vsel %vm1228, %v2002, %v303
    %v2036 = vsel %vm1228, %v2003, %v306
    %v2037 = vsel %vm1228, %v2004, %v309
    %v2038 = vsel %vm1228, %v2005, %v312
    %v2039 = vsel %vm1228, %v2006, %v315
    %v2040 = vsel %vm1228, %v2007, %v318
    %v2041 = vsel %vm1228, %v2008, %v321
    %v2042 = vsel %vm1228, %v2009, %v324
    %v2043 = vsel %vm1228, %v2010, %v327
    %v2044 = vsel %vm1228, %v2011, %v330
    %v2045 = vsel %vm1228, %v2012, %v333
    %v2046 = vsel %vm1228, %v2013, %v336
    %v2047 = vsel %vm1228, %v2014, %v339
    %v2048 = vsel %vm1228, %v2015, %v342
    %v2049 = vsel %vm1228, %v2016, %v345
    %v2050 = vsel %vm1228, %v2017, %v348
    %v2051 = vsel %vm1228, %v2018, %v351
    %v2052 = vsel %vm1228, %v2019, %v354
    %v2053 = vsel %vm1228, %v2020, %v357
    %v2054 = vsel %vm1228, %v2021, %v360
    %v2055 = vsel %vm1228, %v2022, %v363
    %v2056 = vsel %vm1228, %v2023, %v366
    %v2057 = vsel %vm1228, %v2024, %v369
    %s2058 = scalar_lea.vmem [#allocation5], 128
    %v2059 = vld [vmem:[%s2058] sm:$0xff]
    %v2060 = vld [vmem:[%s2058 + $0x8] sm:$0xff]
    %v2061 = vld [vmem:[%s2058 + $0x10] sm:$0xff]
    %v2062 = vld [vmem:[%s2058 + $0x18] sm:$0xff]
    %v2063 = vld [vmem:[%s2058 + $0x20] sm:$0xff]
    %v2064 = vld [vmem:[%s2058 + $0x28] sm:$0xff]
    %v2065 = vld [vmem:[%s2058 + $0x30] sm:$0xff]
    %v2066 = vld [vmem:[%s2058 + $0x38] sm:$0xff]
    %v2067 = vld [vmem:[%s2058 + $0x40] sm:$0xff]
    %v2068 = vld [vmem:[%s2058 + $0x48] sm:$0xff]
    %v2069 = vld [vmem:[%s2058 + $0x50] sm:$0xff]
    %v2070 = vld [vmem:[%s2058 + $0x58] sm:$0xff]
    %v2071 = vld [vmem:[%s2058 + $0x60] sm:$0xff]
    %v2072 = vld [vmem:[%s2058 + $0x68] sm:$0xff]
    %v2073 = vld [vmem:[%s2058 + $0x70] sm:$0xff]
    %v2074 = vld [vmem:[%s2058 + $0x78] sm:$0xff]
    %2075 = vmatprep.subr.mxu0 0.0
    %2076 = vmatpush1.msra.mxu0 %v2059
    %2077 = vmatprep.subr.mxu0 0.0
    %2078 = vmatpush1.msra.mxu0 %v2060
    %2079 = vmatprep.subr.mxu0 0.0
    %2080 = vmatpush1.msra.mxu0 %v2061
    %2081 = vmatprep.subr.mxu0 0.0
    %2082 = vmatpush1.msra.mxu0 %v2062
    %2083 = vmatprep.subr.mxu0 0.0
    %2084 = vmatpush1.msra.mxu0 %v2063
    %2085 = vmatprep.subr.mxu0 0.0
    %2086 = vmatpush1.msra.mxu0 %v2064
    %2087 = vmatprep.subr.mxu0 0.0
    %2088 = vmatpush1.msra.mxu0 %v2065
    %2089 = vmatprep.subr.mxu0 0.0
    %2090 = vmatpush1.msra.mxu0 %v2066
    %2091 = vmatprep.subr.mxu0 0.0
    %2092 = vmatpush1.msra.mxu0 %v2067
    %2093 = vmatprep.subr.mxu0 0.0
    %2094 = vmatpush1.msra.mxu0 %v2068
    %2095 = vmatprep.subr.mxu0 0.0
    %2096 = vmatpush1.msra.mxu0 %v2069
    %2097 = vmatprep.subr.mxu0 0.0
    %2098 = vmatpush1.msra.mxu0 %v2070
    %2099 = vmatprep.subr.mxu0 0.0
    %2100 = vmatpush1.msra.mxu0 %v2071
    %2101 = vmatprep.subr.mxu0 0.0
    %2102 = vmatpush1.msra.mxu0 %v2072
    %2103 = vmatprep.subr.mxu0 0.0
    %2104 = vmatpush1.msra.mxu0 %v2073
    %2105 = vmatprep.subr.mxu0 0.0
    %2106 = vmatpush1.msra.mxu0 %v2074
    %2107 = vmatprep.subr.mxu0 0.0
    %2108 = vmatpush1.msra.mxu0 0.0
    %2109 = vmatprep.subr.mxu0 0.0
    %2110 = vmatpush1.msra.mxu0 0.0
    %2111 = vmatprep.subr.mxu0 0.0
    %2112 = vmatpush1.msra.mxu0 0.0
    %2113 = vmatprep.subr.mxu0 0.0
    %2114 = vmatpush1.msra.mxu0 0.0
    %2115 = vmatprep.subr.mxu0 0.0
    %2116 = vmatpush1.msra.mxu0 0.0
    %2117 = vmatprep.subr.mxu0 0.0
    %2118 = vmatpush1.msra.mxu0 0.0
    %2119 = vmatprep.subr.mxu0 0.0
    %2120 = vmatpush1.msra.mxu0 0.0
    %2121 = vmatprep.subr.mxu0 0.0
    %2122 = vmatpush1.msra.mxu0 0.0
    %2123 = vmatprep.subr.mxu0 0.0
    %2124 = vmatpush1.msra.mxu0 0.0
    %2125 = vmatprep.subr.mxu0 0.0
    %2126 = vmatpush1.msra.mxu0 0.0
    %2127 = vmatprep.subr.mxu0 0.0
    %2128 = vmatpush1.msra.mxu0 0.0
    %2129 = vmatprep.subr.mxu0 0.0
    %2130 = vmatpush1.msra.mxu0 0.0
    %2131 = vmatprep.subr.mxu0 0.0
    %2132 = vmatpush1.msra.mxu0 0.0
    %2133 = vmatprep.subr.mxu0 0.0
    %2134 = vmatpush1.msra.mxu0 0.0
    %2135 = vmatprep.subr.mxu0 0.0
    %2136 = vmatpush1.msra.mxu0 0.0
    %2137 = vmatprep.subr.mxu0 0.0
    %2138 = vmatpush1.msra.mxu0 0.0
    %2139 = vmatprep.mubr.f32.mxu0 0.0
    %2140 = vmatmul.mubr.f32.gmra.mrb[0].mxu0 %v2025
    %v2141 = vpop.f32.mrb[0].mxu0
    %v2142 = vadd.f32 0.0, %v2141
    %v2143 = vpop.f32.mrb[0].mxu0
    %2144 = vmatprep.mubr.f32.mxu0 0.0
    %2145 = vmatmul.mubr.f32.gmra.mrb[0].mxu0 %v2027
    %v2146 = vpop.f32.mrb[0].mxu0
    %v2147 = vadd.f32 0.0, %v2146
    %v2148 = vpop.f32.mrb[0].mxu0
    %2149 = vmatprep.mubr.f32.mxu0 0.0
    %2150 = vmatmul.mubr.f32.gmra.mrb[0].mxu0 %v2029
    %v2151 = vpop.f32.mrb[0].mxu0
    %v2152 = vadd.f32 0.0, %v2151
    %v2153 = vpop.f32.mrb[0].mxu0
    %2154 = vmatprep.mubr.f32.mxu0 0.0
    %2155 = vmatmul.mubr.f32.gmra.mrb[0].mxu0 %v2031
    %v2156 = vpop.f32.mrb[0].mxu0
    %v2157 = vadd.f32 0.0, %v2156
    %v2158 = vpop.f32.mrb[0].mxu0
    %2159 = vmatprep.mubr.f32.mxu0 0.0
    %2160 = vmatmul.mubr.f32.gmra.mrb[0].mxu0 %v2033
    %v2161 = vpop.f32.mrb[0].mxu0
    %v2162 = vadd.f32 0.0, %v2161
    %v2163 = vpop.f32.mrb[0].mxu0
    %2164 = vmatprep.mubr.f32.mxu0 0.0
    %2165 = vmatmul.mubr.f32.gmra.mrb[0].mxu0 %v2035
    %v2166 = vpop.f32.mrb[0].mxu0
    %v2167 = vadd.f32 0.0, %v2166
    %v2168 = vpop.f32.mrb[0].mxu0
    %2169 = vmatprep.mubr.f32.mxu0 0.0
    %2170 = vmatmul.mubr.f32.gmra.mrb[0].mxu0 %v2037
    %v2171 = vpop.f32.mrb[0].mxu0
    %v2172 = vadd.f32 0.0, %v2171
    %v2173 = vpop.f32.mrb[0].mxu0
    %2174 = vmatprep.mubr.f32.mxu0 0.0
    %2175 = vmatmul.mubr.f32.gmra.mrb[0].mxu0 %v2039
    %v2176 = vpop.f32.mrb[0].mxu0
    %v2177 = vadd.f32 0.0, %v2176
    %v2178 = vpop.f32.mrb[0].mxu0
    %2179 = vmatprep.mubr.f32.mxu0 0.0
    %2180 = vmatmul.mubr.f32.gmra.mrb[0].mxu0 %v2025
    %v2181 = vpop.f32.mrb[0].mxu0
    %v2182 = vadd.f32 0.0, %v2181
    %v2183 = vpop.f32.mrb[0].mxu0
    %2184 = vmatprep.mubr.f32.mxu0 0.0
    %2185 = vmatmul.mubr.f32.gmra.mrb[0].mxu0 %v2043
    %v2186 = vpop.f32.mrb[0].mxu0
    %v2187 = vadd.f32 0.0, %v2186
    %v2188 = vpop.f32.mrb[0].mxu0
    %2189 = vmatprep.mubr.f32.mxu0 0.0
    %2190 = vmatmul.mubr.f32.gmra.mrb[0].mxu0 %v2045
    %v2191 = vpop.f32.mrb[0].mxu0
    %v2192 = vadd.f32 0.0, %v2191
    %v2193 = vpop.f32.mrb[0].mxu0
    %2194 = vmatprep.mubr.f32.mxu0 0.0
    %2195 = vmatmul.mubr.f32.gmra.mrb[0].mxu0 %v2047
    %v2196 = vpop.f32.mrb[0].mxu0
    %v2197 = vadd.f32 0.0, %v2196
    %v2198 = vpop.f32.mrb[0].mxu0
    %2199 = vmatprep.mubr.f32.mxu0 0.0
    %2200 = vmatmul.mubr.f32.gmra.mrb[0].mxu0 %v2049
    %v2201 = vpop.f32.mrb[0].mxu0
    %v2202 = vadd.f32 0.0, %v2201
    %v2203 = vpop.f32.mrb[0].mxu0
    %2204 = vmatprep.mubr.f32.mxu0 0.0
    %2205 = vmatmul.mubr.f32.gmra.mrb[0].mxu0 %v2051
    %v2206 = vpop.f32.mrb[0].mxu0
    %v2207 = vadd.f32 0.0, %v2206
    %v2208 = vpop.f32.mrb[0].mxu0
    %2209 = vmatprep.mubr.f32.mxu0 0.0
    %2210 = vmatmul.mubr.f32.gmra.mrb[0].mxu0 %v2053
    %v2211 = vpop.f32.mrb[0].mxu0
    %v2212 = vadd.f32 0.0, %v2211
    %v2213 = vpop.f32.mrb[0].mxu0
    %2214 = vmatprep.mubr.f32.mxu0 0.0
    %2215 = vmatmul.mubr.f32.gmra.mrb[0].mxu0 %v2055
    %v2216 = vpop.f32.mrb[0].mxu0
    %v2217 = vadd.f32 0.0, %v2216
    %v2218 = vpop.f32.mrb[0].mxu0
    %2219 = vdwg.mxu0
    %v2220 = vadd.f32 %v1747, %v2142
    %v2221 = vadd.f32 %v1748, %v2147
    %v2222 = vadd.f32 %v1749, %v2152
    %v2223 = vadd.f32 %v1750, %v2157
    %v2224 = vadd.f32 %v1751, %v2162
    %v2225 = vadd.f32 %v1752, %v2167
    %v2226 = vadd.f32 %v1753, %v2172
    %v2227 = vadd.f32 %v1754, %v2177
    %v2228 = vadd.f32 %v1755, %v2182
    %v2229 = vadd.f32 %v1756, %v2187
    %v2230 = vadd.f32 %v1757, %v2192
    %v2231 = vadd.f32 %v1758, %v2197
    %v2232 = vadd.f32 %v1759, %v2202
    %v2233 = vadd.f32 %v1760, %v2207
    %v2234 = vadd.f32 %v1761, %v2212
    %v2235 = vadd.f32 %v1762, %v2217
    %s2236 = scalar_lea.vmem [#allocation5], 512
    %v2237 = vld [vmem:[%s2236] sm:$0xff]
    %v2238 = vld [vmem:[%s2236 + $0x8] sm:$0xff]
    %v2239 = vld [vmem:[%s2236 + $0x10] sm:$0xff]
    %v2240 = vld [vmem:[%s2236 + $0x18] sm:$0xff]
    %v2241 = vld [vmem:[%s2236 + $0x20] sm:$0xff]
    %v2242 = vld [vmem:[%s2236 + $0x28] sm:$0xff]
    %v2243 = vld [vmem:[%s2236 + $0x30] sm:$0xff]
    %v2244 = vld [vmem:[%s2236 + $0x38] sm:$0xff]
    %v2245 = vld [vmem:[%s2236 + $0x40] sm:$0xff]
    %v2246 = vld [vmem:[%s2236 + $0x48] sm:$0xff]
    %v2247 = vld [vmem:[%s2236 + $0x50] sm:$0xff]
    %v2248 = vld [vmem:[%s2236 + $0x58] sm:$0xff]
    %v2249 = vld [vmem:[%s2236 + $0x60] sm:$0xff]
    %v2250 = vld [vmem:[%s2236 + $0x68] sm:$0xff]
    %v2251 = vld [vmem:[%s2236 + $0x70] sm:$0xff]
    %v2252 = vld [vmem:[%s2236 + $0x78] sm:$0xff]
    %2253 = vmatprep.subr.mxu0 0.0
    %2254 = vmatpush1.msra.mxu0 %v2237
    %2255 = vmatprep.subr.mxu0 0.0
    %2256 = vmatpush1.msra.mxu0 %v2238
    %2257 = vmatprep.subr.mxu0 0.0
    %2258 = vmatpush1.msra.mxu0 %v2239
    %2259 = vmatprep.subr.mxu0 0.0
    %2260 = vmatpush1.msra.mxu0 %v2240
    %2261 = vmatprep.subr.mxu0 0.0
    %2262 = vmatpush1.msra.mxu0 %v2241
    %2263 = vmatprep.subr.mxu0 0.0
    %2264 = vmatpush1.msra.mxu0 %v2242
    %2265 = vmatprep.subr.mxu0 0.0
    %2266 = vmatpush1.msra.mxu0 %v2243
    %2267 = vmatprep.subr.mxu0 0.0
    %2268 = vmatpush1.msra.mxu0 %v2244
    %2269 = vmatprep.subr.mxu0 0.0
    %2270 = vmatpush1.msra.mxu0 %v2245
    %2271 = vmatprep.subr.mxu0 0.0
    %2272 = vmatpush1.msra.mxu0 %v2246
    %2273 = vmatprep.subr.mxu0 0.0
    %2274 = vmatpush1.msra.mxu0 %v2247
    %2275 = vmatprep.subr.mxu0 0.0
    %2276 = vmatpush1.msra.mxu0 %v2248
    %2277 = vmatprep.subr.mxu0 0.0
    %2278 = vmatpush1.msra.mxu0 %v2249
    %2279 = vmatprep.subr.mxu0 0.0
    %2280 = vmatpush1.msra.mxu0 %v2250
    %2281 = vmatprep.subr.mxu0 0.0
    %2282 = vmatpush1.msra.mxu0 %v2251
    %2283 = vmatprep.subr.mxu0 0.0
    %2284 = vmatpush1.msra.mxu0 %v2252
    %2285 = vmatprep.subr.mxu0 0.0
    %2286 = vmatpush1.msra.mxu0 0.0
    %2287 = vmatprep.subr.mxu0 0.0
    %2288 = vmatpush1.msra.mxu0 0.0
    %2289 = vmatprep.subr.mxu0 0.0
    %2290 = vmatpush1.msra.mxu0 0.0
    %2291 = vmatprep.subr.mxu0 0.0
    %2292 = vmatpush1.msra.mxu0 0.0
    %2293 = vmatprep.subr.mxu0 0.0
    %2294 = vmatpush1.msra.mxu0 0.0
    %2295 = vmatprep.subr.mxu0 0.0
    %2296 = vmatpush1.msra.mxu0 0.0
    %2297 = vmatprep.subr.mxu0 0.0
    %2298 = vmatpush1.msra.mxu0 0.0
    %2299 = vmatprep.subr.mxu0 0.0
    %2300 = vmatpush1.msra.mxu0 0.0
    %2301 = vmatprep.subr.mxu0 0.0
    %2302 = vmatpush1.msra.mxu0 0.0
    %2303 = vmatprep.subr.mxu0 0.0
    %2304 = vmatpush1.msra.mxu0 0.0
    %2305 = vmatprep.subr.mxu0 0.0
    %2306 = vmatpush1.msra.mxu0 0.0
    %2307 = vmatprep.subr.mxu0 0.0
    %2308 = vmatpush1.msra.mxu0 0.0
    %2309 = vmatprep.subr.mxu0 0.0
    %2310 = vmatpush1.msra.mxu0 0.0
    %2311 = vmatprep.subr.mxu0 0.0
    %2312 = vmatpush1.msra.mxu0 0.0
    %2313 = vmatprep.subr.mxu0 0.0
    %2314 = vmatpush1.msra.mxu0 0.0
    %2315 = vmatprep.subr.mxu0 0.0
    %2316 = vmatpush1.msra.mxu0 0.0
    %2317 = vmatprep.mubr.f32.mxu0 0.0
    %2318 = vmatmul.mubr.f32.gmra.mrb[0].mxu0 %v2026
    %v2319 = vpop.f32.mrb[0].mxu0
    %v2320 = vadd.f32 0.0, %v2319
    %v2321 = vpop.f32.mrb[0].mxu0
    %2322 = vmatprep.mubr.f32.mxu0 0.0
    %2323 = vmatmul.mubr.f32.gmra.mrb[0].mxu0 %v2028
    %v2324 = vpop.f32.mrb[0].mxu0
    %v2325 = vadd.f32 0.0, %v2324
    %v2326 = vpop.f32.mrb[0].mxu0
    %2327 = vmatprep.mubr.f32.mxu0 0.0
    %2328 = vmatmul.mubr.f32.gmra.mrb[0].mxu0 %v2030
    %v2329 = vpop.f32.mrb[0].mxu0
    %v2330 = vadd.f32 0.0, %v2329
    %v2331 = vpop.f32.mrb[0].mxu0
    %2332 = vmatprep.mubr.f32.mxu0 0.0
    %2333 = vmatmul.mubr.f32.gmra.mrb[0].mxu0 %v2032
    %v2334 = vpop.f32.mrb[0].mxu0
    %v2335 = vadd.f32 0.0, %v2334
    %v2336 = vpop.f32.mrb[0].mxu0
    %2337 = vmatprep.mubr.f32.mxu0 0.0
    %2338 = vmatmul.mubr.f32.gmra.mrb[0].mxu0 %v2034
    %v2339 = vpop.f32.mrb[0].mxu0
    %v2340 = vadd.f32 0.0, %v2339
    %v2341 = vpop.f32.mrb[0].mxu0
    %2342 = vmatprep.mubr.f32.mxu0 0.0
    %2343 = vmatmul.mubr.f32.gmra.mrb[0].mxu0 %v2036
    %v2344 = vpop.f32.mrb[0].mxu0
    %v2345 = vadd.f32 0.0, %v2344
    %v2346 = vpop.f32.mrb[0].mxu0
    %2347 = vmatprep.mubr.f32.mxu0 0.0
    %2348 = vmatmul.mubr.f32.gmra.mrb[0].mxu0 %v2038
    %v2349 = vpop.f32.mrb[0].mxu0
    %v2350 = vadd.f32 0.0, %v2349
    %v2351 = vpop.f32.mrb[0].mxu0
    %2352 = vmatprep.mubr.f32.mxu0 0.0
    %2353 = vmatmul.mubr.f32.gmra.mrb[0].mxu0 %v2040
    %v2354 = vpop.f32.mrb[0].mxu0
    %v2355 = vadd.f32 0.0, %v2354
    %v2356 = vpop.f32.mrb[0].mxu0
    %2357 = vmatprep.mubr.f32.mxu0 0.0
    %2358 = vmatmul.mubr.f32.gmra.mrb[0].mxu0 %v2042
    %v2359 = vpop.f32.mrb[0].mxu0
    %v2360 = vadd.f32 0.0, %v2359
    %v2361 = vpop.f32.mrb[0].mxu0
    %2362 = vmatprep.mubr.f32.mxu0 0.0
    %2363 = vmatmul.mubr.f32.gmra.mrb[0].mxu0 %v2044
    %v2364 = vpop.f32.mrb[0].mxu0
    %v2365 = vadd.f32 0.0, %v2364
    %v2366 = vpop.f32.mrb[0].mxu0
    %2367 = vmatprep.mubr.f32.mxu0 0.0
    %2368 = vmatmul.mubr.f32.gmra.mrb[0].mxu0 %v2046
    %v2369 = vpop.f32.mrb[0].mxu0
    %v2370 = vadd.f32 0.0, %v2369
    %v2371 = vpop.f32.mrb[0].mxu0
    %2372 = vmatprep.mubr.f32.mxu0 0.0
    %2373 = vmatmul.mubr.f32.gmra.mrb[0].mxu0 %v2048
    %v2374 = vpop.f32.mrb[0].mxu0
    %v2375 = vadd.f32 0.0, %v2374
    %v2376 = vpop.f32.mrb[0].mxu0
    %2377 = vmatprep.mubr.f32.mxu0 0.0
    %2378 = vmatmul.mubr.f32.gmra.mrb[0].mxu0 %v2050
    %v2379 = vpop.f32.mrb[0].mxu0
    %v2380 = vadd.f32 0.0, %v2379
    %v2381 = vpop.f32.mrb[0].mxu0
    %2382 = vmatprep.mubr.f32.mxu0 0.0
    %2383 = vmatmul.mubr.f32.gmra.mrb[0].mxu0 %v2052
    %v2384 = vpop.f32.mrb[0].mxu0
    %v2385 = vadd.f32 0.0, %v2384
    %v2386 = vpop.f32.mrb[0].mxu0
    %2387 = vmatprep.mubr.f32.mxu0 0.0
    %2388 = vmatmul.mubr.f32.gmra.mrb[0].mxu0 %v2054
    %v2389 = vpop.f32.mrb[0].mxu0
    %v2390 = vadd.f32 0.0, %v2389
    %v2391 = vpop.f32.mrb[0].mxu0
    %2392 = vmatprep.mubr.f32.mxu0 0.0
    %2393 = vmatmul.mubr.f32.gmra.mrb[0].mxu0 %v2056
    %v2394 = vpop.f32.mrb[0].mxu0
    %v2395 = vadd.f32 0.0, %v2394
    %v2396 = vpop.f32.mrb[0].mxu0
    %2397 = vdwg.mxu0
    %v2398 = vadd.f32 %v2220, %v2320
    %v2399 = vadd.f32 %v2221, %v2325
    %v2400 = vadd.f32 %v2222, %v2330
    %v2401 = vadd.f32 %v2223, %v2335
    %v2402 = vadd.f32 %v2224, %v2340
    %v2403 = vadd.f32 %v2225, %v2345
    %v2404 = vadd.f32 %v2226, %v2350
    %v2405 = vadd.f32 %v2227, %v2355
    %v2406 = vadd.f32 %v2228, %v2360
    %v2407 = vadd.f32 %v2229, %v2365
    %v2408 = vadd.f32 %v2230, %v2370
    %v2409 = vadd.f32 %v2231, %v2375
    %v2410 = vadd.f32 %v2232, %v2380
    %v2411 = vadd.f32 %v2233, %v2385
    %v2412 = vadd.f32 %v2234, %v2390
    %v2413 = vadd.f32 %v2235, %v2395
    %s2414 = scalar_lea.vmem [#allocation5], 896
    %v2415 = vld [vmem:[%s2414] sm:$0xff]
    %v2416 = vld [vmem:[%s2414 + $0x8] sm:$0xff]
    %v2417 = vld [vmem:[%s2414 + $0x10] sm:$0xff]
    %v2418 = vld [vmem:[%s2414 + $0x18] sm:$0xff]
    %v2419 = vld [vmem:[%s2414 + $0x20] sm:$0xff]
    %v2420 = vld [vmem:[%s2414 + $0x28] sm:$0xff]
    %v2421 = vld [vmem:[%s2414 + $0x30] sm:$0xff]
    %v2422 = vld [vmem:[%s2414 + $0x38] sm:$0xff]
    %v2423 = vld [vmem:[%s2414 + $0x40] sm:$0xff]
    %v2424 = vld [vmem:[%s2414 + $0x48] sm:$0xff]
    %v2425 = vld [vmem:[%s2414 + $0x50] sm:$0xff]
    %v2426 = vld [vmem:[%s2414 + $0x58] sm:$0xff]
    %v2427 = vld [vmem:[%s2414 + $0x60] sm:$0xff]
    %v2428 = vld [vmem:[%s2414 + $0x68] sm:$0xff]
    %v2429 = vld [vmem:[%s2414 + $0x70] sm:$0xff]
    %v2430 = vld [vmem:[%s2414 + $0x78] sm:$0xff]
    %2431 = vmatprep.subr.mxu0 0.0
    %2432 = vmatpush1.msra.mxu0 %v2415
    %2433 = vmatprep.subr.mxu0 0.0
    %2434 = vmatpush1.msra.mxu0 %v2416
    %2435 = vmatprep.subr.mxu0 0.0
    %2436 = vmatpush1.msra.mxu0 %v2417
    %2437 = vmatprep.subr.mxu0 0.0
    %2438 = vmatpush1.msra.mxu0 %v2418
    %2439 = vmatprep.subr.mxu0 0.0
    %2440 = vmatpush1.msra.mxu0 %v2419
    %2441 = vmatprep.subr.mxu0 0.0
    %2442 = vmatpush1.msra.mxu0 %v2420
    %2443 = vmatprep.subr.mxu0 0.0
    %2444 = vmatpush1.msra.mxu0 %v2421
    %2445 = vmatprep.subr.mxu0 0.0
    %2446 = vmatpush1.msra.mxu0 %v2422
    %2447 = vmatprep.subr.mxu0 0.0
    %2448 = vmatpush1.msra.mxu0 %v2423
    %2449 = vmatprep.subr.mxu0 0.0
    %2450 = vmatpush1.msra.mxu0 %v2424
    %2451 = vmatprep.subr.mxu0 0.0
    %2452 = vmatpush1.msra.mxu0 %v2425
    %2453 = vmatprep.subr.mxu0 0.0
    %2454 = vmatpush1.msra.mxu0 %v2426
    %2455 = vmatprep.subr.mxu0 0.0
    %2456 = vmatpush1.msra.mxu0 %v2427
    %2457 = vmatprep.subr.mxu0 0.0
    %2458 = vmatpush1.msra.mxu0 %v2428
    %2459 = vmatprep.subr.mxu0 0.0
    %2460 = vmatpush1.msra.mxu0 %v2429
    %2461 = vmatprep.subr.mxu0 0.0
    %2462 = vmatpush1.msra.mxu0 %v2430
    %2463 = vmatprep.subr.mxu0 0.0
    %2464 = vmatpush1.msra.mxu0 0.0
    %2465 = vmatprep.subr.mxu0 0.0
    %2466 = vmatpush1.msra.mxu0 0.0
    %2467 = vmatprep.subr.mxu0 0.0
    %2468 = vmatpush1.msra.mxu0 0.0
    %2469 = vmatprep.subr.mxu0 0.0
    %2470 = vmatpush1.msra.mxu0 0.0
    %2471 = vmatprep.subr.mxu0 0.0
    %2472 = vmatpush1.msra.mxu0 0.0
    %2473 = vmatprep.subr.mxu0 0.0
    %2474 = vmatpush1.msra.mxu0 0.0
    %2475 = vmatprep.subr.mxu0 0.0
    %2476 = vmatpush1.msra.mxu0 0.0
    %2477 = vmatprep.subr.mxu0 0.0
    %2478 = vmatpush1.msra.mxu0 0.0
    %2479 = vmatprep.subr.mxu0 0.0
    %2480 = vmatpush1.msra.mxu0 0.0
    %2481 = vmatprep.subr.mxu0 0.0
    %2482 = vmatpush1.msra.mxu0 0.0
    %2483 = vmatprep.subr.mxu0 0.0
    %2484 = vmatpush1.msra.mxu0 0.0
    %2485 = vmatprep.subr.mxu0 0.0
    %2486 = vmatpush1.msra.mxu0 0.0
    %2487 = vmatprep.subr.mxu0 0.0
    %2488 = vmatpush1.msra.mxu0 0.0
    %2489 = vmatprep.subr.mxu0 0.0
    %2490 = vmatpush1.msra.mxu0 0.0
    %2491 = vmatprep.subr.mxu0 0.0
    %2492 = vmatpush1.msra.mxu0 0.0
    %2493 = vmatprep.subr.mxu0 0.0
    %2494 = vmatpush1.msra.mxu0 0.0
    %2495 = vmatprep.mubr.f32.mxu0 0.0
    %2496 = vmatmul.mubr.f32.gmra.mrb[0].mxu0 %v2027
    %v2497 = vpop.f32.mrb[0].mxu0
    %v2498 = vadd.f32 0.0, %v2497
    %v2499 = vpop.f32.mrb[0].mxu0
    %2500 = vmatprep.mubr.f32.mxu0 0.0
    %2501 = vmatmul.mubr.f32.gmra.mrb[0].mxu0 %v2029
    %v2502 = vpop.f32.mrb[0].mxu0
    %v2503 = vadd.f32 0.0, %v2502
    %v2504 = vpop.f32.mrb[0].mxu0
    %2505 = vmatprep.mubr.f32.mxu0 0.0
    %2506 = vmatmul.mubr.f32.gmra.mrb[0].mxu0 %v2031
    %v2507 = vpop.f32.mrb[0].mxu0
    %v2508 = vadd.f32 0.0, %v2507
    %v2509 = vpop.f32.mrb[0].mxu0
    %2510 = vmatprep.mubr.f32.mxu0 0.0
    %2511 = vmatmul.mubr.f32.gmra.mrb[0].mxu0 %v2033
    %v2512 = vpop.f32.mrb[0].mxu0
    %v2513 = vadd.f32 0.0, %v2512
    %v2514 = vpop.f32.mrb[0].mxu0
    %2515 = vmatprep.mubr.f32.mxu0 0.0
    %2516 = vmatmul.mubr.f32.gmra.mrb[0].mxu0 %v2035
    %v2517 = vpop.f32.mrb[0].mxu0
    %v2518 = vadd.f32 0.0, %v2517
    %v2519 = vpop.f32.mrb[0].mxu0
    %2520 = vmatprep.mubr.f32.mxu0 0.0
    %2521 = vmatmul.mubr.f32.gmra.mrb[0].mxu0 %v2037
    %v2522 = vpop.f32.mrb[0].mxu0
    %v2523 = vadd.f32 0.0, %v2522
    %v2524 = vpop.f32.mrb[0].mxu0
    %2525 = vmatprep.mubr.f32.mxu0 0.0
    %2526 = vmatmul.mubr.f32.gmra.mrb[0].mxu0 %v2039
    %v2527 = vpop.f32.mrb[0].mxu0
    %v2528 = vadd.f32 0.0, %v2527
    %v2529 = vpop.f32.mrb[0].mxu0
    %2530 = vmatprep.mubr.f32.mxu0 0.0
    %2531 = vmatmul.mubr.f32.gmra.mrb[0].mxu0 %v2041
    %v2532 = vpop.f32.mrb[0].mxu0
    %v2533 = vadd.f32 0.0, %v2532
    %v2534 = vpop.f32.mrb[0].mxu0
    %2535 = vmatprep.mubr.f32.mxu0 0.0
    %2536 = vmatmul.mubr.f32.gmra.mrb[0].mxu0 %v2043
    %v2537 = vpop.f32.mrb[0].mxu0
    %v2538 = vadd.f32 0.0, %v2537
    %v2539 = vpop.f32.mrb[0].mxu0
    %2540 = vmatprep.mubr.f32.mxu0 0.0
    %2541 = vmatmul.mubr.f32.gmra.mrb[0].mxu0 %v2045
    %v2542 = vpop.f32.mrb[0].mxu0
    %v2543 = vadd.f32 0.0, %v2542
    %v2544 = vpop.f32.mrb[0].mxu0
    %2545 = vmatprep.mubr.f32.mxu0 0.0
    %2546 = vmatmul.mubr.f32.gmra.mrb[0].mxu0 %v2047
    %v2547 = vpop.f32.mrb[0].mxu0
    %v2548 = vadd.f32 0.0, %v2547
    %v2549 = vpop.f32.mrb[0].mxu0
    %2550 = vmatprep.mubr.f32.mxu0 0.0
    %2551 = vmatmul.mubr.f32.gmra.mrb[0].mxu0 %v2049
    %v2552 = vpop.f32.mrb[0].mxu0
    %v2553 = vadd.f32 0.0, %v2552
    %v2554 = vpop.f32.mrb[0].mxu0
    %2555 = vmatprep.mubr.f32.mxu0 0.0
    %2556 = vmatmul.mubr.f32.gmra.mrb[0].mxu0 %v2051
    %v2557 = vpop.f32.mrb[0].mxu0
    %v2558 = vadd.f32 0.0, %v2557
    %v2559 = vpop.f32.mrb[0].mxu0
    %2560 = vmatprep.mubr.f32.mxu0 0.0
    %2561 = vmatmul.mubr.f32.gmra.mrb[0].mxu0 %v2053
    %v2562 = vpop.f32.mrb[0].mxu0
    %v2563 = vadd.f32 0.0, %v2562
    %v2564 = vpop.f32.mrb[0].mxu0
    %2565 = vmatprep.mubr.f32.mxu0 0.0
    %2566 = vmatmul.mubr.f32.gmra.mrb[0].mxu0 %v2055
    %v2567 = vpop.f32.mrb[0].mxu0
    %v2568 = vadd.f32 0.0, %v2567
    %v2569 = vpop.f32.mrb[0].mxu0
    %2570 = vmatprep.mubr.f32.mxu0 0.0
    %2571 = vmatmul.mubr.f32.gmra.mrb[0].mxu0 %v2057
    %v2572 = vpop.f32.mrb[0].mxu0
    %v2573 = vadd.f32 0.0, %v2572
    %v2574 = vpop.f32.mrb[0].mxu0
    %2575 = vdwg.mxu0
    %v2576 = vadd.f32 %v2398, %v2498
    %v2577 = vadd.f32 %v2399, %v2503
    %v2578 = vadd.f32 %v2400, %v2508
    %v2579 = vadd.f32 %v2401, %v2513
    %v2580 = vadd.f32 %v2402, %v2518
    %v2581 = vadd.f32 %v2403, %v2523
    %v2582 = vadd.f32 %v2404, %v2528
    %v2583 = vadd.f32 %v2405, %v2533
    %v2584 = vadd.f32 %v2406, %v2538
    %v2585 = vadd.f32 %v2407, %v2543
    %v2586 = vadd.f32 %v2408, %v2548
    %v2587 = vadd.f32 %v2409, %v2553
    %v2588 = vadd.f32 %v2410, %v2558
    %v2589 = vadd.f32 %v2411, %v2563
    %v2590 = vadd.f32 %v2412, %v2568
    %v2591 = vadd.f32 %v2413, %v2573
    %v2624 = vrot.slane %v498, 1
    %v2625 = vrot.slane %v499, 1
    %v2626 = vrot.slane %v500, 1
    %v2627 = vrot.slane %v501, 1
    %v2628 = vrot.slane %v502, 1
    %v2629 = vrot.slane %v503, 1
    %v2630 = vrot.slane %v504, 1
    %v2631 = vrot.slane %v505, 1
    %v2632 = vrot.slane %v506, 1
    %v2633 = vrot.slane %v507, 1
    %v2634 = vrot.slane %v508, 1
    %v2635 = vrot.slane %v509, 1
    %v2636 = vrot.slane %v510, 1
    %v2637 = vrot.slane %v511, 1
    %v2638 = vrot.slane %v512, 1
    %v2639 = vrot.slane %v513, 1
    %v2640 = vrot.slane %v514, 1
    %v2641 = vrot.slane %v515, 1
    %v2642 = vrot.slane %v516, 1
    %v2643 = vrot.slane %v517, 1
    %v2644 = vrot.slane %v518, 1
    %v2645 = vrot.slane %v519, 1
    %v2646 = vrot.slane %v520, 1
    %v2647 = vrot.slane %v521, 1
    %v2648 = vrot.slane %v522, 1
    %v2649 = vrot.slane %v523, 1
    %v2650 = vrot.slane %v524, 1
    %v2651 = vrot.slane %v525, 1
    %v2652 = vrot.slane %v526, 1
    %v2653 = vrot.slane %v527, 1
    %v2654 = vrot.slane %v528, 1
    %v2655 = vrot.slane %v529, 1
    %v2688 = vsel %vm273, %v629, %v695
    %v2689 = vsel %vm273, %v630, %v696
    %v2690 = vsel %vm273, %v631, %v697
    %v2691 = vsel %vm273, %v632, %v698
    %v2692 = vsel %vm273, %v633, %v699
    %v2693 = vsel %vm273, %v634, %v700
    %v2694 = vsel %vm273, %v635, %v701
    %v2695 = vsel %vm273, %v636, %v702
    %v2696 = vsel %vm273, %v637, %v703
    %v2697 = vsel %vm273, %v638, %v704
    %v2698 = vsel %vm273, %v639, %v705
    %v2699 = vsel %vm273, %v640, %v706
    %v2700 = vsel %vm273, %v641, %v707
    %v2701 = vsel %vm273, %v642, %v708
    %v2702 = vsel %vm273, %v643, %v709
    %v2703 = vsel %vm273, %v644, %v710
    %v2704 = vsel %vm273, %v645, %v711
    %v2705 = vsel %vm273, %v646, %v712
    %v2706 = vsel %vm273, %v647, %v713
    %v2707 = vsel %vm273, %v648, %v714
    %v2708 = vsel %vm273, %v649, %v715
    %v2709 = vsel %vm273, %v650, %v716
    %v2710 = vsel %vm273, %v651, %v717
    %v2711 = vsel %vm273, %v652, %v718
    %v2712 = vsel %vm273, %v653, %v719
    %v2713 = vsel %vm273, %v654, %v720
    %v2714 = vsel %vm273, %v655, %v721
    %v2715 = vsel %vm273, %v656, %v722
    %v2716 = vsel %vm273, %v657, %v723
    %v2717 = vsel %vm273, %v658, %v724
    %v2718 = vsel %vm273, %v659, %v725
    %v2719 = vsel %vm273, %v660, %v726
    %v2720 = vsel %vm273, %v661, %v727
    %v2721 = vsel %vm1058, %v2688, %v761
    %v2722 = vsel %vm1058, %v2689, %v1763
    %v2723 = vsel %vm1058, %v2690, %v1764
    %v2724 = vsel %vm1058, %v2691, %v1765
    %v2725 = vsel %vm1058, %v2692, %v1766
    %v2726 = vsel %vm1058, %v2693, %v1767
    %v2727 = vsel %vm1058, %v2694, %v1768
    %v2728 = vsel %vm1058, %v2695, %v1769
    %v2729 = vsel %vm1058, %v2696, %v1770
    %v2730 = vsel %vm1058, %v2697, %v1771
    %v2731 = vsel %vm1058, %v2698, %v1772
    %v2732 = vsel %vm1058, %v2699, %v1773
    %v2733 = vsel %vm1058, %v2700, %v1774
    %v2734 = vsel %vm1058, %v2701, %v1775
    %v2735 = vsel %vm1058, %v2702, %v1776
    %v2736 = vsel %vm1058, %v2703, %v1777
    %v2737 = vsel %vm1058, %v2704, %v1778
    %v2738 = vsel %vm1058, %v2705, %v1779
    %v2739 = vsel %vm1058, %v2706, %v1780
    %v2740 = vsel %vm1058, %v2707, %v1781
    %v2741 = vsel %vm1058, %v2708, %v1782
    %v2742 = vsel %vm1058, %v2709, %v1783
    %v2743 = vsel %vm1058, %v2710, %v1784
    %v2744 = vsel %vm1058, %v2711, %v1785
    %v2745 = vsel %vm1058, %v2712, %v1786
    %v2746 = vsel %vm1058, %v2713, %v1787
    %v2747 = vsel %vm1058, %v2714, %v1788
    %v2748 = vsel %vm1058, %v2715, %v1789
    %v2749 = vsel %vm1058, %v2716, %v1790
    %v2750 = vsel %vm1058, %v2717, %v1791
    %v2751 = vsel %vm1058, %v2718, %v1792
    %v2752 = vsel %vm1058, %v2719, %v1793
    %v2753 = vsel %vm1058, %v2720, %v1794
    %v2754 = vsel %vm1092, %v2721, %v827
    %v2755 = vsel %vm1092, %v2722, %v828
    %v2756 = vsel %vm1092, %v2723, %v829
    %v2757 = vsel %vm1092, %v2724, %v830
    %v2758 = vsel %vm1092, %v2725, %v831
    %v2759 = vsel %vm1092, %v2726, %v832
    %v2760 = vsel %vm1092, %v2727, %v833
    %v2761 = vsel %vm1092, %v2728, %v834
    %v2762 = vsel %vm1092, %v2729, %v835
    %v2763 = vsel %vm1092, %v2730, %v836
    %v2764 = vsel %vm1092, %v2731, %v837
    %v2765 = vsel %vm1092, %v2732, %v838
    %v2766 = vsel %vm1092, %v2733, %v839
    %v2767 = vsel %vm1092, %v2734, %v840
    %v2768 = vsel %vm1092, %v2735, %v841
    %v2769 = vsel %vm1092, %v2736, %v842
    %v2770 = vsel %vm1092, %v2737, %v843
    %v2771 = vsel %vm1092, %v2738, %v844
    %v2772 = vsel %vm1092, %v2739, %v845
    %v2773 = vsel %vm1092, %v2740, %v846
    %v2774 = vsel %vm1092, %v2741, %v847
    %v2775 = vsel %vm1092, %v2742, %v848
    %v2776 = vsel %vm1092, %v2743, %v849
    %v2777 = vsel %vm1092, %v2744, %v850
    %v2778 = vsel %vm1092, %v2745, %v851
    %v2779 = vsel %vm1092, %v2746, %v852
    %v2780 = vsel %vm1092, %v2747, %v853
    %v2781 = vsel %vm1092, %v2748, %v854
    %v2782 = vsel %vm1092, %v2749, %v855
    %v2783 = vsel %vm1092, %v2750, %v856
    %v2784 = vsel %vm1092, %v2751, %v857
    %v2785 = vsel %vm1092, %v2752, %v858
    %v2786 = vsel %vm1092, %v2753, %v859
    %v2787 = vsel %vm1126, %v2754, %v893
    %v2788 = vsel %vm1126, %v2755, %v894
    %v2789 = vsel %vm1126, %v2756, %v895
    %v2790 = vsel %vm1126, %v2757, %v896
    %v2791 = vsel %vm1126, %v2758, %v897
    %v2792 = vsel %vm1126, %v2759, %v898
    %v2793 = vsel %vm1126, %v2760, %v899
    %v2794 = vsel %vm1126, %v2761, %v900
    %v2795 = vsel %vm1126, %v2762, %v901
    %v2796 = vsel %vm1126, %v2763, %v902
    %v2797 = vsel %vm1126, %v2764, %v903
    %v2798 = vsel %vm1126, %v2765, %v904
    %v2799 = vsel %vm1126, %v2766, %v905
    %v2800 = vsel %vm1126, %v2767, %v906
    %v2801 = vsel %vm1126, %v2768, %v907
    %v2802 = vsel %vm1126, %v2769, %v908
    %v2803 = vsel %vm1126, %v2770, %v909
    %v2804 = vsel %vm1126, %v2771, %v910
    %v2805 = vsel %vm1126, %v2772, %v911
    %v2806 = vsel %vm1126, %v2773, %v912
    %v2807 = vsel %vm1126, %v2774, %v913
    %v2808 = vsel %vm1126, %v2775, %v914
    %v2809 = vsel %vm1126, %v2776, %v915
    %v2810 = vsel %vm1126, %v2777, %v916
    %v2811 = vsel %vm1126, %v2778, %v917
    %v2812 = vsel %vm1126, %v2779, %v918
    %v2813 = vsel %vm1126, %v2780, %v919
    %v2814 = vsel %vm1126, %v2781, %v920
    %v2815 = vsel %vm1126, %v2782, %v921
    %v2816 = vsel %vm1126, %v2783, %v922
    %v2817 = vsel %vm1126, %v2784, %v923
    %v2818 = vsel %vm1126, %v2785, %v924
    %v2819 = vsel %vm1126, %v2786, %v925
    %v2820 = vsel %vm1160, %v2787, %v959
    %v2821 = vsel %vm1160, %v2788, %v960
    %v2822 = vsel %vm1160, %v2789, %v961
    %v2823 = vsel %vm1160, %v2790, %v962
    %v2824 = vsel %vm1160, %v2791, %v963
    %v2825 = vsel %vm1160, %v2792, %v964
    %v2826 = vsel %vm1160, %v2793, %v965
    %v2827 = vsel %vm1160, %v2794, %v966
    %v2828 = vsel %vm1160, %v2795, %v967
    %v2829 = vsel %vm1160, %v2796, %v968
    %v2830 = vsel %vm1160, %v2797, %v969
    %v2831 = vsel %vm1160, %v2798, %v970
    %v2832 = vsel %vm1160, %v2799, %v971
    %v2833 = vsel %vm1160, %v2800, %v972
    %v2834 = vsel %vm1160, %v2801, %v973
    %v2835 = vsel %vm1160, %v2802, %v974
    %v2836 = vsel %vm1160, %v2803, %v975
    %v2837 = vsel %vm1160, %v2804, %v976
    %v2838 = vsel %vm1160, %v2805, %v977
    %v2839 = vsel %vm1160, %v2806, %v978
    %v2840 = vsel %vm1160, %v2807, %v979
    %v2841 = vsel %vm1160, %v2808, %v980
    %v2842 = vsel %vm1160, %v2809, %v981
    %v2843 = vsel %vm1160, %v2810, %v982
    %v2844 = vsel %vm1160, %v2811, %v983
    %v2845 = vsel %vm1160, %v2812, %v984
    %v2846 = vsel %vm1160, %v2813, %v985
    %v2847 = vsel %vm1160, %v2814, %v986
    %v2848 = vsel %vm1160, %v2815, %v987
    %v2849 = vsel %vm1160, %v2816, %v988
    %v2850 = vsel %vm1160, %v2817, %v989
    %v2851 = vsel %vm1160, %v2818, %v990
    %v2852 = vsel %vm1160, %v2819, %v991
    %v2853 = vsel %vm1194, %v2820, 0.0
    %v2854 = vsel %vm1194, %v2821, %v276
    %v2855 = vsel %vm1194, %v2822, %v279
    %v2856 = vsel %vm1194, %v2823, %v282
    %v2857 = vsel %vm1194, %v2824, %v285
    %v2858 = vsel %vm1194, %v2825, %v288
    %v2859 = vsel %vm1194, %v2826, %v291
    %v2860 = vsel %vm1194, %v2827, %v294
    %v2861 = vsel %vm1194, %v2828, %v297
    %v2862 = vsel %vm1194, %v2829, %v300
    %v2863 = vsel %vm1194, %v2830, %v303
    %v2864 = vsel %vm1194, %v2831, %v306
    %v2865 = vsel %vm1194, %v2832, %v309
    %v2866 = vsel %vm1194, %v2833, %v312
    %v2867 = vsel %vm1194, %v2834, %v315
    %v2868 = vsel %vm1194, %v2835, %v318
    %v2869 = vsel %vm1194, %v2836, %v321
    %v2870 = vsel %vm1194, %v2837, %v324
    %v2871 = vsel %vm1194, %v2838, %v327
    %v2872 = vsel %vm1194, %v2839, %v330
    %v2873 = vsel %vm1194, %v2840, %v333
    %v2874 = vsel %vm1194, %v2841, %v336
    %v2875 = vsel %vm1194, %v2842, %v339
    %v2876 = vsel %vm1194, %v2843, %v342
    %v2877 = vsel %vm1194, %v2844, %v345
    %v2878 = vsel %vm1194, %v2845, %v348
    %v2879 = vsel %vm1194, %v2846, %v351
    %v2880 = vsel %vm1194, %v2847, %v354
    %v2881 = vsel %vm1194, %v2848, %v357
    %v2882 = vsel %vm1194, %v2849, %v360
    %v2883 = vsel %vm1194, %v2850, %v363
    %v2884 = vsel %vm1194, %v2851, %v366
    %v2885 = vsel %vm1194, %v2852, %v369
    %v2886 = vsel %vm1228, %v2853, %v563
    %v2887 = vsel %vm1228, %v2854, %v2624
    %v2888 = vsel %vm1228, %v2855, %v2625
    %v2889 = vsel %vm1228, %v2856, %v2626
    %v2890 = vsel %vm1228, %v2857, %v2627
    %v2891 = vsel %vm1228, %v2858, %v2628
    %v2892 = vsel %vm1228, %v2859, %v2629
    %v2893 = vsel %vm1228, %v2860, %v2630
    %v2894 = vsel %vm1228, %v2861, %v2631
    %v2895 = vsel %vm1228, %v2862, %v2632
    %v2896 = vsel %vm1228, %v2863, %v2633
    %v2897 = vsel %vm1228, %v2864, %v2634
    %v2898 = vsel %vm1228, %v2865, %v2635
    %v2899 = vsel %vm1228, %v2866, %v2636
    %v2900 = vsel %vm1228, %v2867, %v2637
    %v2901 = vsel %vm1228, %v2868, %v2638
    %v2902 = vsel %vm1228, %v2869, %v2639
    %v2903 = vsel %vm1228, %v2870, %v2640
    %v2904 = vsel %vm1228, %v2871, %v2641
    %v2905 = vsel %vm1228, %v2872, %v2642
    %v2906 = vsel %vm1228, %v2873, %v2643
    %v2907 = vsel %vm1228, %v2874, %v2644
    %v2908 = vsel %vm1228, %v2875, %v2645
    %v2909 = vsel %vm1228, %v2876, %v2646
    %v2910 = vsel %vm1228, %v2877, %v2647
    %v2911 = vsel %vm1228, %v2878, %v2648
    %v2912 = vsel %vm1228, %v2879, %v2649
    %v2913 = vsel %vm1228, %v2880, %v2650
    %v2914 = vsel %vm1228, %v2881, %v2651
    %v2915 = vsel %vm1228, %v2882, %v2652
    %v2916 = vsel %vm1228, %v2883, %v2653
    %v2917 = vsel %vm1228, %v2884, %v2654
    %v2918 = vsel %vm1228, %v2885, %v2655
    %s2919 = scalar_lea.vmem [#allocation5], 256
    %v2920 = vld [vmem:[%s2919] sm:$0xff]
    %v2921 = vld [vmem:[%s2919 + $0x8] sm:$0xff]
    %v2922 = vld [vmem:[%s2919 + $0x10] sm:$0xff]
    %v2923 = vld [vmem:[%s2919 + $0x18] sm:$0xff]
    %v2924 = vld [vmem:[%s2919 + $0x20] sm:$0xff]
    %v2925 = vld [vmem:[%s2919 + $0x28] sm:$0xff]
    %v2926 = vld [vmem:[%s2919 + $0x30] sm:$0xff]
    %v2927 = vld [vmem:[%s2919 + $0x38] sm:$0xff]
    %v2928 = vld [vmem:[%s2919 + $0x40] sm:$0xff]
    %v2929 = vld [vmem:[%s2919 + $0x48] sm:$0xff]
    %v2930 = vld [vmem:[%s2919 + $0x50] sm:$0xff]
    %v2931 = vld [vmem:[%s2919 + $0x58] sm:$0xff]
    %v2932 = vld [vmem:[%s2919 + $0x60] sm:$0xff]
    %v2933 = vld [vmem:[%s2919 + $0x68] sm:$0xff]
    %v2934 = vld [vmem:[%s2919 + $0x70] sm:$0xff]
    %v2935 = vld [vmem:[%s2919 + $0x78] sm:$0xff]
    %2936 = vmatprep.subr.mxu0 0.0
    %2937 = vmatpush1.msra.mxu0 %v2920
    %2938 = vmatprep.subr.mxu0 0.0
    %2939 = vmatpush1.msra.mxu0 %v2921
    %2940 = vmatprep.subr.mxu0 0.0
    %2941 = vmatpush1.msra.mxu0 %v2922
    %2942 = vmatprep.subr.mxu0 0.0
    %2943 = vmatpush1.msra.mxu0 %v2923
    %2944 = vmatprep.subr.mxu0 0.0
    %2945 = vmatpush1.msra.mxu0 %v2924
    %2946 = vmatprep.subr.mxu0 0.0
    %2947 = vmatpush1.msra.mxu0 %v2925
    %2948 = vmatprep.subr.mxu0 0.0
    %2949 = vmatpush1.msra.mxu0 %v2926
    %2950 = vmatprep.subr.mxu0 0.0
    %2951 = vmatpush1.msra.mxu0 %v2927
    %2952 = vmatprep.subr.mxu0 0.0
    %2953 = vmatpush1.msra.mxu0 %v2928
    %2954 = vmatprep.subr.mxu0 0.0
    %2955 = vmatpush1.msra.mxu0 %v2929
    %2956 = vmatprep.subr.mxu0 0.0
    %2957 = vmatpush1.msra.mxu0 %v2930
    %2958 = vmatprep.subr.mxu0 0.0
    %2959 = vmatpush1.msra.mxu0 %v2931
    %2960 = vmatprep.subr.mxu0 0.0
    %2961 = vmatpush1.msra.mxu0 %v2932
    %2962 = vmatprep.subr.mxu0 0.0
    %2963 = vmatpush1.msra.mxu0 %v2933
    %2964 = vmatprep.subr.mxu0 0.0
    %2965 = vmatpush1.msra.mxu0 %v2934
    %2966 = vmatprep.subr.mxu0 0.0
    %2967 = vmatpush1.msra.mxu0 %v2935
    %2968 = vmatprep.subr.mxu0 0.0
    %2969 = vmatpush1.msra.mxu0 0.0
    %2970 = vmatprep.subr.mxu0 0.0
    %2971 = vmatpush1.msra.mxu0 0.0
    %2972 = vmatprep.subr.mxu0 0.0
    %2973 = vmatpush1.msra.mxu0 0.0
    %2974 = vmatprep.subr.mxu0 0.0
    %2975 = vmatpush1.msra.mxu0 0.0
    %2976 = vmatprep.subr.mxu0 0.0
    %2977 = vmatpush1.msra.mxu0 0.0
    %2978 = vmatprep.subr.mxu0 0.0
    %2979 = vmatpush1.msra.mxu0 0.0
    %2980 = vmatprep.subr.mxu0 0.0
    %2981 = vmatpush1.msra.mxu0 0.0
    %2982 = vmatprep.subr.mxu0 0.0
    %2983 = vmatpush1.msra.mxu0 0.0
    %2984 = vmatprep.subr.mxu0 0.0
    %2985 = vmatpush1.msra.mxu0 0.0
    %2986 = vmatprep.subr.mxu0 0.0
    %2987 = vmatpush1.msra.mxu0 0.0
    %2988 = vmatprep.subr.mxu0 0.0
    %2989 = vmatpush1.msra.mxu0 0.0
    %2990 = vmatprep.subr.mxu0 0.0
    %2991 = vmatpush1.msra.mxu0 0.0
    %2992 = vmatprep.subr.mxu0 0.0
    %2993 = vmatpush1.msra.mxu0 0.0
    %2994 = vmatprep.subr.mxu0 0.0
    %2995 = vmatpush1.msra.mxu0 0.0
    %2996 = vmatprep.subr.mxu0 0.0
    %2997 = vmatpush1.msra.mxu0 0.0
    %2998 = vmatprep.subr.mxu0 0.0
    %2999 = vmatpush1.msra.mxu0 0.0
    %3000 = vmatprep.mubr.f32.mxu0 0.0
    %3001 = vmatmul.mubr.f32.gmra.mrb[0].mxu0 %v2886
    %v3002 = vpop.f32.mrb[0].mxu0
    %v3003 = vadd.f32 0.0, %v3002
    %v3004 = vpop.f32.mrb[0].mxu0
    %3005 = vmatprep.mubr.f32.mxu0 0.0
    %3006 = vmatmul.mubr.f32.gmra.mrb[0].mxu0 %v2888
    %v3007 = vpop.f32.mrb[0].mxu0
    %v3008 = vadd.f32 0.0, %v3007
    %v3009 = vpop.f32.mrb[0].mxu0
    %3010 = vmatprep.mubr.f32.mxu0 0.0
    %3011 = vmatmul.mubr.f32.gmra.mrb[0].mxu0 %v2890
    %v3012 = vpop.f32.mrb[0].mxu0
    %v3013 = vadd.f32 0.0, %v3012
    %v3014 = vpop.f32.mrb[0].mxu0
    %3015 = vmatprep.mubr.f32.mxu0 0.0
    %3016 = vmatmul.mubr.f32.gmra.mrb[0].mxu0 %v2892
    %v3017 = vpop.f32.mrb[0].mxu0
    %v3018 = vadd.f32 0.0, %v3017
    %v3019 = vpop.f32.mrb[0].mxu0
    %3020 = vmatprep.mubr.f32.mxu0 0.0
    %3021 = vmatmul.mubr.f32.gmra.mrb[0].mxu0 %v2894
    %v3022 = vpop.f32.mrb[0].mxu0
    %v3023 = vadd.f32 0.0, %v3022
    %v3024 = vpop.f32.mrb[0].mxu0
    %3025 = vmatprep.mubr.f32.mxu0 0.0
    %3026 = vmatmul.mubr.f32.gmra.mrb[0].mxu0 %v2896
    %v3027 = vpop.f32.mrb[0].mxu0
    %v3028 = vadd.f32 0.0, %v3027
    %v3029 = vpop.f32.mrb[0].mxu0
    %3030 = vmatprep.mubr.f32.mxu0 0.0
    %3031 = vmatmul.mubr.f32.gmra.mrb[0].mxu0 %v2898
    %v3032 = vpop.f32.mrb[0].mxu0
    %v3033 = vadd.f32 0.0, %v3032
    %v3034 = vpop.f32.mrb[0].mxu0
    %3035 = vmatprep.mubr.f32.mxu0 0.0
    %3036 = vmatmul.mubr.f32.gmra.mrb[0].mxu0 %v2900
    %v3037 = vpop.f32.mrb[0].mxu0
    %v3038 = vadd.f32 0.0, %v3037
    %v3039 = vpop.f32.mrb[0].mxu0
    %3040 = vmatprep.mubr.f32.mxu0 0.0
    %3041 = vmatmul.mubr.f32.gmra.mrb[0].mxu0 %v2886
    %v3042 = vpop.f32.mrb[0].mxu0
    %v3043 = vadd.f32 0.0, %v3042
    %v3044 = vpop.f32.mrb[0].mxu0
    %3045 = vmatprep.mubr.f32.mxu0 0.0
    %3046 = vmatmul.mubr.f32.gmra.mrb[0].mxu0 %v2904
    %v3047 = vpop.f32.mrb[0].mxu0
    %v3048 = vadd.f32 0.0, %v3047
    %v3049 = vpop.f32.mrb[0].mxu0
    %3050 = vmatprep.mubr.f32.mxu0 0.0
    %3051 = vmatmul.mubr.f32.gmra.mrb[0].mxu0 %v2906
    %v3052 = vpop.f32.mrb[0].mxu0
    %v3053 = vadd.f32 0.0, %v3052
    %v3054 = vpop.f32.mrb[0].mxu0
    %3055 = vmatprep.mubr.f32.mxu0 0.0
    %3056 = vmatmul.mubr.f32.gmra.mrb[0].mxu0 %v2908
    %v3057 = vpop.f32.mrb[0].mxu0
    %v3058 = vadd.f32 0.0, %v3057
    %v3059 = vpop.f32.mrb[0].mxu0
    %3060 = vmatprep.mubr.f32.mxu0 0.0
    %3061 = vmatmul.mubr.f32.gmra.mrb[0].mxu0 %v2910
    %v3062 = vpop.f32.mrb[0].mxu0
    %v3063 = vadd.f32 0.0, %v3062
    %v3064 = vpop.f32.mrb[0].mxu0
    %3065 = vmatprep.mubr.f32.mxu0 0.0
    %3066 = vmatmul.mubr.f32.gmra.mrb[0].mxu0 %v2912
    %v3067 = vpop.f32.mrb[0].mxu0
    %v3068 = vadd.f32 0.0, %v3067
    %v3069 = vpop.f32.mrb[0].mxu0
    %3070 = vmatprep.mubr.f32.mxu0 0.0
    %3071 = vmatmul.mubr.f32.gmra.mrb[0].mxu0 %v2914
    %v3072 = vpop.f32.mrb[0].mxu0
    %v3073 = vadd.f32 0.0, %v3072
    %v3074 = vpop.f32.mrb[0].mxu0
    %3075 = vmatprep.mubr.f32.mxu0 0.0
    %3076 = vmatmul.mubr.f32.gmra.mrb[0].mxu0 %v2916
    %v3077 = vpop.f32.mrb[0].mxu0
    %v3078 = vadd.f32 0.0, %v3077
    %v3079 = vpop.f32.mrb[0].mxu0
    %3080 = vdwg.mxu0
    %v3081 = vadd.f32 %v2576, %v3003
    %v3082 = vadd.f32 %v2577, %v3008
    %v3083 = vadd.f32 %v2578, %v3013
    %v3084 = vadd.f32 %v2579, %v3018
    %v3085 = vadd.f32 %v2580, %v3023
    %v3086 = vadd.f32 %v2581, %v3028
    %v3087 = vadd.f32 %v2582, %v3033
    %v3088 = vadd.f32 %v2583, %v3038
    %v3089 = vadd.f32 %v2584, %v3043
    %v3090 = vadd.f32 %v2585, %v3048
    %v3091 = vadd.f32 %v2586, %v3053
    %v3092 = vadd.f32 %v2587, %v3058
    %v3093 = vadd.f32 %v2588, %v3063
    %v3094 = vadd.f32 %v2589, %v3068
    %v3095 = vadd.f32 %v2590, %v3073
    %v3096 = vadd.f32 %v2591, %v3078
    %s3097 = scalar_lea.vmem [#allocation5], 640
    %v3098 = vld [vmem:[%s3097] sm:$0xff]
    %v3099 = vld [vmem:[%s3097 + $0x8] sm:$0xff]
    %v3100 = vld [vmem:[%s3097 + $0x10] sm:$0xff]
    %v3101 = vld [vmem:[%s3097 + $0x18] sm:$0xff]
    %v3102 = vld [vmem:[%s3097 + $0x20] sm:$0xff]
    %v3103 = vld [vmem:[%s3097 + $0x28] sm:$0xff]
    %v3104 = vld [vmem:[%s3097 + $0x30] sm:$0xff]
    %v3105 = vld [vmem:[%s3097 + $0x38] sm:$0xff]
    %v3106 = vld [vmem:[%s3097 + $0x40] sm:$0xff]
    %v3107 = vld [vmem:[%s3097 + $0x48] sm:$0xff]
    %v3108 = vld [vmem:[%s3097 + $0x50] sm:$0xff]
    %v3109 = vld [vmem:[%s3097 + $0x58] sm:$0xff]
    %v3110 = vld [vmem:[%s3097 + $0x60] sm:$0xff]
    %v3111 = vld [vmem:[%s3097 + $0x68] sm:$0xff]
    %v3112 = vld [vmem:[%s3097 + $0x70] sm:$0xff]
    %v3113 = vld [vmem:[%s3097 + $0x78] sm:$0xff]
    %3114 = vmatprep.subr.mxu0 0.0
    %3115 = vmatpush1.msra.mxu0 %v3098
    %3116 = vmatprep.subr.mxu0 0.0
    %3117 = vmatpush1.msra.mxu0 %v3099
    %3118 = vmatprep.subr.mxu0 0.0
    %3119 = vmatpush1.msra.mxu0 %v3100
    %3120 = vmatprep.subr.mxu0 0.0
    %3121 = vmatpush1.msra.mxu0 %v3101
    %3122 = vmatprep.subr.mxu0 0.0
    %3123 = vmatpush1.msra.mxu0 %v3102
    %3124 = vmatprep.subr.mxu0 0.0
    %3125 = vmatpush1.msra.mxu0 %v3103
    %3126 = vmatprep.subr.mxu0 0.0
    %3127 = vmatpush1.msra.mxu0 %v3104
    %3128 = vmatprep.subr.mxu0 0.0
    %3129 = vmatpush1.msra.mxu0 %v3105
    %3130 = vmatprep.subr.mxu0 0.0
    %3131 = vmatpush1.msra.mxu0 %v3106
    %3132 = vmatprep.subr.mxu0 0.0
    %3133 = vmatpush1.msra.mxu0 %v3107
    %3134 = vmatprep.subr.mxu0 0.0
    %3135 = vmatpush1.msra.mxu0 %v3108
    %3136 = vmatprep.subr.mxu0 0.0
    %3137 = vmatpush1.msra.mxu0 %v3109
    %3138 = vmatprep.subr.mxu0 0.0
    %3139 = vmatpush1.msra.mxu0 %v3110
    %3140 = vmatprep.subr.mxu0 0.0
    %3141 = vmatpush1.msra.mxu0 %v3111
    %3142 = vmatprep.subr.mxu0 0.0
    %3143 = vmatpush1.msra.mxu0 %v3112
    %3144 = vmatprep.subr.mxu0 0.0
    %3145 = vmatpush1.msra.mxu0 %v3113
    %3146 = vmatprep.subr.mxu0 0.0
    %3147 = vmatpush1.msra.mxu0 0.0
    %3148 = vmatprep.subr.mxu0 0.0
    %3149 = vmatpush1.msra.mxu0 0.0
    %3150 = vmatprep.subr.mxu0 0.0
    %3151 = vmatpush1.msra.mxu0 0.0
    %3152 = vmatprep.subr.mxu0 0.0
    %3153 = vmatpush1.msra.mxu0 0.0
    %3154 = vmatprep.subr.mxu0 0.0
    %3155 = vmatpush1.msra.mxu0 0.0
    %3156 = vmatprep.subr.mxu0 0.0
    %3157 = vmatpush1.msra.mxu0 0.0
    %3158 = vmatprep.subr.mxu0 0.0
    %3159 = vmatpush1.msra.mxu0 0.0
    %3160 = vmatprep.subr.mxu0 0.0
    %3161 = vmatpush1.msra.mxu0 0.0
    %3162 = vmatprep.subr.mxu0 0.0
    %3163 = vmatpush1.msra.mxu0 0.0
    %3164 = vmatprep.subr.mxu0 0.0
    %3165 = vmatpush1.msra.mxu0 0.0
    %3166 = vmatprep.subr.mxu0 0.0
    %3167 = vmatpush1.msra.mxu0 0.0
    %3168 = vmatprep.subr.mxu0 0.0
    %3169 = vmatpush1.msra.mxu0 0.0
    %3170 = vmatprep.subr.mxu0 0.0
    %3171 = vmatpush1.msra.mxu0 0.0
    %3172 = vmatprep.subr.mxu0 0.0
    %3173 = vmatpush1.msra.mxu0 0.0
    %3174 = vmatprep.subr.mxu0 0.0
    %3175 = vmatpush1.msra.mxu0 0.0
    %3176 = vmatprep.subr.mxu0 0.0
    %3177 = vmatpush1.msra.mxu0 0.0
    %3178 = vmatprep.mubr.f32.mxu0 0.0
    %3179 = vmatmul.mubr.f32.gmra.mrb[0].mxu0 %v2887
    %v3180 = vpop.f32.mrb[0].mxu0
    %v3181 = vadd.f32 0.0, %v3180
    %v3182 = vpop.f32.mrb[0].mxu0
    %3183 = vmatprep.mubr.f32.mxu0 0.0
    %3184 = vmatmul.mubr.f32.gmra.mrb[0].mxu0 %v2889
    %v3185 = vpop.f32.mrb[0].mxu0
    %v3186 = vadd.f32 0.0, %v3185
    %v3187 = vpop.f32.mrb[0].mxu0
    %3188 = vmatprep.mubr.f32.mxu0 0.0
    %3189 = vmatmul.mubr.f32.gmra.mrb[0].mxu0 %v2891
    %v3190 = vpop.f32.mrb[0].mxu0
    %v3191 = vadd.f32 0.0, %v3190
    %v3192 = vpop.f32.mrb[0].mxu0
    %3193 = vmatprep.mubr.f32.mxu0 0.0
    %3194 = vmatmul.mubr.f32.gmra.mrb[0].mxu0 %v2893
    %v3195 = vpop.f32.mrb[0].mxu0
    %v3196 = vadd.f32 0.0, %v3195
    %v3197 = vpop.f32.mrb[0].mxu0
    %3198 = vmatprep.mubr.f32.mxu0 0.0
    %3199 = vmatmul.mubr.f32.gmra.mrb[0].mxu0 %v2895
    %v3200 = vpop.f32.mrb[0].mxu0
    %v3201 = vadd.f32 0.0, %v3200
    %v3202 = vpop.f32.mrb[0].mxu0
    %3203 = vmatprep.mubr.f32.mxu0 0.0
    %3204 = vmatmul.mubr.f32.gmra.mrb[0].mxu0 %v2897
    %v3205 = vpop.f32.mrb[0].mxu0
    %v3206 = vadd.f32 0.0, %v3205
    %v3207 = vpop.f32.mrb[0].mxu0
    %3208 = vmatprep.mubr.f32.mxu0 0.0
    %3209 = vmatmul.mubr.f32.gmra.mrb[0].mxu0 %v2899
    %v3210 = vpop.f32.mrb[0].mxu0
    %v3211 = vadd.f32 0.0, %v3210
    %v3212 = vpop.f32.mrb[0].mxu0
    %3213 = vmatprep.mubr.f32.mxu0 0.0
    %3214 = vmatmul.mubr.f32.gmra.mrb[0].mxu0 %v2901
    %v3215 = vpop.f32.mrb[0].mxu0
    %v3216 = vadd.f32 0.0, %v3215
    %v3217 = vpop.f32.mrb[0].mxu0
    %3218 = vmatprep.mubr.f32.mxu0 0.0
    %3219 = vmatmul.mubr.f32.gmra.mrb[0].mxu0 %v2903
    %v3220 = vpop.f32.mrb[0].mxu0
    %v3221 = vadd.f32 0.0, %v3220
    %v3222 = vpop.f32.mrb[0].mxu0
    %3223 = vmatprep.mubr.f32.mxu0 0.0
    %3224 = vmatmul.mubr.f32.gmra.mrb[0].mxu0 %v2905
    %v3225 = vpop.f32.mrb[0].mxu0
    %v3226 = vadd.f32 0.0, %v3225
    %v3227 = vpop.f32.mrb[0].mxu0
    %3228 = vmatprep.mubr.f32.mxu0 0.0
    %3229 = vmatmul.mubr.f32.gmra.mrb[0].mxu0 %v2907
    %v3230 = vpop.f32.mrb[0].mxu0
    %v3231 = vadd.f32 0.0, %v3230
    %v3232 = vpop.f32.mrb[0].mxu0
    %3233 = vmatprep.mubr.f32.mxu0 0.0
    %3234 = vmatmul.mubr.f32.gmra.mrb[0].mxu0 %v2909
    %v3235 = vpop.f32.mrb[0].mxu0
    %v3236 = vadd.f32 0.0, %v3235
    %v3237 = vpop.f32.mrb[0].mxu0
    %3238 = vmatprep.mubr.f32.mxu0 0.0
    %3239 = vmatmul.mubr.f32.gmra.mrb[0].mxu0 %v2911
    %v3240 = vpop.f32.mrb[0].mxu0
    %v3241 = vadd.f32 0.0, %v3240
    %v3242 = vpop.f32.mrb[0].mxu0
    %3243 = vmatprep.mubr.f32.mxu0 0.0
    %3244 = vmatmul.mubr.f32.gmra.mrb[0].mxu0 %v2913
    %v3245 = vpop.f32.mrb[0].mxu0
    %v3246 = vadd.f32 0.0, %v3245
    %v3247 = vpop.f32.mrb[0].mxu0
    %3248 = vmatprep.mubr.f32.mxu0 0.0
    %3249 = vmatmul.mubr.f32.gmra.mrb[0].mxu0 %v2915
    %v3250 = vpop.f32.mrb[0].mxu0
    %v3251 = vadd.f32 0.0, %v3250
    %v3252 = vpop.f32.mrb[0].mxu0
    %3253 = vmatprep.mubr.f32.mxu0 0.0
    %3254 = vmatmul.mubr.f32.gmra.mrb[0].mxu0 %v2917
    %v3255 = vpop.f32.mrb[0].mxu0
    %v3256 = vadd.f32 0.0, %v3255
    %v3257 = vpop.f32.mrb[0].mxu0
    %3258 = vdwg.mxu0
    %v3259 = vadd.f32 %v3081, %v3181
    %v3260 = vadd.f32 %v3082, %v3186
    %v3261 = vadd.f32 %v3083, %v3191
    %v3262 = vadd.f32 %v3084, %v3196
    %v3263 = vadd.f32 %v3085, %v3201
    %v3264 = vadd.f32 %v3086, %v3206
    %v3265 = vadd.f32 %v3087, %v3211
    %v3266 = vadd.f32 %v3088, %v3216
    %v3267 = vadd.f32 %v3089, %v3221
    %v3268 = vadd.f32 %v3090, %v3226
    %v3269 = vadd.f32 %v3091, %v3231
    %v3270 = vadd.f32 %v3092, %v3236
    %v3271 = vadd.f32 %v3093, %v3241
    %v3272 = vadd.f32 %v3094, %v3246
    %v3273 = vadd.f32 %v3095, %v3251
    %v3274 = vadd.f32 %v3096, %v3256
    %s3275 = scalar_lea.vmem [#allocation5], 1024
    %v3276 = vld [vmem:[%s3275] sm:$0xff]
    %v3277 = vld [vmem:[%s3275 + $0x8] sm:$0xff]
    %v3278 = vld [vmem:[%s3275 + $0x10] sm:$0xff]
    %v3279 = vld [vmem:[%s3275 + $0x18] sm:$0xff]
    %v3280 = vld [vmem:[%s3275 + $0x20] sm:$0xff]
    %v3281 = vld [vmem:[%s3275 + $0x28] sm:$0xff]
    %v3282 = vld [vmem:[%s3275 + $0x30] sm:$0xff]
    %v3283 = vld [vmem:[%s3275 + $0x38] sm:$0xff]
    %v3284 = vld [vmem:[%s3275 + $0x40] sm:$0xff]
    %v3285 = vld [vmem:[%s3275 + $0x48] sm:$0xff]
    %v3286 = vld [vmem:[%s3275 + $0x50] sm:$0xff]
    %v3287 = vld [vmem:[%s3275 + $0x58] sm:$0xff]
    %v3288 = vld [vmem:[%s3275 + $0x60] sm:$0xff]
    %v3289 = vld [vmem:[%s3275 + $0x68] sm:$0xff]
    %v3290 = vld [vmem:[%s3275 + $0x70] sm:$0xff]
    %v3291 = vld [vmem:[%s3275 + $0x78] sm:$0xff]
    %3292 = vmatprep.subr.mxu0 0.0
    %3293 = vmatpush1.msra.mxu0 %v3276
    %3294 = vmatprep.subr.mxu0 0.0
    %3295 = vmatpush1.msra.mxu0 %v3277
    %3296 = vmatprep.subr.mxu0 0.0
    %3297 = vmatpush1.msra.mxu0 %v3278
    %3298 = vmatprep.subr.mxu0 0.0
    %3299 = vmatpush1.msra.mxu0 %v3279
    %3300 = vmatprep.subr.mxu0 0.0
    %3301 = vmatpush1.msra.mxu0 %v3280
    %3302 = vmatprep.subr.mxu0 0.0
    %3303 = vmatpush1.msra.mxu0 %v3281
    %3304 = vmatprep.subr.mxu0 0.0
    %3305 = vmatpush1.msra.mxu0 %v3282
    %3306 = vmatprep.subr.mxu0 0.0
    %3307 = vmatpush1.msra.mxu0 %v3283
    %3308 = vmatprep.subr.mxu0 0.0
    %3309 = vmatpush1.msra.mxu0 %v3284
    %3310 = vmatprep.subr.mxu0 0.0
    %3311 = vmatpush1.msra.mxu0 %v3285
    %3312 = vmatprep.subr.mxu0 0.0
    %3313 = vmatpush1.msra.mxu0 %v3286
    %3314 = vmatprep.subr.mxu0 0.0
    %3315 = vmatpush1.msra.mxu0 %v3287
    %3316 = vmatprep.subr.mxu0 0.0
    %3317 = vmatpush1.msra.mxu0 %v3288
    %3318 = vmatprep.subr.mxu0 0.0
    %3319 = vmatpush1.msra.mxu0 %v3289
    %3320 = vmatprep.subr.mxu0 0.0
    %3321 = vmatpush1.msra.mxu0 %v3290
    %3322 = vmatprep.subr.mxu0 0.0
    %3323 = vmatpush1.msra.mxu0 %v3291
    %3324 = vmatprep.subr.mxu0 0.0
    %3325 = vmatpush1.msra.mxu0 0.0
    %3326 = vmatprep.subr.mxu0 0.0
    %3327 = vmatpush1.msra.mxu0 0.0
    %3328 = vmatprep.subr.mxu0 0.0
    %3329 = vmatpush1.msra.mxu0 0.0
    %3330 = vmatprep.subr.mxu0 0.0
    %3331 = vmatpush1.msra.mxu0 0.0
    %3332 = vmatprep.subr.mxu0 0.0
    %3333 = vmatpush1.msra.mxu0 0.0
    %3334 = vmatprep.subr.mxu0 0.0
    %3335 = vmatpush1.msra.mxu0 0.0
    %3336 = vmatprep.subr.mxu0 0.0
    %3337 = vmatpush1.msra.mxu0 0.0
    %3338 = vmatprep.subr.mxu0 0.0
    %3339 = vmatpush1.msra.mxu0 0.0
    %3340 = vmatprep.subr.mxu0 0.0
    %3341 = vmatpush1.msra.mxu0 0.0
    %3342 = vmatprep.subr.mxu0 0.0
    %3343 = vmatpush1.msra.mxu0 0.0
    %3344 = vmatprep.subr.mxu0 0.0
    %3345 = vmatpush1.msra.mxu0 0.0
    %3346 = vmatprep.subr.mxu0 0.0
    %3347 = vmatpush1.msra.mxu0 0.0
    %3348 = vmatprep.subr.mxu0 0.0
    %3349 = vmatpush1.msra.mxu0 0.0
    %3350 = vmatprep.subr.mxu0 0.0
    %3351 = vmatpush1.msra.mxu0 0.0
    %3352 = vmatprep.subr.mxu0 0.0
    %3353 = vmatpush1.msra.mxu0 0.0
    %3354 = vmatprep.subr.mxu0 0.0
    %3355 = vmatpush1.msra.mxu0 0.0
    %3356 = vmatprep.mubr.f32.mxu0 0.0
    %3357 = vmatmul.mubr.f32.gmra.mrb[0].mxu0 %v2888
    %v3358 = vpop.f32.mrb[0].mxu0
    %v3359 = vadd.f32 0.0, %v3358
    %v3360 = vpop.f32.mrb[0].mxu0
    %3361 = vmatprep.mubr.f32.mxu0 0.0
    %3362 = vmatmul.mubr.f32.gmra.mrb[0].mxu0 %v2890
    %v3363 = vpop.f32.mrb[0].mxu0
    %v3364 = vadd.f32 0.0, %v3363
    %v3365 = vpop.f32.mrb[0].mxu0
    %3366 = vmatprep.mubr.f32.mxu0 0.0
    %3367 = vmatmul.mubr.f32.gmra.mrb[0].mxu0 %v2892
    %v3368 = vpop.f32.mrb[0].mxu0
    %v3369 = vadd.f32 0.0, %v3368
    %v3370 = vpop.f32.mrb[0].mxu0
    %3371 = vmatprep.mubr.f32.mxu0 0.0
    %3372 = vmatmul.mubr.f32.gmra.mrb[0].mxu0 %v2894
    %v3373 = vpop.f32.mrb[0].mxu0
    %v3374 = vadd.f32 0.0, %v3373
    %v3375 = vpop.f32.mrb[0].mxu0
    %3376 = vmatprep.mubr.f32.mxu0 0.0
    %3377 = vmatmul.mubr.f32.gmra.mrb[0].mxu0 %v2896
    %v3378 = vpop.f32.mrb[0].mxu0
    %v3379 = vadd.f32 0.0, %v3378
    %v3380 = vpop.f32.mrb[0].mxu0
    %3381 = vmatprep.mubr.f32.mxu0 0.0
    %3382 = vmatmul.mubr.f32.gmra.mrb[0].mxu0 %v2898
    %v3383 = vpop.f32.mrb[0].mxu0
    %v3384 = vadd.f32 0.0, %v3383
    %v3385 = vpop.f32.mrb[0].mxu0
    %3386 = vmatprep.mubr.f32.mxu0 0.0
    %3387 = vmatmul.mubr.f32.gmra.mrb[0].mxu0 %v2900
    %v3388 = vpop.f32.mrb[0].mxu0
    %v3389 = vadd.f32 0.0, %v3388
    %v3390 = vpop.f32.mrb[0].mxu0
    %3391 = vmatprep.mubr.f32.mxu0 0.0
    %3392 = vmatmul.mubr.f32.gmra.mrb[0].mxu0 %v2902
    %v3393 = vpop.f32.mrb[0].mxu0
    %v3394 = vadd.f32 0.0, %v3393
    %v3395 = vpop.f32.mrb[0].mxu0
    %3396 = vmatprep.mubr.f32.mxu0 0.0
    %3397 = vmatmul.mubr.f32.gmra.mrb[0].mxu0 %v2904
    %v3398 = vpop.f32.mrb[0].mxu0
    %v3399 = vadd.f32 0.0, %v3398
    %v3400 = vpop.f32.mrb[0].mxu0
    %3401 = vmatprep.mubr.f32.mxu0 0.0
    %3402 = vmatmul.mubr.f32.gmra.mrb[0].mxu0 %v2906
    %v3403 = vpop.f32.mrb[0].mxu0
    %v3404 = vadd.f32 0.0, %v3403
    %v3405 = vpop.f32.mrb[0].mxu0
    %3406 = vmatprep.mubr.f32.mxu0 0.0
    %3407 = vmatmul.mubr.f32.gmra.mrb[0].mxu0 %v2908
    %v3408 = vpop.f32.mrb[0].mxu0
    %v3409 = vadd.f32 0.0, %v3408
    %v3410 = vpop.f32.mrb[0].mxu0
    %3411 = vmatprep.mubr.f32.mxu0 0.0
    %3412 = vmatmul.mubr.f32.gmra.mrb[0].mxu0 %v2910
    %v3413 = vpop.f32.mrb[0].mxu0
    %v3414 = vadd.f32 0.0, %v3413
    %v3415 = vpop.f32.mrb[0].mxu0
    %3416 = vmatprep.mubr.f32.mxu0 0.0
    %3417 = vmatmul.mubr.f32.gmra.mrb[0].mxu0 %v2912
    %v3418 = vpop.f32.mrb[0].mxu0
    %v3419 = vadd.f32 0.0, %v3418
    %v3420 = vpop.f32.mrb[0].mxu0
    %3421 = vmatprep.mubr.f32.mxu0 0.0
    %3422 = vmatmul.mubr.f32.gmra.mrb[0].mxu0 %v2914
    %v3423 = vpop.f32.mrb[0].mxu0
    %v3424 = vadd.f32 0.0, %v3423
    %v3425 = vpop.f32.mrb[0].mxu0
    %3426 = vmatprep.mubr.f32.mxu0 0.0
    %3427 = vmatmul.mubr.f32.gmra.mrb[0].mxu0 %v2916
    %v3428 = vpop.f32.mrb[0].mxu0
    %v3429 = vadd.f32 0.0, %v3428
    %v3430 = vpop.f32.mrb[0].mxu0
    %3431 = vmatprep.mubr.f32.mxu0 0.0
    %3432 = vmatmul.mubr.f32.gmra.mrb[0].mxu0 %v2918
    %v3433 = vpop.f32.mrb[0].mxu0
    %v3434 = vadd.f32 0.0, %v3433
    %v3435 = vpop.f32.mrb[0].mxu0
    %3436 = vdwg.mxu0
    %v3437 = vadd.f32 %v3259, %v3359
    %v3438 = vadd.f32 %v3260, %v3364
    %v3439 = vadd.f32 %v3261, %v3369
    %v3440 = vadd.f32 %v3262, %v3374
    %v3441 = vadd.f32 %v3263, %v3379
    %v3442 = vadd.f32 %v3264, %v3384
    %v3443 = vadd.f32 %v3265, %v3389
    %v3444 = vadd.f32 %v3266, %v3394
    %v3445 = vadd.f32 %v3267, %v3399
    %v3446 = vadd.f32 %v3268, %v3404
    %v3447 = vadd.f32 %v3269, %v3409
    %v3448 = vadd.f32 %v3270, %v3414
    %v3449 = vadd.f32 %v3271, %v3419
    %v3450 = vadd.f32 %v3272, %v3424
    %v3451 = vadd.f32 %v3273, %v3429
    %v3452 = vadd.f32 %v3274, %v3434
    %v3453 = vadd.f32 %v3437, %v3438
    %v3454 = vadd.f32 %v3453, %v3439
    %v3455 = vadd.f32 %v3454, %v3440
    %v3456 = vadd.f32 %v3455, %v3441
    %v3457 = vadd.f32 %v3456, %v3442
    %v3458 = vadd.f32 %v3457, %v3443
    %v3459 = vadd.f32 %v3458, %v3444
    %v3460 = vadd.f32 %v3459, %v3445
    %v3461 = vadd.f32 %v3460, %v3446
    %v3462 = vadd.f32 %v3461, %v3447
    %v3463 = vadd.f32 %v3462, %v3448
    %v3464 = vadd.f32 %v3463, %v3449
    %v3465 = vadd.f32 %v3464, %v3450
    %v3466 = vadd.f32 %v3465, %v3451
    %v3467 = vadd.f32 %v3466, %v3452
    %v3468 = vrot.slane %v3467, 4
    %v3469 = vadd.f32 %v3467, %v3468
    %v3470 = vrot.slane %v3469, 2
    %v3471 = vadd.f32 %v3469, %v3470
    %v3472 = vrot.slane %v3471, 1
    %v3473 = vadd.f32 %v3471, %v3472
    %v3474 = vrcp.pop 128.0
    %v3475 = vmul.f32 %v3473, %v3474
    %v3476 = vsub.f32 %v3437, %v3475
    %v3477 = vsub.f32 %v3438, %v3475
    %v3478 = vsub.f32 %v3439, %v3475
    %v3479 = vsub.f32 %v3440, %v3475
    %v3480 = vsub.f32 %v3441, %v3475
    %v3481 = vsub.f32 %v3442, %v3475
    %v3482 = vsub.f32 %v3443, %v3475
    %v3483 = vsub.f32 %v3444, %v3475
    %v3484 = vsub.f32 %v3445, %v3475
    %v3485 = vsub.f32 %v3446, %v3475
    %v3486 = vsub.f32 %v3447, %v3475
    %v3487 = vsub.f32 %v3448, %v3475
    %v3488 = vsub.f32 %v3449, %v3475
    %v3489 = vsub.f32 %v3450, %v3475
    %v3490 = vsub.f32 %v3451, %v3475
    %v3491 = vsub.f32 %v3452, %v3475
    %v3492 = vmul.f32 %v3476, %v3476
    %v3493 = vmul.f32 %v3477, %v3477
    %v3494 = vmul.f32 %v3478, %v3478
    %v3495 = vmul.f32 %v3479, %v3479
    %v3496 = vmul.f32 %v3480, %v3480
    %v3497 = vmul.f32 %v3481, %v3481
    %v3498 = vmul.f32 %v3482, %v3482
    %v3499 = vmul.f32 %v3483, %v3483
    %v3500 = vmul.f32 %v3484, %v3484
    %v3501 = vmul.f32 %v3485, %v3485
    %v3502 = vmul.f32 %v3486, %v3486
    %v3503 = vmul.f32 %v3487, %v3487
    %v3504 = vmul.f32 %v3488, %v3488
    %v3505 = vmul.f32 %v3489, %v3489
    %v3506 = vmul.f32 %v3490, %v3490
    %v3507 = vmul.f32 %v3491, %v3491
    %v3508 = vadd.f32 %v3492, %v3493
    %v3509 = vadd.f32 %v3508, %v3494
    %v3510 = vadd.f32 %v3509, %v3495
    %v3511 = vadd.f32 %v3510, %v3496
    %v3512 = vadd.f32 %v3511, %v3497
    %v3513 = vadd.f32 %v3512, %v3498
    %v3514 = vadd.f32 %v3513, %v3499
    %v3515 = vadd.f32 %v3514, %v3500
    %v3516 = vadd.f32 %v3515, %v3501
    %v3517 = vadd.f32 %v3516, %v3502
    %v3518 = vadd.f32 %v3517, %v3503
    %v3519 = vadd.f32 %v3518, %v3504
    %v3520 = vadd.f32 %v3519, %v3505
    %v3521 = vadd.f32 %v3520, %v3506
    %v3522 = vadd.f32 %v3521, %v3507
    %v3523 = vrot.slane %v3522, 4
    %v3524 = vadd.f32 %v3522, %v3523
    %v3525 = vrot.slane %v3524, 2
    %v3526 = vadd.f32 %v3524, %v3525
    %v3527 = vrot.slane %v3526, 1
    %v3528 = vadd.f32 %v3526, %v3527
    %v3529 = vmul.f32 %v3528, %v3474
    %v3530 = vadd.f32 %v3529, 1e-05
    %v3531 = vrsqrt.pop %v3530
    %v3532 = vmul.f32 %v3476, %v3531
    %v3533 = vmul.f32 %v3477, %v3531
    %v3534 = vmul.f32 %v3478, %v3531
    %v3535 = vmul.f32 %v3479, %v3531
    %v3536 = vmul.f32 %v3480, %v3531
    %v3537 = vmul.f32 %v3481, %v3531
    %v3538 = vmul.f32 %v3482, %v3531
    %v3539 = vmul.f32 %v3483, %v3531
    %v3540 = vmul.f32 %v3484, %v3531
    %v3541 = vmul.f32 %v3485, %v3531
    %v3542 = vmul.f32 %v3486, %v3531
    %v3543 = vmul.f32 %v3487, %v3531
    %v3544 = vmul.f32 %v3488, %v3531
    %v3545 = vmul.f32 %v3489, %v3531
    %v3546 = vmul.f32 %v3490, %v3531
    %v3547 = vmul.f32 %v3491, %v3531
    %v3548 = vld [vmem:[#allocation7] sm:$0x1]
    %v3550 = vlaneseq
    %v3551 = vshrl.u32 %v3550, 7
    %v3552 = vsub.s32 0, %v3551
    %v3553 = vrot.slane %v3548, %v3552
    %v3555 = vmul.f32 %v3532, %v3553
    %v3556 = vmul.f32 %v3533, %v3553
    %v3557 = vmul.f32 %v3534, %v3553
    %v3558 = vmul.f32 %v3535, %v3553
    %v3559 = vmul.f32 %v3536, %v3553
    %v3560 = vmul.f32 %v3537, %v3553
    %v3561 = vmul.f32 %v3538, %v3553
    %v3562 = vmul.f32 %v3539, %v3553
    %v3563 = vmul.f32 %v3540, %v3553
    %v3564 = vmul.f32 %v3541, %v3553
    %v3565 = vmul.f32 %v3542, %v3553
    %v3566 = vmul.f32 %v3543, %v3553
    %v3567 = vmul.f32 %v3544, %v3553
    %v3568 = vmul.f32 %v3545, %v3553
    %v3569 = vmul.f32 %v3546, %v3553
    %v3570 = vmul.f32 %v3547, %v3553
    %v3571 = vld [vmem:[#allocation8] sm:$0x1]
    %v3573 = vlaneseq
    %v3574 = vshrl.u32 %v3573, 7
    %v3575 = vsub.s32 0, %v3574
    %v3576 = vrot.slane %v3571, %v3575
    %v3578 = vadd.f32 %v3555, %v3576
    %v3579 = vadd.f32 %v3556, %v3576
    %v3580 = vadd.f32 %v3557, %v3576
    %v3581 = vadd.f32 %v3558, %v3576
    %v3582 = vadd.f32 %v3559, %v3576
    %v3583 = vadd.f32 %v3560, %v3576
    %v3584 = vadd.f32 %v3561, %v3576
    %v3585 = vadd.f32 %v3562, %v3576
    %v3586 = vadd.f32 %v3563, %v3576
    %v3587 = vadd.f32 %v3564, %v3576
    %v3588 = vadd.f32 %v3565, %v3576
    %v3589 = vadd.f32 %v3566, %v3576
    %v3590 = vadd.f32 %v3567, %v3576
    %v3591 = vadd.f32 %v3568, %v3576
    %v3592 = vadd.f32 %v3569, %v3576
    %v3593 = vadd.f32 %v3570, %v3576
    %vm3594 = vcmp.ge.f32.partialorder %v3578, 0.0
    %vm3595 = vcmp.ge.f32.partialorder %v3579, 0.0
    %vm3596 = vcmp.ge.f32.partialorder %v3580, 0.0
    %vm3597 = vcmp.ge.f32.partialorder %v3581, 0.0
    %vm3598 = vcmp.ge.f32.partialorder %v3582, 0.0
    %vm3599 = vcmp.ge.f32.partialorder %v3583, 0.0
    %vm3600 = vcmp.ge.f32.partialorder %v3584, 0.0
    %vm3601 = vcmp.ge.f32.partialorder %v3585, 0.0
    %vm3602 = vcmp.ge.f32.partialorder %v3586, 0.0
    %vm3603 = vcmp.ge.f32.partialorder %v3587, 0.0
    %vm3604 = vcmp.ge.f32.partialorder %v3588, 0.0
    %vm3605 = vcmp.ge.f32.partialorder %v3589, 0.0
    %vm3606 = vcmp.ge.f32.partialorder %v3590, 0.0
    %vm3607 = vcmp.ge.f32.partialorder %v3591, 0.0
    %vm3608 = vcmp.ge.f32.partialorder %v3592, 0.0
    %vm3609 = vcmp.ge.f32.partialorder %v3593, 0.0
    %v3610 = vmul.f32 %v3578, 0.01
    %v3611 = vmul.f32 %v3579, 0.01
    %v3612 = vmul.f32 %v3580, 0.01
    %v3613 = vmul.f32 %v3581, 0.01
    %v3614 = vmul.f32 %v3582, 0.01
    %v3615 = vmul.f32 %v3583, 0.01
    %v3616 = vmul.f32 %v3584, 0.01
    %v3617 = vmul.f32 %v3585, 0.01
    %v3618 = vmul.f32 %v3586, 0.01
    %v3619 = vmul.f32 %v3587, 0.01
    %v3620 = vmul.f32 %v3588, 0.01
    %v3621 = vmul.f32 %v3589, 0.01
    %v3622 = vmul.f32 %v3590, 0.01
    %v3623 = vmul.f32 %v3591, 0.01
    %v3624 = vmul.f32 %v3592, 0.01
    %v3625 = vmul.f32 %v3593, 0.01
    %v3626 = vsel %vm3594, %v3578, %v3610
    %v3627 = vsel %vm3595, %v3579, %v3611
    %v3628 = vsel %vm3596, %v3580, %v3612
    %v3629 = vsel %vm3597, %v3581, %v3613
    %v3630 = vsel %vm3598, %v3582, %v3614
    %v3631 = vsel %vm3599, %v3583, %v3615
    %v3632 = vsel %vm3600, %v3584, %v3616
    %v3633 = vsel %vm3601, %v3585, %v3617
    %v3634 = vsel %vm3602, %v3586, %v3618
    %v3635 = vsel %vm3603, %v3587, %v3619
    %v3636 = vsel %vm3604, %v3588, %v3620
    %v3637 = vsel %vm3605, %v3589, %v3621
    %v3638 = vsel %vm3606, %v3590, %v3622
    %v3639 = vsel %vm3607, %v3591, %v3623
    %v3640 = vsel %vm3608, %v3592, %v3624
    %v3641 = vsel %vm3609, %v3593, %v3625
    %v3658 = vrot.slane %v3626, 7
    %v3659 = vrot.slane %v3627, 7
    %v3660 = vrot.slane %v3628, 7
    %v3661 = vrot.slane %v3629, 7
    %v3662 = vrot.slane %v3630, 7
    %v3663 = vrot.slane %v3631, 7
    %v3664 = vrot.slane %v3632, 7
    %v3665 = vrot.slane %v3633, 7
    %v3666 = vrot.slane %v3634, 7
    %v3667 = vrot.slane %v3635, 7
    %v3668 = vrot.slane %v3636, 7
    %v3669 = vrot.slane %v3637, 7
    %v3670 = vrot.slane %v3638, 7
    %v3671 = vrot.slane %v3639, 7
    %v3672 = vrot.slane %v3640, 7
    %v3673 = vrot.slane %v3641, 7
    %v3690 = vsel %vm273, 0.0, %v3658
    %v3691 = vsel %vm273, 0.0, %v3659
    %v3692 = vsel %vm273, 0.0, %v3660
    %v3693 = vsel %vm273, 0.0, %v3661
    %v3694 = vsel %vm273, 0.0, %v3662
    %v3695 = vsel %vm273, 0.0, %v3663
    %v3696 = vsel %vm273, 0.0, %v3664
    %v3697 = vsel %vm273, 0.0, %v3665
    %v3698 = vsel %vm273, 0.0, %v3666
    %v3699 = vsel %vm273, 0.0, %v3667
    %v3700 = vsel %vm273, 0.0, %v3668
    %v3701 = vsel %vm273, 0.0, %v3669
    %v3702 = vsel %vm273, 0.0, %v3670
    %v3703 = vsel %vm273, 0.0, %v3671
    %v3704 = vsel %vm273, 0.0, %v3672
    %v3705 = vsel %vm273, 0.0, %v3673
    %v3706 = vsel %vm273, %v3658, 0.0
    %v3707 = vsel %vm273, %v3659, 0.0
    %v3708 = vsel %vm273, %v3660, 0.0
    %v3709 = vsel %vm273, %v3661, 0.0
    %v3710 = vsel %vm273, %v3662, 0.0
    %v3711 = vsel %vm273, %v3663, 0.0
    %v3712 = vsel %vm273, %v3664, 0.0
    %v3713 = vsel %vm273, %v3665, 0.0
    %v3714 = vsel %vm273, %v3666, 0.0
    %v3715 = vsel %vm273, %v3667, 0.0
    %v3716 = vsel %vm273, %v3668, 0.0
    %v3717 = vsel %vm273, %v3669, 0.0
    %v3718 = vsel %vm273, %v3670, 0.0
    %v3719 = vsel %vm273, %v3671, 0.0
    %v3720 = vsel %vm273, %v3672, 0.0
    %v3721 = vsel %vm273, %v3673, 0.0
    %v3738 = vrot.slane %v3690, 1
    %v3739 = vrot.slane %v3691, 1
    %v3740 = vrot.slane %v3692, 1
    %v3741 = vrot.slane %v3693, 1
    %v3742 = vrot.slane %v3694, 1
    %v3743 = vrot.slane %v3695, 1
    %v3744 = vrot.slane %v3696, 1
    %v3745 = vrot.slane %v3697, 1
    %v3746 = vrot.slane %v3698, 1
    %v3747 = vrot.slane %v3699, 1
    %v3748 = vrot.slane %v3700, 1
    %v3749 = vrot.slane %v3701, 1
    %v3750 = vrot.slane %v3702, 1
    %v3751 = vrot.slane %v3703, 1
    %v3752 = vrot.slane %v3704, 1
    %v3753 = vrot.slane %v3705, 1
    %v3770 = vrot.slane %v3690, 2
    %v3771 = vrot.slane %v3691, 2
    %v3772 = vrot.slane %v3692, 2
    %v3773 = vrot.slane %v3693, 2
    %v3774 = vrot.slane %v3694, 2
    %v3775 = vrot.slane %v3695, 2
    %v3776 = vrot.slane %v3696, 2
    %v3777 = vrot.slane %v3697, 2
    %v3778 = vrot.slane %v3698, 2
    %v3779 = vrot.slane %v3699, 2
    %v3780 = vrot.slane %v3700, 2
    %v3781 = vrot.slane %v3701, 2
    %v3782 = vrot.slane %v3702, 2
    %v3783 = vrot.slane %v3703, 2
    %v3784 = vrot.slane %v3704, 2
    %v3785 = vrot.slane %v3705, 2
    %v3802 = vrot.slane %v3690, 3
    %v3803 = vrot.slane %v3691, 3
    %v3804 = vrot.slane %v3692, 3
    %v3805 = vrot.slane %v3693, 3
    %v3806 = vrot.slane %v3694, 3
    %v3807 = vrot.slane %v3695, 3
    %v3808 = vrot.slane %v3696, 3
    %v3809 = vrot.slane %v3697, 3
    %v3810 = vrot.slane %v3698, 3
    %v3811 = vrot.slane %v3699, 3
    %v3812 = vrot.slane %v3700, 3
    %v3813 = vrot.slane %v3701, 3
    %v3814 = vrot.slane %v3702, 3
    %v3815 = vrot.slane %v3703, 3
    %v3816 = vrot.slane %v3704, 3
    %v3817 = vrot.slane %v3705, 3
    %v3834 = vsel %vm273, %v3690, %v3738
    %v3835 = vsel %vm273, %v3691, %v3739
    %v3836 = vsel %vm273, %v3692, %v3740
    %v3837 = vsel %vm273, %v3693, %v3741
    %v3838 = vsel %vm273, %v3694, %v3742
    %v3839 = vsel %vm273, %v3695, %v3743
    %v3840 = vsel %vm273, %v3696, %v3744
    %v3841 = vsel %vm273, %v3697, %v3745
    %v3842 = vsel %vm273, %v3698, %v3746
    %v3843 = vsel %vm273, %v3699, %v3747
    %v3844 = vsel %vm273, %v3700, %v3748
    %v3845 = vsel %vm273, %v3701, %v3749
    %v3846 = vsel %vm273, %v3702, %v3750
    %v3847 = vsel %vm273, %v3703, %v3751
    %v3848 = vsel %vm273, %v3704, %v3752
    %v3849 = vsel %vm273, %v3705, %v3753
    %v3850 = vsel %vm1058, %v3834, %v3770
    %v3851 = vsel %vm1058, %v3835, %v3771
    %v3852 = vsel %vm1058, %v3836, %v3772
    %v3853 = vsel %vm1058, %v3837, %v3773
    %v3854 = vsel %vm1058, %v3838, %v3774
    %v3855 = vsel %vm1058, %v3839, %v3775
    %v3856 = vsel %vm1058, %v3840, %v3776
    %v3857 = vsel %vm1058, %v3841, %v3777
    %v3858 = vsel %vm1058, %v3842, %v3778
    %v3859 = vsel %vm1058, %v3843, %v3779
    %v3860 = vsel %vm1058, %v3844, %v3780
    %v3861 = vsel %vm1058, %v3845, %v3781
    %v3862 = vsel %vm1058, %v3846, %v3782
    %v3863 = vsel %vm1058, %v3847, %v3783
    %v3864 = vsel %vm1058, %v3848, %v3784
    %v3865 = vsel %vm1058, %v3849, %v3785
    %v3866 = vsel %vm1092, %v3850, %v3802
    %v3867 = vsel %vm1092, %v3851, %v3803
    %v3868 = vsel %vm1092, %v3852, %v3804
    %v3869 = vsel %vm1092, %v3853, %v3805
    %v3870 = vsel %vm1092, %v3854, %v3806
    %v3871 = vsel %vm1092, %v3855, %v3807
    %v3872 = vsel %vm1092, %v3856, %v3808
    %v3873 = vsel %vm1092, %v3857, %v3809
    %v3874 = vsel %vm1092, %v3858, %v3810
    %v3875 = vsel %vm1092, %v3859, %v3811
    %v3876 = vsel %vm1092, %v3860, %v3812
    %v3877 = vsel %vm1092, %v3861, %v3813
    %v3878 = vsel %vm1092, %v3862, %v3814
    %v3879 = vsel %vm1092, %v3863, %v3815
    %v3880 = vsel %vm1092, %v3864, %v3816
    %v3881 = vsel %vm1092, %v3865, %v3817
    %v3882 = vld [vmem:[#allocation10] sm:$0xff]
    %v3883 = vld [vmem:[#allocation10 + $0x8] sm:$0xff]
    %v3884 = vld [vmem:[#allocation10 + $0x10] sm:$0xff]
    %v3885 = vld [vmem:[#allocation10 + $0x18] sm:$0xff]
    %v3886 = vld [vmem:[#allocation10 + $0x20] sm:$0xff]
    %v3887 = vld [vmem:[#allocation10 + $0x28] sm:$0xff]
    %v3888 = vld [vmem:[#allocation10 + $0x30] sm:$0xff]
    %v3889 = vld [vmem:[#allocation10 + $0x38] sm:$0xff]
    %v3890 = vld [vmem:[#allocation10 + $0x40] sm:$0xff]
    %v3891 = vld [vmem:[#allocation10 + $0x48] sm:$0xff]
    %v3892 = vld [vmem:[#allocation10 + $0x50] sm:$0xff]
    %v3893 = vld [vmem:[#allocation10 + $0x58] sm:$0xff]
    %v3894 = vld [vmem:[#allocation10 + $0x60] sm:$0xff]
    %v3895 = vld [vmem:[#allocation10 + $0x68] sm:$0xff]
    %v3896 = vld [vmem:[#allocation10 + $0x70] sm:$0xff]
    %v3897 = vld [vmem:[#allocation10 + $0x78] sm:$0xff]
    %s3898 = scalar_lea.vmem [#allocation10], 384
    %v3899 = vld [vmem:[%s3898] sm:$0xff]
    %v3900 = vld [vmem:[%s3898 + $0x8] sm:$0xff]
    %v3901 = vld [vmem:[%s3898 + $0x10] sm:$0xff]
    %v3902 = vld [vmem:[%s3898 + $0x18] sm:$0xff]
    %v3903 = vld [vmem:[%s3898 + $0x20] sm:$0xff]
    %v3904 = vld [vmem:[%s3898 + $0x28] sm:$0xff]
    %v3905 = vld [vmem:[%s3898 + $0x30] sm:$0xff]
    %v3906 = vld [vmem:[%s3898 + $0x38] sm:$0xff]
    %v3907 = vld [vmem:[%s3898 + $0x40] sm:$0xff]
    %v3908 = vld [vmem:[%s3898 + $0x48] sm:$0xff]
    %v3909 = vld [vmem:[%s3898 + $0x50] sm:$0xff]
    %v3910 = vld [vmem:[%s3898 + $0x58] sm:$0xff]
    %v3911 = vld [vmem:[%s3898 + $0x60] sm:$0xff]
    %v3912 = vld [vmem:[%s3898 + $0x68] sm:$0xff]
    %v3913 = vld [vmem:[%s3898 + $0x70] sm:$0xff]
    %v3914 = vld [vmem:[%s3898 + $0x78] sm:$0xff]
    %v3923 = vcombine.low %v3866, %v3868
    %v3924 = vcombine.low %v3870, %v3872
    %v3925 = vcombine.low %v3874, %v3876
    %v3926 = vcombine.low %v3878, %v3880
    %3931 = vmatprep.subr.mxu0 0.0
    %3932 = vmatpush1.msra.mxu0 %v3899
    %3933 = vmatprep.subr.mxu0 0.0
    %3934 = vmatpush1.msra.mxu0 %v3900
    %3935 = vmatprep.subr.mxu0 0.0
    %3936 = vmatpush1.msra.mxu0 %v3901
    %3937 = vmatprep.subr.mxu0 0.0
    %3938 = vmatpush1.msra.mxu0 %v3902
    %3939 = vmatprep.subr.mxu0 0.0
    %3940 = vmatpush1.msra.mxu0 %v3903
    %3941 = vmatprep.subr.mxu0 0.0
    %3942 = vmatpush1.msra.mxu0 %v3904
    %3943 = vmatprep.subr.mxu0 0.0
    %3944 = vmatpush1.msra.mxu0 %v3905
    %3945 = vmatprep.subr.mxu0 0.0
    %3946 = vmatpush1.msra.mxu0 %v3906
    %3947 = vmatprep.subr.mxu0 0.0
    %3948 = vmatpush1.msra.mxu0 %v3907
    %3949 = vmatprep.subr.mxu0 0.0
    %3950 = vmatpush1.msra.mxu0 %v3908
    %3951 = vmatprep.subr.mxu0 0.0
    %3952 = vmatpush1.msra.mxu0 %v3909
    %3953 = vmatprep.subr.mxu0 0.0
    %3954 = vmatpush1.msra.mxu0 %v3910
    %3955 = vmatprep.subr.mxu0 0.0
    %3956 = vmatpush1.msra.mxu0 %v3911
    %3957 = vmatprep.subr.mxu0 0.0
    %3958 = vmatpush1.msra.mxu0 %v3912
    %3959 = vmatprep.subr.mxu0 0.0
    %3960 = vmatpush1.msra.mxu0 %v3913
    %3961 = vmatprep.subr.mxu0 0.0
    %3962 = vmatpush1.msra.mxu0 %v3914
    %3963 = vmatprep.subr.mxu0 0.0
    %3964 = vmatpush1.msra.mxu0 0.0
    %3965 = vmatprep.subr.mxu0 0.0
    %3966 = vmatpush1.msra.mxu0 0.0
    %3967 = vmatprep.subr.mxu0 0.0
    %3968 = vmatpush1.msra.mxu0 0.0
    %3969 = vmatprep.subr.mxu0 0.0
    %3970 = vmatpush1.msra.mxu0 0.0
    %3971 = vmatprep.subr.mxu0 0.0
    %3972 = vmatpush1.msra.mxu0 0.0
    %3973 = vmatprep.subr.mxu0 0.0
    %3974 = vmatpush1.msra.mxu0 0.0
    %3975 = vmatprep.subr.mxu0 0.0
    %3976 = vmatpush1.msra.mxu0 0.0
    %3977 = vmatprep.subr.mxu0 0.0
    %3978 = vmatpush1.msra.mxu0 0.0
    %3979 = vmatprep.subr.mxu0 0.0
    %3980 = vmatpush1.msra.mxu0 0.0
    %3981 = vmatprep.subr.mxu0 0.0
    %3982 = vmatpush1.msra.mxu0 0.0
    %3983 = vmatprep.subr.mxu0 0.0
    %3984 = vmatpush1.msra.mxu0 0.0
    %3985 = vmatprep.subr.mxu0 0.0
    %3986 = vmatpush1.msra.mxu0 0.0
    %3987 = vmatprep.subr.mxu0 0.0
    %3988 = vmatpush1.msra.mxu0 0.0
    %3989 = vmatprep.subr.mxu0 0.0
    %3990 = vmatpush1.msra.mxu0 0.0
    %3991 = vmatprep.subr.mxu0 0.0
    %3992 = vmatpush1.msra.mxu0 0.0
    %3993 = vmatprep.subr.mxu0 0.0
    %3994 = vmatpush1.msra.mxu0 0.0
    %3995 = vmatprep.mubr.f32.mxu0 0.0
    %3996 = vmatmul.mubr.f32.gmra.mrb[0].mxu0 %v3923
    %v3997 = vpop.f32.mrb[0].mxu0
    %v3998 = vadd.f32 0.0, %v3997
    %v3999 = vpop.f32.mrb[0].mxu0
    %4000 = vmatprep.mubr.f32.mxu0 0.0
    %4001 = vmatmul.mubr.f32.gmra.mrb[0].mxu0 %v3924
    %v4002 = vpop.f32.mrb[0].mxu0
    %v4003 = vadd.f32 0.0, %v4002
    %v4004 = vpop.f32.mrb[0].mxu0
    %4005 = vmatprep.mubr.f32.mxu0 0.0
    %4006 = vmatmul.mubr.f32.gmra.mrb[0].mxu0 %v3925
    %v4007 = vpop.f32.mrb[0].mxu0
    %v4008 = vadd.f32 0.0, %v4007
    %v4009 = vpop.f32.mrb[0].mxu0
    %4010 = vmatprep.mubr.f32.mxu0 0.0
    %4011 = vmatmul.mubr.f32.gmra.mrb[0].mxu0 %v3926
    %v4012 = vpop.f32.mrb[0].mxu0
    %v4013 = vadd.f32 0.0, %v4012
    %v4014 = vpop.f32.mrb[0].mxu0
    %4015 = vdwg.mxu0
    %v4023 = vcombine.low %v1093, %v3867
    %v4024 = vcombine.low %v3869, %v3871
    %v4025 = vcombine.low %v1093, %v3875
    %v4026 = vcombine.low %v3877, %v3879
    %4031 = vmatprep.subr.mxu0 0.0
    %4032 = vmatpush1.msra.mxu0 %v3882
    %4033 = vmatprep.subr.mxu0 0.0
    %4034 = vmatpush1.msra.mxu0 %v3883
    %4035 = vmatprep.subr.mxu0 0.0
    %4036 = vmatpush1.msra.mxu0 %v3884
    %4037 = vmatprep.subr.mxu0 0.0
    %4038 = vmatpush1.msra.mxu0 %v3885
    %4039 = vmatprep.subr.mxu0 0.0
    %4040 = vmatpush1.msra.mxu0 %v3886
    %4041 = vmatprep.subr.mxu0 0.0
    %4042 = vmatpush1.msra.mxu0 %v3887
    %4043 = vmatprep.subr.mxu0 0.0
    %4044 = vmatpush1.msra.mxu0 %v3888
    %4045 = vmatprep.subr.mxu0 0.0
    %4046 = vmatpush1.msra.mxu0 %v3889
    %4047 = vmatprep.subr.mxu0 0.0
    %4048 = vmatpush1.msra.mxu0 %v3890
    %4049 = vmatprep.subr.mxu0 0.0
    %4050 = vmatpush1.msra.mxu0 %v3891
    %4051 = vmatprep.subr.mxu0 0.0
    %4052 = vmatpush1.msra.mxu0 %v3892
    %4053 = vmatprep.subr.mxu0 0.0
    %4054 = vmatpush1.msra.mxu0 %v3893
    %4055 = vmatprep.subr.mxu0 0.0
    %4056 = vmatpush1.msra.mxu0 %v3894
    %4057 = vmatprep.subr.mxu0 0.0
    %4058 = vmatpush1.msra.mxu0 %v3895
    %4059 = vmatprep.subr.mxu0 0.0
    %4060 = vmatpush1.msra.mxu0 %v3896
    %4061 = vmatprep.subr.mxu0 0.0
    %4062 = vmatpush1.msra.mxu0 %v3897
    %4063 = vmatprep.subr.mxu0 0.0
    %4064 = vmatpush1.msra.mxu0 0.0
    %4065 = vmatprep.subr.mxu0 0.0
    %4066 = vmatpush1.msra.mxu0 0.0
    %4067 = vmatprep.subr.mxu0 0.0
    %4068 = vmatpush1.msra.mxu0 0.0
    %4069 = vmatprep.subr.mxu0 0.0
    %4070 = vmatpush1.msra.mxu0 0.0
    %4071 = vmatprep.subr.mxu0 0.0
    %4072 = vmatpush1.msra.mxu0 0.0
    %4073 = vmatprep.subr.mxu0 0.0
    %4074 = vmatpush1.msra.mxu0 0.0
    %4075 = vmatprep.subr.mxu0 0.0
    %4076 = vmatpush1.msra.mxu0 0.0
    %4077 = vmatprep.subr.mxu0 0.0
    %4078 = vmatpush1.msra.mxu0 0.0
    %4079 = vmatprep.subr.mxu0 0.0
    %4080 = vmatpush1.msra.mxu0 0.0
    %4081 = vmatprep.subr.mxu0 0.0
    %4082 = vmatpush1.msra.mxu0 0.0
    %4083 = vmatprep.subr.mxu0 0.0
    %4084 = vmatpush1.msra.mxu0 0.0
    %4085 = vmatprep.subr.mxu0 0.0
    %4086 = vmatpush1.msra.mxu0 0.0
    %4087 = vmatprep.subr.mxu0 0.0
    %4088 = vmatpush1.msra.mxu0 0.0
    %4089 = vmatprep.subr.mxu0 0.0
    %4090 = vmatpush1.msra.mxu0 0.0
    %4091 = vmatprep.subr.mxu0 0.0
    %4092 = vmatpush1.msra.mxu0 0.0
    %4093 = vmatprep.subr.mxu0 0.0
    %4094 = vmatpush1.msra.mxu0 0.0
    %4095 = vmatprep.mubr.f32.mxu0 0.0
    %4096 = vmatmul.mubr.f32.gmra.mrb[0].mxu0 %v4023
    %v4097 = vpop.f32.mrb[0].mxu0
    %v4098 = vadd.f32 %v3998, %v4097
    %v4099 = vpop.f32.mrb[0].mxu0
    %4100 = vmatprep.mubr.f32.mxu0 0.0
    %4101 = vmatmul.mubr.f32.gmra.mrb[0].mxu0 %v4024
    %v4102 = vpop.f32.mrb[0].mxu0
    %v4103 = vadd.f32 %v4003, %v4102
    %v4104 = vpop.f32.mrb[0].mxu0
    %4105 = vmatprep.mubr.f32.mxu0 0.0
    %4106 = vmatmul.mubr.f32.gmra.mrb[0].mxu0 %v4025
    %v4107 = vpop.f32.mrb[0].mxu0
    %v4108 = vadd.f32 %v4008, %v4107
    %v4109 = vpop.f32.mrb[0].mxu0
    %4110 = vmatprep.mubr.f32.mxu0 0.0
    %4111 = vmatmul.mubr.f32.gmra.mrb[0].mxu0 %v4026
    %v4112 = vpop.f32.mrb[0].mxu0
    %v4113 = vadd.f32 %v4013, %v4112
    %v4114 = vpop.f32.mrb[0].mxu0
    %4115 = vdwg.mxu0
    %s4116 = scalar_lea.vmem [#allocation10], 768
    %v4117 = vld [vmem:[%s4116] sm:$0xff]
    %v4118 = vld [vmem:[%s4116 + $0x8] sm:$0xff]
    %v4119 = vld [vmem:[%s4116 + $0x10] sm:$0xff]
    %v4120 = vld [vmem:[%s4116 + $0x18] sm:$0xff]
    %v4121 = vld [vmem:[%s4116 + $0x20] sm:$0xff]
    %v4122 = vld [vmem:[%s4116 + $0x28] sm:$0xff]
    %v4123 = vld [vmem:[%s4116 + $0x30] sm:$0xff]
    %v4124 = vld [vmem:[%s4116 + $0x38] sm:$0xff]
    %v4125 = vld [vmem:[%s4116 + $0x40] sm:$0xff]
    %v4126 = vld [vmem:[%s4116 + $0x48] sm:$0xff]
    %v4127 = vld [vmem:[%s4116 + $0x50] sm:$0xff]
    %v4128 = vld [vmem:[%s4116 + $0x58] sm:$0xff]
    %v4129 = vld [vmem:[%s4116 + $0x60] sm:$0xff]
    %v4130 = vld [vmem:[%s4116 + $0x68] sm:$0xff]
    %v4131 = vld [vmem:[%s4116 + $0x70] sm:$0xff]
    %v4132 = vld [vmem:[%s4116 + $0x78] sm:$0xff]
    %v4135 = vcombine.low %v3867, %v3869
    %v4136 = vcombine.low %v3871, %v3873
    %v4137 = vcombine.low %v3875, %v3877
    %v4138 = vcombine.low %v3879, %v3881
    %4143 = vmatprep.subr.mxu0 0.0
    %4144 = vmatpush1.msra.mxu0 %v4117
    %4145 = vmatprep.subr.mxu0 0.0
    %4146 = vmatpush1.msra.mxu0 %v4118
    %4147 = vmatprep.subr.mxu0 0.0
    %4148 = vmatpush1.msra.mxu0 %v4119
    %4149 = vmatprep.subr.mxu0 0.0
    %4150 = vmatpush1.msra.mxu0 %v4120
    %4151 = vmatprep.subr.mxu0 0.0
    %4152 = vmatpush1.msra.mxu0 %v4121
    %4153 = vmatprep.subr.mxu0 0.0
    %4154 = vmatpush1.msra.mxu0 %v4122
    %4155 = vmatprep.subr.mxu0 0.0
    %4156 = vmatpush1.msra.mxu0 %v4123
    %4157 = vmatprep.subr.mxu0 0.0
    %4158 = vmatpush1.msra.mxu0 %v4124
    %4159 = vmatprep.subr.mxu0 0.0
    %4160 = vmatpush1.msra.mxu0 %v4125
    %4161 = vmatprep.subr.mxu0 0.0
    %4162 = vmatpush1.msra.mxu0 %v4126
    %4163 = vmatprep.subr.mxu0 0.0
    %4164 = vmatpush1.msra.mxu0 %v4127
    %4165 = vmatprep.subr.mxu0 0.0
    %4166 = vmatpush1.msra.mxu0 %v4128
    %4167 = vmatprep.subr.mxu0 0.0
    %4168 = vmatpush1.msra.mxu0 %v4129
    %4169 = vmatprep.subr.mxu0 0.0
    %4170 = vmatpush1.msra.mxu0 %v4130
    %4171 = vmatprep.subr.mxu0 0.0
    %4172 = vmatpush1.msra.mxu0 %v4131
    %4173 = vmatprep.subr.mxu0 0.0
    %4174 = vmatpush1.msra.mxu0 %v4132
    %4175 = vmatprep.subr.mxu0 0.0
    %4176 = vmatpush1.msra.mxu0 0.0
    %4177 = vmatprep.subr.mxu0 0.0
    %4178 = vmatpush1.msra.mxu0 0.0
    %4179 = vmatprep.subr.mxu0 0.0
    %4180 = vmatpush1.msra.mxu0 0.0
    %4181 = vmatprep.subr.mxu0 0.0
    %4182 = vmatpush1.msra.mxu0 0.0
    %4183 = vmatprep.subr.mxu0 0.0
    %4184 = vmatpush1.msra.mxu0 0.0
    %4185 = vmatprep.subr.mxu0 0.0
    %4186 = vmatpush1.msra.mxu0 0.0
    %4187 = vmatprep.subr.mxu0 0.0
    %4188 = vmatpush1.msra.mxu0 0.0
    %4189 = vmatprep.subr.mxu0 0.0
    %4190 = vmatpush1.msra.mxu0 0.0
    %4191 = vmatprep.subr.mxu0 0.0
    %4192 = vmatpush1.msra.mxu0 0.0
    %4193 = vmatprep.subr.mxu0 0.0
    %4194 = vmatpush1.msra.mxu0 0.0
    %4195 = vmatprep.subr.mxu0 0.0
    %4196 = vmatpush1.msra.mxu0 0.0
    %4197 = vmatprep.subr.mxu0 0.0
    %4198 = vmatpush1.msra.mxu0 0.0
    %4199 = vmatprep.subr.mxu0 0.0
    %4200 = vmatpush1.msra.mxu0 0.0
    %4201 = vmatprep.subr.mxu0 0.0
    %4202 = vmatpush1.msra.mxu0 0.0
    %4203 = vmatprep.subr.mxu0 0.0
    %4204 = vmatpush1.msra.mxu0 0.0
    %4205 = vmatprep.subr.mxu0 0.0
    %4206 = vmatpush1.msra.mxu0 0.0
    %4207 = vmatprep.mubr.f32.mxu0 0.0
    %4208 = vmatmul.mubr.f32.gmra.mrb[0].mxu0 %v4135
    %v4209 = vpop.f32.mrb[0].mxu0
    %v4210 = vadd.f32 0.0, %v4209
    %v4211 = vpop.f32.mrb[0].mxu0
    %4212 = vmatprep.mubr.f32.mxu0 0.0
    %4213 = vmatmul.mubr.f32.gmra.mrb[0].mxu0 %v4136
    %v4214 = vpop.f32.mrb[0].mxu0
    %v4215 = vadd.f32 0.0, %v4214
    %v4216 = vpop.f32.mrb[0].mxu0
    %4217 = vmatprep.mubr.f32.mxu0 0.0
    %4218 = vmatmul.mubr.f32.gmra.mrb[0].mxu0 %v4137
    %v4219 = vpop.f32.mrb[0].mxu0
    %v4220 = vadd.f32 0.0, %v4219
    %v4221 = vpop.f32.mrb[0].mxu0
    %4222 = vmatprep.mubr.f32.mxu0 0.0
    %4223 = vmatmul.mubr.f32.gmra.mrb[0].mxu0 %v4138
    %v4224 = vpop.f32.mrb[0].mxu0
    %v4225 = vadd.f32 0.0, %v4224
    %v4226 = vpop.f32.mrb[0].mxu0
    %4227 = vdwg.mxu0
    %v4228 = vadd.f32 %v4098, %v4210
    %v4229 = vadd.f32 %v4103, %v4215
    %v4230 = vadd.f32 %v4108, %v4220
    %v4231 = vadd.f32 %v4113, %v4225
    %v4232 = vrot.slane %v3690, 4
    %v4233 = vrot.slane %v3691, 4
    %v4234 = vrot.slane %v3692, 4
    %v4235 = vrot.slane %v3693, 4
    %v4236 = vrot.slane %v3694, 4
    %v4237 = vrot.slane %v3695, 4
    %v4238 = vrot.slane %v3696, 4
    %v4239 = vrot.slane %v3697, 4
    %v4240 = vrot.slane %v3698, 4
    %v4241 = vrot.slane %v3699, 4
    %v4242 = vrot.slane %v3700, 4
    %v4243 = vrot.slane %v3701, 4
    %v4244 = vrot.slane %v3702, 4
    %v4245 = vrot.slane %v3703, 4
    %v4246 = vrot.slane %v3704, 4
    %v4247 = vrot.slane %v3705, 4
    %v4264 = vsel %vm273, %v3738, %v3770
    %v4265 = vsel %vm273, %v3739, %v3771
    %v4266 = vsel %vm273, %v3740, %v3772
    %v4267 = vsel %vm273, %v3741, %v3773
    %v4268 = vsel %vm273, %v3742, %v3774
    %v4269 = vsel %vm273, %v3743, %v3775
    %v4270 = vsel %vm273, %v3744, %v3776
    %v4271 = vsel %vm273, %v3745, %v3777
    %v4272 = vsel %vm273, %v3746, %v3778
    %v4273 = vsel %vm273, %v3747, %v3779
    %v4274 = vsel %vm273, %v3748, %v3780
    %v4275 = vsel %vm273, %v3749, %v3781
    %v4276 = vsel %vm273, %v3750, %v3782
    %v4277 = vsel %vm273, %v3751, %v3783
    %v4278 = vsel %vm273, %v3752, %v3784
    %v4279 = vsel %vm273, %v3753, %v3785
    %v4280 = vsel %vm1058, %v4264, %v3802
    %v4281 = vsel %vm1058, %v4265, %v3803
    %v4282 = vsel %vm1058, %v4266, %v3804
    %v4283 = vsel %vm1058, %v4267, %v3805
    %v4284 = vsel %vm1058, %v4268, %v3806
    %v4285 = vsel %vm1058, %v4269, %v3807
    %v4286 = vsel %vm1058, %v4270, %v3808
    %v4287 = vsel %vm1058, %v4271, %v3809
    %v4288 = vsel %vm1058, %v4272, %v3810
    %v4289 = vsel %vm1058, %v4273, %v3811
    %v4290 = vsel %vm1058, %v4274, %v3812
    %v4291 = vsel %vm1058, %v4275, %v3813
    %v4292 = vsel %vm1058, %v4276, %v3814
    %v4293 = vsel %vm1058, %v4277, %v3815
    %v4294 = vsel %vm1058, %v4278, %v3816
    %v4295 = vsel %vm1058, %v4279, %v3817
    %v4296 = vsel %vm1092, %v4280, %v4232
    %v4297 = vsel %vm1092, %v4281, %v4233
    %v4298 = vsel %vm1092, %v4282, %v4234
    %v4299 = vsel %vm1092, %v4283, %v4235
    %v4300 = vsel %vm1092, %v4284, %v4236
    %v4301 = vsel %vm1092, %v4285, %v4237
    %v4302 = vsel %vm1092, %v4286, %v4238
    %v4303 = vsel %vm1092, %v4287, %v4239
    %v4304 = vsel %vm1092, %v4288, %v4240
    %v4305 = vsel %vm1092, %v4289, %v4241
    %v4306 = vsel %vm1092, %v4290, %v4242
    %v4307 = vsel %vm1092, %v4291, %v4243
    %v4308 = vsel %vm1092, %v4292, %v4244
    %v4309 = vsel %vm1092, %v4293, %v4245
    %v4310 = vsel %vm1092, %v4294, %v4246
    %v4311 = vsel %vm1092, %v4295, %v4247
    %s4312 = scalar_lea.vmem [#allocation10], 128
    %v4313 = vld [vmem:[%s4312] sm:$0xff]
    %v4314 = vld [vmem:[%s4312 + $0x8] sm:$0xff]
    %v4315 = vld [vmem:[%s4312 + $0x10] sm:$0xff]
    %v4316 = vld [vmem:[%s4312 + $0x18] sm:$0xff]
    %v4317 = vld [vmem:[%s4312 + $0x20] sm:$0xff]
    %v4318 = vld [vmem:[%s4312 + $0x28] sm:$0xff]
    %v4319 = vld [vmem:[%s4312 + $0x30] sm:$0xff]
    %v4320 = vld [vmem:[%s4312 + $0x38] sm:$0xff]
    %v4321 = vld [vmem:[%s4312 + $0x40] sm:$0xff]
    %v4322 = vld [vmem:[%s4312 + $0x48] sm:$0xff]
    %v4323 = vld [vmem:[%s4312 + $0x50] sm:$0xff]
    %v4324 = vld [vmem:[%s4312 + $0x58] sm:$0xff]
    %v4325 = vld [vmem:[%s4312 + $0x60] sm:$0xff]
    %v4326 = vld [vmem:[%s4312 + $0x68] sm:$0xff]
    %v4327 = vld [vmem:[%s4312 + $0x70] sm:$0xff]
    %v4328 = vld [vmem:[%s4312 + $0x78] sm:$0xff]
    %v4336 = vcombine.low %v1893, %v4297
    %v4337 = vcombine.low %v4299, %v4301
    %v4338 = vcombine.low %v1893, %v4305
    %v4339 = vcombine.low %v4307, %v4309
    %4344 = vmatprep.subr.mxu0 0.0
    %4345 = vmatpush1.msra.mxu0 %v4313
    %4346 = vmatprep.subr.mxu0 0.0
    %4347 = vmatpush1.msra.mxu0 %v4314
    %4348 = vmatprep.subr.mxu0 0.0
    %4349 = vmatpush1.msra.mxu0 %v4315
    %4350 = vmatprep.subr.mxu0 0.0
    %4351 = vmatpush1.msra.mxu0 %v4316
    %4352 = vmatprep.subr.mxu0 0.0
    %4353 = vmatpush1.msra.mxu0 %v4317
    %4354 = vmatprep.subr.mxu0 0.0
    %4355 = vmatpush1.msra.mxu0 %v4318
    %4356 = vmatprep.subr.mxu0 0.0
    %4357 = vmatpush1.msra.mxu0 %v4319
    %4358 = vmatprep.subr.mxu0 0.0
    %4359 = vmatpush1.msra.mxu0 %v4320
    %4360 = vmatprep.subr.mxu0 0.0
    %4361 = vmatpush1.msra.mxu0 %v4321
    %4362 = vmatprep.subr.mxu0 0.0
    %4363 = vmatpush1.msra.mxu0 %v4322
    %4364 = vmatprep.subr.mxu0 0.0
    %4365 = vmatpush1.msra.mxu0 %v4323
    %4366 = vmatprep.subr.mxu0 0.0
    %4367 = vmatpush1.msra.mxu0 %v4324
    %4368 = vmatprep.subr.mxu0 0.0
    %4369 = vmatpush1.msra.mxu0 %v4325
    %4370 = vmatprep.subr.mxu0 0.0
    %4371 = vmatpush1.msra.mxu0 %v4326
    %4372 = vmatprep.subr.mxu0 0.0
    %4373 = vmatpush1.msra.mxu0 %v4327
    %4374 = vmatprep.subr.mxu0 0.0
    %4375 = vmatpush1.msra.mxu0 %v4328
    %4376 = vmatprep.subr.mxu0 0.0
    %4377 = vmatpush1.msra.mxu0 0.0
    %4378 = vmatprep.subr.mxu0 0.0
    %4379 = vmatpush1.msra.mxu0 0.0
    %4380 = vmatprep.subr.mxu0 0.0
    %4381 = vmatpush1.msra.mxu0 0.0
    %4382 = vmatprep.subr.mxu0 0.0
    %4383 = vmatpush1.msra.mxu0 0.0
    %4384 = vmatprep.subr.mxu0 0.0
    %4385 = vmatpush1.msra.mxu0 0.0
    %4386 = vmatprep.subr.mxu0 0.0
    %4387 = vmatpush1.msra.mxu0 0.0
    %4388 = vmatprep.subr.mxu0 0.0
    %4389 = vmatpush1.msra.mxu0 0.0
    %4390 = vmatprep.subr.mxu0 0.0
    %4391 = vmatpush1.msra.mxu0 0.0
    %4392 = vmatprep.subr.mxu0 0.0
    %4393 = vmatpush1.msra.mxu0 0.0
    %4394 = vmatprep.subr.mxu0 0.0
    %4395 = vmatpush1.msra.mxu0 0.0
    %4396 = vmatprep.subr.mxu0 0.0
    %4397 = vmatpush1.msra.mxu0 0.0
    %4398 = vmatprep.subr.mxu0 0.0
    %4399 = vmatpush1.msra.mxu0 0.0
    %4400 = vmatprep.subr.mxu0 0.0
    %4401 = vmatpush1.msra.mxu0 0.0
    %4402 = vmatprep.subr.mxu0 0.0
    %4403 = vmatpush1.msra.mxu0 0.0
    %4404 = vmatprep.subr.mxu0 0.0
    %4405 = vmatpush1.msra.mxu0 0.0
    %4406 = vmatprep.subr.mxu0 0.0
    %4407 = vmatpush1.msra.mxu0 0.0
    %4408 = vmatprep.mubr.f32.mxu0 0.0
    %4409 = vmatmul.mubr.f32.gmra.mrb[0].mxu0 %v4336
    %v4410 = vpop.f32.mrb[0].mxu0
    %v4411 = vadd.f32 0.0, %v4410
    %v4412 = vpop.f32.mrb[0].mxu0
    %4413 = vmatprep.mubr.f32.mxu0 0.0
    %4414 = vmatmul.mubr.f32.gmra.mrb[0].mxu0 %v4337
    %v4415 = vpop.f32.mrb[0].mxu0
    %v4416 = vadd.f32 0.0, %v4415
    %v4417 = vpop.f32.mrb[0].mxu0
    %4418 = vmatprep.mubr.f32.mxu0 0.0
    %4419 = vmatmul.mubr.f32.gmra.mrb[0].mxu0 %v4338
    %v4420 = vpop.f32.mrb[0].mxu0
    %v4421 = vadd.f32 0.0, %v4420
    %v4422 = vpop.f32.mrb[0].mxu0
    %4423 = vmatprep.mubr.f32.mxu0 0.0
    %4424 = vmatmul.mubr.f32.gmra.mrb[0].mxu0 %v4339
    %v4425 = vpop.f32.mrb[0].mxu0
    %v4426 = vadd.f32 0.0, %v4425
    %v4427 = vpop.f32.mrb[0].mxu0
    %4428 = vdwg.mxu0
    %v4429 = vadd.f32 %v4228, %v4411
    %v4430 = vadd.f32 %v4229, %v4416
    %v4431 = vadd.f32 %v4230, %v4421
    %v4432 = vadd.f32 %v4231, %v4426
    %s4433 = scalar_lea.vmem [#allocation10], 512
    %v4434 = vld [vmem:[%s4433] sm:$0xff]
    %v4435 = vld [vmem:[%s4433 + $0x8] sm:$0xff]
    %v4436 = vld [vmem:[%s4433 + $0x10] sm:$0xff]
    %v4437 = vld [vmem:[%s4433 + $0x18] sm:$0xff]
    %v4438 = vld [vmem:[%s4433 + $0x20] sm:$0xff]
    %v4439 = vld [vmem:[%s4433 + $0x28] sm:$0xff]
    %v4440 = vld [vmem:[%s4433 + $0x30] sm:$0xff]
    %v4441 = vld [vmem:[%s4433 + $0x38] sm:$0xff]
    %v4442 = vld [vmem:[%s4433 + $0x40] sm:$0xff]
    %v4443 = vld [vmem:[%s4433 + $0x48] sm:$0xff]
    %v4444 = vld [vmem:[%s4433 + $0x50] sm:$0xff]
    %v4445 = vld [vmem:[%s4433 + $0x58] sm:$0xff]
    %v4446 = vld [vmem:[%s4433 + $0x60] sm:$0xff]
    %v4447 = vld [vmem:[%s4433 + $0x68] sm:$0xff]
    %v4448 = vld [vmem:[%s4433 + $0x70] sm:$0xff]
    %v4449 = vld [vmem:[%s4433 + $0x78] sm:$0xff]
    %v4458 = vcombine.low %v4296, %v4298
    %v4459 = vcombine.low %v4300, %v4302
    %v4460 = vcombine.low %v4304, %v4306
    %v4461 = vcombine.low %v4308, %v4310
    %4466 = vmatprep.subr.mxu0 0.0
    %4467 = vmatpush1.msra.mxu0 %v4434
    %4468 = vmatprep.subr.mxu0 0.0
    %4469 = vmatpush1.msra.mxu0 %v4435
    %4470 = vmatprep.subr.mxu0 0.0
    %4471 = vmatpush1.msra.mxu0 %v4436
    %4472 = vmatprep.subr.mxu0 0.0
    %4473 = vmatpush1.msra.mxu0 %v4437
    %4474 = vmatprep.subr.mxu0 0.0
    %4475 = vmatpush1.msra.mxu0 %v4438
    %4476 = vmatprep.subr.mxu0 0.0
    %4477 = vmatpush1.msra.mxu0 %v4439
    %4478 = vmatprep.subr.mxu0 0.0
    %4479 = vmatpush1.msra.mxu0 %v4440
    %4480 = vmatprep.subr.mxu0 0.0
    %4481 = vmatpush1.msra.mxu0 %v4441
    %4482 = vmatprep.subr.mxu0 0.0
    %4483 = vmatpush1.msra.mxu0 %v4442
    %4484 = vmatprep.subr.mxu0 0.0
    %4485 = vmatpush1.msra.mxu0 %v4443
    %4486 = vmatprep.subr.mxu0 0.0
    %4487 = vmatpush1.msra.mxu0 %v4444
    %4488 = vmatprep.subr.mxu0 0.0
    %4489 = vmatpush1.msra.mxu0 %v4445
    %4490 = vmatprep.subr.mxu0 0.0
    %4491 = vmatpush1.msra.mxu0 %v4446
    %4492 = vmatprep.subr.mxu0 0.0
    %4493 = vmatpush1.msra.mxu0 %v4447
    %4494 = vmatprep.subr.mxu0 0.0
    %4495 = vmatpush1.msra.mxu0 %v4448
    %4496 = vmatprep.subr.mxu0 0.0
    %4497 = vmatpush1.msra.mxu0 %v4449
    %4498 = vmatprep.subr.mxu0 0.0
    %4499 = vmatpush1.msra.mxu0 0.0
    %4500 = vmatprep.subr.mxu0 0.0
    %4501 = vmatpush1.msra.mxu0 0.0
    %4502 = vmatprep.subr.mxu0 0.0
    %4503 = vmatpush1.msra.mxu0 0.0
    %4504 = vmatprep.subr.mxu0 0.0
    %4505 = vmatpush1.msra.mxu0 0.0
    %4506 = vmatprep.subr.mxu0 0.0
    %4507 = vmatpush1.msra.mxu0 0.0
    %4508 = vmatprep.subr.mxu0 0.0
    %4509 = vmatpush1.msra.mxu0 0.0
    %4510 = vmatprep.subr.mxu0 0.0
    %4511 = vmatpush1.msra.mxu0 0.0
    %4512 = vmatprep.subr.mxu0 0.0
    %4513 = vmatpush1.msra.mxu0 0.0
    %4514 = vmatprep.subr.mxu0 0.0
    %4515 = vmatpush1.msra.mxu0 0.0
    %4516 = vmatprep.subr.mxu0 0.0
    %4517 = vmatpush1.msra.mxu0 0.0
    %4518 = vmatprep.subr.mxu0 0.0
    %4519 = vmatpush1.msra.mxu0 0.0
    %4520 = vmatprep.subr.mxu0 0.0
    %4521 = vmatpush1.msra.mxu0 0.0
    %4522 = vmatprep.subr.mxu0 0.0
    %4523 = vmatpush1.msra.mxu0 0.0
    %4524 = vmatprep.subr.mxu0 0.0
    %4525 = vmatpush1.msra.mxu0 0.0
    %4526 = vmatprep.subr.mxu0 0.0
    %4527 = vmatpush1.msra.mxu0 0.0
    %4528 = vmatprep.subr.mxu0 0.0
    %4529 = vmatpush1.msra.mxu0 0.0
    %4530 = vmatprep.mubr.f32.mxu0 0.0
    %4531 = vmatmul.mubr.f32.gmra.mrb[0].mxu0 %v4458
    %v4532 = vpop.f32.mrb[0].mxu0
    %v4533 = vadd.f32 0.0, %v4532
    %v4534 = vpop.f32.mrb[0].mxu0
    %4535 = vmatprep.mubr.f32.mxu0 0.0
    %4536 = vmatmul.mubr.f32.gmra.mrb[0].mxu0 %v4459
    %v4537 = vpop.f32.mrb[0].mxu0
    %v4538 = vadd.f32 0.0, %v4537
    %v4539 = vpop.f32.mrb[0].mxu0
    %4540 = vmatprep.mubr.f32.mxu0 0.0
    %4541 = vmatmul.mubr.f32.gmra.mrb[0].mxu0 %v4460
    %v4542 = vpop.f32.mrb[0].mxu0
    %v4543 = vadd.f32 0.0, %v4542
    %v4544 = vpop.f32.mrb[0].mxu0
    %4545 = vmatprep.mubr.f32.mxu0 0.0
    %4546 = vmatmul.mubr.f32.gmra.mrb[0].mxu0 %v4461
    %v4547 = vpop.f32.mrb[0].mxu0
    %v4548 = vadd.f32 0.0, %v4547
    %v4549 = vpop.f32.mrb[0].mxu0
    %4550 = vdwg.mxu0
    %v4551 = vadd.f32 %v4429, %v4533
    %v4552 = vadd.f32 %v4430, %v4538
    %v4553 = vadd.f32 %v4431, %v4543
    %v4554 = vadd.f32 %v4432, %v4548
    %s4555 = scalar_lea.vmem [#allocation10], 896
    %v4556 = vld [vmem:[%s4555] sm:$0xff]
    %v4557 = vld [vmem:[%s4555 + $0x8] sm:$0xff]
    %v4558 = vld [vmem:[%s4555 + $0x10] sm:$0xff]
    %v4559 = vld [vmem:[%s4555 + $0x18] sm:$0xff]
    %v4560 = vld [vmem:[%s4555 + $0x20] sm:$0xff]
    %v4561 = vld [vmem:[%s4555 + $0x28] sm:$0xff]
    %v4562 = vld [vmem:[%s4555 + $0x30] sm:$0xff]
    %v4563 = vld [vmem:[%s4555 + $0x38] sm:$0xff]
    %v4564 = vld [vmem:[%s4555 + $0x40] sm:$0xff]
    %v4565 = vld [vmem:[%s4555 + $0x48] sm:$0xff]
    %v4566 = vld [vmem:[%s4555 + $0x50] sm:$0xff]
    %v4567 = vld [vmem:[%s4555 + $0x58] sm:$0xff]
    %v4568 = vld [vmem:[%s4555 + $0x60] sm:$0xff]
    %v4569 = vld [vmem:[%s4555 + $0x68] sm:$0xff]
    %v4570 = vld [vmem:[%s4555 + $0x70] sm:$0xff]
    %v4571 = vld [vmem:[%s4555 + $0x78] sm:$0xff]
    %v4574 = vcombine.low %v4297, %v4299
    %v4575 = vcombine.low %v4301, %v4303
    %v4576 = vcombine.low %v4305, %v4307
    %v4577 = vcombine.low %v4309, %v4311
    %4582 = vmatprep.subr.mxu0 0.0
    %4583 = vmatpush1.msra.mxu0 %v4556
    %4584 = vmatprep.subr.mxu0 0.0
    %4585 = vmatpush1.msra.mxu0 %v4557
    %4586 = vmatprep.subr.mxu0 0.0
    %4587 = vmatpush1.msra.mxu0 %v4558
    %4588 = vmatprep.subr.mxu0 0.0
    %4589 = vmatpush1.msra.mxu0 %v4559
    %4590 = vmatprep.subr.mxu0 0.0
    %4591 = vmatpush1.msra.mxu0 %v4560
    %4592 = vmatprep.subr.mxu0 0.0
    %4593 = vmatpush1.msra.mxu0 %v4561
    %4594 = vmatprep.subr.mxu0 0.0
    %4595 = vmatpush1.msra.mxu0 %v4562
    %4596 = vmatprep.subr.mxu0 0.0
    %4597 = vmatpush1.msra.mxu0 %v4563
    %4598 = vmatprep.subr.mxu0 0.0
    %4599 = vmatpush1.msra.mxu0 %v4564
    %4600 = vmatprep.subr.mxu0 0.0
    %4601 = vmatpush1.msra.mxu0 %v4565
    %4602 = vmatprep.subr.mxu0 0.0
    %4603 = vmatpush1.msra.mxu0 %v4566
    %4604 = vmatprep.subr.mxu0 0.0
    %4605 = vmatpush1.msra.mxu0 %v4567
    %4606 = vmatprep.subr.mxu0 0.0
    %4607 = vmatpush1.msra.mxu0 %v4568
    %4608 = vmatprep.subr.mxu0 0.0
    %4609 = vmatpush1.msra.mxu0 %v4569
    %4610 = vmatprep.subr.mxu0 0.0
    %4611 = vmatpush1.msra.mxu0 %v4570
    %4612 = vmatprep.subr.mxu0 0.0
    %4613 = vmatpush1.msra.mxu0 %v4571
    %4614 = vmatprep.subr.mxu0 0.0
    %4615 = vmatpush1.msra.mxu0 0.0
    %4616 = vmatprep.subr.mxu0 0.0
    %4617 = vmatpush1.msra.mxu0 0.0
    %4618 = vmatprep.subr.mxu0 0.0
    %4619 = vmatpush1.msra.mxu0 0.0
    %4620 = vmatprep.subr.mxu0 0.0
    %4621 = vmatpush1.msra.mxu0 0.0
    %4622 = vmatprep.subr.mxu0 0.0
    %4623 = vmatpush1.msra.mxu0 0.0
    %4624 = vmatprep.subr.mxu0 0.0
    %4625 = vmatpush1.msra.mxu0 0.0
    %4626 = vmatprep.subr.mxu0 0.0
    %4627 = vmatpush1.msra.mxu0 0.0
    %4628 = vmatprep.subr.mxu0 0.0
    %4629 = vmatpush1.msra.mxu0 0.0
    %4630 = vmatprep.subr.mxu0 0.0
    %4631 = vmatpush1.msra.mxu0 0.0
    %4632 = vmatprep.subr.mxu0 0.0
    %4633 = vmatpush1.msra.mxu0 0.0
    %4634 = vmatprep.subr.mxu0 0.0
    %4635 = vmatpush1.msra.mxu0 0.0
    %4636 = vmatprep.subr.mxu0 0.0
    %4637 = vmatpush1.msra.mxu0 0.0
    %4638 = vmatprep.subr.mxu0 0.0
    %4639 = vmatpush1.msra.mxu0 0.0
    %4640 = vmatprep.subr.mxu0 0.0
    %4641 = vmatpush1.msra.mxu0 0.0
    %4642 = vmatprep.subr.mxu0 0.0
    %4643 = vmatpush1.msra.mxu0 0.0
    %4644 = vmatprep.subr.mxu0 0.0
    %4645 = vmatpush1.msra.mxu0 0.0
    %4646 = vmatprep.mubr.f32.mxu0 0.0
    %4647 = vmatmul.mubr.f32.gmra.mrb[0].mxu0 %v4574
    %v4648 = vpop.f32.mrb[0].mxu0
    %v4649 = vadd.f32 0.0, %v4648
    %v4650 = vpop.f32.mrb[0].mxu0
    %4651 = vmatprep.mubr.f32.mxu0 0.0
    %4652 = vmatmul.mubr.f32.gmra.mrb[0].mxu0 %v4575
    %v4653 = vpop.f32.mrb[0].mxu0
    %v4654 = vadd.f32 0.0, %v4653
    %v4655 = vpop.f32.mrb[0].mxu0
    %4656 = vmatprep.mubr.f32.mxu0 0.0
    %4657 = vmatmul.mubr.f32.gmra.mrb[0].mxu0 %v4576
    %v4658 = vpop.f32.mrb[0].mxu0
    %v4659 = vadd.f32 0.0, %v4658
    %v4660 = vpop.f32.mrb[0].mxu0
    %4661 = vmatprep.mubr.f32.mxu0 0.0
    %4662 = vmatmul.mubr.f32.gmra.mrb[0].mxu0 %v4577
    %v4663 = vpop.f32.mrb[0].mxu0
    %v4664 = vadd.f32 0.0, %v4663
    %v4665 = vpop.f32.mrb[0].mxu0
    %4666 = vdwg.mxu0
    %v4667 = vadd.f32 %v4551, %v4649
    %v4668 = vadd.f32 %v4552, %v4654
    %v4669 = vadd.f32 %v4553, %v4659
    %v4670 = vadd.f32 %v4554, %v4664
    %v4687 = vrot.slane %v3706, 5
    %v4688 = vrot.slane %v3707, 5
    %v4689 = vrot.slane %v3708, 5
    %v4690 = vrot.slane %v3709, 5
    %v4691 = vrot.slane %v3710, 5
    %v4692 = vrot.slane %v3711, 5
    %v4693 = vrot.slane %v3712, 5
    %v4694 = vrot.slane %v3713, 5
    %v4695 = vrot.slane %v3714, 5
    %v4696 = vrot.slane %v3715, 5
    %v4697 = vrot.slane %v3716, 5
    %v4698 = vrot.slane %v3717, 5
    %v4699 = vrot.slane %v3718, 5
    %v4700 = vrot.slane %v3719, 5
    %v4701 = vrot.slane %v3720, 5
    %v4702 = vrot.slane %v3721, 5
    %v4719 = vsel %vm273, %v3770, %v3802
    %v4720 = vsel %vm273, %v3771, %v3803
    %v4721 = vsel %vm273, %v3772, %v3804
    %v4722 = vsel %vm273, %v3773, %v3805
    %v4723 = vsel %vm273, %v3774, %v3806
    %v4724 = vsel %vm273, %v3775, %v3807
    %v4725 = vsel %vm273, %v3776, %v3808
    %v4726 = vsel %vm273, %v3777, %v3809
    %v4727 = vsel %vm273, %v3778, %v3810
    %v4728 = vsel %vm273, %v3779, %v3811
    %v4729 = vsel %vm273, %v3780, %v3812
    %v4730 = vsel %vm273, %v3781, %v3813
    %v4731 = vsel %vm273, %v3782, %v3814
    %v4732 = vsel %vm273, %v3783, %v3815
    %v4733 = vsel %vm273, %v3784, %v3816
    %v4734 = vsel %vm273, %v3785, %v3817
    %v4735 = vsel %vm1058, %v4719, %v4232
    %v4736 = vsel %vm1058, %v4720, %v4233
    %v4737 = vsel %vm1058, %v4721, %v4234
    %v4738 = vsel %vm1058, %v4722, %v4235
    %v4739 = vsel %vm1058, %v4723, %v4236
    %v4740 = vsel %vm1058, %v4724, %v4237
    %v4741 = vsel %vm1058, %v4725, %v4238
    %v4742 = vsel %vm1058, %v4726, %v4239
    %v4743 = vsel %vm1058, %v4727, %v4240
    %v4744 = vsel %vm1058, %v4728, %v4241
    %v4745 = vsel %vm1058, %v4729, %v4242
    %v4746 = vsel %vm1058, %v4730, %v4243
    %v4747 = vsel %vm1058, %v4731, %v4244
    %v4748 = vsel %vm1058, %v4732, %v4245
    %v4749 = vsel %vm1058, %v4733, %v4246
    %v4750 = vsel %vm1058, %v4734, %v4247
    %v4751 = vsel %vm1092, %v4735, %v4687
    %v4752 = vsel %vm1092, %v4736, %v4688
    %v4753 = vsel %vm1092, %v4737, %v4689
    %v4754 = vsel %vm1092, %v4738, %v4690
    %v4755 = vsel %vm1092, %v4739, %v4691
    %v4756 = vsel %vm1092, %v4740, %v4692
    %v4757 = vsel %vm1092, %v4741, %v4693
    %v4758 = vsel %vm1092, %v4742, %v4694
    %v4759 = vsel %vm1092, %v4743, %v4695
    %v4760 = vsel %vm1092, %v4744, %v4696
    %v4761 = vsel %vm1092, %v4745, %v4697
    %v4762 = vsel %vm1092, %v4746, %v4698
    %v4763 = vsel %vm1092, %v4747, %v4699
    %v4764 = vsel %vm1092, %v4748, %v4700
    %v4765 = vsel %vm1092, %v4749, %v4701
    %v4766 = vsel %vm1092, %v4750, %v4702
    %s4767 = scalar_lea.vmem [#allocation10], 256
    %v4768 = vld [vmem:[%s4767] sm:$0xff]
    %v4769 = vld [vmem:[%s4767 + $0x8] sm:$0xff]
    %v4770 = vld [vmem:[%s4767 + $0x10] sm:$0xff]
    %v4771 = vld [vmem:[%s4767 + $0x18] sm:$0xff]
    %v4772 = vld [vmem:[%s4767 + $0x20] sm:$0xff]
    %v4773 = vld [vmem:[%s4767 + $0x28] sm:$0xff]
    %v4774 = vld [vmem:[%s4767 + $0x30] sm:$0xff]
    %v4775 = vld [vmem:[%s4767 + $0x38] sm:$0xff]
    %v4776 = vld [vmem:[%s4767 + $0x40] sm:$0xff]
    %v4777 = vld [vmem:[%s4767 + $0x48] sm:$0xff]
    %v4778 = vld [vmem:[%s4767 + $0x50] sm:$0xff]
    %v4779 = vld [vmem:[%s4767 + $0x58] sm:$0xff]
    %v4780 = vld [vmem:[%s4767 + $0x60] sm:$0xff]
    %v4781 = vld [vmem:[%s4767 + $0x68] sm:$0xff]
    %v4782 = vld [vmem:[%s4767 + $0x70] sm:$0xff]
    %v4783 = vld [vmem:[%s4767 + $0x78] sm:$0xff]
    %v4791 = vcombine.low %v2754, %v4752
    %v4792 = vcombine.low %v4754, %v4756
    %v4793 = vcombine.low %v2754, %v4760
    %v4794 = vcombine.low %v4762, %v4764
    %4799 = vmatprep.subr.mxu0 0.0
    %4800 = vmatpush1.msra.mxu0 %v4768
    %4801 = vmatprep.subr.mxu0 0.0
    %4802 = vmatpush1.msra.mxu0 %v4769
    %4803 = vmatprep.subr.mxu0 0.0
    %4804 = vmatpush1.msra.mxu0 %v4770
    %4805 = vmatprep.subr.mxu0 0.0
    %4806 = vmatpush1.msra.mxu0 %v4771
    %4807 = vmatprep.subr.mxu0 0.0
    %4808 = vmatpush1.msra.mxu0 %v4772
    %4809 = vmatprep.subr.mxu0 0.0
    %4810 = vmatpush1.msra.mxu0 %v4773
    %4811 = vmatprep.subr.mxu0 0.0
    %4812 = vmatpush1.msra.mxu0 %v4774
    %4813 = vmatprep.subr.mxu0 0.0
    %4814 = vmatpush1.msra.mxu0 %v4775
    %4815 = vmatprep.subr.mxu0 0.0
    %4816 = vmatpush1.msra.mxu0 %v4776
    %4817 = vmatprep.subr.mxu0 0.0
    %4818 = vmatpush1.msra.mxu0 %v4777
    %4819 = vmatprep.subr.mxu0 0.0
    %4820 = vmatpush1.msra.mxu0 %v4778
    %4821 = vmatprep.subr.mxu0 0.0
    %4822 = vmatpush1.msra.mxu0 %v4779
    %4823 = vmatprep.subr.mxu0 0.0
    %4824 = vmatpush1.msra.mxu0 %v4780
    %4825 = vmatprep.subr.mxu0 0.0
    %4826 = vmatpush1.msra.mxu0 %v4781
    %4827 = vmatprep.subr.mxu0 0.0
    %4828 = vmatpush1.msra.mxu0 %v4782
    %4829 = vmatprep.subr.mxu0 0.0
    %4830 = vmatpush1.msra.mxu0 %v4783
    %4831 = vmatprep.subr.mxu0 0.0
    %4832 = vmatpush1.msra.mxu0 0.0
    %4833 = vmatprep.subr.mxu0 0.0
    %4834 = vmatpush1.msra.mxu0 0.0
    %4835 = vmatprep.subr.mxu0 0.0
    %4836 = vmatpush1.msra.mxu0 0.0
    %4837 = vmatprep.subr.mxu0 0.0
    %4838 = vmatpush1.msra.mxu0 0.0
    %4839 = vmatprep.subr.mxu0 0.0
    %4840 = vmatpush1.msra.mxu0 0.0
    %4841 = vmatprep.subr.mxu0 0.0
    %4842 = vmatpush1.msra.mxu0 0.0
    %4843 = vmatprep.subr.mxu0 0.0
    %4844 = vmatpush1.msra.mxu0 0.0
    %4845 = vmatprep.subr.mxu0 0.0
    %4846 = vmatpush1.msra.mxu0 0.0
    %4847 = vmatprep.subr.mxu0 0.0
    %4848 = vmatpush1.msra.mxu0 0.0
    %4849 = vmatprep.subr.mxu0 0.0
    %4850 = vmatpush1.msra.mxu0 0.0
    %4851 = vmatprep.subr.mxu0 0.0
    %4852 = vmatpush1.msra.mxu0 0.0
    %4853 = vmatprep.subr.mxu0 0.0
    %4854 = vmatpush1.msra.mxu0 0.0
    %4855 = vmatprep.subr.mxu0 0.0
    %4856 = vmatpush1.msra.mxu0 0.0
    %4857 = vmatprep.subr.mxu0 0.0
    %4858 = vmatpush1.msra.mxu0 0.0
    %4859 = vmatprep.subr.mxu0 0.0
    %4860 = vmatpush1.msra.mxu0 0.0
    %4861 = vmatprep.subr.mxu0 0.0
    %4862 = vmatpush1.msra.mxu0 0.0
    %4863 = vmatprep.mubr.f32.mxu0 0.0
    %4864 = vmatmul.mubr.f32.gmra.mrb[0].mxu0 %v4791
    %v4865 = vpop.f32.mrb[0].mxu0
    %v4866 = vadd.f32 0.0, %v4865
    %v4867 = vpop.f32.mrb[0].mxu0
    %4868 = vmatprep.mubr.f32.mxu0 0.0
    %4869 = vmatmul.mubr.f32.gmra.mrb[0].mxu0 %v4792
    %v4870 = vpop.f32.mrb[0].mxu0
    %v4871 = vadd.f32 0.0, %v4870
    %v4872 = vpop.f32.mrb[0].mxu0
    %4873 = vmatprep.mubr.f32.mxu0 0.0
    %4874 = vmatmul.mubr.f32.gmra.mrb[0].mxu0 %v4793
    %v4875 = vpop.f32.mrb[0].mxu0
    %v4876 = vadd.f32 0.0, %v4875
    %v4877 = vpop.f32.mrb[0].mxu0
    %4878 = vmatprep.mubr.f32.mxu0 0.0
    %4879 = vmatmul.mubr.f32.gmra.mrb[0].mxu0 %v4794
    %v4880 = vpop.f32.mrb[0].mxu0
    %v4881 = vadd.f32 0.0, %v4880
    %v4882 = vpop.f32.mrb[0].mxu0
    %4883 = vdwg.mxu0
    %v4884 = vadd.f32 %v4667, %v4866
    %v4885 = vadd.f32 %v4668, %v4871
    %v4886 = vadd.f32 %v4669, %v4876
    %v4887 = vadd.f32 %v4670, %v4881
    %s4888 = scalar_lea.vmem [#allocation10], 640
    %v4889 = vld [vmem:[%s4888] sm:$0xff]
    %v4890 = vld [vmem:[%s4888 + $0x8] sm:$0xff]
    %v4891 = vld [vmem:[%s4888 + $0x10] sm:$0xff]
    %v4892 = vld [vmem:[%s4888 + $0x18] sm:$0xff]
    %v4893 = vld [vmem:[%s4888 + $0x20] sm:$0xff]
    %v4894 = vld [vmem:[%s4888 + $0x28] sm:$0xff]
    %v4895 = vld [vmem:[%s4888 + $0x30] sm:$0xff]
    %v4896 = vld [vmem:[%s4888 + $0x38] sm:$0xff]
    %v4897 = vld [vmem:[%s4888 + $0x40] sm:$0xff]
    %v4898 = vld [vmem:[%s4888 + $0x48] sm:$0xff]
    %v4899 = vld [vmem:[%s4888 + $0x50] sm:$0xff]
    %v4900 = vld [vmem:[%s4888 + $0x58] sm:$0xff]
    %v4901 = vld [vmem:[%s4888 + $0x60] sm:$0xff]
    %v4902 = vld [vmem:[%s4888 + $0x68] sm:$0xff]
    %v4903 = vld [vmem:[%s4888 + $0x70] sm:$0xff]
    %v4904 = vld [vmem:[%s4888 + $0x78] sm:$0xff]
    %v4913 = vcombine.low %v4751, %v4753
    %v4914 = vcombine.low %v4755, %v4757
    %v4915 = vcombine.low %v4759, %v4761
    %v4916 = vcombine.low %v4763, %v4765
    %4921 = vmatprep.subr.mxu0 0.0
    %4922 = vmatpush1.msra.mxu0 %v4889
    %4923 = vmatprep.subr.mxu0 0.0
    %4924 = vmatpush1.msra.mxu0 %v4890
    %4925 = vmatprep.subr.mxu0 0.0
    %4926 = vmatpush1.msra.mxu0 %v4891
    %4927 = vmatprep.subr.mxu0 0.0
    %4928 = vmatpush1.msra.mxu0 %v4892
    %4929 = vmatprep.subr.mxu0 0.0
    %4930 = vmatpush1.msra.mxu0 %v4893
    %4931 = vmatprep.subr.mxu0 0.0
    %4932 = vmatpush1.msra.mxu0 %v4894
    %4933 = vmatprep.subr.mxu0 0.0
    %4934 = vmatpush1.msra.mxu0 %v4895
    %4935 = vmatprep.subr.mxu0 0.0
    %4936 = vmatpush1.msra.mxu0 %v4896
    %4937 = vmatprep.subr.mxu0 0.0
    %4938 = vmatpush1.msra.mxu0 %v4897
    %4939 = vmatprep.subr.mxu0 0.0
    %4940 = vmatpush1.msra.mxu0 %v4898
    %4941 = vmatprep.subr.mxu0 0.0
    %4942 = vmatpush1.msra.mxu0 %v4899
    %4943 = vmatprep.subr.mxu0 0.0
    %4944 = vmatpush1.msra.mxu0 %v4900
    %4945 = vmatprep.subr.mxu0 0.0
    %4946 = vmatpush1.msra.mxu0 %v4901
    %4947 = vmatprep.subr.mxu0 0.0
    %4948 = vmatpush1.msra.mxu0 %v4902
    %4949 = vmatprep.subr.mxu0 0.0
    %4950 = vmatpush1.msra.mxu0 %v4903
    %4951 = vmatprep.subr.mxu0 0.0
    %4952 = vmatpush1.msra.mxu0 %v4904
    %4953 = vmatprep.subr.mxu0 0.0
    %4954 = vmatpush1.msra.mxu0 0.0
    %4955 = vmatprep.subr.mxu0 0.0
    %4956 = vmatpush1.msra.mxu0 0.0
    %4957 = vmatprep.subr.mxu0 0.0
    %4958 = vmatpush1.msra.mxu0 0.0
    %4959 = vmatprep.subr.mxu0 0.0
    %4960 = vmatpush1.msra.mxu0 0.0
    %4961 = vmatprep.subr.mxu0 0.0
    %4962 = vmatpush1.msra.mxu0 0.0
    %4963 = vmatprep.subr.mxu0 0.0
    %4964 = vmatpush1.msra.mxu0 0.0
    %4965 = vmatprep.subr.mxu0 0.0
    %4966 = vmatpush1.msra.mxu0 0.0
    %4967 = vmatprep.subr.mxu0 0.0
    %4968 = vmatpush1.msra.mxu0 0.0
    %4969 = vmatprep.subr.mxu0 0.0
    %4970 = vmatpush1.msra.mxu0 0.0
    %4971 = vmatprep.subr.mxu0 0.0
    %4972 = vmatpush1.msra.mxu0 0.0
    %4973 = vmatprep.subr.mxu0 0.0
    %4974 = vmatpush1.msra.mxu0 0.0
    %4975 = vmatprep.subr.mxu0 0.0
    %4976 = vmatpush1.msra.mxu0 0.0
    %4977 = vmatprep.subr.mxu0 0.0
    %4978 = vmatpush1.msra.mxu0 0.0
    %4979 = vmatprep.subr.mxu0 0.0
    %4980 = vmatpush1.msra.mxu0 0.0
    %4981 = vmatprep.subr.mxu0 0.0
    %4982 = vmatpush1.msra.mxu0 0.0
    %4983 = vmatprep.subr.mxu0 0.0
    %4984 = vmatpush1.msra.mxu0 0.0
    %4985 = vmatprep.mubr.f32.mxu0 0.0
    %4986 = vmatmul.mubr.f32.gmra.mrb[0].mxu0 %v4913
    %v4987 = vpop.f32.mrb[0].mxu0
    %v4988 = vadd.f32 0.0, %v4987
    %v4989 = vpop.f32.mrb[0].mxu0
    %4990 = vmatprep.mubr.f32.mxu0 0.0
    %4991 = vmatmul.mubr.f32.gmra.mrb[0].mxu0 %v4914
    %v4992 = vpop.f32.mrb[0].mxu0
    %v4993 = vadd.f32 0.0, %v4992
    %v4994 = vpop.f32.mrb[0].mxu0
    %4995 = vmatprep.mubr.f32.mxu0 0.0
    %4996 = vmatmul.mubr.f32.gmra.mrb[0].mxu0 %v4915
    %v4997 = vpop.f32.mrb[0].mxu0
    %v4998 = vadd.f32 0.0, %v4997
    %v4999 = vpop.f32.mrb[0].mxu0
    %5000 = vmatprep.mubr.f32.mxu0 0.0
    %5001 = vmatmul.mubr.f32.gmra.mrb[0].mxu0 %v4916
    %v5002 = vpop.f32.mrb[0].mxu0
    %v5003 = vadd.f32 0.0, %v5002
    %v5004 = vpop.f32.mrb[0].mxu0
    %5005 = vdwg.mxu0
    %v5006 = vadd.f32 %v4884, %v4988
    %v5007 = vadd.f32 %v4885, %v4993
    %v5008 = vadd.f32 %v4886, %v4998
    %v5009 = vadd.f32 %v4887, %v5003
    %s5010 = scalar_lea.vmem [#allocation10], 1024
    %v5011 = vld [vmem:[%s5010] sm:$0xff]
    %v5012 = vld [vmem:[%s5010 + $0x8] sm:$0xff]
    %v5013 = vld [vmem:[%s5010 + $0x10] sm:$0xff]
    %v5014 = vld [vmem:[%s5010 + $0x18] sm:$0xff]
    %v5015 = vld [vmem:[%s5010 + $0x20] sm:$0xff]
    %v5016 = vld [vmem:[%s5010 + $0x28] sm:$0xff]
    %v5017 = vld [vmem:[%s5010 + $0x30] sm:$0xff]
    %v5018 = vld [vmem:[%s5010 + $0x38] sm:$0xff]
    %v5019 = vld [vmem:[%s5010 + $0x40] sm:$0xff]
    %v5020 = vld [vmem:[%s5010 + $0x48] sm:$0xff]
    %v5021 = vld [vmem:[%s5010 + $0x50] sm:$0xff]
    %v5022 = vld [vmem:[%s5010 + $0x58] sm:$0xff]
    %v5023 = vld [vmem:[%s5010 + $0x60] sm:$0xff]
    %v5024 = vld [vmem:[%s5010 + $0x68] sm:$0xff]
    %v5025 = vld [vmem:[%s5010 + $0x70] sm:$0xff]
    %v5026 = vld [vmem:[%s5010 + $0x78] sm:$0xff]
    %v5029 = vcombine.low %v4752, %v4754
    %v5030 = vcombine.low %v4756, %v4758
    %v5031 = vcombine.low %v4760, %v4762
    %v5032 = vcombine.low %v4764, %v4766
    %5037 = vmatprep.subr.mxu0 0.0
    %5038 = vmatpush1.msra.mxu0 %v5011
    %5039 = vmatprep.subr.mxu0 0.0
    %5040 = vmatpush1.msra.mxu0 %v5012
    %5041 = vmatprep.subr.mxu0 0.0
    %5042 = vmatpush1.msra.mxu0 %v5013
    %5043 = vmatprep.subr.mxu0 0.0
    %5044 = vmatpush1.msra.mxu0 %v5014
    %5045 = vmatprep.subr.mxu0 0.0
    %5046 = vmatpush1.msra.mxu0 %v5015
    %5047 = vmatprep.subr.mxu0 0.0
    %5048 = vmatpush1.msra.mxu0 %v5016
    %5049 = vmatprep.subr.mxu0 0.0
    %5050 = vmatpush1.msra.mxu0 %v5017
    %5051 = vmatprep.subr.mxu0 0.0
    %5052 = vmatpush1.msra.mxu0 %v5018
    %5053 = vmatprep.subr.mxu0 0.0
    %5054 = vmatpush1.msra.mxu0 %v5019
    %5055 = vmatprep.subr.mxu0 0.0
    %5056 = vmatpush1.msra.mxu0 %v5020
    %5057 = vmatprep.subr.mxu0 0.0
    %5058 = vmatpush1.msra.mxu0 %v5021
    %5059 = vmatprep.subr.mxu0 0.0
    %5060 = vmatpush1.msra.mxu0 %v5022
    %5061 = vmatprep.subr.mxu0 0.0
    %5062 = vmatpush1.msra.mxu0 %v5023
    %5063 = vmatprep.subr.mxu0 0.0
    %5064 = vmatpush1.msra.mxu0 %v5024
    %5065 = vmatprep.subr.mxu0 0.0
    %5066 = vmatpush1.msra.mxu0 %v5025
    %5067 = vmatprep.subr.mxu0 0.0
    %5068 = vmatpush1.msra.mxu0 %v5026
    %5069 = vmatprep.subr.mxu0 0.0
    %5070 = vmatpush1.msra.mxu0 0.0
    %5071 = vmatprep.subr.mxu0 0.0
    %5072 = vmatpush1.msra.mxu0 0.0
    %5073 = vmatprep.subr.mxu0 0.0
    %5074 = vmatpush1.msra.mxu0 0.0
    %5075 = vmatprep.subr.mxu0 0.0
    %5076 = vmatpush1.msra.mxu0 0.0
    %5077 = vmatprep.subr.mxu0 0.0
    %5078 = vmatpush1.msra.mxu0 0.0
    %5079 = vmatprep.subr.mxu0 0.0
    %5080 = vmatpush1.msra.mxu0 0.0
    %5081 = vmatprep.subr.mxu0 0.0
    %5082 = vmatpush1.msra.mxu0 0.0
    %5083 = vmatprep.subr.mxu0 0.0
    %5084 = vmatpush1.msra.mxu0 0.0
    %5085 = vmatprep.subr.mxu0 0.0
    %5086 = vmatpush1.msra.mxu0 0.0
    %5087 = vmatprep.subr.mxu0 0.0
    %5088 = vmatpush1.msra.mxu0 0.0
    %5089 = vmatprep.subr.mxu0 0.0
    %5090 = vmatpush1.msra.mxu0 0.0
    %5091 = vmatprep.subr.mxu0 0.0
    %5092 = vmatpush1.msra.mxu0 0.0
    %5093 = vmatprep.subr.mxu0 0.0
    %5094 = vmatpush1.msra.mxu0 0.0
    %5095 = vmatprep.subr.mxu0 0.0
    %5096 = vmatpush1.msra.mxu0 0.0
    %5097 = vmatprep.subr.mxu0 0.0
    %5098 = vmatpush1.msra.mxu0 0.0
    %5099 = vmatprep.subr.mxu0 0.0
    %5100 = vmatpush1.msra.mxu0 0.0
    %5101 = vmatprep.mubr.f32.mxu0 0.0
    %5102 = vmatmul.mubr.f32.gmra.mrb[0].mxu0 %v5029
    %v5103 = vpop.f32.mrb[0].mxu0
    %v5104 = vadd.f32 0.0, %v5103
    %v5105 = vpop.f32.mrb[0].mxu0
    %5106 = vmatprep.mubr.f32.mxu0 0.0
    %5107 = vmatmul.mubr.f32.gmra.mrb[0].mxu0 %v5030
    %v5108 = vpop.f32.mrb[0].mxu0
    %v5109 = vadd.f32 0.0, %v5108
    %v5110 = vpop.f32.mrb[0].mxu0
    %5111 = vmatprep.mubr.f32.mxu0 0.0
    %5112 = vmatmul.mubr.f32.gmra.mrb[0].mxu0 %v5031
    %v5113 = vpop.f32.mrb[0].mxu0
    %v5114 = vadd.f32 0.0, %v5113
    %v5115 = vpop.f32.mrb[0].mxu0
    %5116 = vmatprep.mubr.f32.mxu0 0.0
    %5117 = vmatmul.mubr.f32.gmra.mrb[0].mxu0 %v5032
    %v5118 = vpop.f32.mrb[0].mxu0
    %v5119 = vadd.f32 0.0, %v5118
    %v5120 = vpop.f32.mrb[0].mxu0
    %5121 = vdwg.mxu0
    %v5122 = vadd.f32 %v5006, %v5104
    %v5123 = vadd.f32 %v5007, %v5109
    %v5124 = vadd.f32 %v5008, %v5114
    %v5125 = vadd.f32 %v5009, %v5119
    %v5126 = vadd.f32 %v5122, %v5123
    %v5127 = vadd.f32 %v5126, %v5124
    %v5128 = vadd.f32 %v5127, %v5125
    %v5129 = vrot.slane %v5128, 4
    %v5130 = vadd.f32 %v5128, %v5129
    %v5131 = vrot.slane %v5130, 2
    %v5132 = vadd.f32 %v5130, %v5131
    %v5133 = vrot.slane %v5132, 1
    %v5134 = vadd.f32 %v5132, %v5133
    %v5135 = vrcp.pop 32.0
    %v5136 = vmul.f32 %v5134, %v5135
    %v5137 = vsub.f32 %v5122, %v5136
    %v5138 = vsub.f32 %v5123, %v5136
    %v5139 = vsub.f32 %v5124, %v5136
    %v5140 = vsub.f32 %v5125, %v5136
    %v5141 = vmul.f32 %v5137, %v5137
    %v5142 = vmul.f32 %v5138, %v5138
    %v5143 = vmul.f32 %v5139, %v5139
    %v5144 = vmul.f32 %v5140, %v5140
    %v5145 = vadd.f32 %v5141, %v5142
    %v5146 = vadd.f32 %v5145, %v5143
    %v5147 = vadd.f32 %v5146, %v5144
    %v5148 = vrot.slane %v5147, 4
    %v5149 = vadd.f32 %v5147, %v5148
    %v5150 = vrot.slane %v5149, 2
    %v5151 = vadd.f32 %v5149, %v5150
    %v5152 = vrot.slane %v5151, 1
    %v5153 = vadd.f32 %v5151, %v5152
    %v5154 = vmul.f32 %v5153, %v5135
    %v5155 = vadd.f32 %v5154, 1e-05
    %v5156 = vrsqrt.pop %v5155
    %v5157 = vmul.f32 %v5137, %v5156
    %v5158 = vmul.f32 %v5138, %v5156
    %v5159 = vmul.f32 %v5139, %v5156
    %v5160 = vmul.f32 %v5140, %v5156
    %v5161 = vld [vmem:[#allocation11] sm:$0x1]
    %v5163 = vlaneseq
    %v5164 = vshrl.u32 %v5163, 7
    %v5165 = vsub.s32 0, %v5164
    %v5166 = vrot.slane %v5161, %v5165
    %v5168 = vmul.f32 %v5157, %v5166
    %v5169 = vmul.f32 %v5158, %v5166
    %v5170 = vmul.f32 %v5159, %v5166
    %v5171 = vmul.f32 %v5160, %v5166
    %v5172 = vld [vmem:[#allocation13] sm:$0x1]
    %v5174 = vlaneseq
    %v5175 = vshrl.u32 %v5174, 7
    %v5176 = vsub.s32 0, %v5175
    %v5177 = vrot.slane %v5172, %v5176
    %v5179 = vadd.f32 %v5168, %v5177
    %v5180 = vadd.f32 %v5169, %v5177
    %v5181 = vadd.f32 %v5170, %v5177
    %v5182 = vadd.f32 %v5171, %v5177
    %vm5183 = vcmp.ge.f32.partialorder %v5179, 0.0
    %vm5184 = vcmp.ge.f32.partialorder %v5180, 0.0
    %vm5185 = vcmp.ge.f32.partialorder %v5181, 0.0
    %vm5186 = vcmp.ge.f32.partialorder %v5182, 0.0
    %v5187 = vmul.f32 %v5179, 0.01
    %v5188 = vmul.f32 %v5180, 0.01
    %v5189 = vmul.f32 %v5181, 0.01
    %v5190 = vmul.f32 %v5182, 0.01
    %v5191 = vsel %vm5183, %v5179, %v5187
    %v5192 = vsel %vm5184, %v5180, %v5188
    %v5193 = vsel %vm5185, %v5181, %v5189
    %v5194 = vsel %vm5186, %v5182, %v5190
    %v5199 = vcombine.high %v5191, %v5191
    %v5200 = vcombine.high %v5192, %v5192
    %v5201 = vcombine.high %v5193, %v5193
    %v5202 = vcombine.high %v5194, %v5194
    %v5203 = vrot.slane %v5191, 7
    %v5204 = vrot.slane %v5199, 7
    %v5205 = vrot.slane %v5192, 7
    %v5206 = vrot.slane %v5200, 7
    %v5207 = vrot.slane %v5193, 7
    %v5208 = vrot.slane %v5201, 7
    %v5209 = vrot.slane %v5194, 7
    %v5210 = vrot.slane %v5202, 7
    %v5219 = vsel %vm273, 0.0, %v5203
    %v5220 = vsel %vm273, 0.0, %v5204
    %v5221 = vsel %vm273, 0.0, %v5205
    %v5222 = vsel %vm273, 0.0, %v5206
    %v5223 = vsel %vm273, 0.0, %v5207
    %v5224 = vsel %vm273, 0.0, %v5208
    %v5225 = vsel %vm273, 0.0, %v5209
    %v5226 = vsel %vm273, 0.0, %v5210
    %v5227 = vsel %vm1160, %v5219, 0.0
    %v5228 = vsel %vm1160, %v5220, 0.0
    %v5229 = vsel %vm1160, %v5221, 0.0
    %v5230 = vsel %vm1160, %v5222, 0.0
    %v5231 = vsel %vm1160, %v5223, 0.0
    %v5232 = vsel %vm1160, %v5224, 0.0
    %v5233 = vsel %vm1160, %v5225, 0.0
    %v5234 = vsel %vm1160, %v5226, 0.0
    %v5243 = vrot.slane %v5227, 1
    %v5244 = vrot.slane %v5228, 1
    %v5245 = vrot.slane %v5229, 1
    %v5246 = vrot.slane %v5230, 1
    %v5247 = vrot.slane %v5231, 1
    %v5248 = vrot.slane %v5232, 1
    %v5249 = vrot.slane %v5233, 1
    %v5250 = vrot.slane %v5234, 1
    %v5259 = vsel %vm273, %v5227, %v5243
    %v5260 = vsel %vm273, %v5228, %v5244
    %v5261 = vsel %vm273, %v5229, %v5245
    %v5262 = vsel %vm273, %v5230, %v5246
    %v5263 = vsel %vm273, %v5231, %v5247
    %v5264 = vsel %vm273, %v5232, %v5248
    %v5265 = vsel %vm273, %v5233, %v5249
    %v5266 = vsel %vm273, %v5234, %v5250
    %v5267 = vld [vmem:[#allocation14] sm:$0xff]
    %v5268 = vld [vmem:[#allocation14 + $0x8] sm:$0xff]
    %v5269 = vld [vmem:[#allocation14 + $0x10] sm:$0xff]
    %v5270 = vld [vmem:[#allocation14 + $0x18] sm:$0xff]
    %v5271 = vld [vmem:[#allocation14 + $0x20] sm:$0xff]
    %v5272 = vld [vmem:[#allocation14 + $0x28] sm:$0xff]
    %v5273 = vld [vmem:[#allocation14 + $0x30] sm:$0xff]
    %v5274 = vld [vmem:[#allocation14 + $0x38] sm:$0xff]
    %v5275 = vld [vmem:[#allocation14 + $0x40] sm:$0xff]
    %v5276 = vld [vmem:[#allocation14 + $0x48] sm:$0xff]
    %v5277 = vld [vmem:[#allocation14 + $0x50] sm:$0xff]
    %v5278 = vld [vmem:[#allocation14 + $0x58] sm:$0xff]
    %v5279 = vld [vmem:[#allocation14 + $0x60] sm:$0xff]
    %v5280 = vld [vmem:[#allocation14 + $0x68] sm:$0xff]
    %v5281 = vld [vmem:[#allocation14 + $0x70] sm:$0xff]
    %v5282 = vld [vmem:[#allocation14 + $0x78] sm:$0xff]
    %s5283 = scalar_lea.vmem [#allocation14], 384
    %v5284 = vld [vmem:[%s5283] sm:$0xff]
    %v5285 = vld [vmem:[%s5283 + $0x8] sm:$0xff]
    %v5286 = vld [vmem:[%s5283 + $0x10] sm:$0xff]
    %v5287 = vld [vmem:[%s5283 + $0x18] sm:$0xff]
    %v5288 = vld [vmem:[%s5283 + $0x20] sm:$0xff]
    %v5289 = vld [vmem:[%s5283 + $0x28] sm:$0xff]
    %v5290 = vld [vmem:[%s5283 + $0x30] sm:$0xff]
    %v5291 = vld [vmem:[%s5283 + $0x38] sm:$0xff]
    %v5292 = vld [vmem:[%s5283 + $0x40] sm:$0xff]
    %v5293 = vld [vmem:[%s5283 + $0x48] sm:$0xff]
    %v5294 = vld [vmem:[%s5283 + $0x50] sm:$0xff]
    %v5295 = vld [vmem:[%s5283 + $0x58] sm:$0xff]
    %v5296 = vld [vmem:[%s5283 + $0x60] sm:$0xff]
    %v5297 = vld [vmem:[%s5283 + $0x68] sm:$0xff]
    %v5298 = vld [vmem:[%s5283 + $0x70] sm:$0xff]
    %v5299 = vld [vmem:[%s5283 + $0x78] sm:$0xff]
    %v5304 = vcombine.low %v5259, %v5261
    %v5305 = vcombine.low %v5263, %v5265
    %v5307 = vunpack.c.l.s4 1983009808
    %v5308 = vunpack.c.0.s8 %v5307
    %v5309 = vlaneseq
    %v5310 = vshrl.u32 %v5309, 7
    %v5311 = vsub.s32 %v5308, %v5310
    %v5312 = vrot.slane %v5304, %v5311
    %v5314 = vunpack.c.l.s4 1983009808
    %v5315 = vunpack.c.0.s8 %v5314
    %v5316 = vlaneseq
    %v5317 = vshrl.u32 %v5316, 7
    %v5318 = vsub.s32 %v5315, %v5317
    %v5319 = vrot.slane %v5305, %v5318
    %v5320 = vcombine.low %v5312, %v5319
    %5322 = vmatprep.subr.mxu0 0.0
    %5323 = vmatpush1.msra.mxu0 %v5284
    %5324 = vmatprep.subr.mxu0 0.0
    %5325 = vmatpush1.msra.mxu0 %v5285
    %5326 = vmatprep.subr.mxu0 0.0
    %5327 = vmatpush1.msra.mxu0 %v5286
    %5328 = vmatprep.subr.mxu0 0.0
    %5329 = vmatpush1.msra.mxu0 %v5287
    %5330 = vmatprep.subr.mxu0 0.0
    %5331 = vmatpush1.msra.mxu0 %v5288
    %5332 = vmatprep.subr.mxu0 0.0
    %5333 = vmatpush1.msra.mxu0 %v5289
    %5334 = vmatprep.subr.mxu0 0.0
    %5335 = vmatpush1.msra.mxu0 %v5290
    %5336 = vmatprep.subr.mxu0 0.0
    %5337 = vmatpush1.msra.mxu0 %v5291
    %5338 = vmatprep.subr.mxu0 0.0
    %5339 = vmatpush1.msra.mxu0 %v5292
    %5340 = vmatprep.subr.mxu0 0.0
    %5341 = vmatpush1.msra.mxu0 %v5293
    %5342 = vmatprep.subr.mxu0 0.0
    %5343 = vmatpush1.msra.mxu0 %v5294
    %5344 = vmatprep.subr.mxu0 0.0
    %5345 = vmatpush1.msra.mxu0 %v5295
    %5346 = vmatprep.subr.mxu0 0.0
    %5347 = vmatpush1.msra.mxu0 %v5296
    %5348 = vmatprep.subr.mxu0 0.0
    %5349 = vmatpush1.msra.mxu0 %v5297
    %5350 = vmatprep.subr.mxu0 0.0
    %5351 = vmatpush1.msra.mxu0 %v5298
    %5352 = vmatprep.subr.mxu0 0.0
    %5353 = vmatpush1.msra.mxu0 %v5299
    %5354 = vmatprep.subr.mxu0 0.0
    %5355 = vmatpush1.msra.mxu0 0.0
    %5356 = vmatprep.subr.mxu0 0.0
    %5357 = vmatpush1.msra.mxu0 0.0
    %5358 = vmatprep.subr.mxu0 0.0
    %5359 = vmatpush1.msra.mxu0 0.0
    %5360 = vmatprep.subr.mxu0 0.0
    %5361 = vmatpush1.msra.mxu0 0.0
    %5362 = vmatprep.subr.mxu0 0.0
    %5363 = vmatpush1.msra.mxu0 0.0
    %5364 = vmatprep.subr.mxu0 0.0
    %5365 = vmatpush1.msra.mxu0 0.0
    %5366 = vmatprep.subr.mxu0 0.0
    %5367 = vmatpush1.msra.mxu0 0.0
    %5368 = vmatprep.subr.mxu0 0.0
    %5369 = vmatpush1.msra.mxu0 0.0
    %5370 = vmatprep.subr.mxu0 0.0
    %5371 = vmatpush1.msra.mxu0 0.0
    %5372 = vmatprep.subr.mxu0 0.0
    %5373 = vmatpush1.msra.mxu0 0.0
    %5374 = vmatprep.subr.mxu0 0.0
    %5375 = vmatpush1.msra.mxu0 0.0
    %5376 = vmatprep.subr.mxu0 0.0
    %5377 = vmatpush1.msra.mxu0 0.0
    %5378 = vmatprep.subr.mxu0 0.0
    %5379 = vmatpush1.msra.mxu0 0.0
    %5380 = vmatprep.subr.mxu0 0.0
    %5381 = vmatpush1.msra.mxu0 0.0
    %5382 = vmatprep.subr.mxu0 0.0
    %5383 = vmatpush1.msra.mxu0 0.0
    %5384 = vmatprep.subr.mxu0 0.0
    %5385 = vmatpush1.msra.mxu0 0.0
    %5386 = vmatprep.mubr.f32.mxu0 0.0
    %5387 = vmatmul.mubr.f32.gmra.mrb[0].mxu0 %v5320
    %v5388 = vpop.f32.mrb[0].mxu0
    %v5389 = vadd.f32 0.0, %v5388
    %v5390 = vpop.f32.mrb[0].mxu0
    %5391 = vdwg.mxu0
    %v5395 = vcombine.low %v1025, %v5260
    %v5396 = vcombine.low %v1025, %v5264
    %v5398 = vunpack.c.l.s4 1983009808
    %v5399 = vunpack.c.0.s8 %v5398
    %v5400 = vlaneseq
    %v5401 = vshrl.u32 %v5400, 7
    %v5402 = vsub.s32 %v5399, %v5401
    %v5403 = vrot.slane %v5395, %v5402
    %v5405 = vunpack.c.l.s4 1983009808
    %v5406 = vunpack.c.0.s8 %v5405
    %v5407 = vlaneseq
    %v5408 = vshrl.u32 %v5407, 7
    %v5409 = vsub.s32 %v5406, %v5408
    %v5410 = vrot.slane %v5396, %v5409
    %v5411 = vcombine.low %v5403, %v5410
    %5413 = vmatprep.subr.mxu0 0.0
    %5414 = vmatpush1.msra.mxu0 %v5267
    %5415 = vmatprep.subr.mxu0 0.0
    %5416 = vmatpush1.msra.mxu0 %v5268
    %5417 = vmatprep.subr.mxu0 0.0
    %5418 = vmatpush1.msra.mxu0 %v5269
    %5419 = vmatprep.subr.mxu0 0.0
    %5420 = vmatpush1.msra.mxu0 %v5270
    %5421 = vmatprep.subr.mxu0 0.0
    %5422 = vmatpush1.msra.mxu0 %v5271
    %5423 = vmatprep.subr.mxu0 0.0
    %5424 = vmatpush1.msra.mxu0 %v5272
    %5425 = vmatprep.subr.mxu0 0.0
    %5426 = vmatpush1.msra.mxu0 %v5273
    %5427 = vmatprep.subr.mxu0 0.0
    %5428 = vmatpush1.msra.mxu0 %v5274
    %5429 = vmatprep.subr.mxu0 0.0
    %5430 = vmatpush1.msra.mxu0 %v5275
    %5431 = vmatprep.subr.mxu0 0.0
    %5432 = vmatpush1.msra.mxu0 %v5276
    %5433 = vmatprep.subr.mxu0 0.0
    %5434 = vmatpush1.msra.mxu0 %v5277
    %5435 = vmatprep.subr.mxu0 0.0
    %5436 = vmatpush1.msra.mxu0 %v5278
    %5437 = vmatprep.subr.mxu0 0.0
    %5438 = vmatpush1.msra.mxu0 %v5279
    %5439 = vmatprep.subr.mxu0 0.0
    %5440 = vmatpush1.msra.mxu0 %v5280
    %5441 = vmatprep.subr.mxu0 0.0
    %5442 = vmatpush1.msra.mxu0 %v5281
    %5443 = vmatprep.subr.mxu0 0.0
    %5444 = vmatpush1.msra.mxu0 %v5282
    %5445 = vmatprep.subr.mxu0 0.0
    %5446 = vmatpush1.msra.mxu0 0.0
    %5447 = vmatprep.subr.mxu0 0.0
    %5448 = vmatpush1.msra.mxu0 0.0
    %5449 = vmatprep.subr.mxu0 0.0
    %5450 = vmatpush1.msra.mxu0 0.0
    %5451 = vmatprep.subr.mxu0 0.0
    %5452 = vmatpush1.msra.mxu0 0.0
    %5453 = vmatprep.subr.mxu0 0.0
    %5454 = vmatpush1.msra.mxu0 0.0
    %5455 = vmatprep.subr.mxu0 0.0
    %5456 = vmatpush1.msra.mxu0 0.0
    %5457 = vmatprep.subr.mxu0 0.0
    %5458 = vmatpush1.msra.mxu0 0.0
    %5459 = vmatprep.subr.mxu0 0.0
    %5460 = vmatpush1.msra.mxu0 0.0
    %5461 = vmatprep.subr.mxu0 0.0
    %5462 = vmatpush1.msra.mxu0 0.0
    %5463 = vmatprep.subr.mxu0 0.0
    %5464 = vmatpush1.msra.mxu0 0.0
    %5465 = vmatprep.subr.mxu0 0.0
    %5466 = vmatpush1.msra.mxu0 0.0
    %5467 = vmatprep.subr.mxu0 0.0
    %5468 = vmatpush1.msra.mxu0 0.0
    %5469 = vmatprep.subr.mxu0 0.0
    %5470 = vmatpush1.msra.mxu0 0.0
    %5471 = vmatprep.subr.mxu0 0.0
    %5472 = vmatpush1.msra.mxu0 0.0
    %5473 = vmatprep.subr.mxu0 0.0
    %5474 = vmatpush1.msra.mxu0 0.0
    %5475 = vmatprep.subr.mxu0 0.0
    %5476 = vmatpush1.msra.mxu0 0.0
    %5477 = vmatprep.mubr.f32.mxu0 0.0
    %5478 = vmatmul.mubr.f32.gmra.mrb[0].mxu0 %v5411
    %v5479 = vpop.f32.mrb[0].mxu0
    %v5480 = vadd.f32 %v5389, %v5479
    %v5481 = vpop.f32.mrb[0].mxu0
    %5482 = vdwg.mxu0
    %s5483 = scalar_lea.vmem [#allocation14], 768
    %v5484 = vld [vmem:[%s5483] sm:$0xff]
    %v5485 = vld [vmem:[%s5483 + $0x8] sm:$0xff]
    %v5486 = vld [vmem:[%s5483 + $0x10] sm:$0xff]
    %v5487 = vld [vmem:[%s5483 + $0x18] sm:$0xff]
    %v5488 = vld [vmem:[%s5483 + $0x20] sm:$0xff]
    %v5489 = vld [vmem:[%s5483 + $0x28] sm:$0xff]
    %v5490 = vld [vmem:[%s5483 + $0x30] sm:$0xff]
    %v5491 = vld [vmem:[%s5483 + $0x38] sm:$0xff]
    %v5492 = vld [vmem:[%s5483 + $0x40] sm:$0xff]
    %v5493 = vld [vmem:[%s5483 + $0x48] sm:$0xff]
    %v5494 = vld [vmem:[%s5483 + $0x50] sm:$0xff]
    %v5495 = vld [vmem:[%s5483 + $0x58] sm:$0xff]
    %v5496 = vld [vmem:[%s5483 + $0x60] sm:$0xff]
    %v5497 = vld [vmem:[%s5483 + $0x68] sm:$0xff]
    %v5498 = vld [vmem:[%s5483 + $0x70] sm:$0xff]
    %v5499 = vld [vmem:[%s5483 + $0x78] sm:$0xff]
    %v5502 = vcombine.low %v5260, %v5262
    %v5503 = vcombine.low %v5264, %v5266
    %v5505 = vunpack.c.l.s4 1983009808
    %v5506 = vunpack.c.0.s8 %v5505
    %v5507 = vlaneseq
    %v5508 = vshrl.u32 %v5507, 7
    %v5509 = vsub.s32 %v5506, %v5508
    %v5510 = vrot.slane %v5502, %v5509
    %v5512 = vunpack.c.l.s4 1983009808
    %v5513 = vunpack.c.0.s8 %v5512
    %v5514 = vlaneseq
    %v5515 = vshrl.u32 %v5514, 7
    %v5516 = vsub.s32 %v5513, %v5515
    %v5517 = vrot.slane %v5503, %v5516
    %v5518 = vcombine.low %v5510, %v5517
    %5520 = vmatprep.subr.mxu0 0.0
    %5521 = vmatpush1.msra.mxu0 %v5484
    %5522 = vmatprep.subr.mxu0 0.0
    %5523 = vmatpush1.msra.mxu0 %v5485
    %5524 = vmatprep.subr.mxu0 0.0
    %5525 = vmatpush1.msra.mxu0 %v5486
    %5526 = vmatprep.subr.mxu0 0.0
    %5527 = vmatpush1.msra.mxu0 %v5487
    %5528 = vmatprep.subr.mxu0 0.0
    %5529 = vmatpush1.msra.mxu0 %v5488
    %5530 = vmatprep.subr.mxu0 0.0
    %5531 = vmatpush1.msra.mxu0 %v5489
    %5532 = vmatprep.subr.mxu0 0.0
    %5533 = vmatpush1.msra.mxu0 %v5490
    %5534 = vmatprep.subr.mxu0 0.0
    %5535 = vmatpush1.msra.mxu0 %v5491
    %5536 = vmatprep.subr.mxu0 0.0
    %5537 = vmatpush1.msra.mxu0 %v5492
    %5538 = vmatprep.subr.mxu0 0.0
    %5539 = vmatpush1.msra.mxu0 %v5493
    %5540 = vmatprep.subr.mxu0 0.0
    %5541 = vmatpush1.msra.mxu0 %v5494
    %5542 = vmatprep.subr.mxu0 0.0
    %5543 = vmatpush1.msra.mxu0 %v5495
    %5544 = vmatprep.subr.mxu0 0.0
    %5545 = vmatpush1.msra.mxu0 %v5496
    %5546 = vmatprep.subr.mxu0 0.0
    %5547 = vmatpush1.msra.mxu0 %v5497
    %5548 = vmatprep.subr.mxu0 0.0
    %5549 = vmatpush1.msra.mxu0 %v5498
    %5550 = vmatprep.subr.mxu0 0.0
    %5551 = vmatpush1.msra.mxu0 %v5499
    %5552 = vmatprep.subr.mxu0 0.0
    %5553 = vmatpush1.msra.mxu0 0.0
    %5554 = vmatprep.subr.mxu0 0.0
    %5555 = vmatpush1.msra.mxu0 0.0
    %5556 = vmatprep.subr.mxu0 0.0
    %5557 = vmatpush1.msra.mxu0 0.0
    %5558 = vmatprep.subr.mxu0 0.0
    %5559 = vmatpush1.msra.mxu0 0.0
    %5560 = vmatprep.subr.mxu0 0.0
    %5561 = vmatpush1.msra.mxu0 0.0
    %5562 = vmatprep.subr.mxu0 0.0
    %5563 = vmatpush1.msra.mxu0 0.0
    %5564 = vmatprep.subr.mxu0 0.0
    %5565 = vmatpush1.msra.mxu0 0.0
    %5566 = vmatprep.subr.mxu0 0.0
    %5567 = vmatpush1.msra.mxu0 0.0
    %5568 = vmatprep.subr.mxu0 0.0
    %5569 = vmatpush1.msra.mxu0 0.0
    %5570 = vmatprep.subr.mxu0 0.0
    %5571 = vmatpush1.msra.mxu0 0.0
    %5572 = vmatprep.subr.mxu0 0.0
    %5573 = vmatpush1.msra.mxu0 0.0
    %5574 = vmatprep.subr.mxu0 0.0
    %5575 = vmatpush1.msra.mxu0 0.0
    %5576 = vmatprep.subr.mxu0 0.0
    %5577 = vmatpush1.msra.mxu0 0.0
    %5578 = vmatprep.subr.mxu0 0.0
    %5579 = vmatpush1.msra.mxu0 0.0
    %5580 = vmatprep.subr.mxu0 0.0
    %5581 = vmatpush1.msra.mxu0 0.0
    %5582 = vmatprep.subr.mxu0 0.0
    %5583 = vmatpush1.msra.mxu0 0.0
    %5584 = vmatprep.mubr.f32.mxu0 0.0
    %5585 = vmatmul.mubr.f32.gmra.mrb[0].mxu0 %v5518
    %v5586 = vpop.f32.mrb[0].mxu0
    %v5587 = vadd.f32 0.0, %v5586
    %v5588 = vpop.f32.mrb[0].mxu0
    %5589 = vdwg.mxu0
    %v5590 = vadd.f32 %v5480, %v5587
    %v5591 = vrot.slane %v5227, 2
    %v5592 = vrot.slane %v5228, 2
    %v5593 = vrot.slane %v5229, 2
    %v5594 = vrot.slane %v5230, 2
    %v5595 = vrot.slane %v5231, 2
    %v5596 = vrot.slane %v5232, 2
    %v5597 = vrot.slane %v5233, 2
    %v5598 = vrot.slane %v5234, 2
    %v5607 = vsel %vm273, %v5243, %v5591
    %v5608 = vsel %vm273, %v5244, %v5592
    %v5609 = vsel %vm273, %v5245, %v5593
    %v5610 = vsel %vm273, %v5246, %v5594
    %v5611 = vsel %vm273, %v5247, %v5595
    %v5612 = vsel %vm273, %v5248, %v5596
    %v5613 = vsel %vm273, %v5249, %v5597
    %v5614 = vsel %vm273, %v5250, %v5598
    %s5615 = scalar_lea.vmem [#allocation14], 128
    %v5616 = vld [vmem:[%s5615] sm:$0xff]
    %v5617 = vld [vmem:[%s5615 + $0x8] sm:$0xff]
    %v5618 = vld [vmem:[%s5615 + $0x10] sm:$0xff]
    %v5619 = vld [vmem:[%s5615 + $0x18] sm:$0xff]
    %v5620 = vld [vmem:[%s5615 + $0x20] sm:$0xff]
    %v5621 = vld [vmem:[%s5615 + $0x28] sm:$0xff]
    %v5622 = vld [vmem:[%s5615 + $0x30] sm:$0xff]
    %v5623 = vld [vmem:[%s5615 + $0x38] sm:$0xff]
    %v5624 = vld [vmem:[%s5615 + $0x40] sm:$0xff]
    %v5625 = vld [vmem:[%s5615 + $0x48] sm:$0xff]
    %v5626 = vld [vmem:[%s5615 + $0x50] sm:$0xff]
    %v5627 = vld [vmem:[%s5615 + $0x58] sm:$0xff]
    %v5628 = vld [vmem:[%s5615 + $0x60] sm:$0xff]
    %v5629 = vld [vmem:[%s5615 + $0x68] sm:$0xff]
    %v5630 = vld [vmem:[%s5615 + $0x70] sm:$0xff]
    %v5631 = vld [vmem:[%s5615 + $0x78] sm:$0xff]
    %v5635 = vcombine.low %v1827, %v5608
    %v5636 = vcombine.low %v1827, %v5612
    %v5638 = vunpack.c.l.s4 1983009808
    %v5639 = vunpack.c.0.s8 %v5638
    %v5640 = vlaneseq
    %v5641 = vshrl.u32 %v5640, 7
    %v5642 = vsub.s32 %v5639, %v5641
    %v5643 = vrot.slane %v5635, %v5642
    %v5645 = vunpack.c.l.s4 1983009808
    %v5646 = vunpack.c.0.s8 %v5645
    %v5647 = vlaneseq
    %v5648 = vshrl.u32 %v5647, 7
    %v5649 = vsub.s32 %v5646, %v5648
    %v5650 = vrot.slane %v5636, %v5649
    %v5651 = vcombine.low %v5643, %v5650
    %5653 = vmatprep.subr.mxu0 0.0
    %5654 = vmatpush1.msra.mxu0 %v5616
    %5655 = vmatprep.subr.mxu0 0.0
    %5656 = vmatpush1.msra.mxu0 %v5617
    %5657 = vmatprep.subr.mxu0 0.0
    %5658 = vmatpush1.msra.mxu0 %v5618
    %5659 = vmatprep.subr.mxu0 0.0
    %5660 = vmatpush1.msra.mxu0 %v5619
    %5661 = vmatprep.subr.mxu0 0.0
    %5662 = vmatpush1.msra.mxu0 %v5620
    %5663 = vmatprep.subr.mxu0 0.0
    %5664 = vmatpush1.msra.mxu0 %v5621
    %5665 = vmatprep.subr.mxu0 0.0
    %5666 = vmatpush1.msra.mxu0 %v5622
    %5667 = vmatprep.subr.mxu0 0.0
    %5668 = vmatpush1.msra.mxu0 %v5623
    %5669 = vmatprep.subr.mxu0 0.0
    %5670 = vmatpush1.msra.mxu0 %v5624
    %5671 = vmatprep.subr.mxu0 0.0
    %5672 = vmatpush1.msra.mxu0 %v5625
    %5673 = vmatprep.subr.mxu0 0.0
    %5674 = vmatpush1.msra.mxu0 %v5626
    %5675 = vmatprep.subr.mxu0 0.0
    %5676 = vmatpush1.msra.mxu0 %v5627
    %5677 = vmatprep.subr.mxu0 0.0
    %5678 = vmatpush1.msra.mxu0 %v5628
    %5679 = vmatprep.subr.mxu0 0.0
    %5680 = vmatpush1.msra.mxu0 %v5629
    %5681 = vmatprep.subr.mxu0 0.0
    %5682 = vmatpush1.msra.mxu0 %v5630
    %5683 = vmatprep.subr.mxu0 0.0
    %5684 = vmatpush1.msra.mxu0 %v5631
    %5685 = vmatprep.subr.mxu0 0.0
    %5686 = vmatpush1.msra.mxu0 0.0
    %5687 = vmatprep.subr.mxu0 0.0
    %5688 = vmatpush1.msra.mxu0 0.0
    %5689 = vmatprep.subr.mxu0 0.0
    %5690 = vmatpush1.msra.mxu0 0.0
    %5691 = vmatprep.subr.mxu0 0.0
    %5692 = vmatpush1.msra.mxu0 0.0
    %5693 = vmatprep.subr.mxu0 0.0
    %5694 = vmatpush1.msra.mxu0 0.0
    %5695 = vmatprep.subr.mxu0 0.0
    %5696 = vmatpush1.msra.mxu0 0.0
    %5697 = vmatprep.subr.mxu0 0.0
    %5698 = vmatpush1.msra.mxu0 0.0
    %5699 = vmatprep.subr.mxu0 0.0
    %5700 = vmatpush1.msra.mxu0 0.0
    %5701 = vmatprep.subr.mxu0 0.0
    %5702 = vmatpush1.msra.mxu0 0.0
    %5703 = vmatprep.subr.mxu0 0.0
    %5704 = vmatpush1.msra.mxu0 0.0
    %5705 = vmatprep.subr.mxu0 0.0
    %5706 = vmatpush1.msra.mxu0 0.0
    %5707 = vmatprep.subr.mxu0 0.0
    %5708 = vmatpush1.msra.mxu0 0.0
    %5709 = vmatprep.subr.mxu0 0.0
    %5710 = vmatpush1.msra.mxu0 0.0
    %5711 = vmatprep.subr.mxu0 0.0
    %5712 = vmatpush1.msra.mxu0 0.0
    %5713 = vmatprep.subr.mxu0 0.0
    %5714 = vmatpush1.msra.mxu0 0.0
    %5715 = vmatprep.subr.mxu0 0.0
    %5716 = vmatpush1.msra.mxu0 0.0
    %5717 = vmatprep.mubr.f32.mxu0 0.0
    %5718 = vmatmul.mubr.f32.gmra.mrb[0].mxu0 %v5651
    %v5719 = vpop.f32.mrb[0].mxu0
    %v5720 = vadd.f32 0.0, %v5719
    %v5721 = vpop.f32.mrb[0].mxu0
    %5722 = vdwg.mxu0
    %v5723 = vadd.f32 %v5590, %v5720
    %s5724 = scalar_lea.vmem [#allocation14], 512
    %v5725 = vld [vmem:[%s5724] sm:$0xff]
    %v5726 = vld [vmem:[%s5724 + $0x8] sm:$0xff]
    %v5727 = vld [vmem:[%s5724 + $0x10] sm:$0xff]
    %v5728 = vld [vmem:[%s5724 + $0x18] sm:$0xff]
    %v5729 = vld [vmem:[%s5724 + $0x20] sm:$0xff]
    %v5730 = vld [vmem:[%s5724 + $0x28] sm:$0xff]
    %v5731 = vld [vmem:[%s5724 + $0x30] sm:$0xff]
    %v5732 = vld [vmem:[%s5724 + $0x38] sm:$0xff]
    %v5733 = vld [vmem:[%s5724 + $0x40] sm:$0xff]
    %v5734 = vld [vmem:[%s5724 + $0x48] sm:$0xff]
    %v5735 = vld [vmem:[%s5724 + $0x50] sm:$0xff]
    %v5736 = vld [vmem:[%s5724 + $0x58] sm:$0xff]
    %v5737 = vld [vmem:[%s5724 + $0x60] sm:$0xff]
    %v5738 = vld [vmem:[%s5724 + $0x68] sm:$0xff]
    %v5739 = vld [vmem:[%s5724 + $0x70] sm:$0xff]
    %v5740 = vld [vmem:[%s5724 + $0x78] sm:$0xff]
    %v5745 = vcombine.low %v5607, %v5609
    %v5746 = vcombine.low %v5611, %v5613
    %v5748 = vunpack.c.l.s4 1983009808
    %v5749 = vunpack.c.0.s8 %v5748
    %v5750 = vlaneseq
    %v5751 = vshrl.u32 %v5750, 7
    %v5752 = vsub.s32 %v5749, %v5751
    %v5753 = vrot.slane %v5745, %v5752
    %v5755 = vunpack.c.l.s4 1983009808
    %v5756 = vunpack.c.0.s8 %v5755
    %v5757 = vlaneseq
    %v5758 = vshrl.u32 %v5757, 7
    %v5759 = vsub.s32 %v5756, %v5758
    %v5760 = vrot.slane %v5746, %v5759
    %v5761 = vcombine.low %v5753, %v5760
    %5763 = vmatprep.subr.mxu0 0.0
    %5764 = vmatpush1.msra.mxu0 %v5725
    %5765 = vmatprep.subr.mxu0 0.0
    %5766 = vmatpush1.msra.mxu0 %v5726
    %5767 = vmatprep.subr.mxu0 0.0
    %5768 = vmatpush1.msra.mxu0 %v5727
    %5769 = vmatprep.subr.mxu0 0.0
    %5770 = vmatpush1.msra.mxu0 %v5728
    %5771 = vmatprep.subr.mxu0 0.0
    %5772 = vmatpush1.msra.mxu0 %v5729
    %5773 = vmatprep.subr.mxu0 0.0
    %5774 = vmatpush1.msra.mxu0 %v5730
    %5775 = vmatprep.subr.mxu0 0.0
    %5776 = vmatpush1.msra.mxu0 %v5731
    %5777 = vmatprep.subr.mxu0 0.0
    %5778 = vmatpush1.msra.mxu0 %v5732
    %5779 = vmatprep.subr.mxu0 0.0
    %5780 = vmatpush1.msra.mxu0 %v5733
    %5781 = vmatprep.subr.mxu0 0.0
    %5782 = vmatpush1.msra.mxu0 %v5734
    %5783 = vmatprep.subr.mxu0 0.0
    %5784 = vmatpush1.msra.mxu0 %v5735
    %5785 = vmatprep.subr.mxu0 0.0
    %5786 = vmatpush1.msra.mxu0 %v5736
    %5787 = vmatprep.subr.mxu0 0.0
    %5788 = vmatpush1.msra.mxu0 %v5737
    %5789 = vmatprep.subr.mxu0 0.0
    %5790 = vmatpush1.msra.mxu0 %v5738
    %5791 = vmatprep.subr.mxu0 0.0
    %5792 = vmatpush1.msra.mxu0 %v5739
    %5793 = vmatprep.subr.mxu0 0.0
    %5794 = vmatpush1.msra.mxu0 %v5740
    %5795 = vmatprep.subr.mxu0 0.0
    %5796 = vmatpush1.msra.mxu0 0.0
    %5797 = vmatprep.subr.mxu0 0.0
    %5798 = vmatpush1.msra.mxu0 0.0
    %5799 = vmatprep.subr.mxu0 0.0
    %5800 = vmatpush1.msra.mxu0 0.0
    %5801 = vmatprep.subr.mxu0 0.0
    %5802 = vmatpush1.msra.mxu0 0.0
    %5803 = vmatprep.subr.mxu0 0.0
    %5804 = vmatpush1.msra.mxu0 0.0
    %5805 = vmatprep.subr.mxu0 0.0
    %5806 = vmatpush1.msra.mxu0 0.0
    %5807 = vmatprep.subr.mxu0 0.0
    %5808 = vmatpush1.msra.mxu0 0.0
    %5809 = vmatprep.subr.mxu0 0.0
    %5810 = vmatpush1.msra.mxu0 0.0
    %5811 = vmatprep.subr.mxu0 0.0
    %5812 = vmatpush1.msra.mxu0 0.0
    %5813 = vmatprep.subr.mxu0 0.0
    %5814 = vmatpush1.msra.mxu0 0.0
    %5815 = vmatprep.subr.mxu0 0.0
    %5816 = vmatpush1.msra.mxu0 0.0
    %5817 = vmatprep.subr.mxu0 0.0
    %5818 = vmatpush1.msra.mxu0 0.0
    %5819 = vmatprep.subr.mxu0 0.0
    %5820 = vmatpush1.msra.mxu0 0.0
    %5821 = vmatprep.subr.mxu0 0.0
    %5822 = vmatpush1.msra.mxu0 0.0
    %5823 = vmatprep.subr.mxu0 0.0
    %5824 = vmatpush1.msra.mxu0 0.0
    %5825 = vmatprep.subr.mxu0 0.0
    %5826 = vmatpush1.msra.mxu0 0.0
    %5827 = vmatprep.mubr.f32.mxu0 0.0
    %5828 = vmatmul.mubr.f32.gmra.mrb[0].mxu0 %v5761
    %v5829 = vpop.f32.mrb[0].mxu0
    %v5830 = vadd.f32 0.0, %v5829
    %v5831 = vpop.f32.mrb[0].mxu0
    %5832 = vdwg.mxu0
    %v5833 = vadd.f32 %v5723, %v5830
    %s5834 = scalar_lea.vmem [#allocation14], 896
    %v5835 = vld [vmem:[%s5834] sm:$0xff]
    %v5836 = vld [vmem:[%s5834 + $0x8] sm:$0xff]
    %v5837 = vld [vmem:[%s5834 + $0x10] sm:$0xff]
    %v5838 = vld [vmem:[%s5834 + $0x18] sm:$0xff]
    %v5839 = vld [vmem:[%s5834 + $0x20] sm:$0xff]
    %v5840 = vld [vmem:[%s5834 + $0x28] sm:$0xff]
    %v5841 = vld [vmem:[%s5834 + $0x30] sm:$0xff]
    %v5842 = vld [vmem:[%s5834 + $0x38] sm:$0xff]
    %v5843 = vld [vmem:[%s5834 + $0x40] sm:$0xff]
    %v5844 = vld [vmem:[%s5834 + $0x48] sm:$0xff]
    %v5845 = vld [vmem:[%s5834 + $0x50] sm:$0xff]
    %v5846 = vld [vmem:[%s5834 + $0x58] sm:$0xff]
    %v5847 = vld [vmem:[%s5834 + $0x60] sm:$0xff]
    %v5848 = vld [vmem:[%s5834 + $0x68] sm:$0xff]
    %v5849 = vld [vmem:[%s5834 + $0x70] sm:$0xff]
    %v5850 = vld [vmem:[%s5834 + $0x78] sm:$0xff]
    %v5853 = vcombine.low %v5608, %v5610
    %v5854 = vcombine.low %v5612, %v5614
    %v5856 = vunpack.c.l.s4 1983009808
    %v5857 = vunpack.c.0.s8 %v5856
    %v5858 = vlaneseq
    %v5859 = vshrl.u32 %v5858, 7
    %v5860 = vsub.s32 %v5857, %v5859
    %v5861 = vrot.slane %v5853, %v5860
    %v5863 = vunpack.c.l.s4 1983009808
    %v5864 = vunpack.c.0.s8 %v5863
    %v5865 = vlaneseq
    %v5866 = vshrl.u32 %v5865, 7
    %v5867 = vsub.s32 %v5864, %v5866
    %v5868 = vrot.slane %v5854, %v5867
    %v5869 = vcombine.low %v5861, %v5868
    %5871 = vmatprep.subr.mxu0 0.0
    %5872 = vmatpush1.msra.mxu0 %v5835
    %5873 = vmatprep.subr.mxu0 0.0
    %5874 = vmatpush1.msra.mxu0 %v5836
    %5875 = vmatprep.subr.mxu0 0.0
    %5876 = vmatpush1.msra.mxu0 %v5837
    %5877 = vmatprep.subr.mxu0 0.0
    %5878 = vmatpush1.msra.mxu0 %v5838
    %5879 = vmatprep.subr.mxu0 0.0
    %5880 = vmatpush1.msra.mxu0 %v5839
    %5881 = vmatprep.subr.mxu0 0.0
    %5882 = vmatpush1.msra.mxu0 %v5840
    %5883 = vmatprep.subr.mxu0 0.0
    %5884 = vmatpush1.msra.mxu0 %v5841
    %5885 = vmatprep.subr.mxu0 0.0
    %5886 = vmatpush1.msra.mxu0 %v5842
    %5887 = vmatprep.subr.mxu0 0.0
    %5888 = vmatpush1.msra.mxu0 %v5843
    %5889 = vmatprep.subr.mxu0 0.0
    %5890 = vmatpush1.msra.mxu0 %v5844
    %5891 = vmatprep.subr.mxu0 0.0
    %5892 = vmatpush1.msra.mxu0 %v5845
    %5893 = vmatprep.subr.mxu0 0.0
    %5894 = vmatpush1.msra.mxu0 %v5846
    %5895 = vmatprep.subr.mxu0 0.0
    %5896 = vmatpush1.msra.mxu0 %v5847
    %5897 = vmatprep.subr.mxu0 0.0
    %5898 = vmatpush1.msra.mxu0 %v5848
    %5899 = vmatprep.subr.mxu0 0.0
    %5900 = vmatpush1.msra.mxu0 %v5849
    %5901 = vmatprep.subr.mxu0 0.0
    %5902 = vmatpush1.msra.mxu0 %v5850
    %5903 = vmatprep.subr.mxu0 0.0
    %5904 = vmatpush1.msra.mxu0 0.0
    %5905 = vmatprep.subr.mxu0 0.0
    %5906 = vmatpush1.msra.mxu0 0.0
    %5907 = vmatprep.subr.mxu0 0.0
    %5908 = vmatpush1.msra.mxu0 0.0
    %5909 = vmatprep.subr.mxu0 0.0
    %5910 = vmatpush1.msra.mxu0 0.0
    %5911 = vmatprep.subr.mxu0 0.0
    %5912 = vmatpush1.msra.mxu0 0.0
    %5913 = vmatprep.subr.mxu0 0.0
    %5914 = vmatpush1.msra.mxu0 0.0
    %5915 = vmatprep.subr.mxu0 0.0
    %5916 = vmatpush1.msra.mxu0 0.0
    %5917 = vmatprep.subr.mxu0 0.0
    %5918 = vmatpush1.msra.mxu0 0.0
    %5919 = vmatprep.subr.mxu0 0.0
    %5920 = vmatpush1.msra.mxu0 0.0
    %5921 = vmatprep.subr.mxu0 0.0
    %5922 = vmatpush1.msra.mxu0 0.0
    %5923 = vmatprep.subr.mxu0 0.0
    %5924 = vmatpush1.msra.mxu0 0.0
    %5925 = vmatprep.subr.mxu0 0.0
    %5926 = vmatpush1.msra.mxu0 0.0
    %5927 = vmatprep.subr.mxu0 0.0
    %5928 = vmatpush1.msra.mxu0 0.0
    %5929 = vmatprep.subr.mxu0 0.0
    %5930 = vmatpush1.msra.mxu0 0.0
    %5931 = vmatprep.subr.mxu0 0.0
    %5932 = vmatpush1.msra.mxu0 0.0
    %5933 = vmatprep.subr.mxu0 0.0
    %5934 = vmatpush1.msra.mxu0 0.0
    %5935 = vmatprep.mubr.f32.mxu0 0.0
    %5936 = vmatmul.mubr.f32.gmra.mrb[0].mxu0 %v5869
    %v5937 = vpop.f32.mrb[0].mxu0
    %v5938 = vadd.f32 0.0, %v5937
    %v5939 = vpop.f32.mrb[0].mxu0
    %5940 = vdwg.mxu0
    %v5941 = vadd.f32 %v5833, %v5938
    %v5942 = vrot.slane %v5227, 3
    %v5943 = vrot.slane %v5228, 3
    %v5944 = vrot.slane %v5229, 3
    %v5945 = vrot.slane %v5230, 3
    %v5946 = vrot.slane %v5231, 3
    %v5947 = vrot.slane %v5232, 3
    %v5948 = vrot.slane %v5233, 3
    %v5949 = vrot.slane %v5234, 3
    %v5958 = vsel %vm273, %v5591, %v5942
    %v5959 = vsel %vm273, %v5592, %v5943
    %v5960 = vsel %vm273, %v5593, %v5944
    %v5961 = vsel %vm273, %v5594, %v5945
    %v5962 = vsel %vm273, %v5595, %v5946
    %v5963 = vsel %vm273, %v5596, %v5947
    %v5964 = vsel %vm273, %v5597, %v5948
    %v5965 = vsel %vm273, %v5598, %v5949
    %s5966 = scalar_lea.vmem [#allocation14], 256
    %v5967 = vld [vmem:[%s5966] sm:$0xff]
    %v5968 = vld [vmem:[%s5966 + $0x8] sm:$0xff]
    %v5969 = vld [vmem:[%s5966 + $0x10] sm:$0xff]
    %v5970 = vld [vmem:[%s5966 + $0x18] sm:$0xff]
    %v5971 = vld [vmem:[%s5966 + $0x20] sm:$0xff]
    %v5972 = vld [vmem:[%s5966 + $0x28] sm:$0xff]
    %v5973 = vld [vmem:[%s5966 + $0x30] sm:$0xff]
    %v5974 = vld [vmem:[%s5966 + $0x38] sm:$0xff]
    %v5975 = vld [vmem:[%s5966 + $0x40] sm:$0xff]
    %v5976 = vld [vmem:[%s5966 + $0x48] sm:$0xff]
    %v5977 = vld [vmem:[%s5966 + $0x50] sm:$0xff]
    %v5978 = vld [vmem:[%s5966 + $0x58] sm:$0xff]
    %v5979 = vld [vmem:[%s5966 + $0x60] sm:$0xff]
    %v5980 = vld [vmem:[%s5966 + $0x68] sm:$0xff]
    %v5981 = vld [vmem:[%s5966 + $0x70] sm:$0xff]
    %v5982 = vld [vmem:[%s5966 + $0x78] sm:$0xff]
    %v5986 = vcombine.low %v2688, %v5959
    %v5987 = vcombine.low %v2688, %v5963
    %v5989 = vunpack.c.l.s4 1983009808
    %v5990 = vunpack.c.0.s8 %v5989
    %v5991 = vlaneseq
    %v5992 = vshrl.u32 %v5991, 7
    %v5993 = vsub.s32 %v5990, %v5992
    %v5994 = vrot.slane %v5986, %v5993
    %v5996 = vunpack.c.l.s4 1983009808
    %v5997 = vunpack.c.0.s8 %v5996
    %v5998 = vlaneseq
    %v5999 = vshrl.u32 %v5998, 7
    %v6000 = vsub.s32 %v5997, %v5999
    %v6001 = vrot.slane %v5987, %v6000
    %v6002 = vcombine.low %v5994, %v6001
    %6004 = vmatprep.subr.mxu0 0.0
    %6005 = vmatpush1.msra.mxu0 %v5967
    %6006 = vmatprep.subr.mxu0 0.0
    %6007 = vmatpush1.msra.mxu0 %v5968
    %6008 = vmatprep.subr.mxu0 0.0
    %6009 = vmatpush1.msra.mxu0 %v5969
    %6010 = vmatprep.subr.mxu0 0.0
    %6011 = vmatpush1.msra.mxu0 %v5970
    %6012 = vmatprep.subr.mxu0 0.0
    %6013 = vmatpush1.msra.mxu0 %v5971
    %6014 = vmatprep.subr.mxu0 0.0
    %6015 = vmatpush1.msra.mxu0 %v5972
    %6016 = vmatprep.subr.mxu0 0.0
    %6017 = vmatpush1.msra.mxu0 %v5973
    %6018 = vmatprep.subr.mxu0 0.0
    %6019 = vmatpush1.msra.mxu0 %v5974
    %6020 = vmatprep.subr.mxu0 0.0
    %6021 = vmatpush1.msra.mxu0 %v5975
    %6022 = vmatprep.subr.mxu0 0.0
    %6023 = vmatpush1.msra.mxu0 %v5976
    %6024 = vmatprep.subr.mxu0 0.0
    %6025 = vmatpush1.msra.mxu0 %v5977
    %6026 = vmatprep.subr.mxu0 0.0
    %6027 = vmatpush1.msra.mxu0 %v5978
    %6028 = vmatprep.subr.mxu0 0.0
    %6029 = vmatpush1.msra.mxu0 %v5979
    %6030 = vmatprep.subr.mxu0 0.0
    %6031 = vmatpush1.msra.mxu0 %v5980
    %6032 = vmatprep.subr.mxu0 0.0
    %6033 = vmatpush1.msra.mxu0 %v5981
    %6034 = vmatprep.subr.mxu0 0.0
    %6035 = vmatpush1.msra.mxu0 %v5982
    %6036 = vmatprep.subr.mxu0 0.0
    %6037 = vmatpush1.msra.mxu0 0.0
    %6038 = vmatprep.subr.mxu0 0.0
    %6039 = vmatpush1.msra.mxu0 0.0
    %6040 = vmatprep.subr.mxu0 0.0
    %6041 = vmatpush1.msra.mxu0 0.0
    %6042 = vmatprep.subr.mxu0 0.0
    %6043 = vmatpush1.msra.mxu0 0.0
    %6044 = vmatprep.subr.mxu0 0.0
    %6045 = vmatpush1.msra.mxu0 0.0
    %6046 = vmatprep.subr.mxu0 0.0
    %6047 = vmatpush1.msra.mxu0 0.0
    %6048 = vmatprep.subr.mxu0 0.0
    %6049 = vmatpush1.msra.mxu0 0.0
    %6050 = vmatprep.subr.mxu0 0.0
    %6051 = vmatpush1.msra.mxu0 0.0
    %6052 = vmatprep.subr.mxu0 0.0
    %6053 = vmatpush1.msra.mxu0 0.0
    %6054 = vmatprep.subr.mxu0 0.0
    %6055 = vmatpush1.msra.mxu0 0.0
    %6056 = vmatprep.subr.mxu0 0.0
    %6057 = vmatpush1.msra.mxu0 0.0
    %6058 = vmatprep.subr.mxu0 0.0
    %6059 = vmatpush1.msra.mxu0 0.0
    %6060 = vmatprep.subr.mxu0 0.0
    %6061 = vmatpush1.msra.mxu0 0.0
    %6062 = vmatprep.subr.mxu0 0.0
    %6063 = vmatpush1.msra.mxu0 0.0
    %6064 = vmatprep.subr.mxu0 0.0
    %6065 = vmatpush1.msra.mxu0 0.0
    %6066 = vmatprep.subr.mxu0 0.0
    %6067 = vmatpush1.msra.mxu0 0.0
    %6068 = vmatprep.mubr.f32.mxu0 0.0
    %6069 = vmatmul.mubr.f32.gmra.mrb[0].mxu0 %v6002
    %v6070 = vpop.f32.mrb[0].mxu0
    %v6071 = vadd.f32 0.0, %v6070
    %v6072 = vpop.f32.mrb[0].mxu0
    %6073 = vdwg.mxu0
    %v6074 = vadd.f32 %v5941, %v6071
    %s6075 = scalar_lea.vmem [#allocation14], 640
    %v6076 = vld [vmem:[%s6075] sm:$0xff]
    %v6077 = vld [vmem:[%s6075 + $0x8] sm:$0xff]
    %v6078 = vld [vmem:[%s6075 + $0x10] sm:$0xff]
    %v6079 = vld [vmem:[%s6075 + $0x18] sm:$0xff]
    %v6080 = vld [vmem:[%s6075 + $0x20] sm:$0xff]
    %v6081 = vld [vmem:[%s6075 + $0x28] sm:$0xff]
    %v6082 = vld [vmem:[%s6075 + $0x30] sm:$0xff]
    %v6083 = vld [vmem:[%s6075 + $0x38] sm:$0xff]
    %v6084 = vld [vmem:[%s6075 + $0x40] sm:$0xff]
    %v6085 = vld [vmem:[%s6075 + $0x48] sm:$0xff]
    %v6086 = vld [vmem:[%s6075 + $0x50] sm:$0xff]
    %v6087 = vld [vmem:[%s6075 + $0x58] sm:$0xff]
    %v6088 = vld [vmem:[%s6075 + $0x60] sm:$0xff]
    %v6089 = vld [vmem:[%s6075 + $0x68] sm:$0xff]
    %v6090 = vld [vmem:[%s6075 + $0x70] sm:$0xff]
    %v6091 = vld [vmem:[%s6075 + $0x78] sm:$0xff]
    %v6096 = vcombine.low %v5958, %v5960
    %v6097 = vcombine.low %v5962, %v5964
    %v6099 = vunpack.c.l.s4 1983009808
    %v6100 = vunpack.c.0.s8 %v6099
    %v6101 = vlaneseq
    %v6102 = vshrl.u32 %v6101, 7
    %v6103 = vsub.s32 %v6100, %v6102
    %v6104 = vrot.slane %v6096, %v6103
    %v6106 = vunpack.c.l.s4 1983009808
    %v6107 = vunpack.c.0.s8 %v6106
    %v6108 = vlaneseq
    %v6109 = vshrl.u32 %v6108, 7
    %v6110 = vsub.s32 %v6107, %v6109
    %v6111 = vrot.slane %v6097, %v6110
    %v6112 = vcombine.low %v6104, %v6111
    %6114 = vmatprep.subr.mxu0 0.0
    %6115 = vmatpush1.msra.mxu0 %v6076
    %6116 = vmatprep.subr.mxu0 0.0
    %6117 = vmatpush1.msra.mxu0 %v6077
    %6118 = vmatprep.subr.mxu0 0.0
    %6119 = vmatpush1.msra.mxu0 %v6078
    %6120 = vmatprep.subr.mxu0 0.0
    %6121 = vmatpush1.msra.mxu0 %v6079
    %6122 = vmatprep.subr.mxu0 0.0
    %6123 = vmatpush1.msra.mxu0 %v6080
    %6124 = vmatprep.subr.mxu0 0.0
    %6125 = vmatpush1.msra.mxu0 %v6081
    %6126 = vmatprep.subr.mxu0 0.0
    %6127 = vmatpush1.msra.mxu0 %v6082
    %6128 = vmatprep.subr.mxu0 0.0
    %6129 = vmatpush1.msra.mxu0 %v6083
    %6130 = vmatprep.subr.mxu0 0.0
    %6131 = vmatpush1.msra.mxu0 %v6084
    %6132 = vmatprep.subr.mxu0 0.0
    %6133 = vmatpush1.msra.mxu0 %v6085
    %6134 = vmatprep.subr.mxu0 0.0
    %6135 = vmatpush1.msra.mxu0 %v6086
    %6136 = vmatprep.subr.mxu0 0.0
    %6137 = vmatpush1.msra.mxu0 %v6087
    %6138 = vmatprep.subr.mxu0 0.0
    %6139 = vmatpush1.msra.mxu0 %v6088
    %6140 = vmatprep.subr.mxu0 0.0
    %6141 = vmatpush1.msra.mxu0 %v6089
    %6142 = vmatprep.subr.mxu0 0.0
    %6143 = vmatpush1.msra.mxu0 %v6090
    %6144 = vmatprep.subr.mxu0 0.0
    %6145 = vmatpush1.msra.mxu0 %v6091
    %6146 = vmatprep.subr.mxu0 0.0
    %6147 = vmatpush1.msra.mxu0 0.0
    %6148 = vmatprep.subr.mxu0 0.0
    %6149 = vmatpush1.msra.mxu0 0.0
    %6150 = vmatprep.subr.mxu0 0.0
    %6151 = vmatpush1.msra.mxu0 0.0
    %6152 = vmatprep.subr.mxu0 0.0
    %6153 = vmatpush1.msra.mxu0 0.0
    %6154 = vmatprep.subr.mxu0 0.0
    %6155 = vmatpush1.msra.mxu0 0.0
    %6156 = vmatprep.subr.mxu0 0.0
    %6157 = vmatpush1.msra.mxu0 0.0
    %6158 = vmatprep.subr.mxu0 0.0
    %6159 = vmatpush1.msra.mxu0 0.0
    %6160 = vmatprep.subr.mxu0 0.0
    %6161 = vmatpush1.msra.mxu0 0.0
    %6162 = vmatprep.subr.mxu0 0.0
    %6163 = vmatpush1.msra.mxu0 0.0
    %6164 = vmatprep.subr.mxu0 0.0
    %6165 = vmatpush1.msra.mxu0 0.0
    %6166 = vmatprep.subr.mxu0 0.0
    %6167 = vmatpush1.msra.mxu0 0.0
    %6168 = vmatprep.subr.mxu0 0.0
    %6169 = vmatpush1.msra.mxu0 0.0
    %6170 = vmatprep.subr.mxu0 0.0
    %6171 = vmatpush1.msra.mxu0 0.0
    %6172 = vmatprep.subr.mxu0 0.0
    %6173 = vmatpush1.msra.mxu0 0.0
    %6174 = vmatprep.subr.mxu0 0.0
    %6175 = vmatpush1.msra.mxu0 0.0
    %6176 = vmatprep.subr.mxu0 0.0
    %6177 = vmatpush1.msra.mxu0 0.0
    %6178 = vmatprep.mubr.f32.mxu0 0.0
    %6179 = vmatmul.mubr.f32.gmra.mrb[0].mxu0 %v6112
    %v6180 = vpop.f32.mrb[0].mxu0
    %v6181 = vadd.f32 0.0, %v6180
    %v6182 = vpop.f32.mrb[0].mxu0
    %6183 = vdwg.mxu0
    %v6184 = vadd.f32 %v6074, %v6181
    %s6185 = scalar_lea.vmem [#allocation14], 1024
    %v6186 = vld [vmem:[%s6185] sm:$0xff]
    %v6187 = vld [vmem:[%s6185 + $0x8] sm:$0xff]
    %v6188 = vld [vmem:[%s6185 + $0x10] sm:$0xff]
    %v6189 = vld [vmem:[%s6185 + $0x18] sm:$0xff]
    %v6190 = vld [vmem:[%s6185 + $0x20] sm:$0xff]
    %v6191 = vld [vmem:[%s6185 + $0x28] sm:$0xff]
    %v6192 = vld [vmem:[%s6185 + $0x30] sm:$0xff]
    %v6193 = vld [vmem:[%s6185 + $0x38] sm:$0xff]
    %v6194 = vld [vmem:[%s6185 + $0x40] sm:$0xff]
    %v6195 = vld [vmem:[%s6185 + $0x48] sm:$0xff]
    %v6196 = vld [vmem:[%s6185 + $0x50] sm:$0xff]
    %v6197 = vld [vmem:[%s6185 + $0x58] sm:$0xff]
    %v6198 = vld [vmem:[%s6185 + $0x60] sm:$0xff]
    %v6199 = vld [vmem:[%s6185 + $0x68] sm:$0xff]
    %v6200 = vld [vmem:[%s6185 + $0x70] sm:$0xff]
    %v6201 = vld [vmem:[%s6185 + $0x78] sm:$0xff]
    %v6204 = vcombine.low %v5959, %v5961
    %v6205 = vcombine.low %v5963, %v5965
    %v6207 = vunpack.c.l.s4 1983009808
    %v6208 = vunpack.c.0.s8 %v6207
    %v6209 = vlaneseq
    %v6210 = vshrl.u32 %v6209, 7
    %v6211 = vsub.s32 %v6208, %v6210
    %v6212 = vrot.slane %v6204, %v6211
    %v6214 = vunpack.c.l.s4 1983009808
    %v6215 = vunpack.c.0.s8 %v6214
    %v6216 = vlaneseq
    %v6217 = vshrl.u32 %v6216, 7
    %v6218 = vsub.s32 %v6215, %v6217
    %v6219 = vrot.slane %v6205, %v6218
    %v6220 = vcombine.low %v6212, %v6219
    %6222 = vmatprep.subr.mxu0 0.0
    %6223 = vmatpush1.msra.mxu0 %v6186
    %6224 = vmatprep.subr.mxu0 0.0
    %6225 = vmatpush1.msra.mxu0 %v6187
    %6226 = vmatprep.subr.mxu0 0.0
    %6227 = vmatpush1.msra.mxu0 %v6188
    %6228 = vmatprep.subr.mxu0 0.0
    %6229 = vmatpush1.msra.mxu0 %v6189
    %6230 = vmatprep.subr.mxu0 0.0
    %6231 = vmatpush1.msra.mxu0 %v6190
    %6232 = vmatprep.subr.mxu0 0.0
    %6233 = vmatpush1.msra.mxu0 %v6191
    %6234 = vmatprep.subr.mxu0 0.0
    %6235 = vmatpush1.msra.mxu0 %v6192
    %6236 = vmatprep.subr.mxu0 0.0
    %6237 = vmatpush1.msra.mxu0 %v6193
    %6238 = vmatprep.subr.mxu0 0.0
    %6239 = vmatpush1.msra.mxu0 %v6194
    %6240 = vmatprep.subr.mxu0 0.0
    %6241 = vmatpush1.msra.mxu0 %v6195
    %6242 = vmatprep.subr.mxu0 0.0
    %6243 = vmatpush1.msra.mxu0 %v6196
    %6244 = vmatprep.subr.mxu0 0.0
    %6245 = vmatpush1.msra.mxu0 %v6197
    %6246 = vmatprep.subr.mxu0 0.0
    %6247 = vmatpush1.msra.mxu0 %v6198
    %6248 = vmatprep.subr.mxu0 0.0
    %6249 = vmatpush1.msra.mxu0 %v6199
    %6250 = vmatprep.subr.mxu0 0.0
    %6251 = vmatpush1.msra.mxu0 %v6200
    %6252 = vmatprep.subr.mxu0 0.0
    %6253 = vmatpush1.msra.mxu0 %v6201
    %6254 = vmatprep.subr.mxu0 0.0
    %6255 = vmatpush1.msra.mxu0 0.0
    %6256 = vmatprep.subr.mxu0 0.0
    %6257 = vmatpush1.msra.mxu0 0.0
    %6258 = vmatprep.subr.mxu0 0.0
    %6259 = vmatpush1.msra.mxu0 0.0
    %6260 = vmatprep.subr.mxu0 0.0
    %6261 = vmatpush1.msra.mxu0 0.0
    %6262 = vmatprep.subr.mxu0 0.0
    %6263 = vmatpush1.msra.mxu0 0.0
    %6264 = vmatprep.subr.mxu0 0.0
    %6265 = vmatpush1.msra.mxu0 0.0
    %6266 = vmatprep.subr.mxu0 0.0
    %6267 = vmatpush1.msra.mxu0 0.0
    %6268 = vmatprep.subr.mxu0 0.0
    %6269 = vmatpush1.msra.mxu0 0.0
    %6270 = vmatprep.subr.mxu0 0.0
    %6271 = vmatpush1.msra.mxu0 0.0
    %6272 = vmatprep.subr.mxu0 0.0
    %6273 = vmatpush1.msra.mxu0 0.0
    %6274 = vmatprep.subr.mxu0 0.0
    %6275 = vmatpush1.msra.mxu0 0.0
    %6276 = vmatprep.subr.mxu0 0.0
    %6277 = vmatpush1.msra.mxu0 0.0
    %6278 = vmatprep.subr.mxu0 0.0
    %6279 = vmatpush1.msra.mxu0 0.0
    %6280 = vmatprep.subr.mxu0 0.0
    %6281 = vmatpush1.msra.mxu0 0.0
    %6282 = vmatprep.subr.mxu0 0.0
    %6283 = vmatpush1.msra.mxu0 0.0
    %6284 = vmatprep.subr.mxu0 0.0
    %6285 = vmatpush1.msra.mxu0 0.0
    %6286 = vmatprep.mubr.f32.mxu0 0.0
    %6287 = vmatmul.mubr.f32.gmra.mrb[0].mxu0 %v6220
    %v6288 = vpop.f32.mrb[0].mxu0
    %v6289 = vadd.f32 0.0, %v6288
    %v6290 = vpop.f32.mrb[0].mxu0
    %6291 = vdwg.mxu0
    %v6292 = vadd.f32 %v6184, %v6289
    %v6293 = vld [vmem:[#allocation16] sm:$0x1]
    %v6295 = vlaneseq
    %v6296 = vshrl.u32 %v6295, 7
    %v6297 = vsub.s32 0, %v6296
    %v6298 = vrot.slane %v6293, %v6297
    %v6300 = vadd.f32 %v6292, %v6298
    %6301 = vst [vmem:[#allocation17] sm:$0xff] %v6300
    // Predicated region
    $region74: #{tpu_custom_call.1} parent=1 // pred_check
      _
    $region75: #{tpu_custom_call.1} parent=1 // pred_check_branch
      %6303 = sbr.rel (0) target = $region77
    $region76: #{tpu_custom_call.1} parent=1 // pred_region
      %s6305 = ssub.s32 128, 128
      %6306 = vsyncadd [#allocation4], %s6305
      %s6308 = sshll.u32 [#allocation17], 4
      %s6309 = int_to_ptr.vmem [resolvable:$true] %s6308
      %6311 = dma.vmem_to_hbm [thread:$0]  %s6309, 128, %s9, [#allocation4]
    $region77: #{tpu_custom_call.1} parent=1 // pred_fallthru
      _
    // Predicated region
    $region78: #{tpu_custom_call.1} parent=1 // pred_check
      _
    $region79: #{tpu_custom_call.1} parent=1 // pred_check_branch
      %6313 = sbr.rel (0) target = $region81
    $region80: #{tpu_custom_call.1} parent=1 // pred_region
      %6314 = dma.done [#allocation4], 128
    $region81: #{tpu_custom_call.1} parent=1 // pred_fallthru
      _
    %6315 = vsyncpa [#allocation3], 1
    %6316 = vsyncpa [#allocation6], 1
    %6317 = vsyncpa [#allocation9], 1
    %6318 = vsyncpa [#allocation12], 1
    %6319 = vsyncpa [#allocation15], 1
    %6320 = vsyncpa [#allocation4], 1

</llo_original>
